<compile_context>
chip_gen: v6e
topology: v6e:2x2x1
jax: 0.10.0
libtpu: 0.0.40
codegen_flags: <defaults>
</compile_context>

<pallas_src>
import functools

import jax
import jax.numpy as jnp
from jax.experimental import pallas as pl
from jax.experimental.pallas import tpu as pltpu


# ---------------------------------------------------------------------------
# Pallas kernels
# ---------------------------------------------------------------------------
def _conv_mm_kernel(p_ref, w_ref, b_ref, o_ref):
    # out[Cout, TM] = relu(W[Cout, K] @ patches[K, TM] + b[Cout, 1])
    acc = jnp.dot(w_ref[...], p_ref[...], preferred_element_type=jnp.float32)
    acc = jnp.maximum(acc + b_ref[...], 0.0)
    o_ref[...] = acc.astype(o_ref.dtype)


def _head_kernel(x_ref, w0_ref, b0_ref, w1_ref, b1_ref, w2_ref, b2_ref, o_ref,
                 *, batch, k_half):
    # Linear(1152,288)+ReLU -> concat(state_feat, next_feat) ->
    # Linear(576,256)+ReLU -> Linear(256, A_pad).
    # The concat is expressed as two K-slab matmuls into one accumulator.
    f = jnp.dot(x_ref[...], w0_ref[...], preferred_element_type=jnp.float32)
    f = jnp.maximum(f + b0_ref[...], 0.0).astype(jnp.bfloat16)      # [2B, 288]
    s, ns = f[:batch], f[batch:]
    w1 = w1_ref[...]
    h = (jnp.dot(s, w1[:k_half], preferred_element_type=jnp.float32)
         + jnp.dot(ns, w1[k_half:], preferred_element_type=jnp.float32)
         + b1_ref[...])
    h = jnp.maximum(h, 0.0).astype(jnp.bfloat16)                    # [B, 256]
    o = jnp.dot(h, w2_ref[...], preferred_element_type=jnp.float32) + b2_ref[...]
    o_ref[...] = o.astype(o_ref.dtype)


# ---------------------------------------------------------------------------
# Conv2d(k=3, s=2, p=1) + ReLU as a lane-dense Pallas matmul
# ---------------------------------------------------------------------------
def _im2col_cm(x, ksize=3, stride=2, pad=1):
    """x: [C, B, H, W] -> patches [C*k*k, B*OH*OW].
    K ordered (c, kh, kw) (matches torch weight.reshape(Cout, -1));
    M ordered (b, oh, ow).  Single XLA fusion, no large-dim transposes."""
    C, B, H, W = x.shape
    OH = (H + 2 * pad - ksize) // stride + 1
    OW = (W + 2 * pad - ksize) // stride + 1
    xp = jnp.pad(x, ((0, 0), (0, 0), (pad, pad), (pad, pad)))
    taps = [xp[:, :, kh:kh + stride * OH:stride, kw:kw + stride * OW:stride]
            for kh in range(ksize) for kw in range(ksize)]
    patches = jnp.stack(taps, axis=1)                  # [C, 9, B, OH, OW]
    return patches.reshape(C * ksize * ksize, B * OH * OW), OH, OW


def conv2d_s2p1_relu(x, w_mat, b_col):
    """x: [Cin, B, H, W] bf16, w_mat: [Cout, Cin*9] bf16, b_col: [Cout, 1] f32
    -> [Cout, B, OH, OW] bf16."""
    _, B, _, _ = x.shape
    Cout, K = w_mat.shape
    patches, OH, OW = _im2col_cm(x)
    patches = patches.astype(jnp.bfloat16)
    M = B * OH * OW
    # 2 lane-blocks on the big layers (keeps both v7x TensorCores busy); else 1.
    grid_m = 2 if (M >= 2048 and M % 256 == 0) else 1
    tm = M // grid_m
    y = pl.pallas_call(
        _conv_mm_kernel,
        out_shape=jax.ShapeDtypeStruct((Cout, M), jnp.bfloat16),
        grid=(grid_m,),
        in_specs=[
            pl.BlockSpec((K, tm), lambda i: (0, i)),
            pl.BlockSpec((Cout, K), lambda i: (0, 0)),
            pl.BlockSpec((Cout, 1), lambda i: (0, 0)),
        ],
        out_specs=pl.BlockSpec((Cout, tm), lambda i: (0, i)),
        compiler_params=pltpu.CompilerParams(
            dimension_semantics=("parallel",)),
    )(patches, w_mat, b_col)
    return y.reshape(Cout, B, OH, OW)


# ---------------------------------------------------------------------------
# Fused fc head: Linear(1152,288)+ReLU -> concat -> Linear(576,256)+ReLU
#                -> Linear(256, A_pad)
# ---------------------------------------------------------------------------
def fc_head(feat, prep, batch, n_pad):
    """feat: [2B, 1152] bf16 -> [B, n_pad] f32."""
    B2, K0 = feat.shape
    return pl.pallas_call(
        functools.partial(_head_kernel, batch=batch,
                          k_half=prep["lin0_w"].shape[1]),
        out_shape=jax.ShapeDtypeStruct((batch, n_pad), jnp.float32),
        grid=(1,),
        in_specs=[
            pl.BlockSpec((B2, K0), lambda i: (0, 0)),
            pl.BlockSpec(prep["lin0_w"].shape, lambda i: (0, 0)),
            pl.BlockSpec(prep["lin0_b"].shape, lambda i: (0, 0)),
            pl.BlockSpec(prep["fc1_w"].shape, lambda i: (0, 0)),
            pl.BlockSpec(prep["fc1_b"].shape, lambda i: (0, 0)),
            pl.BlockSpec(prep["fc2_w"].shape, lambda i: (0, 0)),
            pl.BlockSpec(prep["fc2_b"].shape, lambda i: (0, 0)),
        ],
        out_specs=pl.BlockSpec((batch, n_pad), lambda i: (0, 0)),
    )(feat, prep["lin0_w"], prep["lin0_b"], prep["fc1_w"], prep["fc1_b"],
      prep["fc2_w"], prep["fc2_b"])


# ---------------------------------------------------------------------------
# Parameters (torch layout) + one-time kernel-ready preparation
# ---------------------------------------------------------------------------
def _xavier_uniform(key, shape, fan_in, fan_out):
    bound = (6.0 / (fan_in + fan_out)) ** 0.5
    return jax.random.uniform(key, shape, jnp.float32, -bound, bound)


def init_params(key, channels_in=4, action_space=12):
    """Parameters in torch layout: Conv2d [Cout,Cin,3,3], Linear [out,in]."""
    ks = jax.random.split(key, 7)
    p = {}
    cins = [channels_in, 32, 32, 32]
    for i, cin in enumerate(cins):
        p[f"conv{i}_w"] = _xavier_uniform(ks[i], (32, cin, 3, 3), cin * 9, 32 * 9)
        p[f"conv{i}_b"] = jnp.zeros((32,), jnp.float32)
    p["lin0_w"] = _xavier_uniform(ks[4], (288, 1152), 1152, 288)
    p["lin0_b"] = jnp.zeros((288,), jnp.float32)
    p["fc1_w"] = _xavier_uniform(ks[5], (256, 576), 576, 256)
    p["fc1_b"] = jnp.zeros((256,), jnp.float32)
    p["fc2_w"] = _xavier_uniform(ks[6], (action_space, 256), 256, action_space)
    p["fc2_b"] = jnp.zeros((action_space,), jnp.float32)
    return p


def prepare_params(p, action_space=12, lane_pad=128):
    """One-time conversion to kernel-ready layouts: bf16 matmul operands,
    f32 biases, fc2 zero-padded to a lane-dense output width."""
    q = {}
    for i in range(4):
        w = p[f"conv{i}_w"]
        q[f"conv{i}_w"] = w.reshape(w.shape[0], -1).astype(jnp.bfloat16)
        q[f"conv{i}_b"] = p[f"conv{i}_b"].reshape(-1, 1).astype(jnp.float32)
    q["lin0_w"] = p["lin0_w"].T.astype(jnp.bfloat16)            # [1152, 288]
    q["lin0_b"] = p["lin0_b"].reshape(1, -1).astype(jnp.float32)
    q["fc1_w"] = p["fc1_w"].T.astype(jnp.bfloat16)              # [576, 256]
    q["fc1_b"] = p["fc1_b"].reshape(1, -1).astype(jnp.float32)
    n_pad = max(lane_pad, action_space)
    w2 = jnp.zeros((p["fc2_w"].shape[1], n_pad), jnp.float32)
    w2 = w2.at[:, :action_space].set(p["fc2_w"].T)
    b2 = jnp.zeros((1, n_pad), jnp.float32).at[:, :action_space].set(p["fc2_b"])
    q["fc2_w"] = w2.astype(jnp.bfloat16)
    q["fc2_b"] = b2
    return q


# ---------------------------------------------------------------------------
# Module forward (matches Reverse_Dynamics_Module.forward)
# ---------------------------------------------------------------------------
def forward(prep, state, next_state, *, action_space=12):
    """state/next_state: [B, C, H, W] f32 -> [B, action_space] f32."""
    B = state.shape[0]
    # Single backbone pass for both streams: [2B, C, H, W] -> channel-major bf16.
    x = jnp.concatenate([state, next_state], axis=0)
    x = x.transpose(1, 0, 2, 3).astype(jnp.bfloat16)             # [C, 2B, H, W]
    for i in range(4):
        x = conv2d_s2p1_relu(x, prep[f"conv{i}_w"], prep[f"conv{i}_b"])
    Cf, B2, Hf, Wf = x.shape                                     # [32, 2B, 6, 6]
    # torch nn.Flatten order is (C, H, W) per sample.
    feat = x.reshape(Cf, B2, Hf * Wf).transpose(1, 0, 2).reshape(B2, Cf * Hf * Wf)
    out = fc_head(feat, prep, batch=B, n_pad=prep["fc2_w"].shape[1])
    return out[:, :action_space]


if __name__ == "__main__":
    key = jax.random.PRNGKey(0)
    k_p, k_s, k_ns = jax.random.split(key, 3)
    params = init_params(k_p, channels_in=4, action_space=12)
    prep = prepare_params(params, action_space=12)

    # Flatten(1152) = 32 * 6 * 6 after four stride-2 convs => 96x96 input.
    B = 2
    state = jax.random.normal(k_s, (B, 4, 96, 96), jnp.float32)
    next_state = jax.random.normal(k_ns, (B, 4, 96, 96), jnp.float32)

    fwd = jax.jit(functools.partial(forward, action_space=12))
    out = fwd(prep, state, next_state)
    jax.block_until_ready(out)
    assert out.shape == (B, 12) and out.dtype == jnp.float32
    print("KERNEL_OK")
</pallas_src>

<mosaic_0001>
module attributes {stable_mosaic.version = 11 : i64} {
  func.func @_conv_mm_kernel(%arg0: i32, %arg1: memref<36x4608xbf16, #tpu.memory_space<vmem>>, %arg2: memref<32x36xbf16, #tpu.memory_space<vmem>>, %arg3: memref<32x1xf32, #tpu.memory_space<vmem>>, %arg4: memref<32x4608xbf16, #tpu.memory_space<vmem>>) attributes {dimension_semantics = [#tpu.dimension_semantics<parallel>], iteration_bounds = array<i64: 2>, scalar_prefetch = 0 : i64, scratch_operands = 0 : i64, tpu.core_type = #tpu.core_type<tc>, window_params = [{transform_indices = @transform_0, window_bounds = array<i64: 36, 4608>}, {pipeline_mode = #tpu.pipeline_mode<synchronous>, transform_indices = @transform_1, window_bounds = array<i64: 32, 36>}, {pipeline_mode = #tpu.pipeline_mode<synchronous>, transform_indices = @transform_2, window_bounds = array<i64: 32, 1>}, {transform_indices = @transform_3, window_bounds = array<i64: 32, 4608>}]} {
    %c0 = arith.constant 0 : index
    %c0_0 = arith.constant 0 : index
    %0 = vector.load %arg2[%c0, %c0_0] : memref<32x36xbf16, #tpu.memory_space<vmem>>, vector<32x36xbf16>
    %c0_1 = arith.constant 0 : index
    %c0_2 = arith.constant 0 : index
    %1 = vector.load %arg1[%c0_1, %c0_2] : memref<36x4608xbf16, #tpu.memory_space<vmem>>, vector<36x4608xbf16>
    %cst = arith.constant dense<0.000000e+00> : vector<32x4608xf32>
    %2 = tpu.matmul %0, %1, %cst {dimension_numbers = #tpu.dot_dimension_numbers<[1], [0], [0], [1], [0, 0, 1, 1], [], []>} : vector<32x36xbf16>, vector<36x4608xbf16>, vector<32x4608xf32> -> vector<32x4608xf32>
    %c0_3 = arith.constant 0 : index
    %c0_4 = arith.constant 0 : index
    %3 = vector.load %arg3[%c0_3, %c0_4] : memref<32x1xf32, #tpu.memory_space<vmem>>, vector<32x1xf32>
    %4 = vector.broadcast %3 : vector<32x1xf32> to vector<32x4608xf32>
    %5 = arith.addf %2, %4 : vector<32x4608xf32>
    %cst_5 = arith.constant 0.000000e+00 : f32
    %6 = vector.broadcast %cst_5 : f32 to vector<32x4608xf32>
    %7 = arith.maximumf %5, %6 : vector<32x4608xf32>
    %8 = arith.truncf %7 : vector<32x4608xf32> to vector<32x4608xbf16>
    %c0_6 = arith.constant 0 : index
    %c0_7 = arith.constant 0 : index
    %9 = vector.load %arg4[%c0_6, %c0_7] : memref<32x4608xbf16, #tpu.memory_space<vmem>>, vector<32x4608xbf16>
    tpu.vector_store %arg4[%c0_6, %c0_7], %8 {strides = array<i32>} : memref<32x4608xbf16, #tpu.memory_space<vmem>>, vector<32x4608xbf16>,
    return
  }
  func.func @transform_0(%arg0: i32) -> (i32, i32) {
    %c0_i32 = arith.constant 0 : i32
    %c0_i32_0 = arith.constant 0 : i32
    return %c0_i32, %arg0 : i32, i32
  }
  func.func @transform_1(%arg0: i32) -> (i32, i32) {
    %c0_i32 = arith.constant 0 : i32
    %c0_i32_0 = arith.constant 0 : i32
    %c0_i32_1 = arith.constant 0 : i32
    return %c0_i32, %c0_i32_0 : i32, i32
  }
  func.func @transform_2(%arg0: i32) -> (i32, i32) {
    %c0_i32 = arith.constant 0 : i32
    %c0_i32_0 = arith.constant 0 : i32
    %c0_i32_1 = arith.constant 0 : i32
    return %c0_i32, %c0_i32_0 : i32, i32
  }
  func.func @transform_3(%arg0: i32) -> (i32, i32) {
    %c0_i32 = arith.constant 0 : i32
    %c0_i32_0 = arith.constant 0 : i32
    return %c0_i32, %arg0 : i32, i32
  }
}

module attributes {stable_mosaic.version = 11 : i64} {
  func.func @_conv_mm_kernel(%arg0: i32, %arg1: memref<288x1152xbf16, #tpu.memory_space<vmem>>, %arg2: memref<32x288xbf16, #tpu.memory_space<vmem>>, %arg3: memref<32x1xf32, #tpu.memory_space<vmem>>, %arg4: memref<32x1152xbf16, #tpu.memory_space<vmem>>) attributes {dimension_semantics = [#tpu.dimension_semantics<parallel>], iteration_bounds = array<i64: 2>, scalar_prefetch = 0 : i64, scratch_operands = 0 : i64, tpu.core_type = #tpu.core_type<tc>, window_params = [{transform_indices = @transform_0, window_bounds = array<i64: 288, 1152>}, {pipeline_mode = #tpu.pipeline_mode<synchronous>, transform_indices = @transform_1, window_bounds = array<i64: 32, 288>}, {pipeline_mode = #tpu.pipeline_mode<synchronous>, transform_indices = @transform_2, window_bounds = array<i64: 32, 1>}, {transform_indices = @transform_3, window_bounds = array<i64: 32, 1152>}]} {
    %c0 = arith.constant 0 : index
    %c0_0 = arith.constant 0 : index
    %0 = vector.load %arg2[%c0, %c0_0] : memref<32x288xbf16, #tpu.memory_space<vmem>>, vector<32x288xbf16>
    %c0_1 = arith.constant 0 : index
    %c0_2 = arith.constant 0 : index
    %1 = vector.load %arg1[%c0_1, %c0_2] : memref<288x1152xbf16, #tpu.memory_space<vmem>>, vector<288x1152xbf16>
    %cst = arith.constant dense<0.000000e+00> : vector<32x1152xf32>
    %2 = tpu.matmul %0, %1, %cst {dimension_numbers = #tpu.dot_dimension_numbers<[1], [0], [0], [1], [0, 0, 1, 1], [], []>} : vector<32x288xbf16>, vector<288x1152xbf16>, vector<32x1152xf32> -> vector<32x1152xf32>
    %c0_3 = arith.constant 0 : index
    %c0_4 = arith.constant 0 : index
    %3 = vector.load %arg3[%c0_3, %c0_4] : memref<32x1xf32, #tpu.memory_space<vmem>>, vector<32x1xf32>
    %4 = vector.broadcast %3 : vector<32x1xf32> to vector<32x1152xf32>
    %5 = arith.addf %2, %4 : vector<32x1152xf32>
    %cst_5 = arith.constant 0.000000e+00 : f32
    %6 = vector.broadcast %cst_5 : f32 to vector<32x1152xf32>
    %7 = arith.maximumf %5, %6 : vector<32x1152xf32>
    %8 = arith.truncf %7 : vector<32x1152xf32> to vector<32x1152xbf16>
    %c0_6 = arith.constant 0 : index
    %c0_7 = arith.constant 0 : index
    %9 = vector.load %arg4[%c0_6, %c0_7] : memref<32x1152xbf16, #tpu.memory_space<vmem>>, vector<32x1152xbf16>
    tpu.vector_store %arg4[%c0_6, %c0_7], %8 {strides = array<i32>} : memref<32x1152xbf16, #tpu.memory_space<vmem>>, vector<32x1152xbf16>,
    return
  }
  func.func @transform_0(%arg0: i32) -> (i32, i32) {
    %c0_i32 = arith.constant 0 : i32
    %c0_i32_0 = arith.constant 0 : i32
    return %c0_i32, %arg0 : i32, i32
  }
  func.func @transform_1(%arg0: i32) -> (i32, i32) {
    %c0_i32 = arith.constant 0 : i32
    %c0_i32_0 = arith.constant 0 : i32
    %c0_i32_1 = arith.constant 0 : i32
    return %c0_i32, %c0_i32_0 : i32, i32
  }
  func.func @transform_2(%arg0: i32) -> (i32, i32) {
    %c0_i32 = arith.constant 0 : i32
    %c0_i32_0 = arith.constant 0 : i32
    %c0_i32_1 = arith.constant 0 : i32
    return %c0_i32, %c0_i32_0 : i32, i32
  }
  func.func @transform_3(%arg0: i32) -> (i32, i32) {
    %c0_i32 = arith.constant 0 : i32
    %c0_i32_0 = arith.constant 0 : i32
    return %c0_i32, %arg0 : i32, i32
  }
}

module attributes {stable_mosaic.version = 11 : i64} {
  func.func @_conv_mm_kernel(%arg0: i32, %arg1: memref<288x576xbf16, #tpu.memory_space<vmem>>, %arg2: memref<32x288xbf16, #tpu.memory_space<vmem>>, %arg3: memref<32x1xf32, #tpu.memory_space<vmem>>, %arg4: memref<32x576xbf16, #tpu.memory_space<vmem>>) attributes {dimension_semantics = [#tpu.dimension_semantics<parallel>], iteration_bounds = array<i64: 1>, scalar_prefetch = 0 : i64, scratch_operands = 0 : i64, tpu.core_type = #tpu.core_type<tc>, window_params = [{transform_indices = @transform_0, window_bounds = array<i64: 288, 576>}, {pipeline_mode = #tpu.pipeline_mode<synchronous>, transform_indices = @transform_1, window_bounds = array<i64: 32, 288>}, {pipeline_mode = #tpu.pipeline_mode<synchronous>, transform_indices = @transform_2, window_bounds = array<i64: 32, 1>}, {transform_indices = @transform_3, window_bounds = array<i64: 32, 576>}]} {
    %c0 = arith.constant 0 : index
    %c0_0 = arith.constant 0 : index
    %0 = vector.load %arg2[%c0, %c0_0] : memref<32x288xbf16, #tpu.memory_space<vmem>>, vector<32x288xbf16>
    %c0_1 = arith.constant 0 : index
    %c0_2 = arith.constant 0 : index
    %1 = vector.load %arg1[%c0_1, %c0_2] : memref<288x576xbf16, #tpu.memory_space<vmem>>, vector<288x576xbf16>
    %cst = arith.constant dense<0.000000e+00> : vector<32x576xf32>
    %2 = tpu.matmul %0, %1, %cst {dimension_numbers = #tpu.dot_dimension_numbers<[1], [0], [0], [1], [0, 0, 1, 1], [], []>} : vector<32x288xbf16>, vector<288x576xbf16>, vector<32x576xf32> -> vector<32x576xf32>
    %c0_3 = arith.constant 0 : index
    %c0_4 = arith.constant 0 : index
    %3 = vector.load %arg3[%c0_3, %c0_4] : memref<32x1xf32, #tpu.memory_space<vmem>>, vector<32x1xf32>
    %4 = vector.broadcast %3 : vector<32x1xf32> to vector<32x576xf32>
    %5 = arith.addf %2, %4 : vector<32x576xf32>
    %cst_5 = arith.constant 0.000000e+00 : f32
    %6 = vector.broadcast %cst_5 : f32 to vector<32x576xf32>
    %7 = arith.maximumf %5, %6 : vector<32x576xf32>
    %8 = arith.truncf %7 : vector<32x576xf32> to vector<32x576xbf16>
    %c0_6 = arith.constant 0 : index
    %c0_7 = arith.constant 0 : index
    %9 = vector.load %arg4[%c0_6, %c0_7] : memref<32x576xbf16, #tpu.memory_space<vmem>>, vector<32x576xbf16>
    tpu.vector_store %arg4[%c0_6, %c0_7], %8 {strides = array<i32>} : memref<32x576xbf16, #tpu.memory_space<vmem>>, vector<32x576xbf16>,
    return
  }
  func.func @transform_0(%arg0: i32) -> (i32, i32) {
    %c0_i32 = arith.constant 0 : i32
    %c0_i32_0 = arith.constant 0 : i32
    return %c0_i32, %arg0 : i32, i32
  }
  func.func @transform_1(%arg0: i32) -> (i32, i32) {
    %c0_i32 = arith.constant 0 : i32
    %c0_i32_0 = arith.constant 0 : i32
    %c0_i32_1 = arith.constant 0 : i32
    return %c0_i32, %c0_i32_0 : i32, i32
  }
  func.func @transform_2(%arg0: i32) -> (i32, i32) {
    %c0_i32 = arith.constant 0 : i32
    %c0_i32_0 = arith.constant 0 : i32
    %c0_i32_1 = arith.constant 0 : i32
    return %c0_i32, %c0_i32_0 : i32, i32
  }
  func.func @transform_3(%arg0: i32) -> (i32, i32) {
    %c0_i32 = arith.constant 0 : i32
    %c0_i32_0 = arith.constant 0 : i32
    return %c0_i32, %arg0 : i32, i32
  }
}

module attributes {stable_mosaic.version = 11 : i64} {
  func.func @_conv_mm_kernel(%arg0: i32, %arg1: memref<288x144xbf16, #tpu.memory_space<vmem>>, %arg2: memref<32x288xbf16, #tpu.memory_space<vmem>>, %arg3: memref<32x1xf32, #tpu.memory_space<vmem>>, %arg4: memref<32x144xbf16, #tpu.memory_space<vmem>>) attributes {dimension_semantics = [#tpu.dimension_semantics<parallel>], iteration_bounds = array<i64: 1>, scalar_prefetch = 0 : i64, scratch_operands = 0 : i64, tpu.core_type = #tpu.core_type<tc>, window_params = [{transform_indices = @transform_0, window_bounds = array<i64: 288, 144>}, {pipeline_mode = #tpu.pipeline_mode<synchronous>, transform_indices = @transform_1, window_bounds = array<i64: 32, 288>}, {pipeline_mode = #tpu.pipeline_mode<synchronous>, transform_indices = @transform_2, window_bounds = array<i64: 32, 1>}, {transform_indices = @transform_3, window_bounds = array<i64: 32, 144>}]} {
    %c0 = arith.constant 0 : index
    %c0_0 = arith.constant 0 : index
    %0 = vector.load %arg2[%c0, %c0_0] : memref<32x288xbf16, #tpu.memory_space<vmem>>, vector<32x288xbf16>
    %c0_1 = arith.constant 0 : index
    %c0_2 = arith.constant 0 : index
    %1 = vector.load %arg1[%c0_1, %c0_2] : memref<288x144xbf16, #tpu.memory_space<vmem>>, vector<288x144xbf16>
    %cst = arith.constant dense<0.000000e+00> : vector<32x144xf32>
    %2 = tpu.matmul %0, %1, %cst {dimension_numbers = #tpu.dot_dimension_numbers<[1], [0], [0], [1], [0, 0, 1, 1], [], []>} : vector<32x288xbf16>, vector<288x144xbf16>, vector<32x144xf32> -> vector<32x144xf32>
    %c0_3 = arith.constant 0 : index
    %c0_4 = arith.constant 0 : index
    %3 = vector.load %arg3[%c0_3, %c0_4] : memref<32x1xf32, #tpu.memory_space<vmem>>, vector<32x1xf32>
    %4 = vector.broadcast %3 : vector<32x1xf32> to vector<32x144xf32>
    %5 = arith.addf %2, %4 : vector<32x144xf32>
    %cst_5 = arith.constant 0.000000e+00 : f32
    %6 = vector.broadcast %cst_5 : f32 to vector<32x144xf32>
    %7 = arith.maximumf %5, %6 : vector<32x144xf32>
    %8 = arith.truncf %7 : vector<32x144xf32> to vector<32x144xbf16>
    %c0_6 = arith.constant 0 : index
    %c0_7 = arith.constant 0 : index
    %9 = vector.load %arg4[%c0_6, %c0_7] : memref<32x144xbf16, #tpu.memory_space<vmem>>, vector<32x144xbf16>
    tpu.vector_store %arg4[%c0_6, %c0_7], %8 {strides = array<i32>} : memref<32x144xbf16, #tpu.memory_space<vmem>>, vector<32x144xbf16>,
    return
  }
  func.func @transform_0(%arg0: i32) -> (i32, i32) {
    %c0_i32 = arith.constant 0 : i32
    %c0_i32_0 = arith.constant 0 : i32
    return %c0_i32, %arg0 : i32, i32
  }
  func.func @transform_1(%arg0: i32) -> (i32, i32) {
    %c0_i32 = arith.constant 0 : i32
    %c0_i32_0 = arith.constant 0 : i32
    %c0_i32_1 = arith.constant 0 : i32
    return %c0_i32, %c0_i32_0 : i32, i32
  }
  func.func @transform_2(%arg0: i32) -> (i32, i32) {
    %c0_i32 = arith.constant 0 : i32
    %c0_i32_0 = arith.constant 0 : i32
    %c0_i32_1 = arith.constant 0 : i32
    return %c0_i32, %c0_i32_0 : i32, i32
  }
  func.func @transform_3(%arg0: i32) -> (i32, i32) {
    %c0_i32 = arith.constant 0 : i32
    %c0_i32_0 = arith.constant 0 : i32
    return %c0_i32, %arg0 : i32, i32
  }
}

module attributes {stable_mosaic.version = 11 : i64} {
  func.func @_head_kernel(%arg0: i32, %arg1: memref<4x1152xbf16, #tpu.memory_space<vmem>>, %arg2: memref<1152x288xbf16, #tpu.memory_space<vmem>>, %arg3: memref<1x288xf32, #tpu.memory_space<vmem>>, %arg4: memref<576x256xbf16, #tpu.memory_space<vmem>>, %arg5: memref<1x256xf32, #tpu.memory_space<vmem>>, %arg6: memref<256x128xbf16, #tpu.memory_space<vmem>>, %arg7: memref<1x128xf32, #tpu.memory_space<vmem>>, %arg8: memref<2x128xf32, #tpu.memory_space<vmem>>) attributes {dimension_semantics = [#tpu.dimension_semantics<arbitrary>], iteration_bounds = array<i64: 1>, scalar_prefetch = 0 : i64, scratch_operands = 0 : i64, tpu.core_type = #tpu.core_type<tc>, window_params = [{pipeline_mode = #tpu.pipeline_mode<synchronous>, transform_indices = @transform_0, window_bounds = array<i64: 4, 1152>}, {pipeline_mode = #tpu.pipeline_mode<synchronous>, transform_indices = @transform_1, window_bounds = array<i64: 1152, 288>}, {pipeline_mode = #tpu.pipeline_mode<synchronous>, transform_indices = @transform_2, window_bounds = array<i64: 1, 288>}, {pipeline_mode = #tpu.pipeline_mode<synchronous>, transform_indices = @transform_3, window_bounds = array<i64: 576, 256>}, {pipeline_mode = #tpu.pipeline_mode<synchronous>, transform_indices = @transform_4, window_bounds = array<i64: 1, 256>}, {pipeline_mode = #tpu.pipeline_mode<synchronous>, transform_indices = @transform_5, window_bounds = array<i64: 256, 128>}, {pipeline_mode = #tpu.pipeline_mode<synchronous>, transform_indices = @transform_6, window_bounds = array<i64: 1, 128>}, {pipeline_mode = #tpu.pipeline_mode<synchronous>, transform_indices = @transform_7, window_bounds = array<i64: 2, 128>}]} {
    %c0 = arith.constant 0 : index
    %c0_0 = arith.constant 0 : index
    %0 = vector.load %arg1[%c0, %c0_0] : memref<4x1152xbf16, #tpu.memory_space<vmem>>, vector<4x1152xbf16>
    %c0_1 = arith.constant 0 : index
    %c0_2 = arith.constant 0 : index
    %1 = vector.load %arg2[%c0_1, %c0_2] : memref<1152x288xbf16, #tpu.memory_space<vmem>>, vector<1152x288xbf16>
    %cst = arith.constant dense<0.000000e+00> : vector<4x288xf32>
    %2 = tpu.matmul %0, %1, %cst {dimension_numbers = #tpu.dot_dimension_numbers<[1], [0], [0], [1], [0, 0, 1, 1], [], []>} : vector<4x1152xbf16>, vector<1152x288xbf16>, vector<4x288xf32> -> vector<4x288xf32>
    %c0_3 = arith.constant 0 : index
    %c0_4 = arith.constant 0 : index
    %3 = vector.load %arg3[%c0_3, %c0_4] : memref<1x288xf32, #tpu.memory_space<vmem>>, vector<1x288xf32>
    %4 = vector.broadcast %3 : vector<1x288xf32> to vector<4x288xf32>
    %5 = arith.addf %2, %4 : vector<4x288xf32>
    %cst_5 = arith.constant 0.000000e+00 : f32
    %6 = vector.broadcast %cst_5 : f32 to vector<4x288xf32>
    %7 = arith.maximumf %5, %6 : vector<4x288xf32>
    %8 = arith.truncf %7 : vector<4x288xf32> to vector<4x288xbf16>
    %9 = vector.extract_strided_slice %8 {offsets = [0, 0], sizes = [2, 288], strides = [1, 1]} : vector<4x288xbf16> to vector<2x288xbf16>
    %10 = vector.extract_strided_slice %8 {offsets = [2, 0], sizes = [2, 288], strides = [1, 1]} : vector<4x288xbf16> to vector<2x288xbf16>
    %c0_6 = arith.constant 0 : index
    %c0_7 = arith.constant 0 : index
    %11 = vector.load %arg4[%c0_6, %c0_7] : memref<576x256xbf16, #tpu.memory_space<vmem>>, vector<576x256xbf16>
    %12 = vector.extract_strided_slice %11 {offsets = [0, 0], sizes = [288, 256], strides = [1, 1]} : vector<576x256xbf16> to vector<288x256xbf16>
    %cst_8 = arith.constant dense<0.000000e+00> : vector<2x256xf32>
    %13 = tpu.matmul %9, %12, %cst_8 {dimension_numbers = #tpu.dot_dimension_numbers<[1], [0], [0], [1], [0, 0, 1, 1], [], []>} : vector<2x288xbf16>, vector<288x256xbf16>, vector<2x256xf32> -> vector<2x256xf32>
    %14 = vector.extract_strided_slice %11 {offsets = [288, 0], sizes = [288, 256], strides = [1, 1]} : vector<576x256xbf16> to vector<288x256xbf16>
    %cst_9 = arith.constant dense<0.000000e+00> : vector<2x256xf32>
    %15 = tpu.matmul %10, %14, %cst_9 {dimension_numbers = #tpu.dot_dimension_numbers<[1], [0], [0], [1], [0, 0, 1, 1], [], []>} : vector<2x288xbf16>, vector<288x256xbf16>, vector<2x256xf32> -> vector<2x256xf32>
    %16 = arith.addf %13, %15 : vector<2x256xf32>
    %c0_10 = arith.constant 0 : index
    %c0_11 = arith.constant 0 : index
    %17 = vector.load %arg5[%c0_10, %c0_11] : memref<1x256xf32, #tpu.memory_space<vmem>>, vector<1x256xf32>
    %18 = vector.broadcast %17 : vector<1x256xf32> to vector<2x256xf32>
    %19 = arith.addf %16, %18 : vector<2x256xf32>
    %cst_12 = arith.constant 0.000000e+00 : f32
    %20 = vector.broadcast %cst_12 : f32 to vector<2x256xf32>
    %21 = arith.maximumf %19, %20 : vector<2x256xf32>
    %22 = arith.truncf %21 : vector<2x256xf32> to vector<2x256xbf16>
    %c0_13 = arith.constant 0 : index
    %c0_14 = arith.constant 0 : index
    %23 = vector.load %arg6[%c0_13, %c0_14] : memref<256x128xbf16, #tpu.memory_space<vmem>>, vector<256x128xbf16>
    %cst_15 = arith.constant dense<0.000000e+00> : vector<2x128xf32>
    %24 = tpu.matmul %22, %23, %cst_15 {dimension_numbers = #tpu.dot_dimension_numbers<[1], [0], [0], [1], [0, 0, 1, 1], [], []>} : vector<2x256xbf16>, vector<256x128xbf16>, vector<2x128xf32> -> vector<2x128xf32>
    %c0_16 = arith.constant 0 : index
    %c0_17 = arith.constant 0 : index
    %25 = vector.load %arg7[%c0_16, %c0_17] : memref<1x128xf32, #tpu.memory_space<vmem>>, vector<1x128xf32>
    %26 = vector.broadcast %25 : vector<1x128xf32> to vector<2x128xf32>
    %27 = arith.addf %24, %26 : vector<2x128xf32>
    %c0_18 = arith.constant 0 : index
    %c0_19 = arith.constant 0 : index
    %28 = vector.load %arg8[%c0_18, %c0_19] : memref<2x128xf32, #tpu.memory_space<vmem>>, vector<2x128xf32>
    tpu.vector_store %arg8[%c0_18, %c0_19], %27 {strides = array<i32>} : memref<2x128xf32, #tpu.memory_space<vmem>>, vector<2x128xf32>,
    return
  }
  func.func @transform_0(%arg0: i32) -> (i32, i32) {
    %c0_i32 = arith.constant 0 : i32
    %c0_i32_0 = arith.constant 0 : i32
    %c0_i32_1 = arith.constant 0 : i32
    return %c0_i32, %c0_i32_0 : i32, i32
  }
  func.func @transform_1(%arg0: i32) -> (i32, i32) {
    %c0_i32 = arith.constant 0 : i32
    %c0_i32_0 = arith.constant 0 : i32
    %c0_i32_1 = arith.constant 0 : i32
    return %c0_i32, %c0_i32_0 : i32, i32
  }
  func.func @transform_2(%arg0: i32) -> (i32, i32) {
    %c0_i32 = arith.constant 0 : i32
    %c0_i32_0 = arith.constant 0 : i32
    %c0_i32_1 = arith.constant 0 : i32
    return %c0_i32, %c0_i32_0 : i32, i32
  }
  func.func @transform_3(%arg0: i32) -> (i32, i32) {
    %c0_i32 = arith.constant 0 : i32
    %c0_i32_0 = arith.constant 0 : i32
    %c0_i32_1 = arith.constant 0 : i32
    return %c0_i32, %c0_i32_0 : i32, i32
  }
  func.func @transform_4(%arg0: i32) -> (i32, i32) {
    %c0_i32 = arith.constant 0 : i32
    %c0_i32_0 = arith.constant 0 : i32
    %c0_i32_1 = arith.constant 0 : i32
    return %c0_i32, %c0_i32_0 : i32, i32
  }
  func.func @transform_5(%arg0: i32) -> (i32, i32) {
    %c0_i32 = arith.constant 0 : i32
    %c0_i32_0 = arith.constant 0 : i32
    %c0_i32_1 = arith.constant 0 : i32
    return %c0_i32, %c0_i32_0 : i32, i32
  }
  func.func @transform_6(%arg0: i32) -> (i32, i32) {
    %c0_i32 = arith.constant 0 : i32
    %c0_i32_0 = arith.constant 0 : i32
    %c0_i32_1 = arith.constant 0 : i32
    return %c0_i32, %c0_i32_0 : i32, i32
  }
  func.func @transform_7(%arg0: i32) -> (i32, i32) {
    %c0_i32 = arith.constant 0 : i32
    %c0_i32_0 = arith.constant 0 : i32
    %c0_i32_1 = arith.constant 0 : i32
    return %c0_i32, %c0_i32_0 : i32, i32
  }
}

</mosaic_0001>

<llo_original>
// kernel: forward.5
$region0: #{forward.5}
  #allocation0 [shape = 'u32[]', space=smem, size = 0x4, offset = 0x4, fixed_abs, tag = 'smem constant byte address 0x4 - core index']
  #allocation1 [shape = 'u32[144,128]{1,0:T(1,128)}', space=vmem, size = 0x12000, scoped, tag = 'internal scratch']
  %s0 = inlined_call_operand.vmem [shape: bf16[36,9216], index: 0, kind: input, shape index: {}]
  %s1 = inlined_call_operand.vmem [shape: bf16[32,36], index: 1, kind: input, shape index: {}]
  %s2 = inlined_call_operand.vmem [shape: f32[32,1], index: 2, kind: input, shape index: {}]
  %s3 = inlined_call_operand.vmem [shape: bf16[32,9216], index: 3, kind: output, shape index: {}]
  %s4 = sld [smem:[#allocation0]]
  $region87: #{forward.5} parent=0
    _
  %s6 = ssub.s32 1, %s4
  %s7 = scalar_select 0, %s6, %s4
  $region1: #{forward.5} parent=0
    #allocation2 [shape = 'u8[737280]{0}', space=vmem, size = 0xb4000, scoped, tag = 'input window, operand 0']
    #allocation3 [shape = 'u8[589824]{0}', space=vmem, size = 0x90000, scoped, tag = 'output window, operand 0']
    loop: start=0, step=1, limit=4
    $region2: #{forward.5} parent=1 // loop_pre_header
      _
    $region3: #{forward.5} parent=1 // loop_header
      %s9 = sphi 0, %s13
      %p10 = scmp.ge.s32.totalorder %s9, 4
      %s19 = sphi 0, %s21
      %s22 = sphi 0, %s19
      %s23 = sphi 0, %s22
      %s39 = sphi 0, %s23
      %s43 = sphi 0, %s43
      %s45 = sphi 0, %s43
      %s46 = sphi 0, %s45
      %s60 = sphi 0, %s46
      %s64 = sphi 0, %s64
      %s66 = sphi 0, %s64
      %s67 = sphi 0, %s66
      %s81 = sphi 0, %s67
      %s87 = sphi 0, %s89
      %s90 = sphi 0, %s87
      %s91 = sphi 0, %s90
      %s107 = sphi 0, %s91
    $region4: #{forward.5} parent=1 // loop_header_branch
      %12 = sbr.rel (%p10) target = $region8
    $region5: #{forward.5} parent=1 // loop_body
      %s14 = ssub.s32 %s9, 1
      %s15 = ssub.s32 %s9, 2
      %s16 = sadd.s32 %s9, 1
      %s17 = ssub.s32 %s9, %s16
      %p18 = scmp.eq.s32.totalorder %s17, 0
      %s20 = sadd.s32 %s19, 1
      %s21 = scalar_select %p18, %s19, %s20
      %p24 = pneg %p18
      %p25 = scmp.eq.s32.totalorder %s9, 1
      %p26 = por %p24, %p25
      %p27 = scmp.ne.s32.totalorder %s19, %s22
      %p28 = scmp.eq.s32.totalorder %s9, 0
      %p29 = por %p27, %p28
      %p30 = scmp.ne.s32.totalorder %s19, %s22
      %p31 = scmp.eq.s32.totalorder %s14, 1
      %p32 = por %p30, %p31
      %p33 = scmp.ne.s32.totalorder %s22, %s23
      %p34 = scmp.eq.s32.totalorder %s14, 0
      %p35 = por %p33, %p34
      %p36 = scmp.ne.s32.totalorder %s22, %s23
      %p37 = scmp.eq.s32.totalorder %s15, 1
      %p38 = por %p36, %p37
      %p40 = scmp.ne.s32.totalorder %s23, %s39
      %p41 = scmp.eq.s32.totalorder %s15, 0
      %p42 = por %p40, %p41
      %s44 = sadd.s32 %s43, 1
      %p47 = scmp.eq.s32.totalorder %s9, 1
      %p48 = scmp.ne.s32.totalorder %s43, %s45
      %p49 = scmp.eq.s32.totalorder %s9, 0
      %p50 = por %p48, %p49
      %p51 = scmp.ne.s32.totalorder %s43, %s45
      %p52 = scmp.eq.s32.totalorder %s14, 1
      %p53 = por %p51, %p52
      %p54 = scmp.ne.s32.totalorder %s45, %s46
      %p55 = scmp.eq.s32.totalorder %s14, 0
      %p56 = por %p54, %p55
      %p57 = scmp.ne.s32.totalorder %s45, %s46
      %p58 = scmp.eq.s32.totalorder %s15, 1
      %p59 = por %p57, %p58
      %p61 = scmp.ne.s32.totalorder %s46, %s60
      %p62 = scmp.eq.s32.totalorder %s15, 0
      %p63 = por %p61, %p62
      %s65 = sadd.s32 %s64, 1
      %p68 = scmp.eq.s32.totalorder %s9, 1
      %p69 = scmp.ne.s32.totalorder %s64, %s66
      %p70 = scmp.eq.s32.totalorder %s9, 0
      %p71 = por %p69, %p70
      %p72 = scmp.ne.s32.totalorder %s64, %s66
      %p73 = scmp.eq.s32.totalorder %s14, 1
      %p74 = por %p72, %p73
      %p75 = scmp.ne.s32.totalorder %s66, %s67
      %p76 = scmp.eq.s32.totalorder %s14, 0
      %p77 = por %p75, %p76
      %p78 = scmp.ne.s32.totalorder %s66, %s67
      %p79 = scmp.eq.s32.totalorder %s15, 1
      %p80 = por %p78, %p79
      %p82 = scmp.ne.s32.totalorder %s67, %s81
      %p83 = scmp.eq.s32.totalorder %s15, 0
      %p84 = por %p82, %p83
      %s85 = ssub.s32 %s9, %s16
      %p86 = scmp.eq.s32.totalorder %s85, 0
      %s88 = sadd.s32 %s87, 1
      %s89 = scalar_select %p86, %s87, %s88
      %p92 = pneg %p86
      %p93 = scmp.eq.s32.totalorder %s9, 1
      %p94 = por %p92, %p93
      %p95 = scmp.ne.s32.totalorder %s87, %s90
      %p96 = scmp.eq.s32.totalorder %s9, 0
      %p97 = por %p95, %p96
      %p98 = scmp.ne.s32.totalorder %s87, %s90
      %p99 = scmp.eq.s32.totalorder %s14, 1
      %p100 = por %p98, %p99
      %p101 = scmp.ne.s32.totalorder %s90, %s91
      %p102 = scmp.eq.s32.totalorder %s14, 0
      %p103 = por %p101, %p102
      %p104 = scmp.ne.s32.totalorder %s90, %s91
      %p105 = scmp.eq.s32.totalorder %s15, 1
      %p106 = por %p104, %p105
      %p108 = scmp.ne.s32.totalorder %s91, %s107
      %p109 = scmp.eq.s32.totalorder %s15, 0
      %p110 = por %p108, %p109
      %p111 = scmp.le.s32.totalorder 1, %s9
      %p112 = scmp.lt.s32.totalorder %s9, 3
      %p113 = pnand %p111, %p112
      %p114 = pneg %p113
      // Predicated region
      $region9: #{forward.5} parent=5 // pred_check
        _
      $region10: #{forward.5} parent=5 // pred_check_branch
        %116 = sbr.rel (%p113) target = $region12
      $region11: #{forward.5} parent=5 // pred_region
        %s117 = ssub.s32 %s9, 1
        // Predicated region
        $region13: #{forward.5} parent=11 // pred_check
          %p118 = pneg %p56
        $region14: #{forward.5} parent=11 // pred_check_branch
          %120 = sbr.rel (%p118) target = $region16
        $region15: #{forward.5} parent=11 // pred_region
          _
        $region16: #{forward.5} parent=11 // pred_fallthru
          _
        // Predicated region
        $region17: #{forward.5} parent=11 // pred_check
          %p121 = pneg %p77
        $region18: #{forward.5} parent=11 // pred_check_branch
          %123 = sbr.rel (%p121) target = $region20
        $region19: #{forward.5} parent=11 // pred_region
          _
        $region20: #{forward.5} parent=11 // pred_fallthru
          _
      $region12: #{forward.5} parent=5 // pred_fallthru
        _
      %p124 = scmp.lt.s32.totalorder %s9, 2
      // Predicated region
      $region21: #{forward.5} parent=5 // pred_check
        %p125 = pneg %p124
      $region22: #{forward.5} parent=5 // pred_check_branch
        %127 = sbr.rel (%p125) target = $region24
      $region23: #{forward.5} parent=5 // pred_region
        // Predicated region
        $region25: #{forward.5} parent=23 // pred_check
          %p128 = pneg %p29
        $region26: #{forward.5} parent=23 // pred_check_branch
          %130 = sbr.rel (%p128) target = $region28
        $region27: #{forward.5} parent=23 // pred_region
          %s131 = sand.u32 %s19, 1
          %s132 = sand.u32 %s19, 1
          %s133 = smul.addr %s132, 720
          %s134 = scalar_lea.vmem [#allocation2], %s133
          %s135 = smul.u32 36, %s9
          %s136 = smul.addr %s135, 4
          %s137 = scalar_lea.vmem %s0, %s136
          // Predicated region
          $region29: #{forward.5} parent=27 // pred_check
            _
          $region30: #{forward.5} parent=27 // pred_check_branch
            %139 = sbr.rel (0) target = $region32
          $region31: #{forward.5} parent=27 // pred_region
            // Predicated region
            $region33: #{forward.5} parent=31 // pred_check
              _
            $region34: #{forward.5} parent=31 // pred_check_branch
              %141 = sbr.rel (0) target = $region36
            $region35: #{forward.5} parent=31 // pred_region
              loop: start=0, step=1, limit=1
              $region37: #{forward.5} parent=35 // loop_pre_header
                _
              $region38: #{forward.5} parent=35 // loop_header
                %s143 = sphi 0, %s147
                %p144 = scmp.ge.s32.totalorder %s143, 1
                %s148 = sphi %s137, %s137
                %s149 = sphi %s134, %s134
              $region39: #{forward.5} parent=35 // loop_header_branch
                %146 = sbr.rel (%p144) target = $region43
              $region40: #{forward.5} parent=35 // loop_body
                %v150 = vld [vmem:[%s148] sm:$0xff]
                %151 = vst [vmem:[%s149] sm:$0xff] %v150
                %v152 = vld [vmem:[%s148 + $0x8] sm:$0xff]
                %153 = vst [vmem:[%s149 + $0x8] sm:$0xff] %v152
                %v154 = vld [vmem:[%s148 + $0x10] sm:$0xff]
                %155 = vst [vmem:[%s149 + $0x10] sm:$0xff] %v154
                %v156 = vld [vmem:[%s148 + $0x18] sm:$0xff]
                %157 = vst [vmem:[%s149 + $0x18] sm:$0xff] %v156
                %v158 = vld [vmem:[%s148 + $0x20] sm:$0xff]
                %159 = vst [vmem:[%s149 + $0x20] sm:$0xff] %v158
                %v160 = vld [vmem:[%s148 + $0x28] sm:$0xff]
                %161 = vst [vmem:[%s149 + $0x28] sm:$0xff] %v160
                %v162 = vld [vmem:[%s148 + $0x30] sm:$0xff]
                %163 = vst [vmem:[%s149 + $0x30] sm:$0xff] %v162
                %v164 = vld [vmem:[%s148 + $0x38] sm:$0xff]
                %165 = vst [vmem:[%s149 + $0x38] sm:$0xff] %v164
                %v166 = vld [vmem:[%s148 + $0x40] sm:$0xff]
                %167 = vst [vmem:[%s149 + $0x40] sm:$0xff] %v166
                %v168 = vld [vmem:[%s148 + $0x48] sm:$0xff]
                %169 = vst [vmem:[%s149 + $0x48] sm:$0xff] %v168
                %v170 = vld [vmem:[%s148 + $0x50] sm:$0xff]
                %171 = vst [vmem:[%s149 + $0x50] sm:$0xff] %v170
                %v172 = vld [vmem:[%s148 + $0x58] sm:$0xff]
                %173 = vst [vmem:[%s149 + $0x58] sm:$0xff] %v172
                %v174 = vld [vmem:[%s148 + $0x60] sm:$0xff]
                %175 = vst [vmem:[%s149 + $0x60] sm:$0xff] %v174
                %v176 = vld [vmem:[%s148 + $0x68] sm:$0xff]
                %177 = vst [vmem:[%s149 + $0x68] sm:$0xff] %v176
                %v178 = vld [vmem:[%s148 + $0x70] sm:$0xff]
                %179 = vst [vmem:[%s149 + $0x70] sm:$0xff] %v178
                %v180 = vld [vmem:[%s148 + $0x78] sm:$0xff]
                %181 = vst [vmem:[%s149 + $0x78] sm:$0xff] %v180
                %v182 = vld [vmem:[%s148 + $0x80] sm:$0xff]
                %183 = vst [vmem:[%s149 + $0x80] sm:$0xff] %v182
                %v184 = vld [vmem:[%s148 + $0x88] sm:$0xff]
                %185 = vst [vmem:[%s149 + $0x88] sm:$0xff] %v184
                %v186 = vld [vmem:[%s148 + $0x120] sm:$0xff]
                %187 = vst [vmem:[%s149 + $0x90] sm:$0xff] %v186
                %v188 = vld [vmem:[%s148 + $0x128] sm:$0xff]
                %189 = vst [vmem:[%s149 + $0x98] sm:$0xff] %v188
                %v190 = vld [vmem:[%s148 + $0x130] sm:$0xff]
                %191 = vst [vmem:[%s149 + $0xa0] sm:$0xff] %v190
                %v192 = vld [vmem:[%s148 + $0x138] sm:$0xff]
                %193 = vst [vmem:[%s149 + $0xa8] sm:$0xff] %v192
                %v194 = vld [vmem:[%s148 + $0x140] sm:$0xff]
                %195 = vst [vmem:[%s149 + $0xb0] sm:$0xff] %v194
                %v196 = vld [vmem:[%s148 + $0x148] sm:$0xff]
                %197 = vst [vmem:[%s149 + $0xb8] sm:$0xff] %v196
                %v198 = vld [vmem:[%s148 + $0x150] sm:$0xff]
                %199 = vst [vmem:[%s149 + $0xc0] sm:$0xff] %v198
                %v200 = vld [vmem:[%s148 + $0x158] sm:$0xff]
                %201 = vst [vmem:[%s149 + $0xc8] sm:$0xff] %v200
                %v202 = vld [vmem:[%s148 + $0x160] sm:$0xff]
                %203 = vst [vmem:[%s149 + $0xd0] sm:$0xff] %v202
                %v204 = vld [vmem:[%s148 + $0x168] sm:$0xff]
                %205 = vst [vmem:[%s149 + $0xd8] sm:$0xff] %v204
                %v206 = vld [vmem:[%s148 + $0x170] sm:$0xff]
                %207 = vst [vmem:[%s149 + $0xe0] sm:$0xff] %v206
                %v208 = vld [vmem:[%s148 + $0x178] sm:$0xff]
                %209 = vst [vmem:[%s149 + $0xe8] sm:$0xff] %v208
                %v210 = vld [vmem:[%s148 + $0x180] sm:$0xff]
                %211 = vst [vmem:[%s149 + $0xf0] sm:$0xff] %v210
                %v212 = vld [vmem:[%s148 + $0x188] sm:$0xff]
                %213 = vst [vmem:[%s149 + $0xf8] sm:$0xff] %v212
                %v214 = vld [vmem:[%s148 + $0x190] sm:$0xff]
                %215 = vst [vmem:[%s149 + $0x100] sm:$0xff] %v214
                %v216 = vld [vmem:[%s148 + $0x198] sm:$0xff]
                %217 = vst [vmem:[%s149 + $0x108] sm:$0xff] %v216
                %v218 = vld [vmem:[%s148 + $0x1a0] sm:$0xff]
                %219 = vst [vmem:[%s149 + $0x110] sm:$0xff] %v218
                %v220 = vld [vmem:[%s148 + $0x1a8] sm:$0xff]
                %221 = vst [vmem:[%s149 + $0x118] sm:$0xff] %v220
                %v222 = vld [vmem:[%s148 + $0x240] sm:$0xff]
                %223 = vst [vmem:[%s149 + $0x120] sm:$0xff] %v222
                %v224 = vld [vmem:[%s148 + $0x248] sm:$0xff]
                %225 = vst [vmem:[%s149 + $0x128] sm:$0xff] %v224
                %v226 = vld [vmem:[%s148 + $0x250] sm:$0xff]
                %227 = vst [vmem:[%s149 + $0x130] sm:$0xff] %v226
                %v228 = vld [vmem:[%s148 + $0x258] sm:$0xff]
                %229 = vst [vmem:[%s149 + $0x138] sm:$0xff] %v228
                %v230 = vld [vmem:[%s148 + $0x260] sm:$0xff]
                %231 = vst [vmem:[%s149 + $0x140] sm:$0xff] %v230
                %v232 = vld [vmem:[%s148 + $0x268] sm:$0xff]
                %233 = vst [vmem:[%s149 + $0x148] sm:$0xff] %v232
                %v234 = vld [vmem:[%s148 + $0x270] sm:$0xff]
                %235 = vst [vmem:[%s149 + $0x150] sm:$0xff] %v234
                %v236 = vld [vmem:[%s148 + $0x278] sm:$0xff]
                %237 = vst [vmem:[%s149 + $0x158] sm:$0xff] %v236
                %v238 = vld [vmem:[%s148 + $0x280] sm:$0xff]
                %239 = vst [vmem:[%s149 + $0x160] sm:$0xff] %v238
                %v240 = vld [vmem:[%s148 + $0x288] sm:$0xff]
                %241 = vst [vmem:[%s149 + $0x168] sm:$0xff] %v240
                %v242 = vld [vmem:[%s148 + $0x290] sm:$0xff]
                %243 = vst [vmem:[%s149 + $0x170] sm:$0xff] %v242
                %v244 = vld [vmem:[%s148 + $0x298] sm:$0xff]
                %245 = vst [vmem:[%s149 + $0x178] sm:$0xff] %v244
                %v246 = vld [vmem:[%s148 + $0x2a0] sm:$0xff]
                %247 = vst [vmem:[%s149 + $0x180] sm:$0xff] %v246
                %v248 = vld [vmem:[%s148 + $0x2a8] sm:$0xff]
                %249 = vst [vmem:[%s149 + $0x188] sm:$0xff] %v248
                %v250 = vld [vmem:[%s148 + $0x2b0] sm:$0xff]
                %251 = vst [vmem:[%s149 + $0x190] sm:$0xff] %v250
                %v252 = vld [vmem:[%s148 + $0x2b8] sm:$0xff]
                %253 = vst [vmem:[%s149 + $0x198] sm:$0xff] %v252
                %v254 = vld [vmem:[%s148 + $0x2c0] sm:$0xff]
                %255 = vst [vmem:[%s149 + $0x1a0] sm:$0xff] %v254
                %v256 = vld [vmem:[%s148 + $0x2c8] sm:$0xff]
                %257 = vst [vmem:[%s149 + $0x1a8] sm:$0xff] %v256
                %v258 = vld [vmem:[%s148 + $0x360] sm:$0xff]
                %259 = vst [vmem:[%s149 + $0x1b0] sm:$0xff] %v258
                %v260 = vld [vmem:[%s148 + $0x368] sm:$0xff]
                %261 = vst [vmem:[%s149 + $0x1b8] sm:$0xff] %v260
                %v262 = vld [vmem:[%s148 + $0x370] sm:$0xff]
                %263 = vst [vmem:[%s149 + $0x1c0] sm:$0xff] %v262
                %v264 = vld [vmem:[%s148 + $0x378] sm:$0xff]
                %265 = vst [vmem:[%s149 + $0x1c8] sm:$0xff] %v264
                %v266 = vld [vmem:[%s148 + $0x380] sm:$0xff]
                %267 = vst [vmem:[%s149 + $0x1d0] sm:$0xff] %v266
                %v268 = vld [vmem:[%s148 + $0x388] sm:$0xff]
                %269 = vst [vmem:[%s149 + $0x1d8] sm:$0xff] %v268
                %v270 = vld [vmem:[%s148 + $0x390] sm:$0xff]
                %271 = vst [vmem:[%s149 + $0x1e0] sm:$0xff] %v270
                %v272 = vld [vmem:[%s148 + $0x398] sm:$0xff]
                %273 = vst [vmem:[%s149 + $0x1e8] sm:$0xff] %v272
                %v274 = vld [vmem:[%s148 + $0x3a0] sm:$0xff]
                %275 = vst [vmem:[%s149 + $0x1f0] sm:$0xff] %v274
                %v276 = vld [vmem:[%s148 + $0x3a8] sm:$0xff]
                %277 = vst [vmem:[%s149 + $0x1f8] sm:$0xff] %v276
                %v278 = vld [vmem:[%s148 + $0x3b0] sm:$0xff]
                %279 = vst [vmem:[%s149 + $0x200] sm:$0xff] %v278
                %v280 = vld [vmem:[%s148 + $0x3b8] sm:$0xff]
                %281 = vst [vmem:[%s149 + $0x208] sm:$0xff] %v280
                %v282 = vld [vmem:[%s148 + $0x3c0] sm:$0xff]
                %283 = vst [vmem:[%s149 + $0x210] sm:$0xff] %v282
                %v284 = vld [vmem:[%s148 + $0x3c8] sm:$0xff]
                %285 = vst [vmem:[%s149 + $0x218] sm:$0xff] %v284
                %v286 = vld [vmem:[%s148 + $0x3d0] sm:$0xff]
                %287 = vst [vmem:[%s149 + $0x220] sm:$0xff] %v286
                %v288 = vld [vmem:[%s148 + $0x3d8] sm:$0xff]
                %289 = vst [vmem:[%s149 + $0x228] sm:$0xff] %v288
                %v290 = vld [vmem:[%s148 + $0x3e0] sm:$0xff]
                %291 = vst [vmem:[%s149 + $0x230] sm:$0xff] %v290
                %v292 = vld [vmem:[%s148 + $0x3e8] sm:$0xff]
                %293 = vst [vmem:[%s149 + $0x238] sm:$0xff] %v292
                %v294 = vld [vmem:[%s148 + $0x480] sm:$0xff]
                %295 = vst [vmem:[%s149 + $0x240] sm:$0xff] %v294
                %v296 = vld [vmem:[%s148 + $0x488] sm:$0xff]
                %297 = vst [vmem:[%s149 + $0x248] sm:$0xff] %v296
                %v298 = vld [vmem:[%s148 + $0x490] sm:$0xff]
                %299 = vst [vmem:[%s149 + $0x250] sm:$0xff] %v298
                %v300 = vld [vmem:[%s148 + $0x498] sm:$0xff]
                %301 = vst [vmem:[%s149 + $0x258] sm:$0xff] %v300
                %v302 = vld [vmem:[%s148 + $0x4a0] sm:$0xff]
                %303 = vst [vmem:[%s149 + $0x260] sm:$0xff] %v302
                %v304 = vld [vmem:[%s148 + $0x4a8] sm:$0xff]
                %305 = vst [vmem:[%s149 + $0x268] sm:$0xff] %v304
                %v306 = vld [vmem:[%s148 + $0x4b0] sm:$0xff]
                %307 = vst [vmem:[%s149 + $0x270] sm:$0xff] %v306
                %v308 = vld [vmem:[%s148 + $0x4b8] sm:$0xff]
                %309 = vst [vmem:[%s149 + $0x278] sm:$0xff] %v308
                %v310 = vld [vmem:[%s148 + $0x4c0] sm:$0xff]
                %311 = vst [vmem:[%s149 + $0x280] sm:$0xff] %v310
                %v312 = vld [vmem:[%s148 + $0x4c8] sm:$0xff]
                %313 = vst [vmem:[%s149 + $0x288] sm:$0xff] %v312
                %v314 = vld [vmem:[%s148 + $0x4d0] sm:$0xff]
                %315 = vst [vmem:[%s149 + $0x290] sm:$0xff] %v314
                %v316 = vld [vmem:[%s148 + $0x4d8] sm:$0xff]
                %317 = vst [vmem:[%s149 + $0x298] sm:$0xff] %v316
                %v318 = vld [vmem:[%s148 + $0x4e0] sm:$0xff]
                %319 = vst [vmem:[%s149 + $0x2a0] sm:$0xff] %v318
                %v320 = vld [vmem:[%s148 + $0x4e8] sm:$0xff]
                %321 = vst [vmem:[%s149 + $0x2a8] sm:$0xff] %v320
                %v322 = vld [vmem:[%s148 + $0x4f0] sm:$0xff]
                %323 = vst [vmem:[%s149 + $0x2b0] sm:$0xff] %v322
                %v324 = vld [vmem:[%s148 + $0x4f8] sm:$0xff]
                %325 = vst [vmem:[%s149 + $0x2b8] sm:$0xff] %v324
                %v326 = vld [vmem:[%s148 + $0x500] sm:$0xff]
                %327 = vst [vmem:[%s149 + $0x2c0] sm:$0xff] %v326
                %v328 = vld [vmem:[%s148 + $0x508] sm:$0xff]
                %329 = vst [vmem:[%s149 + $0x2c8] sm:$0xff] %v328
              $region41: #{forward.5} parent=35 // loop_footer
                %s147 = sadd.s32 1, %s143
              $region42: #{forward.5} parent=35 // loop_footer_branch
                %142 = sbr.rel target = $region38
              $region43: #{forward.5} parent=35 // loop_exit
                _
            $region36: #{forward.5} parent=31 // pred_fallthru
              _
            // Predicated region
            $region44: #{forward.5} parent=31 // pred_check
              _
            $region45: #{forward.5} parent=31 // pred_check_branch
              %331 = sbr.rel target = $region47
            $region46: #{forward.5} parent=31 // pred_region
              _
            $region47: #{forward.5} parent=31 // pred_fallthru
              _
          $region32: #{forward.5} parent=27 // pred_fallthru
            _
          %332 = vnop
        $region28: #{forward.5} parent=23 // pred_fallthru
          _
      $region24: #{forward.5} parent=5 // pred_fallthru
        _
      %p333 = scmp.le.s32.totalorder 1, %s9
      %p334 = scmp.lt.s32.totalorder %s9, 3
      %p335 = pnand %p333, %p334
      %p336 = pneg %p335
      // Predicated region
      $region48: #{forward.5} parent=5 // pred_check
        _
      $region49: #{forward.5} parent=5 // pred_check_branch
        %338 = sbr.rel (%p335) target = $region51
      $region50: #{forward.5} parent=5 // pred_region
        %s339 = ssub.s32 %s9, 1
        %s340 = sand.u32 %s22, 1
        %s341 = sand.u32 %s22, 1
        %s342 = smul.addr %s341, 720
        %s343 = scalar_lea.vmem [#allocation2], %s342
        // Predicated region
        $region52: #{forward.5} parent=50 // pred_check
          %p344 = pneg %p35
        $region53: #{forward.5} parent=50 // pred_check_branch
          %346 = sbr.rel (%p344) target = $region55
        $region54: #{forward.5} parent=50 // pred_region
          _
        $region55: #{forward.5} parent=50 // pred_fallthru
          _
        %s347 = sand.u32 %s22, 1
        %s348 = sand.u32 %s22, 1
        %s349 = smul.addr %s348, 720
        %s350 = scalar_lea.vmem [#allocation2], %s349
        %p351 = pneg %p35
        %p352 = pneg %p32
        %p353 = pneg %p56
        %p354 = pneg %p53
        %p355 = pneg %p77
        %p356 = pneg %p74
        %p357 = pneg %p103
        %p358 = pneg %p100
        %s359 = sand.u32 %s90, 1
        %s360 = sand.u32 %s90, 1
        %s361 = smul.addr %s360, 576
        %s362 = scalar_lea.vmem [#allocation3], %s361
        %s363 = smul.u32 36, %s14
        %s364 = smul.u32 36, %s14
        %v366 = vld [vmem:[%s1] sm:$0xf]
        %v367 = vld [vmem:[%s1 + $0x4] sm:$0xf]
        %v368 = vld [vmem:[%s1 + $0x8] sm:$0xf]
        %v369 = vld [vmem:[%s1 + $0xc] sm:$0xf]
        %v370 = vld [vmem:[%s343] sm:$0xff]
        %v371 = vld [vmem:[%s343 + $0x8] sm:$0xff]
        %v372 = vld [vmem:[%s343 + $0x10] sm:$0xff]
        %v373 = vld [vmem:[%s343 + $0x18] sm:$0xff]
        %v374 = vld [vmem:[%s343 + $0x20] sm:$0xff]
        %v375 = vld [vmem:[%s343 + $0x28] sm:$0xff]
        %v376 = vld [vmem:[%s343 + $0x30] sm:$0xff]
        %v377 = vld [vmem:[%s343 + $0x38] sm:$0xff]
        %v378 = vld [vmem:[%s343 + $0x40] sm:$0xff]
        %v379 = vld [vmem:[%s343 + $0x48] sm:$0xff]
        %v380 = vld [vmem:[%s343 + $0x50] sm:$0xff]
        %v381 = vld [vmem:[%s343 + $0x58] sm:$0xff]
        %v382 = vld [vmem:[%s343 + $0x60] sm:$0xff]
        %v383 = vld [vmem:[%s343 + $0x68] sm:$0xff]
        %v384 = vld [vmem:[%s343 + $0x70] sm:$0xff]
        %v385 = vld [vmem:[%s343 + $0x78] sm:$0xff]
        %v386 = vld [vmem:[%s343 + $0x80] sm:$0xff]
        %v387 = vld [vmem:[%s343 + $0x88] sm:$0xff]
        %v388 = vld [vmem:[%s343 + $0x90] sm:$0xff]
        %v389 = vld [vmem:[%s343 + $0x98] sm:$0xff]
        %v390 = vld [vmem:[%s343 + $0xa0] sm:$0xff]
        %v391 = vld [vmem:[%s343 + $0xa8] sm:$0xff]
        %v392 = vld [vmem:[%s343 + $0xb0] sm:$0xff]
        %v393 = vld [vmem:[%s343 + $0xb8] sm:$0xff]
        %v394 = vld [vmem:[%s343 + $0xc0] sm:$0xff]
        %v395 = vld [vmem:[%s343 + $0xc8] sm:$0xff]
        %v396 = vld [vmem:[%s343 + $0xd0] sm:$0xff]
        %v397 = vld [vmem:[%s343 + $0xd8] sm:$0xff]
        %v398 = vld [vmem:[%s343 + $0xe0] sm:$0xff]
        %v399 = vld [vmem:[%s343 + $0xe8] sm:$0xff]
        %v400 = vld [vmem:[%s343 + $0xf0] sm:$0xff]
        %v401 = vld [vmem:[%s343 + $0xf8] sm:$0xff]
        %v402 = vld [vmem:[%s343 + $0x100] sm:$0xff]
        %v403 = vld [vmem:[%s343 + $0x108] sm:$0xff]
        %v404 = vld [vmem:[%s343 + $0x110] sm:$0xff]
        %v405 = vld [vmem:[%s343 + $0x118] sm:$0xff]
        %v406 = vld [vmem:[%s343 + $0x120] sm:$0xff]
        %v407 = vld [vmem:[%s343 + $0x128] sm:$0xff]
        %v408 = vld [vmem:[%s343 + $0x130] sm:$0xff]
        %v409 = vld [vmem:[%s343 + $0x138] sm:$0xff]
        %v410 = vld [vmem:[%s343 + $0x140] sm:$0xff]
        %v411 = vld [vmem:[%s343 + $0x148] sm:$0xff]
        %v412 = vld [vmem:[%s343 + $0x150] sm:$0xff]
        %v413 = vld [vmem:[%s343 + $0x158] sm:$0xff]
        %v414 = vld [vmem:[%s343 + $0x160] sm:$0xff]
        %v415 = vld [vmem:[%s343 + $0x168] sm:$0xff]
        %v416 = vld [vmem:[%s343 + $0x170] sm:$0xff]
        %v417 = vld [vmem:[%s343 + $0x178] sm:$0xff]
        %v418 = vld [vmem:[%s343 + $0x180] sm:$0xff]
        %v419 = vld [vmem:[%s343 + $0x188] sm:$0xff]
        %v420 = vld [vmem:[%s343 + $0x190] sm:$0xff]
        %v421 = vld [vmem:[%s343 + $0x198] sm:$0xff]
        %v422 = vld [vmem:[%s343 + $0x1a0] sm:$0xff]
        %v423 = vld [vmem:[%s343 + $0x1a8] sm:$0xff]
        %v424 = vld [vmem:[%s343 + $0x1b0] sm:$0xff]
        %v425 = vld [vmem:[%s343 + $0x1b8] sm:$0xff]
        %v426 = vld [vmem:[%s343 + $0x1c0] sm:$0xff]
        %v427 = vld [vmem:[%s343 + $0x1c8] sm:$0xff]
        %v428 = vld [vmem:[%s343 + $0x1d0] sm:$0xff]
        %v429 = vld [vmem:[%s343 + $0x1d8] sm:$0xff]
        %v430 = vld [vmem:[%s343 + $0x1e0] sm:$0xff]
        %v431 = vld [vmem:[%s343 + $0x1e8] sm:$0xff]
        %v432 = vld [vmem:[%s343 + $0x1f0] sm:$0xff]
        %v433 = vld [vmem:[%s343 + $0x1f8] sm:$0xff]
        %v434 = vld [vmem:[%s343 + $0x200] sm:$0xff]
        %v435 = vld [vmem:[%s343 + $0x208] sm:$0xff]
        %v436 = vld [vmem:[%s343 + $0x210] sm:$0xff]
        %v437 = vld [vmem:[%s343 + $0x218] sm:$0xff]
        %v438 = vld [vmem:[%s343 + $0x220] sm:$0xff]
        %v439 = vld [vmem:[%s343 + $0x228] sm:$0xff]
        %v440 = vld [vmem:[%s343 + $0x230] sm:$0xff]
        %v441 = vld [vmem:[%s343 + $0x238] sm:$0xff]
        %v442 = vld [vmem:[%s343 + $0x240] sm:$0x33]
        %v443 = vld [vmem:[%s343 + $0x248] sm:$0x33]
        %v444 = vld [vmem:[%s343 + $0x250] sm:$0x33]
        %v445 = vld [vmem:[%s343 + $0x258] sm:$0x33]
        %v446 = vld [vmem:[%s343 + $0x260] sm:$0x33]
        %v447 = vld [vmem:[%s343 + $0x268] sm:$0x33]
        %v448 = vld [vmem:[%s343 + $0x270] sm:$0x33]
        %v449 = vld [vmem:[%s343 + $0x278] sm:$0x33]
        %v450 = vld [vmem:[%s343 + $0x280] sm:$0x33]
        %v451 = vld [vmem:[%s343 + $0x288] sm:$0x33]
        %v452 = vld [vmem:[%s343 + $0x290] sm:$0x33]
        %v453 = vld [vmem:[%s343 + $0x298] sm:$0x33]
        %v454 = vld [vmem:[%s343 + $0x2a0] sm:$0x33]
        %v455 = vld [vmem:[%s343 + $0x2a8] sm:$0x33]
        %v456 = vld [vmem:[%s343 + $0x2b0] sm:$0x33]
        %v457 = vld [vmem:[%s343 + $0x2b8] sm:$0x33]
        %v458 = vld [vmem:[%s343 + $0x2c0] sm:$0x33]
        %v459 = vld [vmem:[%s343 + $0x2c8] sm:$0x33]
        %v460 = vld [vmem:[%s2] sm:$0xff]
        %v461 = vld [vmem:[%s2 + $0x8] sm:$0xff]
        %v462 = vld [vmem:[%s2 + $0x10] sm:$0xff]
        %v463 = vld [vmem:[%s2 + $0x18] sm:$0xff]
        %465 = vset.pattern.permute.xlu0 0
        %466 = vperm.xlu0 %465, %v460
        %v467 = vpop.permute.xlu0 %466
        %470 = vset.pattern.permute.xlu0 0
        %471 = vperm.xlu0 %470, %v461
        %v472 = vpop.permute.xlu0 %471
        %475 = vset.pattern.permute.xlu0 0
        %476 = vperm.xlu0 %475, %v462
        %v477 = vpop.permute.xlu0 %476
        %480 = vset.pattern.permute.xlu0 0
        %481 = vperm.xlu0 %480, %v463
        %v482 = vpop.permute.xlu0 %481
        %v488 = vunpack.c.l.b16 %v366
        %v489 = vunpack.c.l.b16 %v367
        %v490 = vunpack.c.l.b16 %v368
        %v491 = vunpack.c.l.b16 %v369
        %v492 = vpack.c.b16 %v489, %v488
        %v493 = vpack.c.b16 %v491, %v490
        %v584 = vunpack.c.l.b16 %v370
        %v585 = vunpack.c.h.b16 %v370
        %v586 = vunpack.c.l.b16 %v371
        %v587 = vunpack.c.h.b16 %v371
        %v588 = vunpack.c.l.b16 %v372
        %v589 = vunpack.c.h.b16 %v372
        %v590 = vunpack.c.l.b16 %v373
        %v591 = vunpack.c.h.b16 %v373
        %v592 = vunpack.c.l.b16 %v374
        %v593 = vunpack.c.h.b16 %v374
        %v594 = vunpack.c.l.b16 %v375
        %v595 = vunpack.c.h.b16 %v375
        %v596 = vunpack.c.l.b16 %v376
        %v597 = vunpack.c.h.b16 %v376
        %v598 = vunpack.c.l.b16 %v377
        %v599 = vunpack.c.h.b16 %v377
        %v600 = vunpack.c.l.b16 %v378
        %v601 = vunpack.c.h.b16 %v378
        %v602 = vunpack.c.l.b16 %v379
        %v603 = vunpack.c.h.b16 %v379
        %v604 = vunpack.c.l.b16 %v380
        %v605 = vunpack.c.h.b16 %v380
        %v606 = vunpack.c.l.b16 %v381
        %v607 = vunpack.c.h.b16 %v381
        %v608 = vunpack.c.l.b16 %v382
        %v609 = vunpack.c.h.b16 %v382
        %v610 = vunpack.c.l.b16 %v383
        %v611 = vunpack.c.h.b16 %v383
        %v612 = vunpack.c.l.b16 %v384
        %v613 = vunpack.c.h.b16 %v384
        %v614 = vunpack.c.l.b16 %v385
        %v615 = vunpack.c.h.b16 %v385
        %v616 = vunpack.c.l.b16 %v386
        %v617 = vunpack.c.h.b16 %v386
        %v618 = vunpack.c.l.b16 %v387
        %v619 = vunpack.c.h.b16 %v387
        %v620 = vunpack.c.l.b16 %v388
        %v621 = vunpack.c.h.b16 %v388
        %v622 = vunpack.c.l.b16 %v389
        %v623 = vunpack.c.h.b16 %v389
        %v624 = vunpack.c.l.b16 %v390
        %v625 = vunpack.c.h.b16 %v390
        %v626 = vunpack.c.l.b16 %v391
        %v627 = vunpack.c.h.b16 %v391
        %v628 = vunpack.c.l.b16 %v392
        %v629 = vunpack.c.h.b16 %v392
        %v630 = vunpack.c.l.b16 %v393
        %v631 = vunpack.c.h.b16 %v393
        %v632 = vunpack.c.l.b16 %v394
        %v633 = vunpack.c.h.b16 %v394
        %v634 = vunpack.c.l.b16 %v395
        %v635 = vunpack.c.h.b16 %v395
        %v636 = vunpack.c.l.b16 %v396
        %v637 = vunpack.c.h.b16 %v396
        %v638 = vunpack.c.l.b16 %v397
        %v639 = vunpack.c.h.b16 %v397
        %v640 = vunpack.c.l.b16 %v398
        %v641 = vunpack.c.h.b16 %v398
        %v642 = vunpack.c.l.b16 %v399
        %v643 = vunpack.c.h.b16 %v399
        %v644 = vunpack.c.l.b16 %v400
        %v645 = vunpack.c.h.b16 %v400
        %v646 = vunpack.c.l.b16 %v401
        %v647 = vunpack.c.h.b16 %v401
        %v648 = vunpack.c.l.b16 %v402
        %v649 = vunpack.c.h.b16 %v402
        %v650 = vunpack.c.l.b16 %v403
        %v651 = vunpack.c.h.b16 %v403
        %v652 = vunpack.c.l.b16 %v404
        %v653 = vunpack.c.h.b16 %v404
        %v654 = vunpack.c.l.b16 %v405
        %v655 = vunpack.c.h.b16 %v405
        %v656 = vunpack.c.l.b16 %v406
        %v657 = vunpack.c.h.b16 %v406
        %v658 = vunpack.c.l.b16 %v407
        %v659 = vunpack.c.h.b16 %v407
        %v660 = vunpack.c.l.b16 %v408
        %v661 = vunpack.c.h.b16 %v408
        %v662 = vunpack.c.l.b16 %v409
        %v663 = vunpack.c.h.b16 %v409
        %v664 = vunpack.c.l.b16 %v410
        %v665 = vunpack.c.h.b16 %v410
        %v666 = vunpack.c.l.b16 %v411
        %v667 = vunpack.c.h.b16 %v411
        %v668 = vunpack.c.l.b16 %v412
        %v669 = vunpack.c.h.b16 %v412
        %v670 = vunpack.c.l.b16 %v413
        %v671 = vunpack.c.h.b16 %v413
        %v672 = vunpack.c.l.b16 %v414
        %v673 = vunpack.c.h.b16 %v414
        %v674 = vunpack.c.l.b16 %v415
        %v675 = vunpack.c.h.b16 %v415
        %v676 = vunpack.c.l.b16 %v416
        %v677 = vunpack.c.h.b16 %v416
        %v678 = vunpack.c.l.b16 %v417
        %v679 = vunpack.c.h.b16 %v417
        %v680 = vunpack.c.l.b16 %v418
        %v681 = vunpack.c.h.b16 %v418
        %v682 = vunpack.c.l.b16 %v419
        %v683 = vunpack.c.h.b16 %v419
        %v684 = vunpack.c.l.b16 %v420
        %v685 = vunpack.c.h.b16 %v420
        %v686 = vunpack.c.l.b16 %v421
        %v687 = vunpack.c.h.b16 %v421
        %v688 = vunpack.c.l.b16 %v422
        %v689 = vunpack.c.h.b16 %v422
        %v690 = vunpack.c.l.b16 %v423
        %v691 = vunpack.c.h.b16 %v423
        %v692 = vunpack.c.l.b16 %v424
        %v693 = vunpack.c.h.b16 %v424
        %v694 = vunpack.c.l.b16 %v425
        %v695 = vunpack.c.h.b16 %v425
        %v696 = vunpack.c.l.b16 %v426
        %v697 = vunpack.c.h.b16 %v426
        %v698 = vunpack.c.l.b16 %v427
        %v699 = vunpack.c.h.b16 %v427
        %v700 = vunpack.c.l.b16 %v428
        %v701 = vunpack.c.h.b16 %v428
        %v702 = vunpack.c.l.b16 %v429
        %v703 = vunpack.c.h.b16 %v429
        %v704 = vunpack.c.l.b16 %v430
        %v705 = vunpack.c.h.b16 %v430
        %v706 = vunpack.c.l.b16 %v431
        %v707 = vunpack.c.h.b16 %v431
        %v708 = vunpack.c.l.b16 %v432
        %v709 = vunpack.c.h.b16 %v432
        %v710 = vunpack.c.l.b16 %v433
        %v711 = vunpack.c.h.b16 %v433
        %v712 = vunpack.c.l.b16 %v434
        %v713 = vunpack.c.h.b16 %v434
        %v714 = vunpack.c.l.b16 %v435
        %v715 = vunpack.c.h.b16 %v435
        %v716 = vunpack.c.l.b16 %v436
        %v717 = vunpack.c.h.b16 %v436
        %v718 = vunpack.c.l.b16 %v437
        %v719 = vunpack.c.h.b16 %v437
        %v720 = vunpack.c.l.b16 %v438
        %v721 = vunpack.c.h.b16 %v438
        %v722 = vunpack.c.l.b16 %v439
        %v723 = vunpack.c.h.b16 %v439
        %v724 = vunpack.c.l.b16 %v440
        %v725 = vunpack.c.h.b16 %v440
        %v726 = vunpack.c.l.b16 %v441
        %v727 = vunpack.c.h.b16 %v441
        %v728 = vunpack.c.l.b16 %v442
        %v729 = vunpack.c.h.b16 %v442
        %v730 = vunpack.c.l.b16 %v443
        %v731 = vunpack.c.h.b16 %v443
        %v732 = vunpack.c.l.b16 %v444
        %v733 = vunpack.c.h.b16 %v444
        %v734 = vunpack.c.l.b16 %v445
        %v735 = vunpack.c.h.b16 %v445
        %v736 = vunpack.c.l.b16 %v446
        %v737 = vunpack.c.h.b16 %v446
        %v738 = vunpack.c.l.b16 %v447
        %v739 = vunpack.c.h.b16 %v447
        %v740 = vunpack.c.l.b16 %v448
        %v741 = vunpack.c.h.b16 %v448
        %v742 = vunpack.c.l.b16 %v449
        %v743 = vunpack.c.h.b16 %v449
        %v744 = vunpack.c.l.b16 %v450
        %v745 = vunpack.c.h.b16 %v450
        %v746 = vunpack.c.l.b16 %v451
        %v747 = vunpack.c.h.b16 %v451
        %v748 = vunpack.c.l.b16 %v452
        %v749 = vunpack.c.h.b16 %v452
        %v750 = vunpack.c.l.b16 %v453
        %v751 = vunpack.c.h.b16 %v453
        %v752 = vunpack.c.l.b16 %v454
        %v753 = vunpack.c.h.b16 %v454
        %v754 = vunpack.c.l.b16 %v455
        %v755 = vunpack.c.h.b16 %v455
        %v756 = vunpack.c.l.b16 %v456
        %v757 = vunpack.c.h.b16 %v456
        %v758 = vunpack.c.l.b16 %v457
        %v759 = vunpack.c.h.b16 %v457
        %v760 = vunpack.c.l.b16 %v458
        %v761 = vunpack.c.h.b16 %v458
        %v762 = vunpack.c.l.b16 %v459
        %v763 = vunpack.c.h.b16 %v459
        %v764 = vpack.c.b16 %v620, %v584
        %v765 = vpack.c.b16 %v621, %v585
        %v766 = vpack.c.b16 %v622, %v586
        %v767 = vpack.c.b16 %v623, %v587
        %v768 = vpack.c.b16 %v624, %v588
        %v769 = vpack.c.b16 %v625, %v589
        %v770 = vpack.c.b16 %v626, %v590
        %v771 = vpack.c.b16 %v627, %v591
        %v772 = vpack.c.b16 %v628, %v592
        %v773 = vpack.c.b16 %v629, %v593
        %v774 = vpack.c.b16 %v630, %v594
        %v775 = vpack.c.b16 %v631, %v595
        %v776 = vpack.c.b16 %v632, %v596
        %v777 = vpack.c.b16 %v633, %v597
        %v778 = vpack.c.b16 %v634, %v598
        %v779 = vpack.c.b16 %v635, %v599
        %v780 = vpack.c.b16 %v636, %v600
        %v781 = vpack.c.b16 %v637, %v601
        %v782 = vpack.c.b16 %v638, %v602
        %v783 = vpack.c.b16 %v639, %v603
        %v784 = vpack.c.b16 %v640, %v604
        %v785 = vpack.c.b16 %v641, %v605
        %v786 = vpack.c.b16 %v642, %v606
        %v787 = vpack.c.b16 %v643, %v607
        %v788 = vpack.c.b16 %v644, %v608
        %v789 = vpack.c.b16 %v645, %v609
        %v790 = vpack.c.b16 %v646, %v610
        %v791 = vpack.c.b16 %v647, %v611
        %v792 = vpack.c.b16 %v648, %v612
        %v793 = vpack.c.b16 %v649, %v613
        %v794 = vpack.c.b16 %v650, %v614
        %v795 = vpack.c.b16 %v651, %v615
        %v796 = vpack.c.b16 %v652, %v616
        %v797 = vpack.c.b16 %v653, %v617
        %v798 = vpack.c.b16 %v654, %v618
        %v799 = vpack.c.b16 %v655, %v619
        %v800 = vpack.c.b16 %v692, %v656
        %v801 = vpack.c.b16 %v693, %v657
        %v802 = vpack.c.b16 %v694, %v658
        %v803 = vpack.c.b16 %v695, %v659
        %v804 = vpack.c.b16 %v696, %v660
        %v805 = vpack.c.b16 %v697, %v661
        %v806 = vpack.c.b16 %v698, %v662
        %v807 = vpack.c.b16 %v699, %v663
        %v808 = vpack.c.b16 %v700, %v664
        %v809 = vpack.c.b16 %v701, %v665
        %v810 = vpack.c.b16 %v702, %v666
        %v811 = vpack.c.b16 %v703, %v667
        %v812 = vpack.c.b16 %v704, %v668
        %v813 = vpack.c.b16 %v705, %v669
        %v814 = vpack.c.b16 %v706, %v670
        %v815 = vpack.c.b16 %v707, %v671
        %v816 = vpack.c.b16 %v708, %v672
        %v817 = vpack.c.b16 %v709, %v673
        %v818 = vpack.c.b16 %v710, %v674
        %v819 = vpack.c.b16 %v711, %v675
        %v820 = vpack.c.b16 %v712, %v676
        %v821 = vpack.c.b16 %v713, %v677
        %v822 = vpack.c.b16 %v714, %v678
        %v823 = vpack.c.b16 %v715, %v679
        %v824 = vpack.c.b16 %v716, %v680
        %v825 = vpack.c.b16 %v717, %v681
        %v826 = vpack.c.b16 %v718, %v682
        %v827 = vpack.c.b16 %v719, %v683
        %v828 = vpack.c.b16 %v720, %v684
        %v829 = vpack.c.b16 %v721, %v685
        %v830 = vpack.c.b16 %v722, %v686
        %v831 = vpack.c.b16 %v723, %v687
        %v832 = vpack.c.b16 %v724, %v688
        %v833 = vpack.c.b16 %v725, %v689
        %v834 = vpack.c.b16 %v726, %v690
        %v835 = vpack.c.b16 %v727, %v691
        %v836 = vpack.c.b16 %v728, %v728
        %v837 = vpack.c.b16 %v729, %v729
        %v838 = vpack.c.b16 %v730, %v730
        %v839 = vpack.c.b16 %v731, %v731
        %v840 = vpack.c.b16 %v732, %v732
        %v841 = vpack.c.b16 %v733, %v733
        %v842 = vpack.c.b16 %v734, %v734
        %v843 = vpack.c.b16 %v735, %v735
        %v844 = vpack.c.b16 %v736, %v736
        %v845 = vpack.c.b16 %v737, %v737
        %v846 = vpack.c.b16 %v738, %v738
        %v847 = vpack.c.b16 %v739, %v739
        %v848 = vpack.c.b16 %v740, %v740
        %v849 = vpack.c.b16 %v741, %v741
        %v850 = vpack.c.b16 %v742, %v742
        %v851 = vpack.c.b16 %v743, %v743
        %v852 = vpack.c.b16 %v744, %v744
        %v853 = vpack.c.b16 %v745, %v745
        %v854 = vpack.c.b16 %v746, %v746
        %v855 = vpack.c.b16 %v747, %v747
        %v856 = vpack.c.b16 %v748, %v748
        %v857 = vpack.c.b16 %v749, %v749
        %v858 = vpack.c.b16 %v750, %v750
        %v859 = vpack.c.b16 %v751, %v751
        %v860 = vpack.c.b16 %v752, %v752
        %v861 = vpack.c.b16 %v753, %v753
        %v862 = vpack.c.b16 %v754, %v754
        %v863 = vpack.c.b16 %v755, %v755
        %v864 = vpack.c.b16 %v756, %v756
        %v865 = vpack.c.b16 %v757, %v757
        %v866 = vpack.c.b16 %v758, %v758
        %v867 = vpack.c.b16 %v759, %v759
        %v868 = vpack.c.b16 %v760, %v760
        %v869 = vpack.c.b16 %v761, %v761
        %v870 = vpack.c.b16 %v762, %v762
        %v871 = vpack.c.b16 %v763, %v763
        %vm944 = vcmask 293888
        %v946 = vsel %vm944, %v492, 0
        %v949 = vsel %vm944, %v493, 0
        %vm951 = vcmask 1041408
        %v953 = vsel %vm951, %v836, 0
        %v956 = vsel %vm951, %v837, 0
        %v959 = vsel %vm951, %v838, 0
        %v962 = vsel %vm951, %v839, 0
        %v965 = vsel %vm951, %v840, 0
        %v968 = vsel %vm951, %v841, 0
        %v971 = vsel %vm951, %v842, 0
        %v974 = vsel %vm951, %v843, 0
        %v977 = vsel %vm951, %v844, 0
        %v980 = vsel %vm951, %v845, 0
        %v983 = vsel %vm951, %v846, 0
        %v986 = vsel %vm951, %v847, 0
        %v989 = vsel %vm951, %v848, 0
        %v992 = vsel %vm951, %v849, 0
        %v995 = vsel %vm951, %v850, 0
        %v998 = vsel %vm951, %v851, 0
        %v1001 = vsel %vm951, %v852, 0
        %v1004 = vsel %vm951, %v853, 0
        %v1007 = vsel %vm951, %v854, 0
        %v1010 = vsel %vm951, %v855, 0
        %v1013 = vsel %vm951, %v856, 0
        %v1016 = vsel %vm951, %v857, 0
        %v1019 = vsel %vm951, %v858, 0
        %v1022 = vsel %vm951, %v859, 0
        %v1025 = vsel %vm951, %v860, 0
        %v1028 = vsel %vm951, %v861, 0
        %v1031 = vsel %vm951, %v862, 0
        %v1034 = vsel %vm951, %v863, 0
        %v1037 = vsel %vm951, %v864, 0
        %v1040 = vsel %vm951, %v865, 0
        %v1043 = vsel %vm951, %v866, 0
        %v1046 = vsel %vm951, %v867, 0
        %v1049 = vsel %vm951, %v868, 0
        %v1052 = vsel %vm951, %v869, 0
        %v1055 = vsel %vm951, %v870, 0
        %v1058 = vsel %vm951, %v871, 0
        %1060 = vmatprep.subr.bf16.mxu0 0
        %1061 = vmatpush1.bf16.msra.mxu0 0
        %1062 = vmatprep.subr.bf16.mxu0 0
        %1063 = vmatpush1.bf16.msra.mxu0 0
        %1064 = vmatprep.subr.bf16.mxu0 0
        %1065 = vmatpush1.bf16.msra.mxu0 0
        %1066 = vmatprep.subr.bf16.mxu0 0
        %1067 = vmatpush1.bf16.msra.mxu0 0
        %1068 = vmatprep.subr.bf16.mxu0 0
        %1069 = vmatpush1.bf16.msra.mxu0 0
        %1070 = vmatprep.subr.bf16.mxu0 %v956
        %1071 = vmatpush1.bf16.msra.mxu0 %v953
        %1072 = vmatprep.subr.bf16.mxu0 %v801
        %1073 = vmatpush1.bf16.msra.mxu0 %v800
        %1074 = vmatprep.subr.bf16.mxu0 %v765
        %1075 = vmatpush1.bf16.msra.mxu0 %v764
        %1076 = vmatprep.subr.bf16.mxu0 0
        %1077 = vmatpush2.bf16.msra.mxu0 0
        %1078 = vmatprep.subr.bf16.mxu0 0
        %1079 = vmatpush2.bf16.msra.mxu0 0
        %1080 = vmatprep.subr.bf16.mxu0 0
        %1081 = vmatpush2.bf16.msra.mxu0 0
        %1082 = vmatprep.subr.bf16.mxu0 0
        %1083 = vmatpush2.bf16.msra.mxu0 0
        %1084 = vmatprep.subr.bf16.mxu0 0
        %1085 = vmatpush2.bf16.msra.mxu0 0
        %1086 = vmatprep.subr.bf16.mxu0 0
        %1087 = vmatpush2.bf16.msra.mxu0 0
        %1088 = vmatprep.subr.bf16.mxu0 0
        %1089 = vmatpush2.bf16.msra.mxu0 0
        %1090 = vmatprep.subr.bf16.mxu0 0
        %1091 = vmatpush2.bf16.msra.mxu0 0
        %1092 = vmatprep.mubr.bf16.mxu0 0
        %1093 = vmatmul.mubr.bf16.gmra.mxu0 %v946
        %v1094 = vpop.f32.mrf.mxu0
        %v1095 = vadd.f32 %v467, %v1094
        %v1096 = vpop.f32.mrf.mxu0
        %v1097 = vadd.f32 %v467, %v1096
        %v1098 = vpop.f32.mrf.mxu0
        %v1099 = vadd.f32 %v472, %v1098
        %v1100 = vpop.f32.mrf.mxu0
        %v1101 = vadd.f32 %v472, %v1100
        %1102 = vmatprep.mubr.bf16.mxu0 0
        %1103 = vmatmul.mubr.bf16.gmra.mxu0 %v949
        %v1104 = vpop.f32.mrf.mxu0
        %v1105 = vadd.f32 %v477, %v1104
        %v1106 = vpop.f32.mrf.mxu0
        %v1107 = vadd.f32 %v477, %v1106
        %v1108 = vpop.f32.mrf.mxu0
        %v1109 = vadd.f32 %v482, %v1108
        %v1110 = vpop.f32.mrf.mxu0
        %v1111 = vadd.f32 %v482, %v1110
        %1112 = vdwg.mxu0
        %1113 = vmatprep.subr.bf16.mxu0 0
        %1114 = vmatpush1.bf16.msra.mxu0 0
        %1115 = vmatprep.subr.bf16.mxu0 0
        %1116 = vmatpush1.bf16.msra.mxu0 0
        %1117 = vmatprep.subr.bf16.mxu0 0
        %1118 = vmatpush1.bf16.msra.mxu0 0
        %1119 = vmatprep.subr.bf16.mxu0 0
        %1120 = vmatpush1.bf16.msra.mxu0 0
        %1121 = vmatprep.subr.bf16.mxu0 0
        %1122 = vmatpush1.bf16.msra.mxu0 0
        %1123 = vmatprep.subr.bf16.mxu0 %v962
        %1124 = vmatpush1.bf16.msra.mxu0 %v959
        %1125 = vmatprep.subr.bf16.mxu0 %v803
        %1126 = vmatpush1.bf16.msra.mxu0 %v802
        %1127 = vmatprep.subr.bf16.mxu0 %v767
        %1128 = vmatpush1.bf16.msra.mxu0 %v766
        %1129 = vmatprep.subr.bf16.mxu0 0
        %1130 = vmatpush2.bf16.msra.mxu0 0
        %1131 = vmatprep.subr.bf16.mxu0 0
        %1132 = vmatpush2.bf16.msra.mxu0 0
        %1133 = vmatprep.subr.bf16.mxu0 0
        %1134 = vmatpush2.bf16.msra.mxu0 0
        %1135 = vmatprep.subr.bf16.mxu0 0
        %1136 = vmatpush2.bf16.msra.mxu0 0
        %1137 = vmatprep.subr.bf16.mxu0 0
        %1138 = vmatpush2.bf16.msra.mxu0 0
        %1139 = vmatprep.subr.bf16.mxu0 0
        %1140 = vmatpush2.bf16.msra.mxu0 0
        %1141 = vmatprep.subr.bf16.mxu0 0
        %1142 = vmatpush2.bf16.msra.mxu0 0
        %1143 = vmatprep.subr.bf16.mxu0 0
        %1144 = vmatpush2.bf16.msra.mxu0 0
        %1145 = vmatprep.mubr.bf16.mxu0 0
        %1146 = vmatmul.mubr.bf16.gmra.mxu0 %v946
        %v1147 = vpop.f32.mrf.mxu0
        %v1148 = vadd.f32 %v467, %v1147
        %v1149 = vpop.f32.mrf.mxu0
        %v1150 = vadd.f32 %v467, %v1149
        %v1151 = vpop.f32.mrf.mxu0
        %v1152 = vadd.f32 %v472, %v1151
        %v1153 = vpop.f32.mrf.mxu0
        %v1154 = vadd.f32 %v472, %v1153
        %1155 = vmatprep.mubr.bf16.mxu0 0
        %1156 = vmatmul.mubr.bf16.gmra.mxu0 %v949
        %v1157 = vpop.f32.mrf.mxu0
        %v1158 = vadd.f32 %v477, %v1157
        %v1159 = vpop.f32.mrf.mxu0
        %v1160 = vadd.f32 %v477, %v1159
        %v1161 = vpop.f32.mrf.mxu0
        %v1162 = vadd.f32 %v482, %v1161
        %v1163 = vpop.f32.mrf.mxu0
        %v1164 = vadd.f32 %v482, %v1163
        %1165 = vdwg.mxu0
        %1166 = vmatprep.subr.bf16.mxu0 0
        %1167 = vmatpush1.bf16.msra.mxu0 0
        %1168 = vmatprep.subr.bf16.mxu0 0
        %1169 = vmatpush1.bf16.msra.mxu0 0
        %1170 = vmatprep.subr.bf16.mxu0 0
        %1171 = vmatpush1.bf16.msra.mxu0 0
        %1172 = vmatprep.subr.bf16.mxu0 0
        %1173 = vmatpush1.bf16.msra.mxu0 0
        %1174 = vmatprep.subr.bf16.mxu0 0
        %1175 = vmatpush1.bf16.msra.mxu0 0
        %1176 = vmatprep.subr.bf16.mxu0 %v968
        %1177 = vmatpush1.bf16.msra.mxu0 %v965
        %1178 = vmatprep.subr.bf16.mxu0 %v805
        %1179 = vmatpush1.bf16.msra.mxu0 %v804
        %1180 = vmatprep.subr.bf16.mxu0 %v769
        %1181 = vmatpush1.bf16.msra.mxu0 %v768
        %1182 = vmatprep.subr.bf16.mxu0 0
        %1183 = vmatpush2.bf16.msra.mxu0 0
        %1184 = vmatprep.subr.bf16.mxu0 0
        %1185 = vmatpush2.bf16.msra.mxu0 0
        %1186 = vmatprep.subr.bf16.mxu0 0
        %1187 = vmatpush2.bf16.msra.mxu0 0
        %1188 = vmatprep.subr.bf16.mxu0 0
        %1189 = vmatpush2.bf16.msra.mxu0 0
        %1190 = vmatprep.subr.bf16.mxu0 0
        %1191 = vmatpush2.bf16.msra.mxu0 0
        %1192 = vmatprep.subr.bf16.mxu0 0
        %1193 = vmatpush2.bf16.msra.mxu0 0
        %1194 = vmatprep.subr.bf16.mxu0 0
        %1195 = vmatpush2.bf16.msra.mxu0 0
        %1196 = vmatprep.subr.bf16.mxu0 0
        %1197 = vmatpush2.bf16.msra.mxu0 0
        %1198 = vmatprep.mubr.bf16.mxu0 0
        %1199 = vmatmul.mubr.bf16.gmra.mxu0 %v946
        %v1200 = vpop.f32.mrf.mxu0
        %v1201 = vadd.f32 %v467, %v1200
        %v1202 = vpop.f32.mrf.mxu0
        %v1203 = vadd.f32 %v467, %v1202
        %v1204 = vpop.f32.mrf.mxu0
        %v1205 = vadd.f32 %v472, %v1204
        %v1206 = vpop.f32.mrf.mxu0
        %v1207 = vadd.f32 %v472, %v1206
        %1208 = vmatprep.mubr.bf16.mxu0 0
        %1209 = vmatmul.mubr.bf16.gmra.mxu0 %v949
        %v1210 = vpop.f32.mrf.mxu0
        %v1211 = vadd.f32 %v477, %v1210
        %v1212 = vpop.f32.mrf.mxu0
        %v1213 = vadd.f32 %v477, %v1212
        %v1214 = vpop.f32.mrf.mxu0
        %v1215 = vadd.f32 %v482, %v1214
        %v1216 = vpop.f32.mrf.mxu0
        %v1217 = vadd.f32 %v482, %v1216
        %1218 = vdwg.mxu0
        %1219 = vmatprep.subr.bf16.mxu0 0
        %1220 = vmatpush1.bf16.msra.mxu0 0
        %1221 = vmatprep.subr.bf16.mxu0 0
        %1222 = vmatpush1.bf16.msra.mxu0 0
        %1223 = vmatprep.subr.bf16.mxu0 0
        %1224 = vmatpush1.bf16.msra.mxu0 0
        %1225 = vmatprep.subr.bf16.mxu0 0
        %1226 = vmatpush1.bf16.msra.mxu0 0
        %1227 = vmatprep.subr.bf16.mxu0 0
        %1228 = vmatpush1.bf16.msra.mxu0 0
        %1229 = vmatprep.subr.bf16.mxu0 %v974
        %1230 = vmatpush1.bf16.msra.mxu0 %v971
        %1231 = vmatprep.subr.bf16.mxu0 %v807
        %1232 = vmatpush1.bf16.msra.mxu0 %v806
        %1233 = vmatprep.subr.bf16.mxu0 %v771
        %1234 = vmatpush1.bf16.msra.mxu0 %v770
        %1235 = vmatprep.subr.bf16.mxu0 0
        %1236 = vmatpush2.bf16.msra.mxu0 0
        %1237 = vmatprep.subr.bf16.mxu0 0
        %1238 = vmatpush2.bf16.msra.mxu0 0
        %1239 = vmatprep.subr.bf16.mxu0 0
        %1240 = vmatpush2.bf16.msra.mxu0 0
        %1241 = vmatprep.subr.bf16.mxu0 0
        %1242 = vmatpush2.bf16.msra.mxu0 0
        %1243 = vmatprep.subr.bf16.mxu0 0
        %1244 = vmatpush2.bf16.msra.mxu0 0
        %1245 = vmatprep.subr.bf16.mxu0 0
        %1246 = vmatpush2.bf16.msra.mxu0 0
        %1247 = vmatprep.subr.bf16.mxu0 0
        %1248 = vmatpush2.bf16.msra.mxu0 0
        %1249 = vmatprep.subr.bf16.mxu0 0
        %1250 = vmatpush2.bf16.msra.mxu0 0
        %1251 = vmatprep.mubr.bf16.mxu0 0
        %1252 = vmatmul.mubr.bf16.gmra.mxu0 %v946
        %v1253 = vpop.f32.mrf.mxu0
        %v1254 = vadd.f32 %v467, %v1253
        %v1255 = vpop.f32.mrf.mxu0
        %v1256 = vadd.f32 %v467, %v1255
        %v1257 = vpop.f32.mrf.mxu0
        %v1258 = vadd.f32 %v472, %v1257
        %v1259 = vpop.f32.mrf.mxu0
        %v1260 = vadd.f32 %v472, %v1259
        %1261 = vmatprep.mubr.bf16.mxu0 0
        %1262 = vmatmul.mubr.bf16.gmra.mxu0 %v949
        %v1263 = vpop.f32.mrf.mxu0
        %v1264 = vadd.f32 %v477, %v1263
        %v1265 = vpop.f32.mrf.mxu0
        %v1266 = vadd.f32 %v477, %v1265
        %v1267 = vpop.f32.mrf.mxu0
        %v1268 = vadd.f32 %v482, %v1267
        %v1269 = vpop.f32.mrf.mxu0
        %v1270 = vadd.f32 %v482, %v1269
        %1271 = vdwg.mxu0
        %1272 = vmatprep.subr.bf16.mxu0 0
        %1273 = vmatpush1.bf16.msra.mxu0 0
        %1274 = vmatprep.subr.bf16.mxu0 0
        %1275 = vmatpush1.bf16.msra.mxu0 0
        %1276 = vmatprep.subr.bf16.mxu0 0
        %1277 = vmatpush1.bf16.msra.mxu0 0
        %1278 = vmatprep.subr.bf16.mxu0 0
        %1279 = vmatpush1.bf16.msra.mxu0 0
        %1280 = vmatprep.subr.bf16.mxu0 0
        %1281 = vmatpush1.bf16.msra.mxu0 0
        %1282 = vmatprep.subr.bf16.mxu0 %v980
        %1283 = vmatpush1.bf16.msra.mxu0 %v977
        %1284 = vmatprep.subr.bf16.mxu0 %v809
        %1285 = vmatpush1.bf16.msra.mxu0 %v808
        %1286 = vmatprep.subr.bf16.mxu0 %v773
        %1287 = vmatpush1.bf16.msra.mxu0 %v772
        %1288 = vmatprep.subr.bf16.mxu0 0
        %1289 = vmatpush2.bf16.msra.mxu0 0
        %1290 = vmatprep.subr.bf16.mxu0 0
        %1291 = vmatpush2.bf16.msra.mxu0 0
        %1292 = vmatprep.subr.bf16.mxu0 0
        %1293 = vmatpush2.bf16.msra.mxu0 0
        %1294 = vmatprep.subr.bf16.mxu0 0
        %1295 = vmatpush2.bf16.msra.mxu0 0
        %1296 = vmatprep.subr.bf16.mxu0 0
        %1297 = vmatpush2.bf16.msra.mxu0 0
        %1298 = vmatprep.subr.bf16.mxu0 0
        %1299 = vmatpush2.bf16.msra.mxu0 0
        %1300 = vmatprep.subr.bf16.mxu0 0
        %1301 = vmatpush2.bf16.msra.mxu0 0
        %1302 = vmatprep.subr.bf16.mxu0 0
        %1303 = vmatpush2.bf16.msra.mxu0 0
        %1304 = vmatprep.mubr.bf16.mxu0 0
        %1305 = vmatmul.mubr.bf16.gmra.mxu0 %v946
        %v1306 = vpop.f32.mrf.mxu0
        %v1307 = vadd.f32 %v467, %v1306
        %v1308 = vpop.f32.mrf.mxu0
        %v1309 = vadd.f32 %v467, %v1308
        %v1310 = vpop.f32.mrf.mxu0
        %v1311 = vadd.f32 %v472, %v1310
        %v1312 = vpop.f32.mrf.mxu0
        %v1313 = vadd.f32 %v472, %v1312
        %1314 = vmatprep.mubr.bf16.mxu0 0
        %1315 = vmatmul.mubr.bf16.gmra.mxu0 %v949
        %v1316 = vpop.f32.mrf.mxu0
        %v1317 = vadd.f32 %v477, %v1316
        %v1318 = vpop.f32.mrf.mxu0
        %v1319 = vadd.f32 %v477, %v1318
        %v1320 = vpop.f32.mrf.mxu0
        %v1321 = vadd.f32 %v482, %v1320
        %v1322 = vpop.f32.mrf.mxu0
        %v1323 = vadd.f32 %v482, %v1322
        %1324 = vdwg.mxu0
        %1325 = vmatprep.subr.bf16.mxu0 0
        %1326 = vmatpush1.bf16.msra.mxu0 0
        %1327 = vmatprep.subr.bf16.mxu0 0
        %1328 = vmatpush1.bf16.msra.mxu0 0
        %1329 = vmatprep.subr.bf16.mxu0 0
        %1330 = vmatpush1.bf16.msra.mxu0 0
        %1331 = vmatprep.subr.bf16.mxu0 0
        %1332 = vmatpush1.bf16.msra.mxu0 0
        %1333 = vmatprep.subr.bf16.mxu0 0
        %1334 = vmatpush1.bf16.msra.mxu0 0
        %1335 = vmatprep.subr.bf16.mxu0 %v986
        %1336 = vmatpush1.bf16.msra.mxu0 %v983
        %1337 = vmatprep.subr.bf16.mxu0 %v811
        %1338 = vmatpush1.bf16.msra.mxu0 %v810
        %1339 = vmatprep.subr.bf16.mxu0 %v775
        %1340 = vmatpush1.bf16.msra.mxu0 %v774
        %1341 = vmatprep.subr.bf16.mxu0 0
        %1342 = vmatpush2.bf16.msra.mxu0 0
        %1343 = vmatprep.subr.bf16.mxu0 0
        %1344 = vmatpush2.bf16.msra.mxu0 0
        %1345 = vmatprep.subr.bf16.mxu0 0
        %1346 = vmatpush2.bf16.msra.mxu0 0
        %1347 = vmatprep.subr.bf16.mxu0 0
        %1348 = vmatpush2.bf16.msra.mxu0 0
        %1349 = vmatprep.subr.bf16.mxu0 0
        %1350 = vmatpush2.bf16.msra.mxu0 0
        %1351 = vmatprep.subr.bf16.mxu0 0
        %1352 = vmatpush2.bf16.msra.mxu0 0
        %1353 = vmatprep.subr.bf16.mxu0 0
        %1354 = vmatpush2.bf16.msra.mxu0 0
        %1355 = vmatprep.subr.bf16.mxu0 0
        %1356 = vmatpush2.bf16.msra.mxu0 0
        %1357 = vmatprep.mubr.bf16.mxu0 0
        %1358 = vmatmul.mubr.bf16.gmra.mxu0 %v946
        %v1359 = vpop.f32.mrf.mxu0
        %v1360 = vadd.f32 %v467, %v1359
        %v1361 = vpop.f32.mrf.mxu0
        %v1362 = vadd.f32 %v467, %v1361
        %v1363 = vpop.f32.mrf.mxu0
        %v1364 = vadd.f32 %v472, %v1363
        %v1365 = vpop.f32.mrf.mxu0
        %v1366 = vadd.f32 %v472, %v1365
        %1367 = vmatprep.mubr.bf16.mxu0 0
        %1368 = vmatmul.mubr.bf16.gmra.mxu0 %v949
        %v1369 = vpop.f32.mrf.mxu0
        %v1370 = vadd.f32 %v477, %v1369
        %v1371 = vpop.f32.mrf.mxu0
        %v1372 = vadd.f32 %v477, %v1371
        %v1373 = vpop.f32.mrf.mxu0
        %v1374 = vadd.f32 %v482, %v1373
        %v1375 = vpop.f32.mrf.mxu0
        %v1376 = vadd.f32 %v482, %v1375
        %1377 = vdwg.mxu0
        %1378 = vmatprep.subr.bf16.mxu0 0
        %1379 = vmatpush1.bf16.msra.mxu0 0
        %1380 = vmatprep.subr.bf16.mxu0 0
        %1381 = vmatpush1.bf16.msra.mxu0 0
        %1382 = vmatprep.subr.bf16.mxu0 0
        %1383 = vmatpush1.bf16.msra.mxu0 0
        %1384 = vmatprep.subr.bf16.mxu0 0
        %1385 = vmatpush1.bf16.msra.mxu0 0
        %1386 = vmatprep.subr.bf16.mxu0 0
        %1387 = vmatpush1.bf16.msra.mxu0 0
        %1388 = vmatprep.subr.bf16.mxu0 %v992
        %1389 = vmatpush1.bf16.msra.mxu0 %v989
        %1390 = vmatprep.subr.bf16.mxu0 %v813
        %1391 = vmatpush1.bf16.msra.mxu0 %v812
        %1392 = vmatprep.subr.bf16.mxu0 %v777
        %1393 = vmatpush1.bf16.msra.mxu0 %v776
        %1394 = vmatprep.subr.bf16.mxu0 0
        %1395 = vmatpush2.bf16.msra.mxu0 0
        %1396 = vmatprep.subr.bf16.mxu0 0
        %1397 = vmatpush2.bf16.msra.mxu0 0
        %1398 = vmatprep.subr.bf16.mxu0 0
        %1399 = vmatpush2.bf16.msra.mxu0 0
        %1400 = vmatprep.subr.bf16.mxu0 0
        %1401 = vmatpush2.bf16.msra.mxu0 0
        %1402 = vmatprep.subr.bf16.mxu0 0
        %1403 = vmatpush2.bf16.msra.mxu0 0
        %1404 = vmatprep.subr.bf16.mxu0 0
        %1405 = vmatpush2.bf16.msra.mxu0 0
        %1406 = vmatprep.subr.bf16.mxu0 0
        %1407 = vmatpush2.bf16.msra.mxu0 0
        %1408 = vmatprep.subr.bf16.mxu0 0
        %1409 = vmatpush2.bf16.msra.mxu0 0
        %1410 = vmatprep.mubr.bf16.mxu0 0
        %1411 = vmatmul.mubr.bf16.gmra.mxu0 %v946
        %v1412 = vpop.f32.mrf.mxu0
        %v1413 = vadd.f32 %v467, %v1412
        %v1414 = vpop.f32.mrf.mxu0
        %v1415 = vadd.f32 %v467, %v1414
        %v1416 = vpop.f32.mrf.mxu0
        %v1417 = vadd.f32 %v472, %v1416
        %v1418 = vpop.f32.mrf.mxu0
        %v1419 = vadd.f32 %v472, %v1418
        %1420 = vmatprep.mubr.bf16.mxu0 0
        %1421 = vmatmul.mubr.bf16.gmra.mxu0 %v949
        %v1422 = vpop.f32.mrf.mxu0
        %v1423 = vadd.f32 %v477, %v1422
        %v1424 = vpop.f32.mrf.mxu0
        %v1425 = vadd.f32 %v477, %v1424
        %v1426 = vpop.f32.mrf.mxu0
        %v1427 = vadd.f32 %v482, %v1426
        %v1428 = vpop.f32.mrf.mxu0
        %v1429 = vadd.f32 %v482, %v1428
        %1430 = vdwg.mxu0
        %1431 = vmatprep.subr.bf16.mxu0 0
        %1432 = vmatpush1.bf16.msra.mxu0 0
        %1433 = vmatprep.subr.bf16.mxu0 0
        %1434 = vmatpush1.bf16.msra.mxu0 0
        %1435 = vmatprep.subr.bf16.mxu0 0
        %1436 = vmatpush1.bf16.msra.mxu0 0
        %1437 = vmatprep.subr.bf16.mxu0 0
        %1438 = vmatpush1.bf16.msra.mxu0 0
        %1439 = vmatprep.subr.bf16.mxu0 0
        %1440 = vmatpush1.bf16.msra.mxu0 0
        %1441 = vmatprep.subr.bf16.mxu0 %v998
        %1442 = vmatpush1.bf16.msra.mxu0 %v995
        %1443 = vmatprep.subr.bf16.mxu0 %v815
        %1444 = vmatpush1.bf16.msra.mxu0 %v814
        %1445 = vmatprep.subr.bf16.mxu0 %v779
        %1446 = vmatpush1.bf16.msra.mxu0 %v778
        %1447 = vmatprep.subr.bf16.mxu0 0
        %1448 = vmatpush2.bf16.msra.mxu0 0
        %1449 = vmatprep.subr.bf16.mxu0 0
        %1450 = vmatpush2.bf16.msra.mxu0 0
        %1451 = vmatprep.subr.bf16.mxu0 0
        %1452 = vmatpush2.bf16.msra.mxu0 0
        %1453 = vmatprep.subr.bf16.mxu0 0
        %1454 = vmatpush2.bf16.msra.mxu0 0
        %1455 = vmatprep.subr.bf16.mxu0 0
        %1456 = vmatpush2.bf16.msra.mxu0 0
        %1457 = vmatprep.subr.bf16.mxu0 0
        %1458 = vmatpush2.bf16.msra.mxu0 0
        %1459 = vmatprep.subr.bf16.mxu0 0
        %1460 = vmatpush2.bf16.msra.mxu0 0
        %1461 = vmatprep.subr.bf16.mxu0 0
        %1462 = vmatpush2.bf16.msra.mxu0 0
        %1463 = vmatprep.mubr.bf16.mxu0 0
        %1464 = vmatmul.mubr.bf16.gmra.mxu0 %v946
        %v1465 = vpop.f32.mrf.mxu0
        %v1466 = vadd.f32 %v467, %v1465
        %v1467 = vpop.f32.mrf.mxu0
        %v1468 = vadd.f32 %v467, %v1467
        %v1469 = vpop.f32.mrf.mxu0
        %v1470 = vadd.f32 %v472, %v1469
        %v1471 = vpop.f32.mrf.mxu0
        %v1472 = vadd.f32 %v472, %v1471
        %1473 = vmatprep.mubr.bf16.mxu0 0
        %1474 = vmatmul.mubr.bf16.gmra.mxu0 %v949
        %v1475 = vpop.f32.mrf.mxu0
        %v1476 = vadd.f32 %v477, %v1475
        %v1477 = vpop.f32.mrf.mxu0
        %v1478 = vadd.f32 %v477, %v1477
        %v1479 = vpop.f32.mrf.mxu0
        %v1480 = vadd.f32 %v482, %v1479
        %v1481 = vpop.f32.mrf.mxu0
        %v1482 = vadd.f32 %v482, %v1481
        %1483 = vdwg.mxu0
        %1484 = vmatprep.subr.bf16.mxu0 0
        %1485 = vmatpush1.bf16.msra.mxu0 0
        %1486 = vmatprep.subr.bf16.mxu0 0
        %1487 = vmatpush1.bf16.msra.mxu0 0
        %1488 = vmatprep.subr.bf16.mxu0 0
        %1489 = vmatpush1.bf16.msra.mxu0 0
        %1490 = vmatprep.subr.bf16.mxu0 0
        %1491 = vmatpush1.bf16.msra.mxu0 0
        %1492 = vmatprep.subr.bf16.mxu0 0
        %1493 = vmatpush1.bf16.msra.mxu0 0
        %1494 = vmatprep.subr.bf16.mxu0 %v1004
        %1495 = vmatpush1.bf16.msra.mxu0 %v1001
        %1496 = vmatprep.subr.bf16.mxu0 %v817
        %1497 = vmatpush1.bf16.msra.mxu0 %v816
        %1498 = vmatprep.subr.bf16.mxu0 %v781
        %1499 = vmatpush1.bf16.msra.mxu0 %v780
        %1500 = vmatprep.subr.bf16.mxu0 0
        %1501 = vmatpush2.bf16.msra.mxu0 0
        %1502 = vmatprep.subr.bf16.mxu0 0
        %1503 = vmatpush2.bf16.msra.mxu0 0
        %1504 = vmatprep.subr.bf16.mxu0 0
        %1505 = vmatpush2.bf16.msra.mxu0 0
        %1506 = vmatprep.subr.bf16.mxu0 0
        %1507 = vmatpush2.bf16.msra.mxu0 0
        %1508 = vmatprep.subr.bf16.mxu0 0
        %1509 = vmatpush2.bf16.msra.mxu0 0
        %1510 = vmatprep.subr.bf16.mxu0 0
        %1511 = vmatpush2.bf16.msra.mxu0 0
        %1512 = vmatprep.subr.bf16.mxu0 0
        %1513 = vmatpush2.bf16.msra.mxu0 0
        %1514 = vmatprep.subr.bf16.mxu0 0
        %1515 = vmatpush2.bf16.msra.mxu0 0
        %1516 = vmatprep.mubr.bf16.mxu0 0
        %1517 = vmatmul.mubr.bf16.gmra.mxu0 %v946
        %v1518 = vpop.f32.mrf.mxu0
        %v1519 = vadd.f32 %v467, %v1518
        %v1520 = vpop.f32.mrf.mxu0
        %v1521 = vadd.f32 %v467, %v1520
        %v1522 = vpop.f32.mrf.mxu0
        %v1523 = vadd.f32 %v472, %v1522
        %v1524 = vpop.f32.mrf.mxu0
        %v1525 = vadd.f32 %v472, %v1524
        %1526 = vmatprep.mubr.bf16.mxu0 0
        %1527 = vmatmul.mubr.bf16.gmra.mxu0 %v949
        %v1528 = vpop.f32.mrf.mxu0
        %v1529 = vadd.f32 %v477, %v1528
        %v1530 = vpop.f32.mrf.mxu0
        %v1531 = vadd.f32 %v477, %v1530
        %v1532 = vpop.f32.mrf.mxu0
        %v1533 = vadd.f32 %v482, %v1532
        %v1534 = vpop.f32.mrf.mxu0
        %v1535 = vadd.f32 %v482, %v1534
        %1536 = vdwg.mxu0
        %1537 = vmatprep.subr.bf16.mxu0 0
        %1538 = vmatpush1.bf16.msra.mxu0 0
        %1539 = vmatprep.subr.bf16.mxu0 0
        %1540 = vmatpush1.bf16.msra.mxu0 0
        %1541 = vmatprep.subr.bf16.mxu0 0
        %1542 = vmatpush1.bf16.msra.mxu0 0
        %1543 = vmatprep.subr.bf16.mxu0 0
        %1544 = vmatpush1.bf16.msra.mxu0 0
        %1545 = vmatprep.subr.bf16.mxu0 0
        %1546 = vmatpush1.bf16.msra.mxu0 0
        %1547 = vmatprep.subr.bf16.mxu0 %v1010
        %1548 = vmatpush1.bf16.msra.mxu0 %v1007
        %1549 = vmatprep.subr.bf16.mxu0 %v819
        %1550 = vmatpush1.bf16.msra.mxu0 %v818
        %1551 = vmatprep.subr.bf16.mxu0 %v783
        %1552 = vmatpush1.bf16.msra.mxu0 %v782
        %1553 = vmatprep.subr.bf16.mxu0 0
        %1554 = vmatpush2.bf16.msra.mxu0 0
        %1555 = vmatprep.subr.bf16.mxu0 0
        %1556 = vmatpush2.bf16.msra.mxu0 0
        %1557 = vmatprep.subr.bf16.mxu0 0
        %1558 = vmatpush2.bf16.msra.mxu0 0
        %1559 = vmatprep.subr.bf16.mxu0 0
        %1560 = vmatpush2.bf16.msra.mxu0 0
        %1561 = vmatprep.subr.bf16.mxu0 0
        %1562 = vmatpush2.bf16.msra.mxu0 0
        %1563 = vmatprep.subr.bf16.mxu0 0
        %1564 = vmatpush2.bf16.msra.mxu0 0
        %1565 = vmatprep.subr.bf16.mxu0 0
        %1566 = vmatpush2.bf16.msra.mxu0 0
        %1567 = vmatprep.subr.bf16.mxu0 0
        %1568 = vmatpush2.bf16.msra.mxu0 0
        %1569 = vmatprep.mubr.bf16.mxu0 0
        %1570 = vmatmul.mubr.bf16.gmra.mxu0 %v946
        %v1571 = vpop.f32.mrf.mxu0
        %v1572 = vadd.f32 %v467, %v1571
        %v1573 = vpop.f32.mrf.mxu0
        %v1574 = vadd.f32 %v467, %v1573
        %v1575 = vpop.f32.mrf.mxu0
        %v1576 = vadd.f32 %v472, %v1575
        %v1577 = vpop.f32.mrf.mxu0
        %v1578 = vadd.f32 %v472, %v1577
        %1579 = vmatprep.mubr.bf16.mxu0 0
        %1580 = vmatmul.mubr.bf16.gmra.mxu0 %v949
        %v1581 = vpop.f32.mrf.mxu0
        %v1582 = vadd.f32 %v477, %v1581
        %v1583 = vpop.f32.mrf.mxu0
        %v1584 = vadd.f32 %v477, %v1583
        %v1585 = vpop.f32.mrf.mxu0
        %v1586 = vadd.f32 %v482, %v1585
        %v1587 = vpop.f32.mrf.mxu0
        %v1588 = vadd.f32 %v482, %v1587
        %1589 = vdwg.mxu0
        %1590 = vmatprep.subr.bf16.mxu0 0
        %1591 = vmatpush1.bf16.msra.mxu0 0
        %1592 = vmatprep.subr.bf16.mxu0 0
        %1593 = vmatpush1.bf16.msra.mxu0 0
        %1594 = vmatprep.subr.bf16.mxu0 0
        %1595 = vmatpush1.bf16.msra.mxu0 0
        %1596 = vmatprep.subr.bf16.mxu0 0
        %1597 = vmatpush1.bf16.msra.mxu0 0
        %1598 = vmatprep.subr.bf16.mxu0 0
        %1599 = vmatpush1.bf16.msra.mxu0 0
        %1600 = vmatprep.subr.bf16.mxu0 %v1016
        %1601 = vmatpush1.bf16.msra.mxu0 %v1013
        %1602 = vmatprep.subr.bf16.mxu0 %v821
        %1603 = vmatpush1.bf16.msra.mxu0 %v820
        %1604 = vmatprep.subr.bf16.mxu0 %v785
        %1605 = vmatpush1.bf16.msra.mxu0 %v784
        %1606 = vmatprep.subr.bf16.mxu0 0
        %1607 = vmatpush2.bf16.msra.mxu0 0
        %1608 = vmatprep.subr.bf16.mxu0 0
        %1609 = vmatpush2.bf16.msra.mxu0 0
        %1610 = vmatprep.subr.bf16.mxu0 0
        %1611 = vmatpush2.bf16.msra.mxu0 0
        %1612 = vmatprep.subr.bf16.mxu0 0
        %1613 = vmatpush2.bf16.msra.mxu0 0
        %1614 = vmatprep.subr.bf16.mxu0 0
        %1615 = vmatpush2.bf16.msra.mxu0 0
        %1616 = vmatprep.subr.bf16.mxu0 0
        %1617 = vmatpush2.bf16.msra.mxu0 0
        %1618 = vmatprep.subr.bf16.mxu0 0
        %1619 = vmatpush2.bf16.msra.mxu0 0
        %1620 = vmatprep.subr.bf16.mxu0 0
        %1621 = vmatpush2.bf16.msra.mxu0 0
        %1622 = vmatprep.mubr.bf16.mxu0 0
        %1623 = vmatmul.mubr.bf16.gmra.mxu0 %v946
        %v1624 = vpop.f32.mrf.mxu0
        %v1625 = vadd.f32 %v467, %v1624
        %v1626 = vpop.f32.mrf.mxu0
        %v1627 = vadd.f32 %v467, %v1626
        %v1628 = vpop.f32.mrf.mxu0
        %v1629 = vadd.f32 %v472, %v1628
        %v1630 = vpop.f32.mrf.mxu0
        %v1631 = vadd.f32 %v472, %v1630
        %1632 = vmatprep.mubr.bf16.mxu0 0
        %1633 = vmatmul.mubr.bf16.gmra.mxu0 %v949
        %v1634 = vpop.f32.mrf.mxu0
        %v1635 = vadd.f32 %v477, %v1634
        %v1636 = vpop.f32.mrf.mxu0
        %v1637 = vadd.f32 %v477, %v1636
        %v1638 = vpop.f32.mrf.mxu0
        %v1639 = vadd.f32 %v482, %v1638
        %v1640 = vpop.f32.mrf.mxu0
        %v1641 = vadd.f32 %v482, %v1640
        %1642 = vdwg.mxu0
        %1643 = vmatprep.subr.bf16.mxu0 0
        %1644 = vmatpush1.bf16.msra.mxu0 0
        %1645 = vmatprep.subr.bf16.mxu0 0
        %1646 = vmatpush1.bf16.msra.mxu0 0
        %1647 = vmatprep.subr.bf16.mxu0 0
        %1648 = vmatpush1.bf16.msra.mxu0 0
        %1649 = vmatprep.subr.bf16.mxu0 0
        %1650 = vmatpush1.bf16.msra.mxu0 0
        %1651 = vmatprep.subr.bf16.mxu0 0
        %1652 = vmatpush1.bf16.msra.mxu0 0
        %1653 = vmatprep.subr.bf16.mxu0 %v1022
        %1654 = vmatpush1.bf16.msra.mxu0 %v1019
        %1655 = vmatprep.subr.bf16.mxu0 %v823
        %1656 = vmatpush1.bf16.msra.mxu0 %v822
        %1657 = vmatprep.subr.bf16.mxu0 %v787
        %1658 = vmatpush1.bf16.msra.mxu0 %v786
        %1659 = vmatprep.subr.bf16.mxu0 0
        %1660 = vmatpush2.bf16.msra.mxu0 0
        %1661 = vmatprep.subr.bf16.mxu0 0
        %1662 = vmatpush2.bf16.msra.mxu0 0
        %1663 = vmatprep.subr.bf16.mxu0 0
        %1664 = vmatpush2.bf16.msra.mxu0 0
        %1665 = vmatprep.subr.bf16.mxu0 0
        %1666 = vmatpush2.bf16.msra.mxu0 0
        %1667 = vmatprep.subr.bf16.mxu0 0
        %1668 = vmatpush2.bf16.msra.mxu0 0
        %1669 = vmatprep.subr.bf16.mxu0 0
        %1670 = vmatpush2.bf16.msra.mxu0 0
        %1671 = vmatprep.subr.bf16.mxu0 0
        %1672 = vmatpush2.bf16.msra.mxu0 0
        %1673 = vmatprep.subr.bf16.mxu0 0
        %1674 = vmatpush2.bf16.msra.mxu0 0
        %1675 = vmatprep.mubr.bf16.mxu0 0
        %1676 = vmatmul.mubr.bf16.gmra.mxu0 %v946
        %v1677 = vpop.f32.mrf.mxu0
        %v1678 = vadd.f32 %v467, %v1677
        %v1679 = vpop.f32.mrf.mxu0
        %v1680 = vadd.f32 %v467, %v1679
        %v1681 = vpop.f32.mrf.mxu0
        %v1682 = vadd.f32 %v472, %v1681
        %v1683 = vpop.f32.mrf.mxu0
        %v1684 = vadd.f32 %v472, %v1683
        %1685 = vmatprep.mubr.bf16.mxu0 0
        %1686 = vmatmul.mubr.bf16.gmra.mxu0 %v949
        %v1687 = vpop.f32.mrf.mxu0
        %v1688 = vadd.f32 %v477, %v1687
        %v1689 = vpop.f32.mrf.mxu0
        %v1690 = vadd.f32 %v477, %v1689
        %v1691 = vpop.f32.mrf.mxu0
        %v1692 = vadd.f32 %v482, %v1691
        %v1693 = vpop.f32.mrf.mxu0
        %v1694 = vadd.f32 %v482, %v1693
        %1695 = vdwg.mxu0
        %1696 = vmatprep.subr.bf16.mxu0 0
        %1697 = vmatpush1.bf16.msra.mxu0 0
        %1698 = vmatprep.subr.bf16.mxu0 0
        %1699 = vmatpush1.bf16.msra.mxu0 0
        %1700 = vmatprep.subr.bf16.mxu0 0
        %1701 = vmatpush1.bf16.msra.mxu0 0
        %1702 = vmatprep.subr.bf16.mxu0 0
        %1703 = vmatpush1.bf16.msra.mxu0 0
        %1704 = vmatprep.subr.bf16.mxu0 0
        %1705 = vmatpush1.bf16.msra.mxu0 0
        %1706 = vmatprep.subr.bf16.mxu0 %v1028
        %1707 = vmatpush1.bf16.msra.mxu0 %v1025
        %1708 = vmatprep.subr.bf16.mxu0 %v825
        %1709 = vmatpush1.bf16.msra.mxu0 %v824
        %1710 = vmatprep.subr.bf16.mxu0 %v789
        %1711 = vmatpush1.bf16.msra.mxu0 %v788
        %1712 = vmatprep.subr.bf16.mxu0 0
        %1713 = vmatpush2.bf16.msra.mxu0 0
        %1714 = vmatprep.subr.bf16.mxu0 0
        %1715 = vmatpush2.bf16.msra.mxu0 0
        %1716 = vmatprep.subr.bf16.mxu0 0
        %1717 = vmatpush2.bf16.msra.mxu0 0
        %1718 = vmatprep.subr.bf16.mxu0 0
        %1719 = vmatpush2.bf16.msra.mxu0 0
        %1720 = vmatprep.subr.bf16.mxu0 0
        %1721 = vmatpush2.bf16.msra.mxu0 0
        %1722 = vmatprep.subr.bf16.mxu0 0
        %1723 = vmatpush2.bf16.msra.mxu0 0
        %1724 = vmatprep.subr.bf16.mxu0 0
        %1725 = vmatpush2.bf16.msra.mxu0 0
        %1726 = vmatprep.subr.bf16.mxu0 0
        %1727 = vmatpush2.bf16.msra.mxu0 0
        %1728 = vmatprep.mubr.bf16.mxu0 0
        %1729 = vmatmul.mubr.bf16.gmra.mxu0 %v946
        %v1730 = vpop.f32.mrf.mxu0
        %v1731 = vadd.f32 %v467, %v1730
        %v1732 = vpop.f32.mrf.mxu0
        %v1733 = vadd.f32 %v467, %v1732
        %v1734 = vpop.f32.mrf.mxu0
        %v1735 = vadd.f32 %v472, %v1734
        %v1736 = vpop.f32.mrf.mxu0
        %v1737 = vadd.f32 %v472, %v1736
        %1738 = vmatprep.mubr.bf16.mxu0 0
        %1739 = vmatmul.mubr.bf16.gmra.mxu0 %v949
        %v1740 = vpop.f32.mrf.mxu0
        %v1741 = vadd.f32 %v477, %v1740
        %v1742 = vpop.f32.mrf.mxu0
        %v1743 = vadd.f32 %v477, %v1742
        %v1744 = vpop.f32.mrf.mxu0
        %v1745 = vadd.f32 %v482, %v1744
        %v1746 = vpop.f32.mrf.mxu0
        %v1747 = vadd.f32 %v482, %v1746
        %1748 = vdwg.mxu0
        %1749 = vmatprep.subr.bf16.mxu0 0
        %1750 = vmatpush1.bf16.msra.mxu0 0
        %1751 = vmatprep.subr.bf16.mxu0 0
        %1752 = vmatpush1.bf16.msra.mxu0 0
        %1753 = vmatprep.subr.bf16.mxu0 0
        %1754 = vmatpush1.bf16.msra.mxu0 0
        %1755 = vmatprep.subr.bf16.mxu0 0
        %1756 = vmatpush1.bf16.msra.mxu0 0
        %1757 = vmatprep.subr.bf16.mxu0 0
        %1758 = vmatpush1.bf16.msra.mxu0 0
        %1759 = vmatprep.subr.bf16.mxu0 %v1034
        %1760 = vmatpush1.bf16.msra.mxu0 %v1031
        %1761 = vmatprep.subr.bf16.mxu0 %v827
        %1762 = vmatpush1.bf16.msra.mxu0 %v826
        %1763 = vmatprep.subr.bf16.mxu0 %v791
        %1764 = vmatpush1.bf16.msra.mxu0 %v790
        %1765 = vmatprep.subr.bf16.mxu0 0
        %1766 = vmatpush2.bf16.msra.mxu0 0
        %1767 = vmatprep.subr.bf16.mxu0 0
        %1768 = vmatpush2.bf16.msra.mxu0 0
        %1769 = vmatprep.subr.bf16.mxu0 0
        %1770 = vmatpush2.bf16.msra.mxu0 0
        %1771 = vmatprep.subr.bf16.mxu0 0
        %1772 = vmatpush2.bf16.msra.mxu0 0
        %1773 = vmatprep.subr.bf16.mxu0 0
        %1774 = vmatpush2.bf16.msra.mxu0 0
        %1775 = vmatprep.subr.bf16.mxu0 0
        %1776 = vmatpush2.bf16.msra.mxu0 0
        %1777 = vmatprep.subr.bf16.mxu0 0
        %1778 = vmatpush2.bf16.msra.mxu0 0
        %1779 = vmatprep.subr.bf16.mxu0 0
        %1780 = vmatpush2.bf16.msra.mxu0 0
        %1781 = vmatprep.mubr.bf16.mxu0 0
        %1782 = vmatmul.mubr.bf16.gmra.mxu0 %v946
        %v1783 = vpop.f32.mrf.mxu0
        %v1784 = vadd.f32 %v467, %v1783
        %v1785 = vpop.f32.mrf.mxu0
        %v1786 = vadd.f32 %v467, %v1785
        %v1787 = vpop.f32.mrf.mxu0
        %v1788 = vadd.f32 %v472, %v1787
        %v1789 = vpop.f32.mrf.mxu0
        %v1790 = vadd.f32 %v472, %v1789
        %1791 = vmatprep.mubr.bf16.mxu0 0
        %1792 = vmatmul.mubr.bf16.gmra.mxu0 %v949
        %v1793 = vpop.f32.mrf.mxu0
        %v1794 = vadd.f32 %v477, %v1793
        %v1795 = vpop.f32.mrf.mxu0
        %v1796 = vadd.f32 %v477, %v1795
        %v1797 = vpop.f32.mrf.mxu0
        %v1798 = vadd.f32 %v482, %v1797
        %v1799 = vpop.f32.mrf.mxu0
        %v1800 = vadd.f32 %v482, %v1799
        %1801 = vdwg.mxu0
        %1802 = vmatprep.subr.bf16.mxu0 0
        %1803 = vmatpush1.bf16.msra.mxu0 0
        %1804 = vmatprep.subr.bf16.mxu0 0
        %1805 = vmatpush1.bf16.msra.mxu0 0
        %1806 = vmatprep.subr.bf16.mxu0 0
        %1807 = vmatpush1.bf16.msra.mxu0 0
        %1808 = vmatprep.subr.bf16.mxu0 0
        %1809 = vmatpush1.bf16.msra.mxu0 0
        %1810 = vmatprep.subr.bf16.mxu0 0
        %1811 = vmatpush1.bf16.msra.mxu0 0
        %1812 = vmatprep.subr.bf16.mxu0 %v1040
        %1813 = vmatpush1.bf16.msra.mxu0 %v1037
        %1814 = vmatprep.subr.bf16.mxu0 %v829
        %1815 = vmatpush1.bf16.msra.mxu0 %v828
        %1816 = vmatprep.subr.bf16.mxu0 %v793
        %1817 = vmatpush1.bf16.msra.mxu0 %v792
        %1818 = vmatprep.subr.bf16.mxu0 0
        %1819 = vmatpush2.bf16.msra.mxu0 0
        %1820 = vmatprep.subr.bf16.mxu0 0
        %1821 = vmatpush2.bf16.msra.mxu0 0
        %1822 = vmatprep.subr.bf16.mxu0 0
        %1823 = vmatpush2.bf16.msra.mxu0 0
        %1824 = vmatprep.subr.bf16.mxu0 0
        %1825 = vmatpush2.bf16.msra.mxu0 0
        %1826 = vmatprep.subr.bf16.mxu0 0
        %1827 = vmatpush2.bf16.msra.mxu0 0
        %1828 = vmatprep.subr.bf16.mxu0 0
        %1829 = vmatpush2.bf16.msra.mxu0 0
        %1830 = vmatprep.subr.bf16.mxu0 0
        %1831 = vmatpush2.bf16.msra.mxu0 0
        %1832 = vmatprep.subr.bf16.mxu0 0
        %1833 = vmatpush2.bf16.msra.mxu0 0
        %1834 = vmatprep.mubr.bf16.mxu0 0
        %1835 = vmatmul.mubr.bf16.gmra.mxu0 %v946
        %v1836 = vpop.f32.mrf.mxu0
        %v1837 = vadd.f32 %v467, %v1836
        %v1838 = vpop.f32.mrf.mxu0
        %v1839 = vadd.f32 %v467, %v1838
        %v1840 = vpop.f32.mrf.mxu0
        %v1841 = vadd.f32 %v472, %v1840
        %v1842 = vpop.f32.mrf.mxu0
        %v1843 = vadd.f32 %v472, %v1842
        %1844 = vmatprep.mubr.bf16.mxu0 0
        %1845 = vmatmul.mubr.bf16.gmra.mxu0 %v949
        %v1846 = vpop.f32.mrf.mxu0
        %v1847 = vadd.f32 %v477, %v1846
        %v1848 = vpop.f32.mrf.mxu0
        %v1849 = vadd.f32 %v477, %v1848
        %v1850 = vpop.f32.mrf.mxu0
        %v1851 = vadd.f32 %v482, %v1850
        %v1852 = vpop.f32.mrf.mxu0
        %v1853 = vadd.f32 %v482, %v1852
        %1854 = vdwg.mxu0
        %1855 = vmatprep.subr.bf16.mxu0 0
        %1856 = vmatpush1.bf16.msra.mxu0 0
        %1857 = vmatprep.subr.bf16.mxu0 0
        %1858 = vmatpush1.bf16.msra.mxu0 0
        %1859 = vmatprep.subr.bf16.mxu0 0
        %1860 = vmatpush1.bf16.msra.mxu0 0
        %1861 = vmatprep.subr.bf16.mxu0 0
        %1862 = vmatpush1.bf16.msra.mxu0 0
        %1863 = vmatprep.subr.bf16.mxu0 0
        %1864 = vmatpush1.bf16.msra.mxu0 0
        %1865 = vmatprep.subr.bf16.mxu0 %v1046
        %1866 = vmatpush1.bf16.msra.mxu0 %v1043
        %1867 = vmatprep.subr.bf16.mxu0 %v831
        %1868 = vmatpush1.bf16.msra.mxu0 %v830
        %1869 = vmatprep.subr.bf16.mxu0 %v795
        %1870 = vmatpush1.bf16.msra.mxu0 %v794
        %1871 = vmatprep.subr.bf16.mxu0 0
        %1872 = vmatpush2.bf16.msra.mxu0 0
        %1873 = vmatprep.subr.bf16.mxu0 0
        %1874 = vmatpush2.bf16.msra.mxu0 0
        %1875 = vmatprep.subr.bf16.mxu0 0
        %1876 = vmatpush2.bf16.msra.mxu0 0
        %1877 = vmatprep.subr.bf16.mxu0 0
        %1878 = vmatpush2.bf16.msra.mxu0 0
        %1879 = vmatprep.subr.bf16.mxu0 0
        %1880 = vmatpush2.bf16.msra.mxu0 0
        %1881 = vmatprep.subr.bf16.mxu0 0
        %1882 = vmatpush2.bf16.msra.mxu0 0
        %1883 = vmatprep.subr.bf16.mxu0 0
        %1884 = vmatpush2.bf16.msra.mxu0 0
        %1885 = vmatprep.subr.bf16.mxu0 0
        %1886 = vmatpush2.bf16.msra.mxu0 0
        %1887 = vmatprep.mubr.bf16.mxu0 0
        %1888 = vmatmul.mubr.bf16.gmra.mxu0 %v946
        %v1889 = vpop.f32.mrf.mxu0
        %v1890 = vadd.f32 %v467, %v1889
        %v1891 = vpop.f32.mrf.mxu0
        %v1892 = vadd.f32 %v467, %v1891
        %v1893 = vpop.f32.mrf.mxu0
        %v1894 = vadd.f32 %v472, %v1893
        %v1895 = vpop.f32.mrf.mxu0
        %v1896 = vadd.f32 %v472, %v1895
        %1897 = vmatprep.mubr.bf16.mxu0 0
        %1898 = vmatmul.mubr.bf16.gmra.mxu0 %v949
        %v1899 = vpop.f32.mrf.mxu0
        %v1900 = vadd.f32 %v477, %v1899
        %v1901 = vpop.f32.mrf.mxu0
        %v1902 = vadd.f32 %v477, %v1901
        %v1903 = vpop.f32.mrf.mxu0
        %v1904 = vadd.f32 %v482, %v1903
        %v1905 = vpop.f32.mrf.mxu0
        %v1906 = vadd.f32 %v482, %v1905
        %1907 = vdwg.mxu0
        %1908 = vmatprep.subr.bf16.mxu0 0
        %1909 = vmatpush1.bf16.msra.mxu0 0
        %1910 = vmatprep.subr.bf16.mxu0 0
        %1911 = vmatpush1.bf16.msra.mxu0 0
        %1912 = vmatprep.subr.bf16.mxu0 0
        %1913 = vmatpush1.bf16.msra.mxu0 0
        %1914 = vmatprep.subr.bf16.mxu0 0
        %1915 = vmatpush1.bf16.msra.mxu0 0
        %1916 = vmatprep.subr.bf16.mxu0 0
        %1917 = vmatpush1.bf16.msra.mxu0 0
        %1918 = vmatprep.subr.bf16.mxu0 %v1052
        %1919 = vmatpush1.bf16.msra.mxu0 %v1049
        %1920 = vmatprep.subr.bf16.mxu0 %v833
        %1921 = vmatpush1.bf16.msra.mxu0 %v832
        %1922 = vmatprep.subr.bf16.mxu0 %v797
        %1923 = vmatpush1.bf16.msra.mxu0 %v796
        %1924 = vmatprep.subr.bf16.mxu0 0
        %1925 = vmatpush2.bf16.msra.mxu0 0
        %1926 = vmatprep.subr.bf16.mxu0 0
        %1927 = vmatpush2.bf16.msra.mxu0 0
        %1928 = vmatprep.subr.bf16.mxu0 0
        %1929 = vmatpush2.bf16.msra.mxu0 0
        %1930 = vmatprep.subr.bf16.mxu0 0
        %1931 = vmatpush2.bf16.msra.mxu0 0
        %1932 = vmatprep.subr.bf16.mxu0 0
        %1933 = vmatpush2.bf16.msra.mxu0 0
        %1934 = vmatprep.subr.bf16.mxu0 0
        %1935 = vmatpush2.bf16.msra.mxu0 0
        %1936 = vmatprep.subr.bf16.mxu0 0
        %1937 = vmatpush2.bf16.msra.mxu0 0
        %1938 = vmatprep.subr.bf16.mxu0 0
        %1939 = vmatpush2.bf16.msra.mxu0 0
        %1940 = vmatprep.mubr.bf16.mxu0 0
        %1941 = vmatmul.mubr.bf16.gmra.mxu0 %v946
        %v1942 = vpop.f32.mrf.mxu0
        %v1943 = vadd.f32 %v467, %v1942
        %v1944 = vpop.f32.mrf.mxu0
        %v1945 = vadd.f32 %v467, %v1944
        %v1946 = vpop.f32.mrf.mxu0
        %v1947 = vadd.f32 %v472, %v1946
        %v1948 = vpop.f32.mrf.mxu0
        %v1949 = vadd.f32 %v472, %v1948
        %1950 = vmatprep.mubr.bf16.mxu0 0
        %1951 = vmatmul.mubr.bf16.gmra.mxu0 %v949
        %v1952 = vpop.f32.mrf.mxu0
        %v1953 = vadd.f32 %v477, %v1952
        %v1954 = vpop.f32.mrf.mxu0
        %v1955 = vadd.f32 %v477, %v1954
        %v1956 = vpop.f32.mrf.mxu0
        %v1957 = vadd.f32 %v482, %v1956
        %v1958 = vpop.f32.mrf.mxu0
        %v1959 = vadd.f32 %v482, %v1958
        %1960 = vdwg.mxu0
        %1961 = vmatprep.subr.bf16.mxu0 0
        %1962 = vmatpush1.bf16.msra.mxu0 0
        %1963 = vmatprep.subr.bf16.mxu0 0
        %1964 = vmatpush1.bf16.msra.mxu0 0
        %1965 = vmatprep.subr.bf16.mxu0 0
        %1966 = vmatpush1.bf16.msra.mxu0 0
        %1967 = vmatprep.subr.bf16.mxu0 0
        %1968 = vmatpush1.bf16.msra.mxu0 0
        %1969 = vmatprep.subr.bf16.mxu0 0
        %1970 = vmatpush1.bf16.msra.mxu0 0
        %1971 = vmatprep.subr.bf16.mxu0 %v1058
        %1972 = vmatpush1.bf16.msra.mxu0 %v1055
        %1973 = vmatprep.subr.bf16.mxu0 %v835
        %1974 = vmatpush1.bf16.msra.mxu0 %v834
        %1975 = vmatprep.subr.bf16.mxu0 %v799
        %1976 = vmatpush1.bf16.msra.mxu0 %v798
        %1977 = vmatprep.subr.bf16.mxu0 0
        %1978 = vmatpush2.bf16.msra.mxu0 0
        %1979 = vmatprep.subr.bf16.mxu0 0
        %1980 = vmatpush2.bf16.msra.mxu0 0
        %1981 = vmatprep.subr.bf16.mxu0 0
        %1982 = vmatpush2.bf16.msra.mxu0 0
        %1983 = vmatprep.subr.bf16.mxu0 0
        %1984 = vmatpush2.bf16.msra.mxu0 0
        %1985 = vmatprep.subr.bf16.mxu0 0
        %1986 = vmatpush2.bf16.msra.mxu0 0
        %1987 = vmatprep.subr.bf16.mxu0 0
        %1988 = vmatpush2.bf16.msra.mxu0 0
        %1989 = vmatprep.subr.bf16.mxu0 0
        %1990 = vmatpush2.bf16.msra.mxu0 0
        %1991 = vmatprep.subr.bf16.mxu0 0
        %1992 = vmatpush2.bf16.msra.mxu0 0
        %1993 = vmatprep.mubr.bf16.mxu0 0
        %1994 = vmatmul.mubr.bf16.gmra.mxu0 %v946
        %v1995 = vpop.f32.mrf.mxu0
        %v1996 = vadd.f32 %v467, %v1995
        %v1997 = vpop.f32.mrf.mxu0
        %v1998 = vadd.f32 %v467, %v1997
        %v1999 = vpop.f32.mrf.mxu0
        %v2000 = vadd.f32 %v472, %v1999
        %v2001 = vpop.f32.mrf.mxu0
        %v2002 = vadd.f32 %v472, %v2001
        %2003 = vmatprep.mubr.bf16.mxu0 0
        %2004 = vmatmul.mubr.bf16.gmra.mxu0 %v949
        %v2005 = vpop.f32.mrf.mxu0
        %v2006 = vadd.f32 %v477, %v2005
        %v2007 = vpop.f32.mrf.mxu0
        %v2008 = vadd.f32 %v477, %v2007
        %v2009 = vpop.f32.mrf.mxu0
        %v2010 = vadd.f32 %v482, %v2009
        %v2011 = vpop.f32.mrf.mxu0
        %v2012 = vadd.f32 %v482, %v2011
        %2013 = vdwg.mxu0
        %v2014 = vmax.f32 %v1095, 0.0
        %v2015 = vmax.f32 %v1097, 0.0
        %v2016 = vmax.f32 %v1148, 0.0
        %v2017 = vmax.f32 %v1150, 0.0
        %v2018 = vmax.f32 %v1201, 0.0
        %v2019 = vmax.f32 %v1203, 0.0
        %v2020 = vmax.f32 %v1254, 0.0
        %v2021 = vmax.f32 %v1256, 0.0
        %v2022 = vmax.f32 %v1307, 0.0
        %v2023 = vmax.f32 %v1309, 0.0
        %v2024 = vmax.f32 %v1360, 0.0
        %v2025 = vmax.f32 %v1362, 0.0
        %v2026 = vmax.f32 %v1413, 0.0
        %v2027 = vmax.f32 %v1415, 0.0
        %v2028 = vmax.f32 %v1466, 0.0
        %v2029 = vmax.f32 %v1468, 0.0
        %v2030 = vmax.f32 %v1519, 0.0
        %v2031 = vmax.f32 %v1521, 0.0
        %v2032 = vmax.f32 %v1572, 0.0
        %v2033 = vmax.f32 %v1574, 0.0
        %v2034 = vmax.f32 %v1625, 0.0
        %v2035 = vmax.f32 %v1627, 0.0
        %v2036 = vmax.f32 %v1678, 0.0
        %v2037 = vmax.f32 %v1680, 0.0
        %v2038 = vmax.f32 %v1731, 0.0
        %v2039 = vmax.f32 %v1733, 0.0
        %v2040 = vmax.f32 %v1784, 0.0
        %v2041 = vmax.f32 %v1786, 0.0
        %v2042 = vmax.f32 %v1837, 0.0
        %v2043 = vmax.f32 %v1839, 0.0
        %v2044 = vmax.f32 %v1890, 0.0
        %v2045 = vmax.f32 %v1892, 0.0
        %v2046 = vmax.f32 %v1943, 0.0
        %v2047 = vmax.f32 %v1945, 0.0
        %v2048 = vmax.f32 %v1996, 0.0
        %v2049 = vmax.f32 %v1998, 0.0
        %v2050 = vmax.f32 %v1099, 0.0
        %v2051 = vmax.f32 %v1101, 0.0
        %v2052 = vmax.f32 %v1152, 0.0
        %v2053 = vmax.f32 %v1154, 0.0
        %v2054 = vmax.f32 %v1205, 0.0
        %v2055 = vmax.f32 %v1207, 0.0
        %v2056 = vmax.f32 %v1258, 0.0
        %v2057 = vmax.f32 %v1260, 0.0
        %v2058 = vmax.f32 %v1311, 0.0
        %v2059 = vmax.f32 %v1313, 0.0
        %v2060 = vmax.f32 %v1364, 0.0
        %v2061 = vmax.f32 %v1366, 0.0
        %v2062 = vmax.f32 %v1417, 0.0
        %v2063 = vmax.f32 %v1419, 0.0
        %v2064 = vmax.f32 %v1470, 0.0
        %v2065 = vmax.f32 %v1472, 0.0
        %v2066 = vmax.f32 %v1523, 0.0
        %v2067 = vmax.f32 %v1525, 0.0
        %v2068 = vmax.f32 %v1576, 0.0
        %v2069 = vmax.f32 %v1578, 0.0
        %v2070 = vmax.f32 %v1629, 0.0
        %v2071 = vmax.f32 %v1631, 0.0
        %v2072 = vmax.f32 %v1682, 0.0
        %v2073 = vmax.f32 %v1684, 0.0
        %v2074 = vmax.f32 %v1735, 0.0
        %v2075 = vmax.f32 %v1737, 0.0
        %v2076 = vmax.f32 %v1788, 0.0
        %v2077 = vmax.f32 %v1790, 0.0
        %v2078 = vmax.f32 %v1841, 0.0
        %v2079 = vmax.f32 %v1843, 0.0
        %v2080 = vmax.f32 %v1894, 0.0
        %v2081 = vmax.f32 %v1896, 0.0
        %v2082 = vmax.f32 %v1947, 0.0
        %v2083 = vmax.f32 %v1949, 0.0
        %v2084 = vmax.f32 %v2000, 0.0
        %v2085 = vmax.f32 %v2002, 0.0
        %v2086 = vmax.f32 %v1105, 0.0
        %v2087 = vmax.f32 %v1107, 0.0
        %v2088 = vmax.f32 %v1158, 0.0
        %v2089 = vmax.f32 %v1160, 0.0
        %v2090 = vmax.f32 %v1211, 0.0
        %v2091 = vmax.f32 %v1213, 0.0
        %v2092 = vmax.f32 %v1264, 0.0
        %v2093 = vmax.f32 %v1266, 0.0
        %v2094 = vmax.f32 %v1317, 0.0
        %v2095 = vmax.f32 %v1319, 0.0
        %v2096 = vmax.f32 %v1370, 0.0
        %v2097 = vmax.f32 %v1372, 0.0
        %v2098 = vmax.f32 %v1423, 0.0
        %v2099 = vmax.f32 %v1425, 0.0
        %v2100 = vmax.f32 %v1476, 0.0
        %v2101 = vmax.f32 %v1478, 0.0
        %v2102 = vmax.f32 %v1529, 0.0
        %v2103 = vmax.f32 %v1531, 0.0
        %v2104 = vmax.f32 %v1582, 0.0
        %v2105 = vmax.f32 %v1584, 0.0
        %v2106 = vmax.f32 %v1635, 0.0
        %v2107 = vmax.f32 %v1637, 0.0
        %v2108 = vmax.f32 %v1688, 0.0
        %v2109 = vmax.f32 %v1690, 0.0
        %v2110 = vmax.f32 %v1741, 0.0
        %v2111 = vmax.f32 %v1743, 0.0
        %v2112 = vmax.f32 %v1794, 0.0
        %v2113 = vmax.f32 %v1796, 0.0
        %v2114 = vmax.f32 %v1847, 0.0
        %v2115 = vmax.f32 %v1849, 0.0
        %v2116 = vmax.f32 %v1900, 0.0
        %v2117 = vmax.f32 %v1902, 0.0
        %v2118 = vmax.f32 %v1953, 0.0
        %v2119 = vmax.f32 %v1955, 0.0
        %v2120 = vmax.f32 %v2006, 0.0
        %v2121 = vmax.f32 %v2008, 0.0
        %v2122 = vmax.f32 %v1109, 0.0
        %v2123 = vmax.f32 %v1111, 0.0
        %v2124 = vmax.f32 %v1162, 0.0
        %v2125 = vmax.f32 %v1164, 0.0
        %v2126 = vmax.f32 %v1215, 0.0
        %v2127 = vmax.f32 %v1217, 0.0
        %v2128 = vmax.f32 %v1268, 0.0
        %v2129 = vmax.f32 %v1270, 0.0
        %v2130 = vmax.f32 %v1321, 0.0
        %v2131 = vmax.f32 %v1323, 0.0
        %v2132 = vmax.f32 %v1374, 0.0
        %v2133 = vmax.f32 %v1376, 0.0
        %v2134 = vmax.f32 %v1427, 0.0
        %v2135 = vmax.f32 %v1429, 0.0
        %v2136 = vmax.f32 %v1480, 0.0
        %v2137 = vmax.f32 %v1482, 0.0
        %v2138 = vmax.f32 %v1533, 0.0
        %v2139 = vmax.f32 %v1535, 0.0
        %v2140 = vmax.f32 %v1586, 0.0
        %v2141 = vmax.f32 %v1588, 0.0
        %v2142 = vmax.f32 %v1639, 0.0
        %v2143 = vmax.f32 %v1641, 0.0
        %v2144 = vmax.f32 %v1692, 0.0
        %v2145 = vmax.f32 %v1694, 0.0
        %v2146 = vmax.f32 %v1745, 0.0
        %v2147 = vmax.f32 %v1747, 0.0
        %v2148 = vmax.f32 %v1798, 0.0
        %v2149 = vmax.f32 %v1800, 0.0
        %v2150 = vmax.f32 %v1851, 0.0
        %v2151 = vmax.f32 %v1853, 0.0
        %v2152 = vmax.f32 %v1904, 0.0
        %v2153 = vmax.f32 %v1906, 0.0
        %v2154 = vmax.f32 %v1957, 0.0
        %v2155 = vmax.f32 %v1959, 0.0
        %v2156 = vmax.f32 %v2010, 0.0
        %v2157 = vmax.f32 %v2012, 0.0
        %v2158 = vpack.c.bf16 %v2050, %v2014
        %v2159 = vpack.c.bf16 %v2051, %v2015
        %v2160 = vpack.c.bf16 %v2052, %v2016
        %v2161 = vpack.c.bf16 %v2053, %v2017
        %v2162 = vpack.c.bf16 %v2054, %v2018
        %v2163 = vpack.c.bf16 %v2055, %v2019
        %v2164 = vpack.c.bf16 %v2056, %v2020
        %v2165 = vpack.c.bf16 %v2057, %v2021
        %v2166 = vpack.c.bf16 %v2058, %v2022
        %v2167 = vpack.c.bf16 %v2059, %v2023
        %v2168 = vpack.c.bf16 %v2060, %v2024
        %v2169 = vpack.c.bf16 %v2061, %v2025
        %v2170 = vpack.c.bf16 %v2062, %v2026
        %v2171 = vpack.c.bf16 %v2063, %v2027
        %v2172 = vpack.c.bf16 %v2064, %v2028
        %v2173 = vpack.c.bf16 %v2065, %v2029
        %v2174 = vpack.c.bf16 %v2066, %v2030
        %v2175 = vpack.c.bf16 %v2067, %v2031
        %v2176 = vpack.c.bf16 %v2068, %v2032
        %v2177 = vpack.c.bf16 %v2069, %v2033
        %v2178 = vpack.c.bf16 %v2070, %v2034
        %v2179 = vpack.c.bf16 %v2071, %v2035
        %v2180 = vpack.c.bf16 %v2072, %v2036
        %v2181 = vpack.c.bf16 %v2073, %v2037
        %v2182 = vpack.c.bf16 %v2074, %v2038
        %v2183 = vpack.c.bf16 %v2075, %v2039
        %v2184 = vpack.c.bf16 %v2076, %v2040
        %v2185 = vpack.c.bf16 %v2077, %v2041
        %v2186 = vpack.c.bf16 %v2078, %v2042
        %v2187 = vpack.c.bf16 %v2079, %v2043
        %v2188 = vpack.c.bf16 %v2080, %v2044
        %v2189 = vpack.c.bf16 %v2081, %v2045
        %v2190 = vpack.c.bf16 %v2082, %v2046
        %v2191 = vpack.c.bf16 %v2083, %v2047
        %v2192 = vpack.c.bf16 %v2084, %v2048
        %v2193 = vpack.c.bf16 %v2085, %v2049
        %v2194 = vpack.c.bf16 %v2122, %v2086
        %v2195 = vpack.c.bf16 %v2123, %v2087
        %v2196 = vpack.c.bf16 %v2124, %v2088
        %v2197 = vpack.c.bf16 %v2125, %v2089
        %v2198 = vpack.c.bf16 %v2126, %v2090
        %v2199 = vpack.c.bf16 %v2127, %v2091
        %v2200 = vpack.c.bf16 %v2128, %v2092
        %v2201 = vpack.c.bf16 %v2129, %v2093
        %v2202 = vpack.c.bf16 %v2130, %v2094
        %v2203 = vpack.c.bf16 %v2131, %v2095
        %v2204 = vpack.c.bf16 %v2132, %v2096
        %v2205 = vpack.c.bf16 %v2133, %v2097
        %v2206 = vpack.c.bf16 %v2134, %v2098
        %v2207 = vpack.c.bf16 %v2135, %v2099
        %v2208 = vpack.c.bf16 %v2136, %v2100
        %v2209 = vpack.c.bf16 %v2137, %v2101
        %v2210 = vpack.c.bf16 %v2138, %v2102
        %v2211 = vpack.c.bf16 %v2139, %v2103
        %v2212 = vpack.c.bf16 %v2140, %v2104
        %v2213 = vpack.c.bf16 %v2141, %v2105
        %v2214 = vpack.c.bf16 %v2142, %v2106
        %v2215 = vpack.c.bf16 %v2143, %v2107
        %v2216 = vpack.c.bf16 %v2144, %v2108
        %v2217 = vpack.c.bf16 %v2145, %v2109
        %v2218 = vpack.c.bf16 %v2146, %v2110
        %v2219 = vpack.c.bf16 %v2147, %v2111
        %v2220 = vpack.c.bf16 %v2148, %v2112
        %v2221 = vpack.c.bf16 %v2149, %v2113
        %v2222 = vpack.c.bf16 %v2150, %v2114
        %v2223 = vpack.c.bf16 %v2151, %v2115
        %v2224 = vpack.c.bf16 %v2152, %v2116
        %v2225 = vpack.c.bf16 %v2153, %v2117
        %v2226 = vpack.c.bf16 %v2154, %v2118
        %v2227 = vpack.c.bf16 %v2155, %v2119
        %v2228 = vpack.c.bf16 %v2156, %v2120
        %v2229 = vpack.c.bf16 %v2157, %v2121
        %v2302 = vunpack.c.l.b16 %v2158
        %v2303 = vunpack.c.l.b16 %v2159
        %v2304 = vunpack.c.l.b16 %v2160
        %v2305 = vunpack.c.l.b16 %v2161
        %v2306 = vunpack.c.l.b16 %v2162
        %v2307 = vunpack.c.l.b16 %v2163
        %v2308 = vunpack.c.l.b16 %v2164
        %v2309 = vunpack.c.l.b16 %v2165
        %v2310 = vunpack.c.l.b16 %v2166
        %v2311 = vunpack.c.l.b16 %v2167
        %v2312 = vunpack.c.l.b16 %v2168
        %v2313 = vunpack.c.l.b16 %v2169
        %v2314 = vunpack.c.l.b16 %v2170
        %v2315 = vunpack.c.l.b16 %v2171
        %v2316 = vunpack.c.l.b16 %v2172
        %v2317 = vunpack.c.l.b16 %v2173
        %v2318 = vunpack.c.l.b16 %v2174
        %v2319 = vunpack.c.l.b16 %v2175
        %v2320 = vunpack.c.l.b16 %v2176
        %v2321 = vunpack.c.l.b16 %v2177
        %v2322 = vunpack.c.l.b16 %v2178
        %v2323 = vunpack.c.l.b16 %v2179
        %v2324 = vunpack.c.l.b16 %v2180
        %v2325 = vunpack.c.l.b16 %v2181
        %v2326 = vunpack.c.l.b16 %v2182
        %v2327 = vunpack.c.l.b16 %v2183
        %v2328 = vunpack.c.l.b16 %v2184
        %v2329 = vunpack.c.l.b16 %v2185
        %v2330 = vunpack.c.l.b16 %v2186
        %v2331 = vunpack.c.l.b16 %v2187
        %v2332 = vunpack.c.l.b16 %v2188
        %v2333 = vunpack.c.l.b16 %v2189
        %v2334 = vunpack.c.l.b16 %v2190
        %v2335 = vunpack.c.l.b16 %v2191
        %v2336 = vunpack.c.l.b16 %v2192
        %v2337 = vunpack.c.l.b16 %v2193
        %v2338 = vunpack.c.h.b16 %v2158
        %v2339 = vunpack.c.h.b16 %v2159
        %v2340 = vunpack.c.h.b16 %v2160
        %v2341 = vunpack.c.h.b16 %v2161
        %v2342 = vunpack.c.h.b16 %v2162
        %v2343 = vunpack.c.h.b16 %v2163
        %v2344 = vunpack.c.h.b16 %v2164
        %v2345 = vunpack.c.h.b16 %v2165
        %v2346 = vunpack.c.h.b16 %v2166
        %v2347 = vunpack.c.h.b16 %v2167
        %v2348 = vunpack.c.h.b16 %v2168
        %v2349 = vunpack.c.h.b16 %v2169
        %v2350 = vunpack.c.h.b16 %v2170
        %v2351 = vunpack.c.h.b16 %v2171
        %v2352 = vunpack.c.h.b16 %v2172
        %v2353 = vunpack.c.h.b16 %v2173
        %v2354 = vunpack.c.h.b16 %v2174
        %v2355 = vunpack.c.h.b16 %v2175
        %v2356 = vunpack.c.h.b16 %v2176
        %v2357 = vunpack.c.h.b16 %v2177
        %v2358 = vunpack.c.h.b16 %v2178
        %v2359 = vunpack.c.h.b16 %v2179
        %v2360 = vunpack.c.h.b16 %v2180
        %v2361 = vunpack.c.h.b16 %v2181
        %v2362 = vunpack.c.h.b16 %v2182
        %v2363 = vunpack.c.h.b16 %v2183
        %v2364 = vunpack.c.h.b16 %v2184
        %v2365 = vunpack.c.h.b16 %v2185
        %v2366 = vunpack.c.h.b16 %v2186
        %v2367 = vunpack.c.h.b16 %v2187
        %v2368 = vunpack.c.h.b16 %v2188
        %v2369 = vunpack.c.h.b16 %v2189
        %v2370 = vunpack.c.h.b16 %v2190
        %v2371 = vunpack.c.h.b16 %v2191
        %v2372 = vunpack.c.h.b16 %v2192
        %v2373 = vunpack.c.h.b16 %v2193
        %v2374 = vunpack.c.l.b16 %v2194
        %v2375 = vunpack.c.l.b16 %v2195
        %v2376 = vunpack.c.l.b16 %v2196
        %v2377 = vunpack.c.l.b16 %v2197
        %v2378 = vunpack.c.l.b16 %v2198
        %v2379 = vunpack.c.l.b16 %v2199
        %v2380 = vunpack.c.l.b16 %v2200
        %v2381 = vunpack.c.l.b16 %v2201
        %v2382 = vunpack.c.l.b16 %v2202
        %v2383 = vunpack.c.l.b16 %v2203
        %v2384 = vunpack.c.l.b16 %v2204
        %v2385 = vunpack.c.l.b16 %v2205
        %v2386 = vunpack.c.l.b16 %v2206
        %v2387 = vunpack.c.l.b16 %v2207
        %v2388 = vunpack.c.l.b16 %v2208
        %v2389 = vunpack.c.l.b16 %v2209
        %v2390 = vunpack.c.l.b16 %v2210
        %v2391 = vunpack.c.l.b16 %v2211
        %v2392 = vunpack.c.l.b16 %v2212
        %v2393 = vunpack.c.l.b16 %v2213
        %v2394 = vunpack.c.l.b16 %v2214
        %v2395 = vunpack.c.l.b16 %v2215
        %v2396 = vunpack.c.l.b16 %v2216
        %v2397 = vunpack.c.l.b16 %v2217
        %v2398 = vunpack.c.l.b16 %v2218
        %v2399 = vunpack.c.l.b16 %v2219
        %v2400 = vunpack.c.l.b16 %v2220
        %v2401 = vunpack.c.l.b16 %v2221
        %v2402 = vunpack.c.l.b16 %v2222
        %v2403 = vunpack.c.l.b16 %v2223
        %v2404 = vunpack.c.l.b16 %v2224
        %v2405 = vunpack.c.l.b16 %v2225
        %v2406 = vunpack.c.l.b16 %v2226
        %v2407 = vunpack.c.l.b16 %v2227
        %v2408 = vunpack.c.l.b16 %v2228
        %v2409 = vunpack.c.l.b16 %v2229
        %v2410 = vunpack.c.h.b16 %v2194
        %v2411 = vunpack.c.h.b16 %v2195
        %v2412 = vunpack.c.h.b16 %v2196
        %v2413 = vunpack.c.h.b16 %v2197
        %v2414 = vunpack.c.h.b16 %v2198
        %v2415 = vunpack.c.h.b16 %v2199
        %v2416 = vunpack.c.h.b16 %v2200
        %v2417 = vunpack.c.h.b16 %v2201
        %v2418 = vunpack.c.h.b16 %v2202
        %v2419 = vunpack.c.h.b16 %v2203
        %v2420 = vunpack.c.h.b16 %v2204
        %v2421 = vunpack.c.h.b16 %v2205
        %v2422 = vunpack.c.h.b16 %v2206
        %v2423 = vunpack.c.h.b16 %v2207
        %v2424 = vunpack.c.h.b16 %v2208
        %v2425 = vunpack.c.h.b16 %v2209
        %v2426 = vunpack.c.h.b16 %v2210
        %v2427 = vunpack.c.h.b16 %v2211
        %v2428 = vunpack.c.h.b16 %v2212
        %v2429 = vunpack.c.h.b16 %v2213
        %v2430 = vunpack.c.h.b16 %v2214
        %v2431 = vunpack.c.h.b16 %v2215
        %v2432 = vunpack.c.h.b16 %v2216
        %v2433 = vunpack.c.h.b16 %v2217
        %v2434 = vunpack.c.h.b16 %v2218
        %v2435 = vunpack.c.h.b16 %v2219
        %v2436 = vunpack.c.h.b16 %v2220
        %v2437 = vunpack.c.h.b16 %v2221
        %v2438 = vunpack.c.h.b16 %v2222
        %v2439 = vunpack.c.h.b16 %v2223
        %v2440 = vunpack.c.h.b16 %v2224
        %v2441 = vunpack.c.h.b16 %v2225
        %v2442 = vunpack.c.h.b16 %v2226
        %v2443 = vunpack.c.h.b16 %v2227
        %v2444 = vunpack.c.h.b16 %v2228
        %v2445 = vunpack.c.h.b16 %v2229
        %v2446 = vpack.c.b16 %v2303, %v2302
        %v2447 = vpack.c.b16 %v2305, %v2304
        %v2448 = vpack.c.b16 %v2307, %v2306
        %v2449 = vpack.c.b16 %v2309, %v2308
        %v2450 = vpack.c.b16 %v2311, %v2310
        %v2451 = vpack.c.b16 %v2313, %v2312
        %v2452 = vpack.c.b16 %v2315, %v2314
        %v2453 = vpack.c.b16 %v2317, %v2316
        %v2454 = vpack.c.b16 %v2319, %v2318
        %v2455 = vpack.c.b16 %v2321, %v2320
        %v2456 = vpack.c.b16 %v2323, %v2322
        %v2457 = vpack.c.b16 %v2325, %v2324
        %v2458 = vpack.c.b16 %v2327, %v2326
        %v2459 = vpack.c.b16 %v2329, %v2328
        %v2460 = vpack.c.b16 %v2331, %v2330
        %v2461 = vpack.c.b16 %v2333, %v2332
        %v2462 = vpack.c.b16 %v2335, %v2334
        %v2463 = vpack.c.b16 %v2337, %v2336
        %v2464 = vpack.c.b16 %v2339, %v2338
        %v2465 = vpack.c.b16 %v2341, %v2340
        %v2466 = vpack.c.b16 %v2343, %v2342
        %v2467 = vpack.c.b16 %v2345, %v2344
        %v2468 = vpack.c.b16 %v2347, %v2346
        %v2469 = vpack.c.b16 %v2349, %v2348
        %v2470 = vpack.c.b16 %v2351, %v2350
        %v2471 = vpack.c.b16 %v2353, %v2352
        %v2472 = vpack.c.b16 %v2355, %v2354
        %v2473 = vpack.c.b16 %v2357, %v2356
        %v2474 = vpack.c.b16 %v2359, %v2358
        %v2475 = vpack.c.b16 %v2361, %v2360
        %v2476 = vpack.c.b16 %v2363, %v2362
        %v2477 = vpack.c.b16 %v2365, %v2364
        %v2478 = vpack.c.b16 %v2367, %v2366
        %v2479 = vpack.c.b16 %v2369, %v2368
        %v2480 = vpack.c.b16 %v2371, %v2370
        %v2481 = vpack.c.b16 %v2373, %v2372
        %v2482 = vpack.c.b16 %v2375, %v2374
        %v2483 = vpack.c.b16 %v2377, %v2376
        %v2484 = vpack.c.b16 %v2379, %v2378
        %v2485 = vpack.c.b16 %v2381, %v2380
        %v2486 = vpack.c.b16 %v2383, %v2382
        %v2487 = vpack.c.b16 %v2385, %v2384
        %v2488 = vpack.c.b16 %v2387, %v2386
        %v2489 = vpack.c.b16 %v2389, %v2388
        %v2490 = vpack.c.b16 %v2391, %v2390
        %v2491 = vpack.c.b16 %v2393, %v2392
        %v2492 = vpack.c.b16 %v2395, %v2394
        %v2493 = vpack.c.b16 %v2397, %v2396
        %v2494 = vpack.c.b16 %v2399, %v2398
        %v2495 = vpack.c.b16 %v2401, %v2400
        %v2496 = vpack.c.b16 %v2403, %v2402
        %v2497 = vpack.c.b16 %v2405, %v2404
        %v2498 = vpack.c.b16 %v2407, %v2406
        %v2499 = vpack.c.b16 %v2409, %v2408
        %v2500 = vpack.c.b16 %v2411, %v2410
        %v2501 = vpack.c.b16 %v2413, %v2412
        %v2502 = vpack.c.b16 %v2415, %v2414
        %v2503 = vpack.c.b16 %v2417, %v2416
        %v2504 = vpack.c.b16 %v2419, %v2418
        %v2505 = vpack.c.b16 %v2421, %v2420
        %v2506 = vpack.c.b16 %v2423, %v2422
        %v2507 = vpack.c.b16 %v2425, %v2424
        %v2508 = vpack.c.b16 %v2427, %v2426
        %v2509 = vpack.c.b16 %v2429, %v2428
        %v2510 = vpack.c.b16 %v2431, %v2430
        %v2511 = vpack.c.b16 %v2433, %v2432
        %v2512 = vpack.c.b16 %v2435, %v2434
        %v2513 = vpack.c.b16 %v2437, %v2436
        %v2514 = vpack.c.b16 %v2439, %v2438
        %v2515 = vpack.c.b16 %v2441, %v2440
        %v2516 = vpack.c.b16 %v2443, %v2442
        %v2517 = vpack.c.b16 %v2445, %v2444
        %2590 = vst [vmem:[%s362] sm:$0xff] %v2446
        %2591 = vst [vmem:[%s362 + $0x8] sm:$0xff] %v2447
        %2592 = vst [vmem:[%s362 + $0x10] sm:$0xff] %v2448
        %2593 = vst [vmem:[%s362 + $0x18] sm:$0xff] %v2449
        %2594 = vst [vmem:[%s362 + $0x20] sm:$0xff] %v2450
        %2595 = vst [vmem:[%s362 + $0x28] sm:$0xff] %v2451
        %2596 = vst [vmem:[%s362 + $0x30] sm:$0xff] %v2452
        %2597 = vst [vmem:[%s362 + $0x38] sm:$0xff] %v2453
        %2598 = vst [vmem:[%s362 + $0x40] sm:$0xff] %v2454
        %2599 = vst [vmem:[%s362 + $0x48] sm:$0xff] %v2455
        %2600 = vst [vmem:[%s362 + $0x50] sm:$0xff] %v2456
        %2601 = vst [vmem:[%s362 + $0x58] sm:$0xff] %v2457
        %2602 = vst [vmem:[%s362 + $0x60] sm:$0xff] %v2458
        %2603 = vst [vmem:[%s362 + $0x68] sm:$0xff] %v2459
        %2604 = vst [vmem:[%s362 + $0x70] sm:$0xff] %v2460
        %2605 = vst [vmem:[%s362 + $0x78] sm:$0xff] %v2461
        %2606 = vst [vmem:[%s362 + $0x80] sm:$0xff] %v2462
        %2607 = vst [vmem:[%s362 + $0x88] sm:$0xff] %v2463
        %2608 = vst [vmem:[%s362 + $0x90] sm:$0xff] %v2464
        %2609 = vst [vmem:[%s362 + $0x98] sm:$0xff] %v2465
        %2610 = vst [vmem:[%s362 + $0xa0] sm:$0xff] %v2466
        %2611 = vst [vmem:[%s362 + $0xa8] sm:$0xff] %v2467
        %2612 = vst [vmem:[%s362 + $0xb0] sm:$0xff] %v2468
        %2613 = vst [vmem:[%s362 + $0xb8] sm:$0xff] %v2469
        %2614 = vst [vmem:[%s362 + $0xc0] sm:$0xff] %v2470
        %2615 = vst [vmem:[%s362 + $0xc8] sm:$0xff] %v2471
        %2616 = vst [vmem:[%s362 + $0xd0] sm:$0xff] %v2472
        %2617 = vst [vmem:[%s362 + $0xd8] sm:$0xff] %v2473
        %2618 = vst [vmem:[%s362 + $0xe0] sm:$0xff] %v2474
        %2619 = vst [vmem:[%s362 + $0xe8] sm:$0xff] %v2475
        %2620 = vst [vmem:[%s362 + $0xf0] sm:$0xff] %v2476
        %2621 = vst [vmem:[%s362 + $0xf8] sm:$0xff] %v2477
        %2622 = vst [vmem:[%s362 + $0x100] sm:$0xff] %v2478
        %2623 = vst [vmem:[%s362 + $0x108] sm:$0xff] %v2479
        %2624 = vst [vmem:[%s362 + $0x110] sm:$0xff] %v2480
        %2625 = vst [vmem:[%s362 + $0x118] sm:$0xff] %v2481
        %2626 = vst [vmem:[%s362 + $0x120] sm:$0xff] %v2482
        %2627 = vst [vmem:[%s362 + $0x128] sm:$0xff] %v2483
        %2628 = vst [vmem:[%s362 + $0x130] sm:$0xff] %v2484
        %2629 = vst [vmem:[%s362 + $0x138] sm:$0xff] %v2485
        %2630 = vst [vmem:[%s362 + $0x140] sm:$0xff] %v2486
        %2631 = vst [vmem:[%s362 + $0x148] sm:$0xff] %v2487
        %2632 = vst [vmem:[%s362 + $0x150] sm:$0xff] %v2488
        %2633 = vst [vmem:[%s362 + $0x158] sm:$0xff] %v2489
        %2634 = vst [vmem:[%s362 + $0x160] sm:$0xff] %v2490
        %2635 = vst [vmem:[%s362 + $0x168] sm:$0xff] %v2491
        %2636 = vst [vmem:[%s362 + $0x170] sm:$0xff] %v2492
        %2637 = vst [vmem:[%s362 + $0x178] sm:$0xff] %v2493
        %2638 = vst [vmem:[%s362 + $0x180] sm:$0xff] %v2494
        %2639 = vst [vmem:[%s362 + $0x188] sm:$0xff] %v2495
        %2640 = vst [vmem:[%s362 + $0x190] sm:$0xff] %v2496
        %2641 = vst [vmem:[%s362 + $0x198] sm:$0xff] %v2497
        %2642 = vst [vmem:[%s362 + $0x1a0] sm:$0xff] %v2498
        %2643 = vst [vmem:[%s362 + $0x1a8] sm:$0xff] %v2499
        %2644 = vst [vmem:[%s362 + $0x1b0] sm:$0xff] %v2500
        %2645 = vst [vmem:[%s362 + $0x1b8] sm:$0xff] %v2501
        %2646 = vst [vmem:[%s362 + $0x1c0] sm:$0xff] %v2502
        %2647 = vst [vmem:[%s362 + $0x1c8] sm:$0xff] %v2503
        %2648 = vst [vmem:[%s362 + $0x1d0] sm:$0xff] %v2504
        %2649 = vst [vmem:[%s362 + $0x1d8] sm:$0xff] %v2505
        %2650 = vst [vmem:[%s362 + $0x1e0] sm:$0xff] %v2506
        %2651 = vst [vmem:[%s362 + $0x1e8] sm:$0xff] %v2507
        %2652 = vst [vmem:[%s362 + $0x1f0] sm:$0xff] %v2508
        %2653 = vst [vmem:[%s362 + $0x1f8] sm:$0xff] %v2509
        %2654 = vst [vmem:[%s362 + $0x200] sm:$0xff] %v2510
        %2655 = vst [vmem:[%s362 + $0x208] sm:$0xff] %v2511
        %2656 = vst [vmem:[%s362 + $0x210] sm:$0xff] %v2512
        %2657 = vst [vmem:[%s362 + $0x218] sm:$0xff] %v2513
        %2658 = vst [vmem:[%s362 + $0x220] sm:$0xff] %v2514
        %2659 = vst [vmem:[%s362 + $0x228] sm:$0xff] %v2515
        %2660 = vst [vmem:[%s362 + $0x230] sm:$0xff] %v2516
        %2661 = vst [vmem:[%s362 + $0x238] sm:$0xff] %v2517
        %s2662 = sand.u32 %s90, 1
        %s2663 = sand.u32 %s90, 1
        %s2664 = smul.addr %s2663, 576
        %s2665 = scalar_lea.vmem [#allocation3], %s2664
        // Predicated region
        $region56: #{forward.5} parent=50 // pred_check
          %p2666 = pneg %p100
        $region57: #{forward.5} parent=50 // pred_check_branch
          %2668 = sbr.rel (%p2666) target = $region59
        $region58: #{forward.5} parent=50 // pred_region
          %s2669 = smul.u32 36, %s14
          %s2670 = smul.addr %s2669, 4
          %s2671 = scalar_lea.vmem %s3, %s2670
          // Predicated region
          $region60: #{forward.5} parent=58 // pred_check
            _
          $region61: #{forward.5} parent=58 // pred_check_branch
            %2673 = sbr.rel (0) target = $region63
          $region62: #{forward.5} parent=58 // pred_region
            // Predicated region
            $region64: #{forward.5} parent=62 // pred_check
              _
            $region65: #{forward.5} parent=62 // pred_check_branch
              %2675 = sbr.rel (0) target = $region67
            $region66: #{forward.5} parent=62 // pred_region
              loop: start=0, step=1, limit=1
              $region68: #{forward.5} parent=66 // loop_pre_header
                _
              $region69: #{forward.5} parent=66 // loop_header
                %s2677 = sphi 0, %s2681
                %p2678 = scmp.ge.s32.totalorder %s2677, 1
                %s2682 = sphi %s2665, %s2665
                %s2683 = sphi %s2671, %s2671
              $region70: #{forward.5} parent=66 // loop_header_branch
                %2680 = sbr.rel (%p2678) target = $region74
              $region71: #{forward.5} parent=66 // loop_body
                %v2684 = vld [vmem:[%s2682] sm:$0xff]
                %2685 = vst [vmem:[%s2683] sm:$0xff] %v2684
                %v2686 = vld [vmem:[%s2682 + $0x8] sm:$0xff]
                %2687 = vst [vmem:[%s2683 + $0x8] sm:$0xff] %v2686
                %v2688 = vld [vmem:[%s2682 + $0x10] sm:$0xff]
                %2689 = vst [vmem:[%s2683 + $0x10] sm:$0xff] %v2688
                %v2690 = vld [vmem:[%s2682 + $0x18] sm:$0xff]
                %2691 = vst [vmem:[%s2683 + $0x18] sm:$0xff] %v2690
                %v2692 = vld [vmem:[%s2682 + $0x20] sm:$0xff]
                %2693 = vst [vmem:[%s2683 + $0x20] sm:$0xff] %v2692
                %v2694 = vld [vmem:[%s2682 + $0x28] sm:$0xff]
                %2695 = vst [vmem:[%s2683 + $0x28] sm:$0xff] %v2694
                %v2696 = vld [vmem:[%s2682 + $0x30] sm:$0xff]
                %2697 = vst [vmem:[%s2683 + $0x30] sm:$0xff] %v2696
                %v2698 = vld [vmem:[%s2682 + $0x38] sm:$0xff]
                %2699 = vst [vmem:[%s2683 + $0x38] sm:$0xff] %v2698
                %v2700 = vld [vmem:[%s2682 + $0x40] sm:$0xff]
                %2701 = vst [vmem:[%s2683 + $0x40] sm:$0xff] %v2700
                %v2702 = vld [vmem:[%s2682 + $0x48] sm:$0xff]
                %2703 = vst [vmem:[%s2683 + $0x48] sm:$0xff] %v2702
                %v2704 = vld [vmem:[%s2682 + $0x50] sm:$0xff]
                %2705 = vst [vmem:[%s2683 + $0x50] sm:$0xff] %v2704
                %v2706 = vld [vmem:[%s2682 + $0x58] sm:$0xff]
                %2707 = vst [vmem:[%s2683 + $0x58] sm:$0xff] %v2706
                %v2708 = vld [vmem:[%s2682 + $0x60] sm:$0xff]
                %2709 = vst [vmem:[%s2683 + $0x60] sm:$0xff] %v2708
                %v2710 = vld [vmem:[%s2682 + $0x68] sm:$0xff]
                %2711 = vst [vmem:[%s2683 + $0x68] sm:$0xff] %v2710
                %v2712 = vld [vmem:[%s2682 + $0x70] sm:$0xff]
                %2713 = vst [vmem:[%s2683 + $0x70] sm:$0xff] %v2712
                %v2714 = vld [vmem:[%s2682 + $0x78] sm:$0xff]
                %2715 = vst [vmem:[%s2683 + $0x78] sm:$0xff] %v2714
                %v2716 = vld [vmem:[%s2682 + $0x80] sm:$0xff]
                %2717 = vst [vmem:[%s2683 + $0x80] sm:$0xff] %v2716
                %v2718 = vld [vmem:[%s2682 + $0x88] sm:$0xff]
                %2719 = vst [vmem:[%s2683 + $0x88] sm:$0xff] %v2718
                %v2720 = vld [vmem:[%s2682 + $0x90] sm:$0xff]
                %2721 = vst [vmem:[%s2683 + $0x120] sm:$0xff] %v2720
                %v2722 = vld [vmem:[%s2682 + $0x98] sm:$0xff]
                %2723 = vst [vmem:[%s2683 + $0x128] sm:$0xff] %v2722
                %v2724 = vld [vmem:[%s2682 + $0xa0] sm:$0xff]
                %2725 = vst [vmem:[%s2683 + $0x130] sm:$0xff] %v2724
                %v2726 = vld [vmem:[%s2682 + $0xa8] sm:$0xff]
                %2727 = vst [vmem:[%s2683 + $0x138] sm:$0xff] %v2726
                %v2728 = vld [vmem:[%s2682 + $0xb0] sm:$0xff]
                %2729 = vst [vmem:[%s2683 + $0x140] sm:$0xff] %v2728
                %v2730 = vld [vmem:[%s2682 + $0xb8] sm:$0xff]
                %2731 = vst [vmem:[%s2683 + $0x148] sm:$0xff] %v2730
                %v2732 = vld [vmem:[%s2682 + $0xc0] sm:$0xff]
                %2733 = vst [vmem:[%s2683 + $0x150] sm:$0xff] %v2732
                %v2734 = vld [vmem:[%s2682 + $0xc8] sm:$0xff]
                %2735 = vst [vmem:[%s2683 + $0x158] sm:$0xff] %v2734
                %v2736 = vld [vmem:[%s2682 + $0xd0] sm:$0xff]
                %2737 = vst [vmem:[%s2683 + $0x160] sm:$0xff] %v2736
                %v2738 = vld [vmem:[%s2682 + $0xd8] sm:$0xff]
                %2739 = vst [vmem:[%s2683 + $0x168] sm:$0xff] %v2738
                %v2740 = vld [vmem:[%s2682 + $0xe0] sm:$0xff]
                %2741 = vst [vmem:[%s2683 + $0x170] sm:$0xff] %v2740
                %v2742 = vld [vmem:[%s2682 + $0xe8] sm:$0xff]
                %2743 = vst [vmem:[%s2683 + $0x178] sm:$0xff] %v2742
                %v2744 = vld [vmem:[%s2682 + $0xf0] sm:$0xff]
                %2745 = vst [vmem:[%s2683 + $0x180] sm:$0xff] %v2744
                %v2746 = vld [vmem:[%s2682 + $0xf8] sm:$0xff]
                %2747 = vst [vmem:[%s2683 + $0x188] sm:$0xff] %v2746
                %v2748 = vld [vmem:[%s2682 + $0x100] sm:$0xff]
                %2749 = vst [vmem:[%s2683 + $0x190] sm:$0xff] %v2748
                %v2750 = vld [vmem:[%s2682 + $0x108] sm:$0xff]
                %2751 = vst [vmem:[%s2683 + $0x198] sm:$0xff] %v2750
                %v2752 = vld [vmem:[%s2682 + $0x110] sm:$0xff]
                %2753 = vst [vmem:[%s2683 + $0x1a0] sm:$0xff] %v2752
                %v2754 = vld [vmem:[%s2682 + $0x118] sm:$0xff]
                %2755 = vst [vmem:[%s2683 + $0x1a8] sm:$0xff] %v2754
                %v2756 = vld [vmem:[%s2682 + $0x120] sm:$0xff]
                %2757 = vst [vmem:[%s2683 + $0x240] sm:$0xff] %v2756
                %v2758 = vld [vmem:[%s2682 + $0x128] sm:$0xff]
                %2759 = vst [vmem:[%s2683 + $0x248] sm:$0xff] %v2758
                %v2760 = vld [vmem:[%s2682 + $0x130] sm:$0xff]
                %2761 = vst [vmem:[%s2683 + $0x250] sm:$0xff] %v2760
                %v2762 = vld [vmem:[%s2682 + $0x138] sm:$0xff]
                %2763 = vst [vmem:[%s2683 + $0x258] sm:$0xff] %v2762
                %v2764 = vld [vmem:[%s2682 + $0x140] sm:$0xff]
                %2765 = vst [vmem:[%s2683 + $0x260] sm:$0xff] %v2764
                %v2766 = vld [vmem:[%s2682 + $0x148] sm:$0xff]
                %2767 = vst [vmem:[%s2683 + $0x268] sm:$0xff] %v2766
                %v2768 = vld [vmem:[%s2682 + $0x150] sm:$0xff]
                %2769 = vst [vmem:[%s2683 + $0x270] sm:$0xff] %v2768
                %v2770 = vld [vmem:[%s2682 + $0x158] sm:$0xff]
                %2771 = vst [vmem:[%s2683 + $0x278] sm:$0xff] %v2770
                %v2772 = vld [vmem:[%s2682 + $0x160] sm:$0xff]
                %2773 = vst [vmem:[%s2683 + $0x280] sm:$0xff] %v2772
                %v2774 = vld [vmem:[%s2682 + $0x168] sm:$0xff]
                %2775 = vst [vmem:[%s2683 + $0x288] sm:$0xff] %v2774
                %v2776 = vld [vmem:[%s2682 + $0x170] sm:$0xff]
                %2777 = vst [vmem:[%s2683 + $0x290] sm:$0xff] %v2776
                %v2778 = vld [vmem:[%s2682 + $0x178] sm:$0xff]
                %2779 = vst [vmem:[%s2683 + $0x298] sm:$0xff] %v2778
                %v2780 = vld [vmem:[%s2682 + $0x180] sm:$0xff]
                %2781 = vst [vmem:[%s2683 + $0x2a0] sm:$0xff] %v2780
                %v2782 = vld [vmem:[%s2682 + $0x188] sm:$0xff]
                %2783 = vst [vmem:[%s2683 + $0x2a8] sm:$0xff] %v2782
                %v2784 = vld [vmem:[%s2682 + $0x190] sm:$0xff]
                %2785 = vst [vmem:[%s2683 + $0x2b0] sm:$0xff] %v2784
                %v2786 = vld [vmem:[%s2682 + $0x198] sm:$0xff]
                %2787 = vst [vmem:[%s2683 + $0x2b8] sm:$0xff] %v2786
                %v2788 = vld [vmem:[%s2682 + $0x1a0] sm:$0xff]
                %2789 = vst [vmem:[%s2683 + $0x2c0] sm:$0xff] %v2788
                %v2790 = vld [vmem:[%s2682 + $0x1a8] sm:$0xff]
                %2791 = vst [vmem:[%s2683 + $0x2c8] sm:$0xff] %v2790
                %v2792 = vld [vmem:[%s2682 + $0x1b0] sm:$0xff]
                %2793 = vst [vmem:[%s2683 + $0x360] sm:$0xff] %v2792
                %v2794 = vld [vmem:[%s2682 + $0x1b8] sm:$0xff]
                %2795 = vst [vmem:[%s2683 + $0x368] sm:$0xff] %v2794
                %v2796 = vld [vmem:[%s2682 + $0x1c0] sm:$0xff]
                %2797 = vst [vmem:[%s2683 + $0x370] sm:$0xff] %v2796
                %v2798 = vld [vmem:[%s2682 + $0x1c8] sm:$0xff]
                %2799 = vst [vmem:[%s2683 + $0x378] sm:$0xff] %v2798
                %v2800 = vld [vmem:[%s2682 + $0x1d0] sm:$0xff]
                %2801 = vst [vmem:[%s2683 + $0x380] sm:$0xff] %v2800
                %v2802 = vld [vmem:[%s2682 + $0x1d8] sm:$0xff]
                %2803 = vst [vmem:[%s2683 + $0x388] sm:$0xff] %v2802
                %v2804 = vld [vmem:[%s2682 + $0x1e0] sm:$0xff]
                %2805 = vst [vmem:[%s2683 + $0x390] sm:$0xff] %v2804
                %v2806 = vld [vmem:[%s2682 + $0x1e8] sm:$0xff]
                %2807 = vst [vmem:[%s2683 + $0x398] sm:$0xff] %v2806
                %v2808 = vld [vmem:[%s2682 + $0x1f0] sm:$0xff]
                %2809 = vst [vmem:[%s2683 + $0x3a0] sm:$0xff] %v2808
                %v2810 = vld [vmem:[%s2682 + $0x1f8] sm:$0xff]
                %2811 = vst [vmem:[%s2683 + $0x3a8] sm:$0xff] %v2810
                %v2812 = vld [vmem:[%s2682 + $0x200] sm:$0xff]
                %2813 = vst [vmem:[%s2683 + $0x3b0] sm:$0xff] %v2812
                %v2814 = vld [vmem:[%s2682 + $0x208] sm:$0xff]
                %2815 = vst [vmem:[%s2683 + $0x3b8] sm:$0xff] %v2814
                %v2816 = vld [vmem:[%s2682 + $0x210] sm:$0xff]
                %2817 = vst [vmem:[%s2683 + $0x3c0] sm:$0xff] %v2816
                %v2818 = vld [vmem:[%s2682 + $0x218] sm:$0xff]
                %2819 = vst [vmem:[%s2683 + $0x3c8] sm:$0xff] %v2818
                %v2820 = vld [vmem:[%s2682 + $0x220] sm:$0xff]
                %2821 = vst [vmem:[%s2683 + $0x3d0] sm:$0xff] %v2820
                %v2822 = vld [vmem:[%s2682 + $0x228] sm:$0xff]
                %2823 = vst [vmem:[%s2683 + $0x3d8] sm:$0xff] %v2822
                %v2824 = vld [vmem:[%s2682 + $0x230] sm:$0xff]
                %2825 = vst [vmem:[%s2683 + $0x3e0] sm:$0xff] %v2824
                %v2826 = vld [vmem:[%s2682 + $0x238] sm:$0xff]
                %2827 = vst [vmem:[%s2683 + $0x3e8] sm:$0xff] %v2826
              $region72: #{forward.5} parent=66 // loop_footer
                %s2681 = sadd.s32 1, %s2677
              $region73: #{forward.5} parent=66 // loop_footer_branch
                %2676 = sbr.rel target = $region69
              $region74: #{forward.5} parent=66 // loop_exit
                _
            $region67: #{forward.5} parent=62 // pred_fallthru
              _
            // Predicated region
            $region75: #{forward.5} parent=62 // pred_check
              _
            $region76: #{forward.5} parent=62 // pred_check_branch
              %2829 = sbr.rel target = $region78
            $region77: #{forward.5} parent=62 // pred_region
              _
            $region78: #{forward.5} parent=62 // pred_fallthru
              _
          $region63: #{forward.5} parent=58 // pred_fallthru
            _
          %2830 = vnop
        $region59: #{forward.5} parent=50 // pred_fallthru
          _
      $region51: #{forward.5} parent=5 // pred_fallthru
        _
      %p2831 = scmp.le.s32.totalorder 2, %s9
      // Predicated region
      $region79: #{forward.5} parent=5 // pred_check
        %p2832 = pneg %p2831
      $region80: #{forward.5} parent=5 // pred_check_branch
        %2834 = sbr.rel (%p2832) target = $region82
      $region81: #{forward.5} parent=5 // pred_region
        %s2835 = ssub.s32 %s9, 2
        // Predicated region
        $region83: #{forward.5} parent=81 // pred_check
          %p2836 = pneg %p106
        $region84: #{forward.5} parent=81 // pred_check_branch
          %2838 = sbr.rel (%p2836) target = $region86
        $region85: #{forward.5} parent=81 // pred_region
          %s2839 = sand.u32 %s91, 1
          %s2840 = sand.u32 %s91, 1
          %s2841 = smul.addr %s2840, 576
          %s2842 = scalar_lea.vmem [#allocation3], %s2841
        $region86: #{forward.5} parent=81 // pred_fallthru
          _
      $region82: #{forward.5} parent=5 // pred_fallthru
        _
    $region6: #{forward.5} parent=1 // loop_footer
      %s13 = sadd.s32 1, %s9
    $region7: #{forward.5} parent=1 // loop_footer_branch
      %8 = sbr.rel target = $region3
    $region8: #{forward.5} parent=1 // loop_exit
      _

// kernel: forward.6
$region0: #{forward.6}
  #allocation0 [shape = 'u32[]', space=smem, size = 0x4, offset = 0x4, fixed_abs, tag = 'smem constant byte address 0x4 - core index']
  #allocation1 [shape = 'u32[144,128]{1,0:T(1,128)}', space=vmem, size = 0x12000, scoped, tag = 'internal scratch']
  %s0 = inlined_call_operand.vmem [shape: bf16[288,2304], index: 0, kind: input, shape index: {}]
  %s1 = inlined_call_operand.vmem [shape: bf16[32,288], index: 1, kind: input, shape index: {}]
  %s2 = inlined_call_operand.vmem [shape: f32[32,1], index: 2, kind: input, shape index: {}]
  %s3 = inlined_call_operand.vmem [shape: bf16[32,2304], index: 3, kind: output, shape index: {}]
  %s4 = sld [smem:[#allocation0]]
  $region93: #{forward.6} parent=0
    _
  %s6 = ssub.s32 1, %s4
  %s7 = scalar_select 0, %s6, %s4
  $region1: #{forward.6} parent=0
    #allocation2 [shape = 'u8[1327104]{0}', space=vmem, size = 0x144000, scoped, tag = 'input window, operand 0']
    #allocation3 [shape = 'u8[147456]{0}', space=vmem, size = 0x24000, scoped, tag = 'output window, operand 0']
    loop: start=0, step=1, limit=4
    $region2: #{forward.6} parent=1 // loop_pre_header
      _
    $region3: #{forward.6} parent=1 // loop_header
      %s9 = sphi 0, %s13
      %p10 = scmp.ge.s32.totalorder %s9, 4
      %s19 = sphi 0, %s21
      %s22 = sphi 0, %s19
      %s23 = sphi 0, %s22
      %s39 = sphi 0, %s23
      %s43 = sphi 0, %s43
      %s45 = sphi 0, %s43
      %s46 = sphi 0, %s45
      %s60 = sphi 0, %s46
      %s64 = sphi 0, %s64
      %s66 = sphi 0, %s64
      %s67 = sphi 0, %s66
      %s81 = sphi 0, %s67
      %s87 = sphi 0, %s89
      %s90 = sphi 0, %s87
      %s91 = sphi 0, %s90
      %s107 = sphi 0, %s91
    $region4: #{forward.6} parent=1 // loop_header_branch
      %12 = sbr.rel (%p10) target = $region8
    $region5: #{forward.6} parent=1 // loop_body
      %s14 = ssub.s32 %s9, 1
      %s15 = ssub.s32 %s9, 2
      %s16 = sadd.s32 %s9, 1
      %s17 = ssub.s32 %s9, %s16
      %p18 = scmp.eq.s32.totalorder %s17, 0
      %s20 = sadd.s32 %s19, 1
      %s21 = scalar_select %p18, %s19, %s20
      %p24 = pneg %p18
      %p25 = scmp.eq.s32.totalorder %s9, 1
      %p26 = por %p24, %p25
      %p27 = scmp.ne.s32.totalorder %s19, %s22
      %p28 = scmp.eq.s32.totalorder %s9, 0
      %p29 = por %p27, %p28
      %p30 = scmp.ne.s32.totalorder %s19, %s22
      %p31 = scmp.eq.s32.totalorder %s14, 1
      %p32 = por %p30, %p31
      %p33 = scmp.ne.s32.totalorder %s22, %s23
      %p34 = scmp.eq.s32.totalorder %s14, 0
      %p35 = por %p33, %p34
      %p36 = scmp.ne.s32.totalorder %s22, %s23
      %p37 = scmp.eq.s32.totalorder %s15, 1
      %p38 = por %p36, %p37
      %p40 = scmp.ne.s32.totalorder %s23, %s39
      %p41 = scmp.eq.s32.totalorder %s15, 0
      %p42 = por %p40, %p41
      %s44 = sadd.s32 %s43, 1
      %p47 = scmp.eq.s32.totalorder %s9, 1
      %p48 = scmp.ne.s32.totalorder %s43, %s45
      %p49 = scmp.eq.s32.totalorder %s9, 0
      %p50 = por %p48, %p49
      %p51 = scmp.ne.s32.totalorder %s43, %s45
      %p52 = scmp.eq.s32.totalorder %s14, 1
      %p53 = por %p51, %p52
      %p54 = scmp.ne.s32.totalorder %s45, %s46
      %p55 = scmp.eq.s32.totalorder %s14, 0
      %p56 = por %p54, %p55
      %p57 = scmp.ne.s32.totalorder %s45, %s46
      %p58 = scmp.eq.s32.totalorder %s15, 1
      %p59 = por %p57, %p58
      %p61 = scmp.ne.s32.totalorder %s46, %s60
      %p62 = scmp.eq.s32.totalorder %s15, 0
      %p63 = por %p61, %p62
      %s65 = sadd.s32 %s64, 1
      %p68 = scmp.eq.s32.totalorder %s9, 1
      %p69 = scmp.ne.s32.totalorder %s64, %s66
      %p70 = scmp.eq.s32.totalorder %s9, 0
      %p71 = por %p69, %p70
      %p72 = scmp.ne.s32.totalorder %s64, %s66
      %p73 = scmp.eq.s32.totalorder %s14, 1
      %p74 = por %p72, %p73
      %p75 = scmp.ne.s32.totalorder %s66, %s67
      %p76 = scmp.eq.s32.totalorder %s14, 0
      %p77 = por %p75, %p76
      %p78 = scmp.ne.s32.totalorder %s66, %s67
      %p79 = scmp.eq.s32.totalorder %s15, 1
      %p80 = por %p78, %p79
      %p82 = scmp.ne.s32.totalorder %s67, %s81
      %p83 = scmp.eq.s32.totalorder %s15, 0
      %p84 = por %p82, %p83
      %s85 = ssub.s32 %s9, %s16
      %p86 = scmp.eq.s32.totalorder %s85, 0
      %s88 = sadd.s32 %s87, 1
      %s89 = scalar_select %p86, %s87, %s88
      %p92 = pneg %p86
      %p93 = scmp.eq.s32.totalorder %s9, 1
      %p94 = por %p92, %p93
      %p95 = scmp.ne.s32.totalorder %s87, %s90
      %p96 = scmp.eq.s32.totalorder %s9, 0
      %p97 = por %p95, %p96
      %p98 = scmp.ne.s32.totalorder %s87, %s90
      %p99 = scmp.eq.s32.totalorder %s14, 1
      %p100 = por %p98, %p99
      %p101 = scmp.ne.s32.totalorder %s90, %s91
      %p102 = scmp.eq.s32.totalorder %s14, 0
      %p103 = por %p101, %p102
      %p104 = scmp.ne.s32.totalorder %s90, %s91
      %p105 = scmp.eq.s32.totalorder %s15, 1
      %p106 = por %p104, %p105
      %p108 = scmp.ne.s32.totalorder %s91, %s107
      %p109 = scmp.eq.s32.totalorder %s15, 0
      %p110 = por %p108, %p109
      %p111 = scmp.le.s32.totalorder 1, %s9
      %p112 = scmp.lt.s32.totalorder %s9, 3
      %p113 = pnand %p111, %p112
      %p114 = pneg %p113
      // Predicated region
      $region9: #{forward.6} parent=5 // pred_check
        _
      $region10: #{forward.6} parent=5 // pred_check_branch
        %116 = sbr.rel (%p113) target = $region12
      $region11: #{forward.6} parent=5 // pred_region
        %s117 = ssub.s32 %s9, 1
        // Predicated region
        $region13: #{forward.6} parent=11 // pred_check
          %p118 = pneg %p56
        $region14: #{forward.6} parent=11 // pred_check_branch
          %120 = sbr.rel (%p118) target = $region16
        $region15: #{forward.6} parent=11 // pred_region
          _
        $region16: #{forward.6} parent=11 // pred_fallthru
          _
        // Predicated region
        $region17: #{forward.6} parent=11 // pred_check
          %p121 = pneg %p77
        $region18: #{forward.6} parent=11 // pred_check_branch
          %123 = sbr.rel (%p121) target = $region20
        $region19: #{forward.6} parent=11 // pred_region
          _
        $region20: #{forward.6} parent=11 // pred_fallthru
          _
      $region12: #{forward.6} parent=5 // pred_fallthru
        _
      %p124 = scmp.lt.s32.totalorder %s9, 2
      // Predicated region
      $region21: #{forward.6} parent=5 // pred_check
        %p125 = pneg %p124
      $region22: #{forward.6} parent=5 // pred_check_branch
        %127 = sbr.rel (%p125) target = $region24
      $region23: #{forward.6} parent=5 // pred_region
        // Predicated region
        $region25: #{forward.6} parent=23 // pred_check
          %p128 = pneg %p29
        $region26: #{forward.6} parent=23 // pred_check_branch
          %130 = sbr.rel (%p128) target = $region28
        $region27: #{forward.6} parent=23 // pred_region
          %s131 = sand.u32 %s19, 1
          %s132 = sand.u32 %s19, 1
          %s133 = smul.addr %s132, 1296
          %s134 = scalar_lea.vmem [#allocation2], %s133
          %s135 = smul.u32 9, %s9
          %s136 = smul.addr %s135, 4
          %s137 = scalar_lea.vmem %s0, %s136
          // Predicated region
          $region29: #{forward.6} parent=27 // pred_check
            _
          $region30: #{forward.6} parent=27 // pred_check_branch
            %139 = sbr.rel (0) target = $region32
          $region31: #{forward.6} parent=27 // pred_region
            // Predicated region
            $region33: #{forward.6} parent=31 // pred_check
              _
            $region34: #{forward.6} parent=31 // pred_check_branch
              %141 = sbr.rel (0) target = $region36
            $region35: #{forward.6} parent=31 // pred_region
              %s142 = scalar_lea.vmem %s137, 32
              %s143 = scalar_lea.vmem %s134, 32 [#allocation2]
              loop: start=0, step=1, limit=1
              $region37: #{forward.6} parent=35 // loop_pre_header
                _
              $region38: #{forward.6} parent=35 // loop_header
                %s145 = sphi 0, %s149
                %p146 = scmp.ge.s32.totalorder %s145, 1
                %s150 = sphi %s137, %s137
                %s151 = sphi %s134, %s134
              $region39: #{forward.6} parent=35 // loop_header_branch
                %148 = sbr.rel (%p146) target = $region43
              $region40: #{forward.6} parent=35 // loop_body
                %v152 = vld [vmem:[%s150] sm:$0xff]
                %153 = vst [vmem:[%s151] sm:$0xff] %v152
                %v154 = vld [vmem:[%s150 + $0x8] sm:$0xff]
                %155 = vst [vmem:[%s151 + $0x8] sm:$0xff] %v154
                %v156 = vld [vmem:[%s150 + $0x10] sm:$0xff]
                %157 = vst [vmem:[%s151 + $0x10] sm:$0xff] %v156
                %v158 = vld [vmem:[%s150 + $0x18] sm:$0xff]
                %159 = vst [vmem:[%s151 + $0x18] sm:$0xff] %v158
                %v160 = vld [vmem:[%s150 + $0x48] sm:$0xff]
                %161 = vst [vmem:[%s151 + $0x24] sm:$0xff] %v160
                %v162 = vld [vmem:[%s150 + $0x50] sm:$0xff]
                %163 = vst [vmem:[%s151 + $0x2c] sm:$0xff] %v162
                %v164 = vld [vmem:[%s150 + $0x58] sm:$0xff]
                %165 = vst [vmem:[%s151 + $0x34] sm:$0xff] %v164
                %v166 = vld [vmem:[%s150 + $0x60] sm:$0xff]
                %167 = vst [vmem:[%s151 + $0x3c] sm:$0xff] %v166
                %v168 = vld [vmem:[%s150 + $0x90] sm:$0xff]
                %169 = vst [vmem:[%s151 + $0x48] sm:$0xff] %v168
                %v170 = vld [vmem:[%s150 + $0x98] sm:$0xff]
                %171 = vst [vmem:[%s151 + $0x50] sm:$0xff] %v170
                %v172 = vld [vmem:[%s150 + $0xa0] sm:$0xff]
                %173 = vst [vmem:[%s151 + $0x58] sm:$0xff] %v172
                %v174 = vld [vmem:[%s150 + $0xa8] sm:$0xff]
                %175 = vst [vmem:[%s151 + $0x60] sm:$0xff] %v174
                %v176 = vld [vmem:[%s150 + $0xd8] sm:$0xff]
                %177 = vst [vmem:[%s151 + $0x6c] sm:$0xff] %v176
                %v178 = vld [vmem:[%s150 + $0xe0] sm:$0xff]
                %179 = vst [vmem:[%s151 + $0x74] sm:$0xff] %v178
                %v180 = vld [vmem:[%s150 + $0xe8] sm:$0xff]
                %181 = vst [vmem:[%s151 + $0x7c] sm:$0xff] %v180
                %v182 = vld [vmem:[%s150 + $0xf0] sm:$0xff]
                %183 = vst [vmem:[%s151 + $0x84] sm:$0xff] %v182
                %v184 = vld [vmem:[%s150 + $0x120] sm:$0xff]
                %185 = vst [vmem:[%s151 + $0x90] sm:$0xff] %v184
                %v186 = vld [vmem:[%s150 + $0x128] sm:$0xff]
                %187 = vst [vmem:[%s151 + $0x98] sm:$0xff] %v186
                %v188 = vld [vmem:[%s150 + $0x130] sm:$0xff]
                %189 = vst [vmem:[%s151 + $0xa0] sm:$0xff] %v188
                %v190 = vld [vmem:[%s150 + $0x138] sm:$0xff]
                %191 = vst [vmem:[%s151 + $0xa8] sm:$0xff] %v190
                %v192 = vld [vmem:[%s150 + $0x168] sm:$0xff]
                %193 = vst [vmem:[%s151 + $0xb4] sm:$0xff] %v192
                %v194 = vld [vmem:[%s150 + $0x170] sm:$0xff]
                %195 = vst [vmem:[%s151 + $0xbc] sm:$0xff] %v194
                %v196 = vld [vmem:[%s150 + $0x178] sm:$0xff]
                %197 = vst [vmem:[%s151 + $0xc4] sm:$0xff] %v196
                %v198 = vld [vmem:[%s150 + $0x180] sm:$0xff]
                %199 = vst [vmem:[%s151 + $0xcc] sm:$0xff] %v198
                %v200 = vld [vmem:[%s150 + $0x1b0] sm:$0xff]
                %201 = vst [vmem:[%s151 + $0xd8] sm:$0xff] %v200
                %v202 = vld [vmem:[%s150 + $0x1b8] sm:$0xff]
                %203 = vst [vmem:[%s151 + $0xe0] sm:$0xff] %v202
                %v204 = vld [vmem:[%s150 + $0x1c0] sm:$0xff]
                %205 = vst [vmem:[%s151 + $0xe8] sm:$0xff] %v204
                %v206 = vld [vmem:[%s150 + $0x1c8] sm:$0xff]
                %207 = vst [vmem:[%s151 + $0xf0] sm:$0xff] %v206
                %v208 = vld [vmem:[%s150 + $0x1f8] sm:$0xff]
                %209 = vst [vmem:[%s151 + $0xfc] sm:$0xff] %v208
                %v210 = vld [vmem:[%s150 + $0x200] sm:$0xff]
                %211 = vst [vmem:[%s151 + $0x104] sm:$0xff] %v210
                %v212 = vld [vmem:[%s150 + $0x208] sm:$0xff]
                %213 = vst [vmem:[%s151 + $0x10c] sm:$0xff] %v212
                %v214 = vld [vmem:[%s150 + $0x210] sm:$0xff]
                %215 = vst [vmem:[%s151 + $0x114] sm:$0xff] %v214
                %v216 = vld [vmem:[%s150 + $0x240] sm:$0xff]
                %217 = vst [vmem:[%s151 + $0x120] sm:$0xff] %v216
                %v218 = vld [vmem:[%s150 + $0x248] sm:$0xff]
                %219 = vst [vmem:[%s151 + $0x128] sm:$0xff] %v218
                %v220 = vld [vmem:[%s150 + $0x250] sm:$0xff]
                %221 = vst [vmem:[%s151 + $0x130] sm:$0xff] %v220
                %v222 = vld [vmem:[%s150 + $0x258] sm:$0xff]
                %223 = vst [vmem:[%s151 + $0x138] sm:$0xff] %v222
                %v224 = vld [vmem:[%s150 + $0x288] sm:$0xff]
                %225 = vst [vmem:[%s151 + $0x144] sm:$0xff] %v224
                %v226 = vld [vmem:[%s150 + $0x290] sm:$0xff]
                %227 = vst [vmem:[%s151 + $0x14c] sm:$0xff] %v226
                %v228 = vld [vmem:[%s150 + $0x298] sm:$0xff]
                %229 = vst [vmem:[%s151 + $0x154] sm:$0xff] %v228
                %v230 = vld [vmem:[%s150 + $0x2a0] sm:$0xff]
                %231 = vst [vmem:[%s151 + $0x15c] sm:$0xff] %v230
                %v232 = vld [vmem:[%s150 + $0x2d0] sm:$0xff]
                %233 = vst [vmem:[%s151 + $0x168] sm:$0xff] %v232
                %v234 = vld [vmem:[%s150 + $0x2d8] sm:$0xff]
                %235 = vst [vmem:[%s151 + $0x170] sm:$0xff] %v234
                %v236 = vld [vmem:[%s150 + $0x2e0] sm:$0xff]
                %237 = vst [vmem:[%s151 + $0x178] sm:$0xff] %v236
                %v238 = vld [vmem:[%s150 + $0x2e8] sm:$0xff]
                %239 = vst [vmem:[%s151 + $0x180] sm:$0xff] %v238
                %v240 = vld [vmem:[%s150 + $0x318] sm:$0xff]
                %241 = vst [vmem:[%s151 + $0x18c] sm:$0xff] %v240
                %v242 = vld [vmem:[%s150 + $0x320] sm:$0xff]
                %243 = vst [vmem:[%s151 + $0x194] sm:$0xff] %v242
                %v244 = vld [vmem:[%s150 + $0x328] sm:$0xff]
                %245 = vst [vmem:[%s151 + $0x19c] sm:$0xff] %v244
                %v246 = vld [vmem:[%s150 + $0x330] sm:$0xff]
                %247 = vst [vmem:[%s151 + $0x1a4] sm:$0xff] %v246
                %v248 = vld [vmem:[%s150 + $0x360] sm:$0xff]
                %249 = vst [vmem:[%s151 + $0x1b0] sm:$0xff] %v248
                %v250 = vld [vmem:[%s150 + $0x368] sm:$0xff]
                %251 = vst [vmem:[%s151 + $0x1b8] sm:$0xff] %v250
                %v252 = vld [vmem:[%s150 + $0x370] sm:$0xff]
                %253 = vst [vmem:[%s151 + $0x1c0] sm:$0xff] %v252
                %v254 = vld [vmem:[%s150 + $0x378] sm:$0xff]
                %255 = vst [vmem:[%s151 + $0x1c8] sm:$0xff] %v254
                %v256 = vld [vmem:[%s150 + $0x3a8] sm:$0xff]
                %257 = vst [vmem:[%s151 + $0x1d4] sm:$0xff] %v256
                %v258 = vld [vmem:[%s150 + $0x3b0] sm:$0xff]
                %259 = vst [vmem:[%s151 + $0x1dc] sm:$0xff] %v258
                %v260 = vld [vmem:[%s150 + $0x3b8] sm:$0xff]
                %261 = vst [vmem:[%s151 + $0x1e4] sm:$0xff] %v260
                %v262 = vld [vmem:[%s150 + $0x3c0] sm:$0xff]
                %263 = vst [vmem:[%s151 + $0x1ec] sm:$0xff] %v262
                %v264 = vld [vmem:[%s150 + $0x3f0] sm:$0xff]
                %265 = vst [vmem:[%s151 + $0x1f8] sm:$0xff] %v264
                %v266 = vld [vmem:[%s150 + $0x3f8] sm:$0xff]
                %267 = vst [vmem:[%s151 + $0x200] sm:$0xff] %v266
                %v268 = vld [vmem:[%s150 + $0x400] sm:$0xff]
                %269 = vst [vmem:[%s151 + $0x208] sm:$0xff] %v268
                %v270 = vld [vmem:[%s150 + $0x408] sm:$0xff]
                %271 = vst [vmem:[%s151 + $0x210] sm:$0xff] %v270
                %v272 = vld [vmem:[%s150 + $0x438] sm:$0xff]
                %273 = vst [vmem:[%s151 + $0x21c] sm:$0xff] %v272
                %v274 = vld [vmem:[%s150 + $0x440] sm:$0xff]
                %275 = vst [vmem:[%s151 + $0x224] sm:$0xff] %v274
                %v276 = vld [vmem:[%s150 + $0x448] sm:$0xff]
                %277 = vst [vmem:[%s151 + $0x22c] sm:$0xff] %v276
                %v278 = vld [vmem:[%s150 + $0x450] sm:$0xff]
                %279 = vst [vmem:[%s151 + $0x234] sm:$0xff] %v278
                %v280 = vld [vmem:[%s150 + $0x480] sm:$0xff]
                %281 = vst [vmem:[%s151 + $0x240] sm:$0xff] %v280
                %v282 = vld [vmem:[%s150 + $0x488] sm:$0xff]
                %283 = vst [vmem:[%s151 + $0x248] sm:$0xff] %v282
                %v284 = vld [vmem:[%s150 + $0x490] sm:$0xff]
                %285 = vst [vmem:[%s151 + $0x250] sm:$0xff] %v284
                %v286 = vld [vmem:[%s150 + $0x498] sm:$0xff]
                %287 = vst [vmem:[%s151 + $0x258] sm:$0xff] %v286
                %v288 = vld [vmem:[%s150 + $0x4c8] sm:$0xff]
                %289 = vst [vmem:[%s151 + $0x264] sm:$0xff] %v288
                %v290 = vld [vmem:[%s150 + $0x4d0] sm:$0xff]
                %291 = vst [vmem:[%s151 + $0x26c] sm:$0xff] %v290
                %v292 = vld [vmem:[%s150 + $0x4d8] sm:$0xff]
                %293 = vst [vmem:[%s151 + $0x274] sm:$0xff] %v292
                %v294 = vld [vmem:[%s150 + $0x4e0] sm:$0xff]
                %295 = vst [vmem:[%s151 + $0x27c] sm:$0xff] %v294
                %v296 = vld [vmem:[%s150 + $0x510] sm:$0xff]
                %297 = vst [vmem:[%s151 + $0x288] sm:$0xff] %v296
                %v298 = vld [vmem:[%s150 + $0x518] sm:$0xff]
                %299 = vst [vmem:[%s151 + $0x290] sm:$0xff] %v298
                %v300 = vld [vmem:[%s150 + $0x520] sm:$0xff]
                %301 = vst [vmem:[%s151 + $0x298] sm:$0xff] %v300
                %v302 = vld [vmem:[%s150 + $0x528] sm:$0xff]
                %303 = vst [vmem:[%s151 + $0x2a0] sm:$0xff] %v302
                %v304 = vld [vmem:[%s150 + $0x558] sm:$0xff]
                %305 = vst [vmem:[%s151 + $0x2ac] sm:$0xff] %v304
                %v306 = vld [vmem:[%s150 + $0x560] sm:$0xff]
                %307 = vst [vmem:[%s151 + $0x2b4] sm:$0xff] %v306
                %v308 = vld [vmem:[%s150 + $0x568] sm:$0xff]
                %309 = vst [vmem:[%s151 + $0x2bc] sm:$0xff] %v308
                %v310 = vld [vmem:[%s150 + $0x570] sm:$0xff]
                %311 = vst [vmem:[%s151 + $0x2c4] sm:$0xff] %v310
                %v312 = vld [vmem:[%s150 + $0x5a0] sm:$0xff]
                %313 = vst [vmem:[%s151 + $0x2d0] sm:$0xff] %v312
                %v314 = vld [vmem:[%s150 + $0x5a8] sm:$0xff]
                %315 = vst [vmem:[%s151 + $0x2d8] sm:$0xff] %v314
                %v316 = vld [vmem:[%s150 + $0x5b0] sm:$0xff]
                %317 = vst [vmem:[%s151 + $0x2e0] sm:$0xff] %v316
                %v318 = vld [vmem:[%s150 + $0x5b8] sm:$0xff]
                %319 = vst [vmem:[%s151 + $0x2e8] sm:$0xff] %v318
                %v320 = vld [vmem:[%s150 + $0x5e8] sm:$0xff]
                %321 = vst [vmem:[%s151 + $0x2f4] sm:$0xff] %v320
                %v322 = vld [vmem:[%s150 + $0x5f0] sm:$0xff]
                %323 = vst [vmem:[%s151 + $0x2fc] sm:$0xff] %v322
                %v324 = vld [vmem:[%s150 + $0x5f8] sm:$0xff]
                %325 = vst [vmem:[%s151 + $0x304] sm:$0xff] %v324
                %v326 = vld [vmem:[%s150 + $0x600] sm:$0xff]
                %327 = vst [vmem:[%s151 + $0x30c] sm:$0xff] %v326
                %v328 = vld [vmem:[%s150 + $0x630] sm:$0xff]
                %329 = vst [vmem:[%s151 + $0x318] sm:$0xff] %v328
                %v330 = vld [vmem:[%s150 + $0x638] sm:$0xff]
                %331 = vst [vmem:[%s151 + $0x320] sm:$0xff] %v330
                %v332 = vld [vmem:[%s150 + $0x640] sm:$0xff]
                %333 = vst [vmem:[%s151 + $0x328] sm:$0xff] %v332
                %v334 = vld [vmem:[%s150 + $0x648] sm:$0xff]
                %335 = vst [vmem:[%s151 + $0x330] sm:$0xff] %v334
                %v336 = vld [vmem:[%s150 + $0x678] sm:$0xff]
                %337 = vst [vmem:[%s151 + $0x33c] sm:$0xff] %v336
                %v338 = vld [vmem:[%s150 + $0x680] sm:$0xff]
                %339 = vst [vmem:[%s151 + $0x344] sm:$0xff] %v338
                %v340 = vld [vmem:[%s150 + $0x688] sm:$0xff]
                %341 = vst [vmem:[%s151 + $0x34c] sm:$0xff] %v340
                %v342 = vld [vmem:[%s150 + $0x690] sm:$0xff]
                %343 = vst [vmem:[%s151 + $0x354] sm:$0xff] %v342
                %v344 = vld [vmem:[%s150 + $0x6c0] sm:$0xff]
                %345 = vst [vmem:[%s151 + $0x360] sm:$0xff] %v344
                %v346 = vld [vmem:[%s150 + $0x6c8] sm:$0xff]
                %347 = vst [vmem:[%s151 + $0x368] sm:$0xff] %v346
                %v348 = vld [vmem:[%s150 + $0x6d0] sm:$0xff]
                %349 = vst [vmem:[%s151 + $0x370] sm:$0xff] %v348
                %v350 = vld [vmem:[%s150 + $0x6d8] sm:$0xff]
                %351 = vst [vmem:[%s151 + $0x378] sm:$0xff] %v350
                %v352 = vld [vmem:[%s150 + $0x708] sm:$0xff]
                %353 = vst [vmem:[%s151 + $0x384] sm:$0xff] %v352
                %v354 = vld [vmem:[%s150 + $0x710] sm:$0xff]
                %355 = vst [vmem:[%s151 + $0x38c] sm:$0xff] %v354
                %v356 = vld [vmem:[%s150 + $0x718] sm:$0xff]
                %357 = vst [vmem:[%s151 + $0x394] sm:$0xff] %v356
                %v358 = vld [vmem:[%s150 + $0x720] sm:$0xff]
                %359 = vst [vmem:[%s151 + $0x39c] sm:$0xff] %v358
                %v360 = vld [vmem:[%s150 + $0x750] sm:$0xff]
                %361 = vst [vmem:[%s151 + $0x3a8] sm:$0xff] %v360
                %v362 = vld [vmem:[%s150 + $0x758] sm:$0xff]
                %363 = vst [vmem:[%s151 + $0x3b0] sm:$0xff] %v362
                %v364 = vld [vmem:[%s150 + $0x760] sm:$0xff]
                %365 = vst [vmem:[%s151 + $0x3b8] sm:$0xff] %v364
                %v366 = vld [vmem:[%s150 + $0x768] sm:$0xff]
                %367 = vst [vmem:[%s151 + $0x3c0] sm:$0xff] %v366
                %v368 = vld [vmem:[%s150 + $0x798] sm:$0xff]
                %369 = vst [vmem:[%s151 + $0x3cc] sm:$0xff] %v368
                %v370 = vld [vmem:[%s150 + $0x7a0] sm:$0xff]
                %371 = vst [vmem:[%s151 + $0x3d4] sm:$0xff] %v370
                %v372 = vld [vmem:[%s150 + $0x7a8] sm:$0xff]
                %373 = vst [vmem:[%s151 + $0x3dc] sm:$0xff] %v372
                %v374 = vld [vmem:[%s150 + $0x7b0] sm:$0xff]
                %375 = vst [vmem:[%s151 + $0x3e4] sm:$0xff] %v374
                %v376 = vld [vmem:[%s150 + $0x7e0] sm:$0xff]
                %377 = vst [vmem:[%s151 + $0x3f0] sm:$0xff] %v376
                %v378 = vld [vmem:[%s150 + $0x7e8] sm:$0xff]
                %379 = vst [vmem:[%s151 + $0x3f8] sm:$0xff] %v378
                %v380 = vld [vmem:[%s150 + $0x7f0] sm:$0xff]
                %381 = vst [vmem:[%s151 + $0x400] sm:$0xff] %v380
                %v382 = vld [vmem:[%s150 + $0x7f8] sm:$0xff]
                %383 = vst [vmem:[%s151 + $0x408] sm:$0xff] %v382
                %v384 = vld [vmem:[%s150 + $0x828] sm:$0xff]
                %385 = vst [vmem:[%s151 + $0x414] sm:$0xff] %v384
                %v386 = vld [vmem:[%s150 + $0x830] sm:$0xff]
                %387 = vst [vmem:[%s151 + $0x41c] sm:$0xff] %v386
                %v388 = vld [vmem:[%s150 + $0x838] sm:$0xff]
                %389 = vst [vmem:[%s151 + $0x424] sm:$0xff] %v388
                %v390 = vld [vmem:[%s150 + $0x840] sm:$0xff]
                %391 = vst [vmem:[%s151 + $0x42c] sm:$0xff] %v390
                %v392 = vld [vmem:[%s150 + $0x870] sm:$0xff]
                %393 = vst [vmem:[%s151 + $0x438] sm:$0xff] %v392
                %v394 = vld [vmem:[%s150 + $0x878] sm:$0xff]
                %395 = vst [vmem:[%s151 + $0x440] sm:$0xff] %v394
                %v396 = vld [vmem:[%s150 + $0x880] sm:$0xff]
                %397 = vst [vmem:[%s151 + $0x448] sm:$0xff] %v396
                %v398 = vld [vmem:[%s150 + $0x888] sm:$0xff]
                %399 = vst [vmem:[%s151 + $0x450] sm:$0xff] %v398
                %v400 = vld [vmem:[%s150 + $0x8b8] sm:$0xff]
                %401 = vst [vmem:[%s151 + $0x45c] sm:$0xff] %v400
                %v402 = vld [vmem:[%s150 + $0x8c0] sm:$0xff]
                %403 = vst [vmem:[%s151 + $0x464] sm:$0xff] %v402
                %v404 = vld [vmem:[%s150 + $0x8c8] sm:$0xff]
                %405 = vst [vmem:[%s151 + $0x46c] sm:$0xff] %v404
                %v406 = vld [vmem:[%s150 + $0x8d0] sm:$0xff]
                %407 = vst [vmem:[%s151 + $0x474] sm:$0xff] %v406
                %v408 = vld [vmem:[%s150 + $0x900] sm:$0xff]
                %409 = vst [vmem:[%s151 + $0x480] sm:$0xff] %v408
                %v410 = vld [vmem:[%s150 + $0x908] sm:$0xff]
                %411 = vst [vmem:[%s151 + $0x488] sm:$0xff] %v410
                %v412 = vld [vmem:[%s150 + $0x910] sm:$0xff]
                %413 = vst [vmem:[%s151 + $0x490] sm:$0xff] %v412
                %v414 = vld [vmem:[%s150 + $0x918] sm:$0xff]
                %415 = vst [vmem:[%s151 + $0x498] sm:$0xff] %v414
                %v416 = vld [vmem:[%s150 + $0x948] sm:$0xff]
                %417 = vst [vmem:[%s151 + $0x4a4] sm:$0xff] %v416
                %v418 = vld [vmem:[%s150 + $0x950] sm:$0xff]
                %419 = vst [vmem:[%s151 + $0x4ac] sm:$0xff] %v418
                %v420 = vld [vmem:[%s150 + $0x958] sm:$0xff]
                %421 = vst [vmem:[%s151 + $0x4b4] sm:$0xff] %v420
                %v422 = vld [vmem:[%s150 + $0x960] sm:$0xff]
                %423 = vst [vmem:[%s151 + $0x4bc] sm:$0xff] %v422
                %v424 = vld [vmem:[%s150 + $0x990] sm:$0xff]
                %425 = vst [vmem:[%s151 + $0x4c8] sm:$0xff] %v424
                %v426 = vld [vmem:[%s150 + $0x998] sm:$0xff]
                %427 = vst [vmem:[%s151 + $0x4d0] sm:$0xff] %v426
                %v428 = vld [vmem:[%s150 + $0x9a0] sm:$0xff]
                %429 = vst [vmem:[%s151 + $0x4d8] sm:$0xff] %v428
                %v430 = vld [vmem:[%s150 + $0x9a8] sm:$0xff]
                %431 = vst [vmem:[%s151 + $0x4e0] sm:$0xff] %v430
                %v432 = vld [vmem:[%s150 + $0x9d8] sm:$0xff]
                %433 = vst [vmem:[%s151 + $0x4ec] sm:$0xff] %v432
                %v434 = vld [vmem:[%s150 + $0x9e0] sm:$0xff]
                %435 = vst [vmem:[%s151 + $0x4f4] sm:$0xff] %v434
                %v436 = vld [vmem:[%s150 + $0x9e8] sm:$0xff]
                %437 = vst [vmem:[%s151 + $0x4fc] sm:$0xff] %v436
                %v438 = vld [vmem:[%s150 + $0x9f0] sm:$0xff]
                %439 = vst [vmem:[%s151 + $0x504] sm:$0xff] %v438
              $region41: #{forward.6} parent=35 // loop_footer
                %s149 = sadd.s32 1, %s145
              $region42: #{forward.6} parent=35 // loop_footer_branch
                %144 = sbr.rel target = $region38
              $region43: #{forward.6} parent=35 // loop_exit
                _
              %s441 = ssub.s32 16, 1
              loop: start=0, step=1, limit=1
              $region44: #{forward.6} parent=35 // loop_pre_header
                _
              $region45: #{forward.6} parent=35 // loop_header
                %s443 = sphi 0, %s447
                %p444 = scmp.ge.s32.totalorder %s443, 1
                %s448 = sphi %s142, %s142
                %s449 = sphi %s143, %s143
              $region46: #{forward.6} parent=35 // loop_header_branch
                %446 = sbr.rel (%p444) target = $region50
              $region47: #{forward.6} parent=35 // loop_body
                %v450 = vld [vmem:[%s448] sm:%s441]
                %451 = vst [vmem:[%s449] sm:%s441] %v450
                %v452 = vld [vmem:[%s448 + $0x48] sm:%s441]
                %453 = vst [vmem:[%s449 + $0x24] sm:%s441] %v452
                %v454 = vld [vmem:[%s448 + $0x90] sm:%s441]
                %455 = vst [vmem:[%s449 + $0x48] sm:%s441] %v454
                %v456 = vld [vmem:[%s448 + $0xd8] sm:%s441]
                %457 = vst [vmem:[%s449 + $0x6c] sm:%s441] %v456
                %v458 = vld [vmem:[%s448 + $0x120] sm:%s441]
                %459 = vst [vmem:[%s449 + $0x90] sm:%s441] %v458
                %v460 = vld [vmem:[%s448 + $0x168] sm:%s441]
                %461 = vst [vmem:[%s449 + $0xb4] sm:%s441] %v460
                %v462 = vld [vmem:[%s448 + $0x1b0] sm:%s441]
                %463 = vst [vmem:[%s449 + $0xd8] sm:%s441] %v462
                %v464 = vld [vmem:[%s448 + $0x1f8] sm:%s441]
                %465 = vst [vmem:[%s449 + $0xfc] sm:%s441] %v464
                %v466 = vld [vmem:[%s448 + $0x240] sm:%s441]
                %467 = vst [vmem:[%s449 + $0x120] sm:%s441] %v466
                %v468 = vld [vmem:[%s448 + $0x288] sm:%s441]
                %469 = vst [vmem:[%s449 + $0x144] sm:%s441] %v468
                %v470 = vld [vmem:[%s448 + $0x2d0] sm:%s441]
                %471 = vst [vmem:[%s449 + $0x168] sm:%s441] %v470
                %v472 = vld [vmem:[%s448 + $0x318] sm:%s441]
                %473 = vst [vmem:[%s449 + $0x18c] sm:%s441] %v472
                %v474 = vld [vmem:[%s448 + $0x360] sm:%s441]
                %475 = vst [vmem:[%s449 + $0x1b0] sm:%s441] %v474
                %v476 = vld [vmem:[%s448 + $0x3a8] sm:%s441]
                %477 = vst [vmem:[%s449 + $0x1d4] sm:%s441] %v476
                %v478 = vld [vmem:[%s448 + $0x3f0] sm:%s441]
                %479 = vst [vmem:[%s449 + $0x1f8] sm:%s441] %v478
                %v480 = vld [vmem:[%s448 + $0x438] sm:%s441]
                %481 = vst [vmem:[%s449 + $0x21c] sm:%s441] %v480
                %v482 = vld [vmem:[%s448 + $0x480] sm:%s441]
                %483 = vst [vmem:[%s449 + $0x240] sm:%s441] %v482
                %v484 = vld [vmem:[%s448 + $0x4c8] sm:%s441]
                %485 = vst [vmem:[%s449 + $0x264] sm:%s441] %v484
                %v486 = vld [vmem:[%s448 + $0x510] sm:%s441]
                %487 = vst [vmem:[%s449 + $0x288] sm:%s441] %v486
                %v488 = vld [vmem:[%s448 + $0x558] sm:%s441]
                %489 = vst [vmem:[%s449 + $0x2ac] sm:%s441] %v488
                %v490 = vld [vmem:[%s448 + $0x5a0] sm:%s441]
                %491 = vst [vmem:[%s449 + $0x2d0] sm:%s441] %v490
                %v492 = vld [vmem:[%s448 + $0x5e8] sm:%s441]
                %493 = vst [vmem:[%s449 + $0x2f4] sm:%s441] %v492
                %v494 = vld [vmem:[%s448 + $0x630] sm:%s441]
                %495 = vst [vmem:[%s449 + $0x318] sm:%s441] %v494
                %v496 = vld [vmem:[%s448 + $0x678] sm:%s441]
                %497 = vst [vmem:[%s449 + $0x33c] sm:%s441] %v496
                %v498 = vld [vmem:[%s448 + $0x6c0] sm:%s441]
                %499 = vst [vmem:[%s449 + $0x360] sm:%s441] %v498
                %v500 = vld [vmem:[%s448 + $0x708] sm:%s441]
                %501 = vst [vmem:[%s449 + $0x384] sm:%s441] %v500
                %v502 = vld [vmem:[%s448 + $0x750] sm:%s441]
                %503 = vst [vmem:[%s449 + $0x3a8] sm:%s441] %v502
                %v504 = vld [vmem:[%s448 + $0x798] sm:%s441]
                %505 = vst [vmem:[%s449 + $0x3cc] sm:%s441] %v504
                %v506 = vld [vmem:[%s448 + $0x7e0] sm:%s441]
                %507 = vst [vmem:[%s449 + $0x3f0] sm:%s441] %v506
                %v508 = vld [vmem:[%s448 + $0x828] sm:%s441]
                %509 = vst [vmem:[%s449 + $0x414] sm:%s441] %v508
                %v510 = vld [vmem:[%s448 + $0x870] sm:%s441]
                %511 = vst [vmem:[%s449 + $0x438] sm:%s441] %v510
                %v512 = vld [vmem:[%s448 + $0x8b8] sm:%s441]
                %513 = vst [vmem:[%s449 + $0x45c] sm:%s441] %v512
                %v514 = vld [vmem:[%s448 + $0x900] sm:%s441]
                %515 = vst [vmem:[%s449 + $0x480] sm:%s441] %v514
                %v516 = vld [vmem:[%s448 + $0x948] sm:%s441]
                %517 = vst [vmem:[%s449 + $0x4a4] sm:%s441] %v516
                %v518 = vld [vmem:[%s448 + $0x990] sm:%s441]
                %519 = vst [vmem:[%s449 + $0x4c8] sm:%s441] %v518
                %v520 = vld [vmem:[%s448 + $0x9d8] sm:%s441]
                %521 = vst [vmem:[%s449 + $0x4ec] sm:%s441] %v520
              $region48: #{forward.6} parent=35 // loop_footer
                %s447 = sadd.s32 1, %s443
              $region49: #{forward.6} parent=35 // loop_footer_branch
                %442 = sbr.rel target = $region45
              $region50: #{forward.6} parent=35 // loop_exit
                _
            $region36: #{forward.6} parent=31 // pred_fallthru
              _
          $region32: #{forward.6} parent=27 // pred_fallthru
            _
          %522 = vnop
        $region28: #{forward.6} parent=23 // pred_fallthru
          _
      $region24: #{forward.6} parent=5 // pred_fallthru
        _
      %p523 = scmp.le.s32.totalorder 1, %s9
      %p524 = scmp.lt.s32.totalorder %s9, 3
      %p525 = pnand %p523, %p524
      %p526 = pneg %p525
      // Predicated region
      $region51: #{forward.6} parent=5 // pred_check
        _
      $region52: #{forward.6} parent=5 // pred_check_branch
        %528 = sbr.rel (%p525) target = $region54
      $region53: #{forward.6} parent=5 // pred_region
        %s529 = ssub.s32 %s9, 1
        %s530 = sand.u32 %s22, 1
        %s531 = sand.u32 %s22, 1
        %s532 = smul.addr %s531, 1296
        %s533 = scalar_lea.vmem [#allocation2], %s532
        // Predicated region
        $region55: #{forward.6} parent=53 // pred_check
          %p534 = pneg %p35
        $region56: #{forward.6} parent=53 // pred_check_branch
          %536 = sbr.rel (%p534) target = $region58
        $region57: #{forward.6} parent=53 // pred_region
          _
        $region58: #{forward.6} parent=53 // pred_fallthru
          _
        %s537 = sand.u32 %s22, 1
        %s538 = sand.u32 %s22, 1
        %s539 = smul.addr %s538, 1296
        %s540 = scalar_lea.vmem [#allocation2], %s539
        %p541 = pneg %p35
        %p542 = pneg %p32
        %p543 = pneg %p56
        %p544 = pneg %p53
        %p545 = pneg %p77
        %p546 = pneg %p74
        %p547 = pneg %p103
        %p548 = pneg %p100
        %s549 = sand.u32 %s90, 1
        %s550 = sand.u32 %s90, 1
        %s551 = smul.addr %s550, 144
        %s552 = scalar_lea.vmem [#allocation3], %s551
        %s553 = smul.u32 9, %s14
        %s554 = smul.u32 9, %s14
        %v556 = vld [vmem:[%s1] sm:$0xff]
        %v557 = vld [vmem:[%s1 + $0x8] sm:$0xf]
        %v558 = vld [vmem:[%s1 + $0xc] sm:$0xff]
        %v559 = vld [vmem:[%s1 + $0x14] sm:$0xf]
        %v560 = vld [vmem:[%s1 + $0x18] sm:$0xff]
        %v561 = vld [vmem:[%s1 + $0x20] sm:$0xf]
        %v562 = vld [vmem:[%s1 + $0x24] sm:$0xff]
        %v563 = vld [vmem:[%s1 + $0x2c] sm:$0xf]
        %v564 = vld [vmem:[%s533] sm:$0xff]
        %v565 = vld [vmem:[%s533 + $0x8] sm:$0xff]
        %v566 = vld [vmem:[%s533 + $0x10] sm:$0xff]
        %v567 = vld [vmem:[%s533 + $0x18] sm:$0xff]
        %v568 = vld [vmem:[%s533 + $0x20] sm:$0xf]
        %v569 = vld [vmem:[%s533 + $0x24] sm:$0xff]
        %v570 = vld [vmem:[%s533 + $0x2c] sm:$0xff]
        %v571 = vld [vmem:[%s533 + $0x34] sm:$0xff]
        %v572 = vld [vmem:[%s533 + $0x3c] sm:$0xff]
        %v573 = vld [vmem:[%s533 + $0x44] sm:$0xf]
        %v574 = vld [vmem:[%s533 + $0x48] sm:$0xff]
        %v575 = vld [vmem:[%s533 + $0x50] sm:$0xff]
        %v576 = vld [vmem:[%s533 + $0x58] sm:$0xff]
        %v577 = vld [vmem:[%s533 + $0x60] sm:$0xff]
        %v578 = vld [vmem:[%s533 + $0x68] sm:$0xf]
        %v579 = vld [vmem:[%s533 + $0x6c] sm:$0xff]
        %v580 = vld [vmem:[%s533 + $0x74] sm:$0xff]
        %v581 = vld [vmem:[%s533 + $0x7c] sm:$0xff]
        %v582 = vld [vmem:[%s533 + $0x84] sm:$0xff]
        %v583 = vld [vmem:[%s533 + $0x8c] sm:$0xf]
        %v584 = vld [vmem:[%s533 + $0x90] sm:$0xff]
        %v585 = vld [vmem:[%s533 + $0x98] sm:$0xff]
        %v586 = vld [vmem:[%s533 + $0xa0] sm:$0xff]
        %v587 = vld [vmem:[%s533 + $0xa8] sm:$0xff]
        %v588 = vld [vmem:[%s533 + $0xb0] sm:$0xf]
        %v589 = vld [vmem:[%s533 + $0xb4] sm:$0xff]
        %v590 = vld [vmem:[%s533 + $0xbc] sm:$0xff]
        %v591 = vld [vmem:[%s533 + $0xc4] sm:$0xff]
        %v592 = vld [vmem:[%s533 + $0xcc] sm:$0xff]
        %v593 = vld [vmem:[%s533 + $0xd4] sm:$0xf]
        %v594 = vld [vmem:[%s533 + $0xd8] sm:$0xff]
        %v595 = vld [vmem:[%s533 + $0xe0] sm:$0xff]
        %v596 = vld [vmem:[%s533 + $0xe8] sm:$0xff]
        %v597 = vld [vmem:[%s533 + $0xf0] sm:$0xff]
        %v598 = vld [vmem:[%s533 + $0xf8] sm:$0xf]
        %v599 = vld [vmem:[%s533 + $0xfc] sm:$0xff]
        %v600 = vld [vmem:[%s533 + $0x104] sm:$0xff]
        %v601 = vld [vmem:[%s533 + $0x10c] sm:$0xff]
        %v602 = vld [vmem:[%s533 + $0x114] sm:$0xff]
        %v603 = vld [vmem:[%s533 + $0x11c] sm:$0xf]
        %v604 = vld [vmem:[%s533 + $0x120] sm:$0xff]
        %v605 = vld [vmem:[%s533 + $0x128] sm:$0xff]
        %v606 = vld [vmem:[%s533 + $0x130] sm:$0xff]
        %v607 = vld [vmem:[%s533 + $0x138] sm:$0xff]
        %v608 = vld [vmem:[%s533 + $0x140] sm:$0xf]
        %v609 = vld [vmem:[%s533 + $0x144] sm:$0xff]
        %v610 = vld [vmem:[%s533 + $0x14c] sm:$0xff]
        %v611 = vld [vmem:[%s533 + $0x154] sm:$0xff]
        %v612 = vld [vmem:[%s533 + $0x15c] sm:$0xff]
        %v613 = vld [vmem:[%s533 + $0x164] sm:$0xf]
        %v614 = vld [vmem:[%s533 + $0x168] sm:$0xff]
        %v615 = vld [vmem:[%s533 + $0x170] sm:$0xff]
        %v616 = vld [vmem:[%s533 + $0x178] sm:$0xff]
        %v617 = vld [vmem:[%s533 + $0x180] sm:$0xff]
        %v618 = vld [vmem:[%s533 + $0x188] sm:$0xf]
        %v619 = vld [vmem:[%s533 + $0x18c] sm:$0xff]
        %v620 = vld [vmem:[%s533 + $0x194] sm:$0xff]
        %v621 = vld [vmem:[%s533 + $0x19c] sm:$0xff]
        %v622 = vld [vmem:[%s533 + $0x1a4] sm:$0xff]
        %v623 = vld [vmem:[%s533 + $0x1ac] sm:$0xf]
        %v624 = vld [vmem:[%s533 + $0x1b0] sm:$0xff]
        %v625 = vld [vmem:[%s533 + $0x1b8] sm:$0xff]
        %v626 = vld [vmem:[%s533 + $0x1c0] sm:$0xff]
        %v627 = vld [vmem:[%s533 + $0x1c8] sm:$0xff]
        %v628 = vld [vmem:[%s533 + $0x1d0] sm:$0xf]
        %v629 = vld [vmem:[%s533 + $0x1d4] sm:$0xff]
        %v630 = vld [vmem:[%s533 + $0x1dc] sm:$0xff]
        %v631 = vld [vmem:[%s533 + $0x1e4] sm:$0xff]
        %v632 = vld [vmem:[%s533 + $0x1ec] sm:$0xff]
        %v633 = vld [vmem:[%s533 + $0x1f4] sm:$0xf]
        %v634 = vld [vmem:[%s533 + $0x1f8] sm:$0xff]
        %v635 = vld [vmem:[%s533 + $0x200] sm:$0xff]
        %v636 = vld [vmem:[%s533 + $0x208] sm:$0xff]
        %v637 = vld [vmem:[%s533 + $0x210] sm:$0xff]
        %v638 = vld [vmem:[%s533 + $0x218] sm:$0xf]
        %v639 = vld [vmem:[%s533 + $0x21c] sm:$0xff]
        %v640 = vld [vmem:[%s533 + $0x224] sm:$0xff]
        %v641 = vld [vmem:[%s533 + $0x22c] sm:$0xff]
        %v642 = vld [vmem:[%s533 + $0x234] sm:$0xff]
        %v643 = vld [vmem:[%s533 + $0x23c] sm:$0xf]
        %v644 = vld [vmem:[%s533 + $0x240] sm:$0xff]
        %v645 = vld [vmem:[%s533 + $0x248] sm:$0xff]
        %v646 = vld [vmem:[%s533 + $0x250] sm:$0xff]
        %v647 = vld [vmem:[%s533 + $0x258] sm:$0xff]
        %v648 = vld [vmem:[%s533 + $0x260] sm:$0xf]
        %v649 = vld [vmem:[%s533 + $0x264] sm:$0xff]
        %v650 = vld [vmem:[%s533 + $0x26c] sm:$0xff]
        %v651 = vld [vmem:[%s533 + $0x274] sm:$0xff]
        %v652 = vld [vmem:[%s533 + $0x27c] sm:$0xff]
        %v653 = vld [vmem:[%s533 + $0x284] sm:$0xf]
        %v654 = vld [vmem:[%s533 + $0x288] sm:$0xff]
        %v655 = vld [vmem:[%s533 + $0x290] sm:$0xff]
        %v656 = vld [vmem:[%s533 + $0x298] sm:$0xff]
        %v657 = vld [vmem:[%s533 + $0x2a0] sm:$0xff]
        %v658 = vld [vmem:[%s533 + $0x2a8] sm:$0xf]
        %v659 = vld [vmem:[%s533 + $0x2ac] sm:$0xff]
        %v660 = vld [vmem:[%s533 + $0x2b4] sm:$0xff]
        %v661 = vld [vmem:[%s533 + $0x2bc] sm:$0xff]
        %v662 = vld [vmem:[%s533 + $0x2c4] sm:$0xff]
        %v663 = vld [vmem:[%s533 + $0x2cc] sm:$0xf]
        %v664 = vld [vmem:[%s533 + $0x2d0] sm:$0xff]
        %v665 = vld [vmem:[%s533 + $0x2d8] sm:$0xff]
        %v666 = vld [vmem:[%s533 + $0x2e0] sm:$0xff]
        %v667 = vld [vmem:[%s533 + $0x2e8] sm:$0xff]
        %v668 = vld [vmem:[%s533 + $0x2f0] sm:$0xf]
        %v669 = vld [vmem:[%s533 + $0x2f4] sm:$0xff]
        %v670 = vld [vmem:[%s533 + $0x2fc] sm:$0xff]
        %v671 = vld [vmem:[%s533 + $0x304] sm:$0xff]
        %v672 = vld [vmem:[%s533 + $0x30c] sm:$0xff]
        %v673 = vld [vmem:[%s533 + $0x314] sm:$0xf]
        %v674 = vld [vmem:[%s533 + $0x318] sm:$0xff]
        %v675 = vld [vmem:[%s533 + $0x320] sm:$0xff]
        %v676 = vld [vmem:[%s533 + $0x328] sm:$0xff]
        %v677 = vld [vmem:[%s533 + $0x330] sm:$0xff]
        %v678 = vld [vmem:[%s533 + $0x338] sm:$0xf]
        %v679 = vld [vmem:[%s533 + $0x33c] sm:$0xff]
        %v680 = vld [vmem:[%s533 + $0x344] sm:$0xff]
        %v681 = vld [vmem:[%s533 + $0x34c] sm:$0xff]
        %v682 = vld [vmem:[%s533 + $0x354] sm:$0xff]
        %v683 = vld [vmem:[%s533 + $0x35c] sm:$0xf]
        %v684 = vld [vmem:[%s533 + $0x360] sm:$0xff]
        %v685 = vld [vmem:[%s533 + $0x368] sm:$0xff]
        %v686 = vld [vmem:[%s533 + $0x370] sm:$0xff]
        %v687 = vld [vmem:[%s533 + $0x378] sm:$0xff]
        %v688 = vld [vmem:[%s533 + $0x380] sm:$0xf]
        %v689 = vld [vmem:[%s533 + $0x384] sm:$0xff]
        %v690 = vld [vmem:[%s533 + $0x38c] sm:$0xff]
        %v691 = vld [vmem:[%s533 + $0x394] sm:$0xff]
        %v692 = vld [vmem:[%s533 + $0x39c] sm:$0xff]
        %v693 = vld [vmem:[%s533 + $0x3a4] sm:$0xf]
        %v694 = vld [vmem:[%s533 + $0x3a8] sm:$0xff]
        %v695 = vld [vmem:[%s533 + $0x3b0] sm:$0xff]
        %v696 = vld [vmem:[%s533 + $0x3b8] sm:$0xff]
        %v697 = vld [vmem:[%s533 + $0x3c0] sm:$0xff]
        %v698 = vld [vmem:[%s533 + $0x3c8] sm:$0xf]
        %v699 = vld [vmem:[%s533 + $0x3cc] sm:$0xff]
        %v700 = vld [vmem:[%s533 + $0x3d4] sm:$0xff]
        %v701 = vld [vmem:[%s533 + $0x3dc] sm:$0xff]
        %v702 = vld [vmem:[%s533 + $0x3e4] sm:$0xff]
        %v703 = vld [vmem:[%s533 + $0x3ec] sm:$0xf]
        %v704 = vld [vmem:[%s533 + $0x3f0] sm:$0xff]
        %v705 = vld [vmem:[%s533 + $0x3f8] sm:$0xff]
        %v706 = vld [vmem:[%s533 + $0x400] sm:$0xff]
        %v707 = vld [vmem:[%s533 + $0x408] sm:$0xff]
        %v708 = vld [vmem:[%s533 + $0x410] sm:$0xf]
        %v709 = vld [vmem:[%s533 + $0x414] sm:$0xff]
        %v710 = vld [vmem:[%s533 + $0x41c] sm:$0xff]
        %v711 = vld [vmem:[%s533 + $0x424] sm:$0xff]
        %v712 = vld [vmem:[%s533 + $0x42c] sm:$0xff]
        %v713 = vld [vmem:[%s533 + $0x434] sm:$0xf]
        %v714 = vld [vmem:[%s533 + $0x438] sm:$0xff]
        %v715 = vld [vmem:[%s533 + $0x440] sm:$0xff]
        %v716 = vld [vmem:[%s533 + $0x448] sm:$0xff]
        %v717 = vld [vmem:[%s533 + $0x450] sm:$0xff]
        %v718 = vld [vmem:[%s533 + $0x458] sm:$0xf]
        %v719 = vld [vmem:[%s533 + $0x45c] sm:$0xff]
        %v720 = vld [vmem:[%s533 + $0x464] sm:$0xff]
        %v721 = vld [vmem:[%s533 + $0x46c] sm:$0xff]
        %v722 = vld [vmem:[%s533 + $0x474] sm:$0xff]
        %v723 = vld [vmem:[%s533 + $0x47c] sm:$0xf]
        %v724 = vld [vmem:[%s533 + $0x480] sm:$0xff]
        %v725 = vld [vmem:[%s533 + $0x488] sm:$0xff]
        %v726 = vld [vmem:[%s533 + $0x490] sm:$0xff]
        %v727 = vld [vmem:[%s533 + $0x498] sm:$0xff]
        %v728 = vld [vmem:[%s533 + $0x4a0] sm:$0xf]
        %v729 = vld [vmem:[%s533 + $0x4a4] sm:$0xff]
        %v730 = vld [vmem:[%s533 + $0x4ac] sm:$0xff]
        %v731 = vld [vmem:[%s533 + $0x4b4] sm:$0xff]
        %v732 = vld [vmem:[%s533 + $0x4bc] sm:$0xff]
        %v733 = vld [vmem:[%s533 + $0x4c4] sm:$0xf]
        %v734 = vld [vmem:[%s533 + $0x4c8] sm:$0xff]
        %v735 = vld [vmem:[%s533 + $0x4d0] sm:$0xff]
        %v736 = vld [vmem:[%s533 + $0x4d8] sm:$0xff]
        %v737 = vld [vmem:[%s533 + $0x4e0] sm:$0xff]
        %v738 = vld [vmem:[%s533 + $0x4e8] sm:$0xf]
        %v739 = vld [vmem:[%s533 + $0x4ec] sm:$0xff]
        %v740 = vld [vmem:[%s533 + $0x4f4] sm:$0xff]
        %v741 = vld [vmem:[%s533 + $0x4fc] sm:$0xff]
        %v742 = vld [vmem:[%s533 + $0x504] sm:$0xff]
        %v743 = vld [vmem:[%s533 + $0x50c] sm:$0xf]
        %v744 = vld [vmem:[%s2] sm:$0xff]
        %v745 = vld [vmem:[%s2 + $0x8] sm:$0xff]
        %v746 = vld [vmem:[%s2 + $0x10] sm:$0xff]
        %v747 = vld [vmem:[%s2 + $0x18] sm:$0xff]
        %749 = vset.pattern.permute.xlu0 0
        %750 = vperm.xlu0 %749, %v744
        %v751 = vpop.permute.xlu0 %750
        %754 = vset.pattern.permute.xlu0 0
        %755 = vperm.xlu0 %754, %v745
        %v756 = vpop.permute.xlu0 %755
        %759 = vset.pattern.permute.xlu0 0
        %760 = vperm.xlu0 %759, %v746
        %v761 = vpop.permute.xlu0 %760
        %764 = vset.pattern.permute.xlu0 0
        %765 = vperm.xlu0 %764, %v747
        %v766 = vpop.permute.xlu0 %765
        %v776 = vunpack.c.l.b16 %v556
        %v777 = vunpack.c.h.b16 %v556
        %v778 = vunpack.c.l.b16 %v557
        %v779 = vunpack.c.l.b16 %v558
        %v780 = vunpack.c.h.b16 %v558
        %v781 = vunpack.c.l.b16 %v559
        %v782 = vunpack.c.l.b16 %v560
        %v783 = vunpack.c.h.b16 %v560
        %v784 = vunpack.c.l.b16 %v561
        %v785 = vunpack.c.l.b16 %v562
        %v786 = vunpack.c.h.b16 %v562
        %v787 = vunpack.c.l.b16 %v563
        %v788 = vpack.c.b16 %v779, %v776
        %v789 = vpack.c.b16 %v780, %v777
        %v790 = vpack.c.b16 %v781, %v778
        %v791 = vpack.c.b16 %v785, %v782
        %v792 = vpack.c.b16 %v786, %v783
        %v793 = vpack.c.b16 %v787, %v784
        %v978 = vunpack.c.l.b16 %v564
        %v979 = vunpack.c.h.b16 %v564
        %v980 = vunpack.c.l.b16 %v565
        %v981 = vunpack.c.h.b16 %v565
        %v982 = vunpack.c.l.b16 %v566
        %v983 = vunpack.c.h.b16 %v566
        %v984 = vunpack.c.l.b16 %v567
        %v985 = vunpack.c.h.b16 %v567
        %v986 = vunpack.c.l.b16 %v568
        %v987 = vunpack.c.l.b16 %v569
        %v988 = vunpack.c.h.b16 %v569
        %v989 = vunpack.c.l.b16 %v570
        %v990 = vunpack.c.h.b16 %v570
        %v991 = vunpack.c.l.b16 %v571
        %v992 = vunpack.c.h.b16 %v571
        %v993 = vunpack.c.l.b16 %v572
        %v994 = vunpack.c.h.b16 %v572
        %v995 = vunpack.c.l.b16 %v573
        %v996 = vunpack.c.l.b16 %v574
        %v997 = vunpack.c.h.b16 %v574
        %v998 = vunpack.c.l.b16 %v575
        %v999 = vunpack.c.h.b16 %v575
        %v1000 = vunpack.c.l.b16 %v576
        %v1001 = vunpack.c.h.b16 %v576
        %v1002 = vunpack.c.l.b16 %v577
        %v1003 = vunpack.c.h.b16 %v577
        %v1004 = vunpack.c.l.b16 %v578
        %v1005 = vunpack.c.l.b16 %v579
        %v1006 = vunpack.c.h.b16 %v579
        %v1007 = vunpack.c.l.b16 %v580
        %v1008 = vunpack.c.h.b16 %v580
        %v1009 = vunpack.c.l.b16 %v581
        %v1010 = vunpack.c.h.b16 %v581
        %v1011 = vunpack.c.l.b16 %v582
        %v1012 = vunpack.c.h.b16 %v582
        %v1013 = vunpack.c.l.b16 %v583
        %v1014 = vunpack.c.l.b16 %v584
        %v1015 = vunpack.c.h.b16 %v584
        %v1016 = vunpack.c.l.b16 %v585
        %v1017 = vunpack.c.h.b16 %v585
        %v1018 = vunpack.c.l.b16 %v586
        %v1019 = vunpack.c.h.b16 %v586
        %v1020 = vunpack.c.l.b16 %v587
        %v1021 = vunpack.c.h.b16 %v587
        %v1022 = vunpack.c.l.b16 %v588
        %v1023 = vunpack.c.l.b16 %v589
        %v1024 = vunpack.c.h.b16 %v589
        %v1025 = vunpack.c.l.b16 %v590
        %v1026 = vunpack.c.h.b16 %v590
        %v1027 = vunpack.c.l.b16 %v591
        %v1028 = vunpack.c.h.b16 %v591
        %v1029 = vunpack.c.l.b16 %v592
        %v1030 = vunpack.c.h.b16 %v592
        %v1031 = vunpack.c.l.b16 %v593
        %v1032 = vunpack.c.l.b16 %v594
        %v1033 = vunpack.c.h.b16 %v594
        %v1034 = vunpack.c.l.b16 %v595
        %v1035 = vunpack.c.h.b16 %v595
        %v1036 = vunpack.c.l.b16 %v596
        %v1037 = vunpack.c.h.b16 %v596
        %v1038 = vunpack.c.l.b16 %v597
        %v1039 = vunpack.c.h.b16 %v597
        %v1040 = vunpack.c.l.b16 %v598
        %v1041 = vunpack.c.l.b16 %v599
        %v1042 = vunpack.c.h.b16 %v599
        %v1043 = vunpack.c.l.b16 %v600
        %v1044 = vunpack.c.h.b16 %v600
        %v1045 = vunpack.c.l.b16 %v601
        %v1046 = vunpack.c.h.b16 %v601
        %v1047 = vunpack.c.l.b16 %v602
        %v1048 = vunpack.c.h.b16 %v602
        %v1049 = vunpack.c.l.b16 %v603
        %v1050 = vunpack.c.l.b16 %v604
        %v1051 = vunpack.c.h.b16 %v604
        %v1052 = vunpack.c.l.b16 %v605
        %v1053 = vunpack.c.h.b16 %v605
        %v1054 = vunpack.c.l.b16 %v606
        %v1055 = vunpack.c.h.b16 %v606
        %v1056 = vunpack.c.l.b16 %v607
        %v1057 = vunpack.c.h.b16 %v607
        %v1058 = vunpack.c.l.b16 %v608
        %v1059 = vunpack.c.l.b16 %v609
        %v1060 = vunpack.c.h.b16 %v609
        %v1061 = vunpack.c.l.b16 %v610
        %v1062 = vunpack.c.h.b16 %v610
        %v1063 = vunpack.c.l.b16 %v611
        %v1064 = vunpack.c.h.b16 %v611
        %v1065 = vunpack.c.l.b16 %v612
        %v1066 = vunpack.c.h.b16 %v612
        %v1067 = vunpack.c.l.b16 %v613
        %v1068 = vunpack.c.l.b16 %v614
        %v1069 = vunpack.c.h.b16 %v614
        %v1070 = vunpack.c.l.b16 %v615
        %v1071 = vunpack.c.h.b16 %v615
        %v1072 = vunpack.c.l.b16 %v616
        %v1073 = vunpack.c.h.b16 %v616
        %v1074 = vunpack.c.l.b16 %v617
        %v1075 = vunpack.c.h.b16 %v617
        %v1076 = vunpack.c.l.b16 %v618
        %v1077 = vunpack.c.l.b16 %v619
        %v1078 = vunpack.c.h.b16 %v619
        %v1079 = vunpack.c.l.b16 %v620
        %v1080 = vunpack.c.h.b16 %v620
        %v1081 = vunpack.c.l.b16 %v621
        %v1082 = vunpack.c.h.b16 %v621
        %v1083 = vunpack.c.l.b16 %v622
        %v1084 = vunpack.c.h.b16 %v622
        %v1085 = vunpack.c.l.b16 %v623
        %v1086 = vunpack.c.l.b16 %v624
        %v1087 = vunpack.c.h.b16 %v624
        %v1088 = vunpack.c.l.b16 %v625
        %v1089 = vunpack.c.h.b16 %v625
        %v1090 = vunpack.c.l.b16 %v626
        %v1091 = vunpack.c.h.b16 %v626
        %v1092 = vunpack.c.l.b16 %v627
        %v1093 = vunpack.c.h.b16 %v627
        %v1094 = vunpack.c.l.b16 %v628
        %v1095 = vunpack.c.l.b16 %v629
        %v1096 = vunpack.c.h.b16 %v629
        %v1097 = vunpack.c.l.b16 %v630
        %v1098 = vunpack.c.h.b16 %v630
        %v1099 = vunpack.c.l.b16 %v631
        %v1100 = vunpack.c.h.b16 %v631
        %v1101 = vunpack.c.l.b16 %v632
        %v1102 = vunpack.c.h.b16 %v632
        %v1103 = vunpack.c.l.b16 %v633
        %v1104 = vunpack.c.l.b16 %v634
        %v1105 = vunpack.c.h.b16 %v634
        %v1106 = vunpack.c.l.b16 %v635
        %v1107 = vunpack.c.h.b16 %v635
        %v1108 = vunpack.c.l.b16 %v636
        %v1109 = vunpack.c.h.b16 %v636
        %v1110 = vunpack.c.l.b16 %v637
        %v1111 = vunpack.c.h.b16 %v637
        %v1112 = vunpack.c.l.b16 %v638
        %v1113 = vunpack.c.l.b16 %v639
        %v1114 = vunpack.c.h.b16 %v639
        %v1115 = vunpack.c.l.b16 %v640
        %v1116 = vunpack.c.h.b16 %v640
        %v1117 = vunpack.c.l.b16 %v641
        %v1118 = vunpack.c.h.b16 %v641
        %v1119 = vunpack.c.l.b16 %v642
        %v1120 = vunpack.c.h.b16 %v642
        %v1121 = vunpack.c.l.b16 %v643
        %v1122 = vunpack.c.l.b16 %v644
        %v1123 = vunpack.c.h.b16 %v644
        %v1124 = vunpack.c.l.b16 %v645
        %v1125 = vunpack.c.h.b16 %v645
        %v1126 = vunpack.c.l.b16 %v646
        %v1127 = vunpack.c.h.b16 %v646
        %v1128 = vunpack.c.l.b16 %v647
        %v1129 = vunpack.c.h.b16 %v647
        %v1130 = vunpack.c.l.b16 %v648
        %v1131 = vunpack.c.l.b16 %v649
        %v1132 = vunpack.c.h.b16 %v649
        %v1133 = vunpack.c.l.b16 %v650
        %v1134 = vunpack.c.h.b16 %v650
        %v1135 = vunpack.c.l.b16 %v651
        %v1136 = vunpack.c.h.b16 %v651
        %v1137 = vunpack.c.l.b16 %v652
        %v1138 = vunpack.c.h.b16 %v652
        %v1139 = vunpack.c.l.b16 %v653
        %v1140 = vunpack.c.l.b16 %v654
        %v1141 = vunpack.c.h.b16 %v654
        %v1142 = vunpack.c.l.b16 %v655
        %v1143 = vunpack.c.h.b16 %v655
        %v1144 = vunpack.c.l.b16 %v656
        %v1145 = vunpack.c.h.b16 %v656
        %v1146 = vunpack.c.l.b16 %v657
        %v1147 = vunpack.c.h.b16 %v657
        %v1148 = vunpack.c.l.b16 %v658
        %v1149 = vunpack.c.l.b16 %v659
        %v1150 = vunpack.c.h.b16 %v659
        %v1151 = vunpack.c.l.b16 %v660
        %v1152 = vunpack.c.h.b16 %v660
        %v1153 = vunpack.c.l.b16 %v661
        %v1154 = vunpack.c.h.b16 %v661
        %v1155 = vunpack.c.l.b16 %v662
        %v1156 = vunpack.c.h.b16 %v662
        %v1157 = vunpack.c.l.b16 %v663
        %v1158 = vunpack.c.l.b16 %v664
        %v1159 = vunpack.c.h.b16 %v664
        %v1160 = vunpack.c.l.b16 %v665
        %v1161 = vunpack.c.h.b16 %v665
        %v1162 = vunpack.c.l.b16 %v666
        %v1163 = vunpack.c.h.b16 %v666
        %v1164 = vunpack.c.l.b16 %v667
        %v1165 = vunpack.c.h.b16 %v667
        %v1166 = vunpack.c.l.b16 %v668
        %v1167 = vunpack.c.l.b16 %v669
        %v1168 = vunpack.c.h.b16 %v669
        %v1169 = vunpack.c.l.b16 %v670
        %v1170 = vunpack.c.h.b16 %v670
        %v1171 = vunpack.c.l.b16 %v671
        %v1172 = vunpack.c.h.b16 %v671
        %v1173 = vunpack.c.l.b16 %v672
        %v1174 = vunpack.c.h.b16 %v672
        %v1175 = vunpack.c.l.b16 %v673
        %v1176 = vunpack.c.l.b16 %v674
        %v1177 = vunpack.c.h.b16 %v674
        %v1178 = vunpack.c.l.b16 %v675
        %v1179 = vunpack.c.h.b16 %v675
        %v1180 = vunpack.c.l.b16 %v676
        %v1181 = vunpack.c.h.b16 %v676
        %v1182 = vunpack.c.l.b16 %v677
        %v1183 = vunpack.c.h.b16 %v677
        %v1184 = vunpack.c.l.b16 %v678
        %v1185 = vunpack.c.l.b16 %v679
        %v1186 = vunpack.c.h.b16 %v679
        %v1187 = vunpack.c.l.b16 %v680
        %v1188 = vunpack.c.h.b16 %v680
        %v1189 = vunpack.c.l.b16 %v681
        %v1190 = vunpack.c.h.b16 %v681
        %v1191 = vunpack.c.l.b16 %v682
        %v1192 = vunpack.c.h.b16 %v682
        %v1193 = vunpack.c.l.b16 %v683
        %v1194 = vunpack.c.l.b16 %v684
        %v1195 = vunpack.c.h.b16 %v684
        %v1196 = vunpack.c.l.b16 %v685
        %v1197 = vunpack.c.h.b16 %v685
        %v1198 = vunpack.c.l.b16 %v686
        %v1199 = vunpack.c.h.b16 %v686
        %v1200 = vunpack.c.l.b16 %v687
        %v1201 = vunpack.c.h.b16 %v687
        %v1202 = vunpack.c.l.b16 %v688
        %v1203 = vunpack.c.l.b16 %v689
        %v1204 = vunpack.c.h.b16 %v689
        %v1205 = vunpack.c.l.b16 %v690
        %v1206 = vunpack.c.h.b16 %v690
        %v1207 = vunpack.c.l.b16 %v691
        %v1208 = vunpack.c.h.b16 %v691
        %v1209 = vunpack.c.l.b16 %v692
        %v1210 = vunpack.c.h.b16 %v692
        %v1211 = vunpack.c.l.b16 %v693
        %v1212 = vunpack.c.l.b16 %v694
        %v1213 = vunpack.c.h.b16 %v694
        %v1214 = vunpack.c.l.b16 %v695
        %v1215 = vunpack.c.h.b16 %v695
        %v1216 = vunpack.c.l.b16 %v696
        %v1217 = vunpack.c.h.b16 %v696
        %v1218 = vunpack.c.l.b16 %v697
        %v1219 = vunpack.c.h.b16 %v697
        %v1220 = vunpack.c.l.b16 %v698
        %v1221 = vunpack.c.l.b16 %v699
        %v1222 = vunpack.c.h.b16 %v699
        %v1223 = vunpack.c.l.b16 %v700
        %v1224 = vunpack.c.h.b16 %v700
        %v1225 = vunpack.c.l.b16 %v701
        %v1226 = vunpack.c.h.b16 %v701
        %v1227 = vunpack.c.l.b16 %v702
        %v1228 = vunpack.c.h.b16 %v702
        %v1229 = vunpack.c.l.b16 %v703
        %v1230 = vunpack.c.l.b16 %v704
        %v1231 = vunpack.c.h.b16 %v704
        %v1232 = vunpack.c.l.b16 %v705
        %v1233 = vunpack.c.h.b16 %v705
        %v1234 = vunpack.c.l.b16 %v706
        %v1235 = vunpack.c.h.b16 %v706
        %v1236 = vunpack.c.l.b16 %v707
        %v1237 = vunpack.c.h.b16 %v707
        %v1238 = vunpack.c.l.b16 %v708
        %v1239 = vunpack.c.l.b16 %v709
        %v1240 = vunpack.c.h.b16 %v709
        %v1241 = vunpack.c.l.b16 %v710
        %v1242 = vunpack.c.h.b16 %v710
        %v1243 = vunpack.c.l.b16 %v711
        %v1244 = vunpack.c.h.b16 %v711
        %v1245 = vunpack.c.l.b16 %v712
        %v1246 = vunpack.c.h.b16 %v712
        %v1247 = vunpack.c.l.b16 %v713
        %v1248 = vunpack.c.l.b16 %v714
        %v1249 = vunpack.c.h.b16 %v714
        %v1250 = vunpack.c.l.b16 %v715
        %v1251 = vunpack.c.h.b16 %v715
        %v1252 = vunpack.c.l.b16 %v716
        %v1253 = vunpack.c.h.b16 %v716
        %v1254 = vunpack.c.l.b16 %v717
        %v1255 = vunpack.c.h.b16 %v717
        %v1256 = vunpack.c.l.b16 %v718
        %v1257 = vunpack.c.l.b16 %v719
        %v1258 = vunpack.c.h.b16 %v719
        %v1259 = vunpack.c.l.b16 %v720
        %v1260 = vunpack.c.h.b16 %v720
        %v1261 = vunpack.c.l.b16 %v721
        %v1262 = vunpack.c.h.b16 %v721
        %v1263 = vunpack.c.l.b16 %v722
        %v1264 = vunpack.c.h.b16 %v722
        %v1265 = vunpack.c.l.b16 %v723
        %v1266 = vunpack.c.l.b16 %v724
        %v1267 = vunpack.c.h.b16 %v724
        %v1268 = vunpack.c.l.b16 %v725
        %v1269 = vunpack.c.h.b16 %v725
        %v1270 = vunpack.c.l.b16 %v726
        %v1271 = vunpack.c.h.b16 %v726
        %v1272 = vunpack.c.l.b16 %v727
        %v1273 = vunpack.c.h.b16 %v727
        %v1274 = vunpack.c.l.b16 %v728
        %v1275 = vunpack.c.l.b16 %v729
        %v1276 = vunpack.c.h.b16 %v729
        %v1277 = vunpack.c.l.b16 %v730
        %v1278 = vunpack.c.h.b16 %v730
        %v1279 = vunpack.c.l.b16 %v731
        %v1280 = vunpack.c.h.b16 %v731
        %v1281 = vunpack.c.l.b16 %v732
        %v1282 = vunpack.c.h.b16 %v732
        %v1283 = vunpack.c.l.b16 %v733
        %v1284 = vunpack.c.l.b16 %v734
        %v1285 = vunpack.c.h.b16 %v734
        %v1286 = vunpack.c.l.b16 %v735
        %v1287 = vunpack.c.h.b16 %v735
        %v1288 = vunpack.c.l.b16 %v736
        %v1289 = vunpack.c.h.b16 %v736
        %v1290 = vunpack.c.l.b16 %v737
        %v1291 = vunpack.c.h.b16 %v737
        %v1292 = vunpack.c.l.b16 %v738
        %v1293 = vunpack.c.l.b16 %v739
        %v1294 = vunpack.c.h.b16 %v739
        %v1295 = vunpack.c.l.b16 %v740
        %v1296 = vunpack.c.h.b16 %v740
        %v1297 = vunpack.c.l.b16 %v741
        %v1298 = vunpack.c.h.b16 %v741
        %v1299 = vunpack.c.l.b16 %v742
        %v1300 = vunpack.c.h.b16 %v742
        %v1301 = vunpack.c.l.b16 %v743
        %v1302 = vpack.c.b16 %v987, %v978
        %v1303 = vpack.c.b16 %v988, %v979
        %v1304 = vpack.c.b16 %v989, %v980
        %v1305 = vpack.c.b16 %v990, %v981
        %v1306 = vpack.c.b16 %v991, %v982
        %v1307 = vpack.c.b16 %v992, %v983
        %v1308 = vpack.c.b16 %v993, %v984
        %v1309 = vpack.c.b16 %v994, %v985
        %v1310 = vpack.c.b16 %v995, %v986
        %v1311 = vpack.c.b16 %v1005, %v996
        %v1312 = vpack.c.b16 %v1006, %v997
        %v1313 = vpack.c.b16 %v1007, %v998
        %v1314 = vpack.c.b16 %v1008, %v999
        %v1315 = vpack.c.b16 %v1009, %v1000
        %v1316 = vpack.c.b16 %v1010, %v1001
        %v1317 = vpack.c.b16 %v1011, %v1002
        %v1318 = vpack.c.b16 %v1012, %v1003
        %v1319 = vpack.c.b16 %v1013, %v1004
        %v1320 = vpack.c.b16 %v1023, %v1014
        %v1321 = vpack.c.b16 %v1024, %v1015
        %v1322 = vpack.c.b16 %v1025, %v1016
        %v1323 = vpack.c.b16 %v1026, %v1017
        %v1324 = vpack.c.b16 %v1027, %v1018
        %v1325 = vpack.c.b16 %v1028, %v1019
        %v1326 = vpack.c.b16 %v1029, %v1020
        %v1327 = vpack.c.b16 %v1030, %v1021
        %v1328 = vpack.c.b16 %v1031, %v1022
        %v1329 = vpack.c.b16 %v1041, %v1032
        %v1330 = vpack.c.b16 %v1042, %v1033
        %v1331 = vpack.c.b16 %v1043, %v1034
        %v1332 = vpack.c.b16 %v1044, %v1035
        %v1333 = vpack.c.b16 %v1045, %v1036
        %v1334 = vpack.c.b16 %v1046, %v1037
        %v1335 = vpack.c.b16 %v1047, %v1038
        %v1336 = vpack.c.b16 %v1048, %v1039
        %v1337 = vpack.c.b16 %v1049, %v1040
        %v1338 = vpack.c.b16 %v1059, %v1050
        %v1339 = vpack.c.b16 %v1060, %v1051
        %v1340 = vpack.c.b16 %v1061, %v1052
        %v1341 = vpack.c.b16 %v1062, %v1053
        %v1342 = vpack.c.b16 %v1063, %v1054
        %v1343 = vpack.c.b16 %v1064, %v1055
        %v1344 = vpack.c.b16 %v1065, %v1056
        %v1345 = vpack.c.b16 %v1066, %v1057
        %v1346 = vpack.c.b16 %v1067, %v1058
        %v1347 = vpack.c.b16 %v1077, %v1068
        %v1348 = vpack.c.b16 %v1078, %v1069
        %v1349 = vpack.c.b16 %v1079, %v1070
        %v1350 = vpack.c.b16 %v1080, %v1071
        %v1351 = vpack.c.b16 %v1081, %v1072
        %v1352 = vpack.c.b16 %v1082, %v1073
        %v1353 = vpack.c.b16 %v1083, %v1074
        %v1354 = vpack.c.b16 %v1084, %v1075
        %v1355 = vpack.c.b16 %v1085, %v1076
        %v1356 = vpack.c.b16 %v1095, %v1086
        %v1357 = vpack.c.b16 %v1096, %v1087
        %v1358 = vpack.c.b16 %v1097, %v1088
        %v1359 = vpack.c.b16 %v1098, %v1089
        %v1360 = vpack.c.b16 %v1099, %v1090
        %v1361 = vpack.c.b16 %v1100, %v1091
        %v1362 = vpack.c.b16 %v1101, %v1092
        %v1363 = vpack.c.b16 %v1102, %v1093
        %v1364 = vpack.c.b16 %v1103, %v1094
        %v1365 = vpack.c.b16 %v1113, %v1104
        %v1366 = vpack.c.b16 %v1114, %v1105
        %v1367 = vpack.c.b16 %v1115, %v1106
        %v1368 = vpack.c.b16 %v1116, %v1107
        %v1369 = vpack.c.b16 %v1117, %v1108
        %v1370 = vpack.c.b16 %v1118, %v1109
        %v1371 = vpack.c.b16 %v1119, %v1110
        %v1372 = vpack.c.b16 %v1120, %v1111
        %v1373 = vpack.c.b16 %v1121, %v1112
        %v1374 = vpack.c.b16 %v1131, %v1122
        %v1375 = vpack.c.b16 %v1132, %v1123
        %v1376 = vpack.c.b16 %v1133, %v1124
        %v1377 = vpack.c.b16 %v1134, %v1125
        %v1378 = vpack.c.b16 %v1135, %v1126
        %v1379 = vpack.c.b16 %v1136, %v1127
        %v1380 = vpack.c.b16 %v1137, %v1128
        %v1381 = vpack.c.b16 %v1138, %v1129
        %v1382 = vpack.c.b16 %v1139, %v1130
        %v1383 = vpack.c.b16 %v1149, %v1140
        %v1384 = vpack.c.b16 %v1150, %v1141
        %v1385 = vpack.c.b16 %v1151, %v1142
        %v1386 = vpack.c.b16 %v1152, %v1143
        %v1387 = vpack.c.b16 %v1153, %v1144
        %v1388 = vpack.c.b16 %v1154, %v1145
        %v1389 = vpack.c.b16 %v1155, %v1146
        %v1390 = vpack.c.b16 %v1156, %v1147
        %v1391 = vpack.c.b16 %v1157, %v1148
        %v1392 = vpack.c.b16 %v1167, %v1158
        %v1393 = vpack.c.b16 %v1168, %v1159
        %v1394 = vpack.c.b16 %v1169, %v1160
        %v1395 = vpack.c.b16 %v1170, %v1161
        %v1396 = vpack.c.b16 %v1171, %v1162
        %v1397 = vpack.c.b16 %v1172, %v1163
        %v1398 = vpack.c.b16 %v1173, %v1164
        %v1399 = vpack.c.b16 %v1174, %v1165
        %v1400 = vpack.c.b16 %v1175, %v1166
        %v1401 = vpack.c.b16 %v1185, %v1176
        %v1402 = vpack.c.b16 %v1186, %v1177
        %v1403 = vpack.c.b16 %v1187, %v1178
        %v1404 = vpack.c.b16 %v1188, %v1179
        %v1405 = vpack.c.b16 %v1189, %v1180
        %v1406 = vpack.c.b16 %v1190, %v1181
        %v1407 = vpack.c.b16 %v1191, %v1182
        %v1408 = vpack.c.b16 %v1192, %v1183
        %v1409 = vpack.c.b16 %v1193, %v1184
        %v1410 = vpack.c.b16 %v1203, %v1194
        %v1411 = vpack.c.b16 %v1204, %v1195
        %v1412 = vpack.c.b16 %v1205, %v1196
        %v1413 = vpack.c.b16 %v1206, %v1197
        %v1414 = vpack.c.b16 %v1207, %v1198
        %v1415 = vpack.c.b16 %v1208, %v1199
        %v1416 = vpack.c.b16 %v1209, %v1200
        %v1417 = vpack.c.b16 %v1210, %v1201
        %v1418 = vpack.c.b16 %v1211, %v1202
        %v1419 = vpack.c.b16 %v1221, %v1212
        %v1420 = vpack.c.b16 %v1222, %v1213
        %v1421 = vpack.c.b16 %v1223, %v1214
        %v1422 = vpack.c.b16 %v1224, %v1215
        %v1423 = vpack.c.b16 %v1225, %v1216
        %v1424 = vpack.c.b16 %v1226, %v1217
        %v1425 = vpack.c.b16 %v1227, %v1218
        %v1426 = vpack.c.b16 %v1228, %v1219
        %v1427 = vpack.c.b16 %v1229, %v1220
        %v1428 = vpack.c.b16 %v1239, %v1230
        %v1429 = vpack.c.b16 %v1240, %v1231
        %v1430 = vpack.c.b16 %v1241, %v1232
        %v1431 = vpack.c.b16 %v1242, %v1233
        %v1432 = vpack.c.b16 %v1243, %v1234
        %v1433 = vpack.c.b16 %v1244, %v1235
        %v1434 = vpack.c.b16 %v1245, %v1236
        %v1435 = vpack.c.b16 %v1246, %v1237
        %v1436 = vpack.c.b16 %v1247, %v1238
        %v1437 = vpack.c.b16 %v1257, %v1248
        %v1438 = vpack.c.b16 %v1258, %v1249
        %v1439 = vpack.c.b16 %v1259, %v1250
        %v1440 = vpack.c.b16 %v1260, %v1251
        %v1441 = vpack.c.b16 %v1261, %v1252
        %v1442 = vpack.c.b16 %v1262, %v1253
        %v1443 = vpack.c.b16 %v1263, %v1254
        %v1444 = vpack.c.b16 %v1264, %v1255
        %v1445 = vpack.c.b16 %v1265, %v1256
        %v1446 = vpack.c.b16 %v1275, %v1266
        %v1447 = vpack.c.b16 %v1276, %v1267
        %v1448 = vpack.c.b16 %v1277, %v1268
        %v1449 = vpack.c.b16 %v1278, %v1269
        %v1450 = vpack.c.b16 %v1279, %v1270
        %v1451 = vpack.c.b16 %v1280, %v1271
        %v1452 = vpack.c.b16 %v1281, %v1272
        %v1453 = vpack.c.b16 %v1282, %v1273
        %v1454 = vpack.c.b16 %v1283, %v1274
        %v1455 = vpack.c.b16 %v1293, %v1284
        %v1456 = vpack.c.b16 %v1294, %v1285
        %v1457 = vpack.c.b16 %v1295, %v1286
        %v1458 = vpack.c.b16 %v1296, %v1287
        %v1459 = vpack.c.b16 %v1297, %v1288
        %v1460 = vpack.c.b16 %v1298, %v1289
        %v1461 = vpack.c.b16 %v1299, %v1290
        %v1462 = vpack.c.b16 %v1300, %v1291
        %v1463 = vpack.c.b16 %v1301, %v1292
        %vm1626 = vcmask 261120
        %v1628 = vsel %vm1626, %v790, 0
        %v1631 = vsel %vm1626, %v793, 0
        %1633 = vmatprep.subr.bf16.mxu0 %v1366
        %1634 = vmatpush1.bf16.msra.mxu0 %v1365
        %1635 = vmatprep.subr.bf16.mxu0 %v1357
        %1636 = vmatpush1.bf16.msra.mxu0 %v1356
        %1637 = vmatprep.subr.bf16.mxu0 %v1348
        %1638 = vmatpush1.bf16.msra.mxu0 %v1347
        %1639 = vmatprep.subr.bf16.mxu0 %v1339
        %1640 = vmatpush1.bf16.msra.mxu0 %v1338
        %1641 = vmatprep.subr.bf16.mxu0 %v1330
        %1642 = vmatpush1.bf16.msra.mxu0 %v1329
        %1643 = vmatprep.subr.bf16.mxu0 %v1321
        %1644 = vmatpush1.bf16.msra.mxu0 %v1320
        %1645 = vmatprep.subr.bf16.mxu0 %v1312
        %1646 = vmatpush1.bf16.msra.mxu0 %v1311
        %1647 = vmatprep.subr.bf16.mxu0 %v1303
        %1648 = vmatpush1.bf16.msra.mxu0 %v1302
        %1649 = vmatprep.subr.bf16.mxu0 %v1438
        %1650 = vmatpush2.bf16.msra.mxu0 %v1437
        %1651 = vmatprep.subr.bf16.mxu0 %v1429
        %1652 = vmatpush2.bf16.msra.mxu0 %v1428
        %1653 = vmatprep.subr.bf16.mxu0 %v1420
        %1654 = vmatpush2.bf16.msra.mxu0 %v1419
        %1655 = vmatprep.subr.bf16.mxu0 %v1411
        %1656 = vmatpush2.bf16.msra.mxu0 %v1410
        %1657 = vmatprep.subr.bf16.mxu0 %v1402
        %1658 = vmatpush2.bf16.msra.mxu0 %v1401
        %1659 = vmatprep.subr.bf16.mxu0 %v1393
        %1660 = vmatpush2.bf16.msra.mxu0 %v1392
        %1661 = vmatprep.subr.bf16.mxu0 %v1384
        %1662 = vmatpush2.bf16.msra.mxu0 %v1383
        %1663 = vmatprep.subr.bf16.mxu0 %v1375
        %1664 = vmatpush2.bf16.msra.mxu0 %v1374
        %1665 = vmatprep.mubr.bf16.mxu0 %v789
        %1666 = vmatmul.mubr.bf16.gmra.mxu0 %v788
        %v1667 = vpop.f32.mrf.mxu0
        %v1668 = vadd.f32 %v751, %v1667
        %v1669 = vpop.f32.mrf.mxu0
        %v1670 = vadd.f32 %v751, %v1669
        %v1671 = vpop.f32.mrf.mxu0
        %v1672 = vadd.f32 %v756, %v1671
        %v1673 = vpop.f32.mrf.mxu0
        %v1674 = vadd.f32 %v756, %v1673
        %1675 = vmatprep.mubr.bf16.mxu0 %v792
        %1676 = vmatmul.mubr.bf16.gmra.mxu0 %v791
        %v1677 = vpop.f32.mrf.mxu0
        %v1678 = vadd.f32 %v761, %v1677
        %v1679 = vpop.f32.mrf.mxu0
        %v1680 = vadd.f32 %v761, %v1679
        %v1681 = vpop.f32.mrf.mxu0
        %v1682 = vadd.f32 %v766, %v1681
        %v1683 = vpop.f32.mrf.mxu0
        %v1684 = vadd.f32 %v766, %v1683
        %1685 = vdwg.mxu0
        %1686 = vmatprep.subr.bf16.mxu0 0
        %1687 = vmatpush1.bf16.msra.mxu0 0
        %1688 = vmatprep.subr.bf16.mxu0 0
        %1689 = vmatpush1.bf16.msra.mxu0 0
        %1690 = vmatprep.subr.bf16.mxu0 0
        %1691 = vmatpush1.bf16.msra.mxu0 0
        %1692 = vmatprep.subr.bf16.mxu0 0
        %1693 = vmatpush1.bf16.msra.mxu0 0
        %1694 = vmatprep.subr.bf16.mxu0 0
        %1695 = vmatpush1.bf16.msra.mxu0 0
        %1696 = vmatprep.subr.bf16.mxu0 0
        %1697 = vmatpush1.bf16.msra.mxu0 0
        %1698 = vmatprep.subr.bf16.mxu0 %v1456
        %1699 = vmatpush1.bf16.msra.mxu0 %v1455
        %1700 = vmatprep.subr.bf16.mxu0 %v1447
        %1701 = vmatpush1.bf16.msra.mxu0 %v1446
        %1702 = vmatprep.subr.bf16.mxu0 0
        %1703 = vmatpush2.bf16.msra.mxu0 0
        %1704 = vmatprep.subr.bf16.mxu0 0
        %1705 = vmatpush2.bf16.msra.mxu0 0
        %1706 = vmatprep.subr.bf16.mxu0 0
        %1707 = vmatpush2.bf16.msra.mxu0 0
        %1708 = vmatprep.subr.bf16.mxu0 0
        %1709 = vmatpush2.bf16.msra.mxu0 0
        %1710 = vmatprep.subr.bf16.mxu0 0
        %1711 = vmatpush2.bf16.msra.mxu0 0
        %1712 = vmatprep.subr.bf16.mxu0 0
        %1713 = vmatpush2.bf16.msra.mxu0 0
        %1714 = vmatprep.subr.bf16.mxu0 0
        %1715 = vmatpush2.bf16.msra.mxu0 0
        %1716 = vmatprep.subr.bf16.mxu0 0
        %1717 = vmatpush2.bf16.msra.mxu0 0
        %1718 = vmatprep.mubr.bf16.mxu0 0
        %1719 = vmatmul.mubr.bf16.gmra.mxu0 %v1628
        %v1720 = vpop.f32.mrf.mxu0
        %v1721 = vadd.f32 %v1668, %v1720
        %v1722 = vpop.f32.mrf.mxu0
        %v1723 = vadd.f32 %v1670, %v1722
        %v1724 = vpop.f32.mrf.mxu0
        %v1725 = vadd.f32 %v1672, %v1724
        %v1726 = vpop.f32.mrf.mxu0
        %v1727 = vadd.f32 %v1674, %v1726
        %1728 = vmatprep.mubr.bf16.mxu0 0
        %1729 = vmatmul.mubr.bf16.gmra.mxu0 %v1631
        %v1730 = vpop.f32.mrf.mxu0
        %v1731 = vadd.f32 %v1678, %v1730
        %v1732 = vpop.f32.mrf.mxu0
        %v1733 = vadd.f32 %v1680, %v1732
        %v1734 = vpop.f32.mrf.mxu0
        %v1735 = vadd.f32 %v1682, %v1734
        %v1736 = vpop.f32.mrf.mxu0
        %v1737 = vadd.f32 %v1684, %v1736
        %1738 = vdwg.mxu0
        %1739 = vmatprep.subr.bf16.mxu0 %v1368
        %1740 = vmatpush1.bf16.msra.mxu0 %v1367
        %1741 = vmatprep.subr.bf16.mxu0 %v1359
        %1742 = vmatpush1.bf16.msra.mxu0 %v1358
        %1743 = vmatprep.subr.bf16.mxu0 %v1350
        %1744 = vmatpush1.bf16.msra.mxu0 %v1349
        %1745 = vmatprep.subr.bf16.mxu0 %v1341
        %1746 = vmatpush1.bf16.msra.mxu0 %v1340
        %1747 = vmatprep.subr.bf16.mxu0 %v1332
        %1748 = vmatpush1.bf16.msra.mxu0 %v1331
        %1749 = vmatprep.subr.bf16.mxu0 %v1323
        %1750 = vmatpush1.bf16.msra.mxu0 %v1322
        %1751 = vmatprep.subr.bf16.mxu0 %v1314
        %1752 = vmatpush1.bf16.msra.mxu0 %v1313
        %1753 = vmatprep.subr.bf16.mxu0 %v1305
        %1754 = vmatpush1.bf16.msra.mxu0 %v1304
        %1755 = vmatprep.subr.bf16.mxu0 %v1440
        %1756 = vmatpush2.bf16.msra.mxu0 %v1439
        %1757 = vmatprep.subr.bf16.mxu0 %v1431
        %1758 = vmatpush2.bf16.msra.mxu0 %v1430
        %1759 = vmatprep.subr.bf16.mxu0 %v1422
        %1760 = vmatpush2.bf16.msra.mxu0 %v1421
        %1761 = vmatprep.subr.bf16.mxu0 %v1413
        %1762 = vmatpush2.bf16.msra.mxu0 %v1412
        %1763 = vmatprep.subr.bf16.mxu0 %v1404
        %1764 = vmatpush2.bf16.msra.mxu0 %v1403
        %1765 = vmatprep.subr.bf16.mxu0 %v1395
        %1766 = vmatpush2.bf16.msra.mxu0 %v1394
        %1767 = vmatprep.subr.bf16.mxu0 %v1386
        %1768 = vmatpush2.bf16.msra.mxu0 %v1385
        %1769 = vmatprep.subr.bf16.mxu0 %v1377
        %1770 = vmatpush2.bf16.msra.mxu0 %v1376
        %1771 = vmatprep.mubr.bf16.mxu0 %v789
        %1772 = vmatmul.mubr.bf16.gmra.mxu0 %v788
        %v1773 = vpop.f32.mrf.mxu0
        %v1774 = vadd.f32 %v751, %v1773
        %v1775 = vpop.f32.mrf.mxu0
        %v1776 = vadd.f32 %v751, %v1775
        %v1777 = vpop.f32.mrf.mxu0
        %v1778 = vadd.f32 %v756, %v1777
        %v1779 = vpop.f32.mrf.mxu0
        %v1780 = vadd.f32 %v756, %v1779
        %1781 = vmatprep.mubr.bf16.mxu0 %v792
        %1782 = vmatmul.mubr.bf16.gmra.mxu0 %v791
        %v1783 = vpop.f32.mrf.mxu0
        %v1784 = vadd.f32 %v761, %v1783
        %v1785 = vpop.f32.mrf.mxu0
        %v1786 = vadd.f32 %v761, %v1785
        %v1787 = vpop.f32.mrf.mxu0
        %v1788 = vadd.f32 %v766, %v1787
        %v1789 = vpop.f32.mrf.mxu0
        %v1790 = vadd.f32 %v766, %v1789
        %1791 = vdwg.mxu0
        %1792 = vmatprep.subr.bf16.mxu0 0
        %1793 = vmatpush1.bf16.msra.mxu0 0
        %1794 = vmatprep.subr.bf16.mxu0 0
        %1795 = vmatpush1.bf16.msra.mxu0 0
        %1796 = vmatprep.subr.bf16.mxu0 0
        %1797 = vmatpush1.bf16.msra.mxu0 0
        %1798 = vmatprep.subr.bf16.mxu0 0
        %1799 = vmatpush1.bf16.msra.mxu0 0
        %1800 = vmatprep.subr.bf16.mxu0 0
        %1801 = vmatpush1.bf16.msra.mxu0 0
        %1802 = vmatprep.subr.bf16.mxu0 0
        %1803 = vmatpush1.bf16.msra.mxu0 0
        %1804 = vmatprep.subr.bf16.mxu0 %v1458
        %1805 = vmatpush1.bf16.msra.mxu0 %v1457
        %1806 = vmatprep.subr.bf16.mxu0 %v1449
        %1807 = vmatpush1.bf16.msra.mxu0 %v1448
        %1808 = vmatprep.subr.bf16.mxu0 0
        %1809 = vmatpush2.bf16.msra.mxu0 0
        %1810 = vmatprep.subr.bf16.mxu0 0
        %1811 = vmatpush2.bf16.msra.mxu0 0
        %1812 = vmatprep.subr.bf16.mxu0 0
        %1813 = vmatpush2.bf16.msra.mxu0 0
        %1814 = vmatprep.subr.bf16.mxu0 0
        %1815 = vmatpush2.bf16.msra.mxu0 0
        %1816 = vmatprep.subr.bf16.mxu0 0
        %1817 = vmatpush2.bf16.msra.mxu0 0
        %1818 = vmatprep.subr.bf16.mxu0 0
        %1819 = vmatpush2.bf16.msra.mxu0 0
        %1820 = vmatprep.subr.bf16.mxu0 0
        %1821 = vmatpush2.bf16.msra.mxu0 0
        %1822 = vmatprep.subr.bf16.mxu0 0
        %1823 = vmatpush2.bf16.msra.mxu0 0
        %1824 = vmatprep.mubr.bf16.mxu0 0
        %1825 = vmatmul.mubr.bf16.gmra.mxu0 %v1628
        %v1826 = vpop.f32.mrf.mxu0
        %v1827 = vadd.f32 %v1774, %v1826
        %v1828 = vpop.f32.mrf.mxu0
        %v1829 = vadd.f32 %v1776, %v1828
        %v1830 = vpop.f32.mrf.mxu0
        %v1831 = vadd.f32 %v1778, %v1830
        %v1832 = vpop.f32.mrf.mxu0
        %v1833 = vadd.f32 %v1780, %v1832
        %1834 = vmatprep.mubr.bf16.mxu0 0
        %1835 = vmatmul.mubr.bf16.gmra.mxu0 %v1631
        %v1836 = vpop.f32.mrf.mxu0
        %v1837 = vadd.f32 %v1784, %v1836
        %v1838 = vpop.f32.mrf.mxu0
        %v1839 = vadd.f32 %v1786, %v1838
        %v1840 = vpop.f32.mrf.mxu0
        %v1841 = vadd.f32 %v1788, %v1840
        %v1842 = vpop.f32.mrf.mxu0
        %v1843 = vadd.f32 %v1790, %v1842
        %1844 = vdwg.mxu0
        %1845 = vmatprep.subr.bf16.mxu0 %v1370
        %1846 = vmatpush1.bf16.msra.mxu0 %v1369
        %1847 = vmatprep.subr.bf16.mxu0 %v1361
        %1848 = vmatpush1.bf16.msra.mxu0 %v1360
        %1849 = vmatprep.subr.bf16.mxu0 %v1352
        %1850 = vmatpush1.bf16.msra.mxu0 %v1351
        %1851 = vmatprep.subr.bf16.mxu0 %v1343
        %1852 = vmatpush1.bf16.msra.mxu0 %v1342
        %1853 = vmatprep.subr.bf16.mxu0 %v1334
        %1854 = vmatpush1.bf16.msra.mxu0 %v1333
        %1855 = vmatprep.subr.bf16.mxu0 %v1325
        %1856 = vmatpush1.bf16.msra.mxu0 %v1324
        %1857 = vmatprep.subr.bf16.mxu0 %v1316
        %1858 = vmatpush1.bf16.msra.mxu0 %v1315
        %1859 = vmatprep.subr.bf16.mxu0 %v1307
        %1860 = vmatpush1.bf16.msra.mxu0 %v1306
        %1861 = vmatprep.subr.bf16.mxu0 %v1442
        %1862 = vmatpush2.bf16.msra.mxu0 %v1441
        %1863 = vmatprep.subr.bf16.mxu0 %v1433
        %1864 = vmatpush2.bf16.msra.mxu0 %v1432
        %1865 = vmatprep.subr.bf16.mxu0 %v1424
        %1866 = vmatpush2.bf16.msra.mxu0 %v1423
        %1867 = vmatprep.subr.bf16.mxu0 %v1415
        %1868 = vmatpush2.bf16.msra.mxu0 %v1414
        %1869 = vmatprep.subr.bf16.mxu0 %v1406
        %1870 = vmatpush2.bf16.msra.mxu0 %v1405
        %1871 = vmatprep.subr.bf16.mxu0 %v1397
        %1872 = vmatpush2.bf16.msra.mxu0 %v1396
        %1873 = vmatprep.subr.bf16.mxu0 %v1388
        %1874 = vmatpush2.bf16.msra.mxu0 %v1387
        %1875 = vmatprep.subr.bf16.mxu0 %v1379
        %1876 = vmatpush2.bf16.msra.mxu0 %v1378
        %1877 = vmatprep.mubr.bf16.mxu0 %v789
        %1878 = vmatmul.mubr.bf16.gmra.mxu0 %v788
        %v1879 = vpop.f32.mrf.mxu0
        %v1880 = vadd.f32 %v751, %v1879
        %v1881 = vpop.f32.mrf.mxu0
        %v1882 = vadd.f32 %v751, %v1881
        %v1883 = vpop.f32.mrf.mxu0
        %v1884 = vadd.f32 %v756, %v1883
        %v1885 = vpop.f32.mrf.mxu0
        %v1886 = vadd.f32 %v756, %v1885
        %1887 = vmatprep.mubr.bf16.mxu0 %v792
        %1888 = vmatmul.mubr.bf16.gmra.mxu0 %v791
        %v1889 = vpop.f32.mrf.mxu0
        %v1890 = vadd.f32 %v761, %v1889
        %v1891 = vpop.f32.mrf.mxu0
        %v1892 = vadd.f32 %v761, %v1891
        %v1893 = vpop.f32.mrf.mxu0
        %v1894 = vadd.f32 %v766, %v1893
        %v1895 = vpop.f32.mrf.mxu0
        %v1896 = vadd.f32 %v766, %v1895
        %1897 = vdwg.mxu0
        %1898 = vmatprep.subr.bf16.mxu0 0
        %1899 = vmatpush1.bf16.msra.mxu0 0
        %1900 = vmatprep.subr.bf16.mxu0 0
        %1901 = vmatpush1.bf16.msra.mxu0 0
        %1902 = vmatprep.subr.bf16.mxu0 0
        %1903 = vmatpush1.bf16.msra.mxu0 0
        %1904 = vmatprep.subr.bf16.mxu0 0
        %1905 = vmatpush1.bf16.msra.mxu0 0
        %1906 = vmatprep.subr.bf16.mxu0 0
        %1907 = vmatpush1.bf16.msra.mxu0 0
        %1908 = vmatprep.subr.bf16.mxu0 0
        %1909 = vmatpush1.bf16.msra.mxu0 0
        %1910 = vmatprep.subr.bf16.mxu0 %v1460
        %1911 = vmatpush1.bf16.msra.mxu0 %v1459
        %1912 = vmatprep.subr.bf16.mxu0 %v1451
        %1913 = vmatpush1.bf16.msra.mxu0 %v1450
        %1914 = vmatprep.subr.bf16.mxu0 0
        %1915 = vmatpush2.bf16.msra.mxu0 0
        %1916 = vmatprep.subr.bf16.mxu0 0
        %1917 = vmatpush2.bf16.msra.mxu0 0
        %1918 = vmatprep.subr.bf16.mxu0 0
        %1919 = vmatpush2.bf16.msra.mxu0 0
        %1920 = vmatprep.subr.bf16.mxu0 0
        %1921 = vmatpush2.bf16.msra.mxu0 0
        %1922 = vmatprep.subr.bf16.mxu0 0
        %1923 = vmatpush2.bf16.msra.mxu0 0
        %1924 = vmatprep.subr.bf16.mxu0 0
        %1925 = vmatpush2.bf16.msra.mxu0 0
        %1926 = vmatprep.subr.bf16.mxu0 0
        %1927 = vmatpush2.bf16.msra.mxu0 0
        %1928 = vmatprep.subr.bf16.mxu0 0
        %1929 = vmatpush2.bf16.msra.mxu0 0
        %1930 = vmatprep.mubr.bf16.mxu0 0
        %1931 = vmatmul.mubr.bf16.gmra.mxu0 %v1628
        %v1932 = vpop.f32.mrf.mxu0
        %v1933 = vadd.f32 %v1880, %v1932
        %v1934 = vpop.f32.mrf.mxu0
        %v1935 = vadd.f32 %v1882, %v1934
        %v1936 = vpop.f32.mrf.mxu0
        %v1937 = vadd.f32 %v1884, %v1936
        %v1938 = vpop.f32.mrf.mxu0
        %v1939 = vadd.f32 %v1886, %v1938
        %1940 = vmatprep.mubr.bf16.mxu0 0
        %1941 = vmatmul.mubr.bf16.gmra.mxu0 %v1631
        %v1942 = vpop.f32.mrf.mxu0
        %v1943 = vadd.f32 %v1890, %v1942
        %v1944 = vpop.f32.mrf.mxu0
        %v1945 = vadd.f32 %v1892, %v1944
        %v1946 = vpop.f32.mrf.mxu0
        %v1947 = vadd.f32 %v1894, %v1946
        %v1948 = vpop.f32.mrf.mxu0
        %v1949 = vadd.f32 %v1896, %v1948
        %1950 = vdwg.mxu0
        %1951 = vmatprep.subr.bf16.mxu0 %v1372
        %1952 = vmatpush1.bf16.msra.mxu0 %v1371
        %1953 = vmatprep.subr.bf16.mxu0 %v1363
        %1954 = vmatpush1.bf16.msra.mxu0 %v1362
        %1955 = vmatprep.subr.bf16.mxu0 %v1354
        %1956 = vmatpush1.bf16.msra.mxu0 %v1353
        %1957 = vmatprep.subr.bf16.mxu0 %v1345
        %1958 = vmatpush1.bf16.msra.mxu0 %v1344
        %1959 = vmatprep.subr.bf16.mxu0 %v1336
        %1960 = vmatpush1.bf16.msra.mxu0 %v1335
        %1961 = vmatprep.subr.bf16.mxu0 %v1327
        %1962 = vmatpush1.bf16.msra.mxu0 %v1326
        %1963 = vmatprep.subr.bf16.mxu0 %v1318
        %1964 = vmatpush1.bf16.msra.mxu0 %v1317
        %1965 = vmatprep.subr.bf16.mxu0 %v1309
        %1966 = vmatpush1.bf16.msra.mxu0 %v1308
        %1967 = vmatprep.subr.bf16.mxu0 %v1444
        %1968 = vmatpush2.bf16.msra.mxu0 %v1443
        %1969 = vmatprep.subr.bf16.mxu0 %v1435
        %1970 = vmatpush2.bf16.msra.mxu0 %v1434
        %1971 = vmatprep.subr.bf16.mxu0 %v1426
        %1972 = vmatpush2.bf16.msra.mxu0 %v1425
        %1973 = vmatprep.subr.bf16.mxu0 %v1417
        %1974 = vmatpush2.bf16.msra.mxu0 %v1416
        %1975 = vmatprep.subr.bf16.mxu0 %v1408
        %1976 = vmatpush2.bf16.msra.mxu0 %v1407
        %1977 = vmatprep.subr.bf16.mxu0 %v1399
        %1978 = vmatpush2.bf16.msra.mxu0 %v1398
        %1979 = vmatprep.subr.bf16.mxu0 %v1390
        %1980 = vmatpush2.bf16.msra.mxu0 %v1389
        %1981 = vmatprep.subr.bf16.mxu0 %v1381
        %1982 = vmatpush2.bf16.msra.mxu0 %v1380
        %1983 = vmatprep.mubr.bf16.mxu0 %v789
        %1984 = vmatmul.mubr.bf16.gmra.mxu0 %v788
        %v1985 = vpop.f32.mrf.mxu0
        %v1986 = vadd.f32 %v751, %v1985
        %v1987 = vpop.f32.mrf.mxu0
        %v1988 = vadd.f32 %v751, %v1987
        %v1989 = vpop.f32.mrf.mxu0
        %v1990 = vadd.f32 %v756, %v1989
        %v1991 = vpop.f32.mrf.mxu0
        %v1992 = vadd.f32 %v756, %v1991
        %1993 = vmatprep.mubr.bf16.mxu0 %v792
        %1994 = vmatmul.mubr.bf16.gmra.mxu0 %v791
        %v1995 = vpop.f32.mrf.mxu0
        %v1996 = vadd.f32 %v761, %v1995
        %v1997 = vpop.f32.mrf.mxu0
        %v1998 = vadd.f32 %v761, %v1997
        %v1999 = vpop.f32.mrf.mxu0
        %v2000 = vadd.f32 %v766, %v1999
        %v2001 = vpop.f32.mrf.mxu0
        %v2002 = vadd.f32 %v766, %v2001
        %2003 = vdwg.mxu0
        %2004 = vmatprep.subr.bf16.mxu0 0
        %2005 = vmatpush1.bf16.msra.mxu0 0
        %2006 = vmatprep.subr.bf16.mxu0 0
        %2007 = vmatpush1.bf16.msra.mxu0 0
        %2008 = vmatprep.subr.bf16.mxu0 0
        %2009 = vmatpush1.bf16.msra.mxu0 0
        %2010 = vmatprep.subr.bf16.mxu0 0
        %2011 = vmatpush1.bf16.msra.mxu0 0
        %2012 = vmatprep.subr.bf16.mxu0 0
        %2013 = vmatpush1.bf16.msra.mxu0 0
        %2014 = vmatprep.subr.bf16.mxu0 0
        %2015 = vmatpush1.bf16.msra.mxu0 0
        %2016 = vmatprep.subr.bf16.mxu0 %v1462
        %2017 = vmatpush1.bf16.msra.mxu0 %v1461
        %2018 = vmatprep.subr.bf16.mxu0 %v1453
        %2019 = vmatpush1.bf16.msra.mxu0 %v1452
        %2020 = vmatprep.subr.bf16.mxu0 0
        %2021 = vmatpush2.bf16.msra.mxu0 0
        %2022 = vmatprep.subr.bf16.mxu0 0
        %2023 = vmatpush2.bf16.msra.mxu0 0
        %2024 = vmatprep.subr.bf16.mxu0 0
        %2025 = vmatpush2.bf16.msra.mxu0 0
        %2026 = vmatprep.subr.bf16.mxu0 0
        %2027 = vmatpush2.bf16.msra.mxu0 0
        %2028 = vmatprep.subr.bf16.mxu0 0
        %2029 = vmatpush2.bf16.msra.mxu0 0
        %2030 = vmatprep.subr.bf16.mxu0 0
        %2031 = vmatpush2.bf16.msra.mxu0 0
        %2032 = vmatprep.subr.bf16.mxu0 0
        %2033 = vmatpush2.bf16.msra.mxu0 0
        %2034 = vmatprep.subr.bf16.mxu0 0
        %2035 = vmatpush2.bf16.msra.mxu0 0
        %2036 = vmatprep.mubr.bf16.mxu0 0
        %2037 = vmatmul.mubr.bf16.gmra.mxu0 %v1628
        %v2038 = vpop.f32.mrf.mxu0
        %v2039 = vadd.f32 %v1986, %v2038
        %v2040 = vpop.f32.mrf.mxu0
        %v2041 = vadd.f32 %v1988, %v2040
        %v2042 = vpop.f32.mrf.mxu0
        %v2043 = vadd.f32 %v1990, %v2042
        %v2044 = vpop.f32.mrf.mxu0
        %v2045 = vadd.f32 %v1992, %v2044
        %2046 = vmatprep.mubr.bf16.mxu0 0
        %2047 = vmatmul.mubr.bf16.gmra.mxu0 %v1631
        %v2048 = vpop.f32.mrf.mxu0
        %v2049 = vadd.f32 %v1996, %v2048
        %v2050 = vpop.f32.mrf.mxu0
        %v2051 = vadd.f32 %v1998, %v2050
        %v2052 = vpop.f32.mrf.mxu0
        %v2053 = vadd.f32 %v2000, %v2052
        %v2054 = vpop.f32.mrf.mxu0
        %v2055 = vadd.f32 %v2002, %v2054
        %2056 = vdwg.mxu0
        %2057 = vmatprep.subr.bf16.mxu0 0
        %2058 = vmatpush1.bf16.msra.mxu0 %v1373
        %2059 = vmatprep.subr.bf16.mxu0 0
        %2060 = vmatpush1.bf16.msra.mxu0 %v1364
        %2061 = vmatprep.subr.bf16.mxu0 0
        %2062 = vmatpush1.bf16.msra.mxu0 %v1355
        %2063 = vmatprep.subr.bf16.mxu0 0
        %2064 = vmatpush1.bf16.msra.mxu0 %v1346
        %2065 = vmatprep.subr.bf16.mxu0 0
        %2066 = vmatpush1.bf16.msra.mxu0 %v1337
        %2067 = vmatprep.subr.bf16.mxu0 0
        %2068 = vmatpush1.bf16.msra.mxu0 %v1328
        %2069 = vmatprep.subr.bf16.mxu0 0
        %2070 = vmatpush1.bf16.msra.mxu0 %v1319
        %2071 = vmatprep.subr.bf16.mxu0 0
        %2072 = vmatpush1.bf16.msra.mxu0 %v1310
        %2073 = vmatprep.subr.bf16.mxu0 0
        %2074 = vmatpush2.bf16.msra.mxu0 %v1445
        %2075 = vmatprep.subr.bf16.mxu0 0
        %2076 = vmatpush2.bf16.msra.mxu0 %v1436
        %2077 = vmatprep.subr.bf16.mxu0 0
        %2078 = vmatpush2.bf16.msra.mxu0 %v1427
        %2079 = vmatprep.subr.bf16.mxu0 0
        %2080 = vmatpush2.bf16.msra.mxu0 %v1418
        %2081 = vmatprep.subr.bf16.mxu0 0
        %2082 = vmatpush2.bf16.msra.mxu0 %v1409
        %2083 = vmatprep.subr.bf16.mxu0 0
        %2084 = vmatpush2.bf16.msra.mxu0 %v1400
        %2085 = vmatprep.subr.bf16.mxu0 0
        %2086 = vmatpush2.bf16.msra.mxu0 %v1391
        %2087 = vmatprep.subr.bf16.mxu0 0
        %2088 = vmatpush2.bf16.msra.mxu0 %v1382
        %2089 = vmatprep.mubr.bf16.mxu0 %v789
        %2090 = vmatmul.mubr.bf16.gmra.mxu0 %v788
        %v2091 = vpop.f32.mrf.mxu0
        %v2092 = vadd.f32 %v751, %v2091
        %v2093 = vpop.f32.mrf.mxu0
        %v2094 = vpop.f32.mrf.mxu0
        %v2095 = vadd.f32 %v756, %v2094
        %v2096 = vpop.f32.mrf.mxu0
        %2097 = vmatprep.mubr.bf16.mxu0 %v792
        %2098 = vmatmul.mubr.bf16.gmra.mxu0 %v791
        %v2099 = vpop.f32.mrf.mxu0
        %v2100 = vadd.f32 %v761, %v2099
        %v2101 = vpop.f32.mrf.mxu0
        %v2102 = vpop.f32.mrf.mxu0
        %v2103 = vadd.f32 %v766, %v2102
        %v2104 = vpop.f32.mrf.mxu0
        %2105 = vdwg.mxu0
        %2106 = vmatprep.subr.bf16.mxu0 0
        %2107 = vmatpush1.bf16.msra.mxu0 0
        %2108 = vmatprep.subr.bf16.mxu0 0
        %2109 = vmatpush1.bf16.msra.mxu0 0
        %2110 = vmatprep.subr.bf16.mxu0 0
        %2111 = vmatpush1.bf16.msra.mxu0 0
        %2112 = vmatprep.subr.bf16.mxu0 0
        %2113 = vmatpush1.bf16.msra.mxu0 0
        %2114 = vmatprep.subr.bf16.mxu0 0
        %2115 = vmatpush1.bf16.msra.mxu0 0
        %2116 = vmatprep.subr.bf16.mxu0 0
        %2117 = vmatpush1.bf16.msra.mxu0 0
        %2118 = vmatprep.subr.bf16.mxu0 0
        %2119 = vmatpush1.bf16.msra.mxu0 %v1463
        %2120 = vmatprep.subr.bf16.mxu0 0
        %2121 = vmatpush1.bf16.msra.mxu0 %v1454
        %2122 = vmatprep.subr.bf16.mxu0 0
        %2123 = vmatpush2.bf16.msra.mxu0 0
        %2124 = vmatprep.subr.bf16.mxu0 0
        %2125 = vmatpush2.bf16.msra.mxu0 0
        %2126 = vmatprep.subr.bf16.mxu0 0
        %2127 = vmatpush2.bf16.msra.mxu0 0
        %2128 = vmatprep.subr.bf16.mxu0 0
        %2129 = vmatpush2.bf16.msra.mxu0 0
        %2130 = vmatprep.subr.bf16.mxu0 0
        %2131 = vmatpush2.bf16.msra.mxu0 0
        %2132 = vmatprep.subr.bf16.mxu0 0
        %2133 = vmatpush2.bf16.msra.mxu0 0
        %2134 = vmatprep.subr.bf16.mxu0 0
        %2135 = vmatpush2.bf16.msra.mxu0 0
        %2136 = vmatprep.subr.bf16.mxu0 0
        %2137 = vmatpush2.bf16.msra.mxu0 0
        %2138 = vmatprep.mubr.bf16.mxu0 0
        %2139 = vmatmul.mubr.bf16.gmra.mxu0 %v1628
        %v2140 = vpop.f32.mrf.mxu0
        %v2141 = vadd.f32 %v2092, %v2140
        %v2142 = vpop.f32.mrf.mxu0
        %v2143 = vpop.f32.mrf.mxu0
        %v2144 = vadd.f32 %v2095, %v2143
        %v2145 = vpop.f32.mrf.mxu0
        %2146 = vmatprep.mubr.bf16.mxu0 0
        %2147 = vmatmul.mubr.bf16.gmra.mxu0 %v1631
        %v2148 = vpop.f32.mrf.mxu0
        %v2149 = vadd.f32 %v2100, %v2148
        %v2150 = vpop.f32.mrf.mxu0
        %v2151 = vpop.f32.mrf.mxu0
        %v2152 = vadd.f32 %v2103, %v2151
        %v2153 = vpop.f32.mrf.mxu0
        %2154 = vdwg.mxu0
        %v2155 = vmax.f32 %v1721, 0.0
        %v2156 = vmax.f32 %v1723, 0.0
        %v2157 = vmax.f32 %v1827, 0.0
        %v2158 = vmax.f32 %v1829, 0.0
        %v2159 = vmax.f32 %v1933, 0.0
        %v2160 = vmax.f32 %v1935, 0.0
        %v2161 = vmax.f32 %v2039, 0.0
        %v2162 = vmax.f32 %v2041, 0.0
        %v2163 = vmax.f32 %v2141, 0.0
        %v2164 = vmax.f32 %v1725, 0.0
        %v2165 = vmax.f32 %v1727, 0.0
        %v2166 = vmax.f32 %v1831, 0.0
        %v2167 = vmax.f32 %v1833, 0.0
        %v2168 = vmax.f32 %v1937, 0.0
        %v2169 = vmax.f32 %v1939, 0.0
        %v2170 = vmax.f32 %v2043, 0.0
        %v2171 = vmax.f32 %v2045, 0.0
        %v2172 = vmax.f32 %v2144, 0.0
        %v2173 = vmax.f32 %v1731, 0.0
        %v2174 = vmax.f32 %v1733, 0.0
        %v2175 = vmax.f32 %v1837, 0.0
        %v2176 = vmax.f32 %v1839, 0.0
        %v2177 = vmax.f32 %v1943, 0.0
        %v2178 = vmax.f32 %v1945, 0.0
        %v2179 = vmax.f32 %v2049, 0.0
        %v2180 = vmax.f32 %v2051, 0.0
        %v2181 = vmax.f32 %v2149, 0.0
        %v2182 = vmax.f32 %v1735, 0.0
        %v2183 = vmax.f32 %v1737, 0.0
        %v2184 = vmax.f32 %v1841, 0.0
        %v2185 = vmax.f32 %v1843, 0.0
        %v2186 = vmax.f32 %v1947, 0.0
        %v2187 = vmax.f32 %v1949, 0.0
        %v2188 = vmax.f32 %v2053, 0.0
        %v2189 = vmax.f32 %v2055, 0.0
        %v2190 = vmax.f32 %v2152, 0.0
        %v2191 = vpack.c.bf16 %v2164, %v2155
        %v2192 = vpack.c.bf16 %v2165, %v2156
        %v2193 = vpack.c.bf16 %v2166, %v2157
        %v2194 = vpack.c.bf16 %v2167, %v2158
        %v2195 = vpack.c.bf16 %v2168, %v2159
        %v2196 = vpack.c.bf16 %v2169, %v2160
        %v2197 = vpack.c.bf16 %v2170, %v2161
        %v2198 = vpack.c.bf16 %v2171, %v2162
        %v2199 = vpack.c.bf16 %v2172, %v2163
        %v2200 = vpack.c.bf16 %v2182, %v2173
        %v2201 = vpack.c.bf16 %v2183, %v2174
        %v2202 = vpack.c.bf16 %v2184, %v2175
        %v2203 = vpack.c.bf16 %v2185, %v2176
        %v2204 = vpack.c.bf16 %v2186, %v2177
        %v2205 = vpack.c.bf16 %v2187, %v2178
        %v2206 = vpack.c.bf16 %v2188, %v2179
        %v2207 = vpack.c.bf16 %v2189, %v2180
        %v2208 = vpack.c.bf16 %v2190, %v2181
        %v2227 = vunpack.c.l.b16 %v2191
        %v2228 = vunpack.c.l.b16 %v2192
        %v2229 = vunpack.c.l.b16 %v2193
        %v2230 = vunpack.c.l.b16 %v2194
        %v2231 = vunpack.c.l.b16 %v2195
        %v2232 = vunpack.c.l.b16 %v2196
        %v2233 = vunpack.c.l.b16 %v2197
        %v2234 = vunpack.c.l.b16 %v2198
        %v2235 = vunpack.c.l.b16 %v2199
        %v2236 = vunpack.c.h.b16 %v2191
        %v2237 = vunpack.c.h.b16 %v2192
        %v2238 = vunpack.c.h.b16 %v2193
        %v2239 = vunpack.c.h.b16 %v2194
        %v2240 = vunpack.c.h.b16 %v2195
        %v2241 = vunpack.c.h.b16 %v2196
        %v2242 = vunpack.c.h.b16 %v2197
        %v2243 = vunpack.c.h.b16 %v2198
        %v2244 = vunpack.c.h.b16 %v2199
        %v2245 = vunpack.c.l.b16 %v2200
        %v2246 = vunpack.c.l.b16 %v2201
        %v2247 = vunpack.c.l.b16 %v2202
        %v2248 = vunpack.c.l.b16 %v2203
        %v2249 = vunpack.c.l.b16 %v2204
        %v2250 = vunpack.c.l.b16 %v2205
        %v2251 = vunpack.c.l.b16 %v2206
        %v2252 = vunpack.c.l.b16 %v2207
        %v2253 = vunpack.c.l.b16 %v2208
        %v2254 = vunpack.c.h.b16 %v2200
        %v2255 = vunpack.c.h.b16 %v2201
        %v2256 = vunpack.c.h.b16 %v2202
        %v2257 = vunpack.c.h.b16 %v2203
        %v2258 = vunpack.c.h.b16 %v2204
        %v2259 = vunpack.c.h.b16 %v2205
        %v2260 = vunpack.c.h.b16 %v2206
        %v2261 = vunpack.c.h.b16 %v2207
        %v2262 = vunpack.c.h.b16 %v2208
        %v2263 = vpack.c.b16 %v2228, %v2227
        %v2264 = vpack.c.b16 %v2230, %v2229
        %v2265 = vpack.c.b16 %v2232, %v2231
        %v2266 = vpack.c.b16 %v2234, %v2233
        %v2267 = vpack.c.b16 %v2235, %v2235
        %v2268 = vpack.c.b16 %v2237, %v2236
        %v2269 = vpack.c.b16 %v2239, %v2238
        %v2270 = vpack.c.b16 %v2241, %v2240
        %v2271 = vpack.c.b16 %v2243, %v2242
        %v2272 = vpack.c.b16 %v2244, %v2244
        %v2273 = vpack.c.b16 %v2246, %v2245
        %v2274 = vpack.c.b16 %v2248, %v2247
        %v2275 = vpack.c.b16 %v2250, %v2249
        %v2276 = vpack.c.b16 %v2252, %v2251
        %v2277 = vpack.c.b16 %v2253, %v2253
        %v2278 = vpack.c.b16 %v2255, %v2254
        %v2279 = vpack.c.b16 %v2257, %v2256
        %v2280 = vpack.c.b16 %v2259, %v2258
        %v2281 = vpack.c.b16 %v2261, %v2260
        %v2282 = vpack.c.b16 %v2262, %v2262
        %2303 = vst [vmem:[%s552] sm:$0xff] %v2263
        %2304 = vst [vmem:[%s552 + $0x8] sm:$0xff] %v2264
        %2305 = vst [vmem:[%s552 + $0x10] sm:$0xff] %v2265
        %2306 = vst [vmem:[%s552 + $0x18] sm:$0xff] %v2266
        %2307 = vst [vmem:[%s552 + $0x20] sm:$0xf] %v2267
        %2308 = vst [vmem:[%s552 + $0x24] sm:$0xff] %v2268
        %2309 = vst [vmem:[%s552 + $0x2c] sm:$0xff] %v2269
        %2310 = vst [vmem:[%s552 + $0x34] sm:$0xff] %v2270
        %2311 = vst [vmem:[%s552 + $0x3c] sm:$0xff] %v2271
        %2312 = vst [vmem:[%s552 + $0x44] sm:$0xf] %v2272
        %2313 = vst [vmem:[%s552 + $0x48] sm:$0xff] %v2273
        %2314 = vst [vmem:[%s552 + $0x50] sm:$0xff] %v2274
        %2315 = vst [vmem:[%s552 + $0x58] sm:$0xff] %v2275
        %2316 = vst [vmem:[%s552 + $0x60] sm:$0xff] %v2276
        %2317 = vst [vmem:[%s552 + $0x68] sm:$0xf] %v2277
        %2318 = vst [vmem:[%s552 + $0x6c] sm:$0xff] %v2278
        %2319 = vst [vmem:[%s552 + $0x74] sm:$0xff] %v2279
        %2320 = vst [vmem:[%s552 + $0x7c] sm:$0xff] %v2280
        %2321 = vst [vmem:[%s552 + $0x84] sm:$0xff] %v2281
        %2322 = vst [vmem:[%s552 + $0x8c] sm:$0xf] %v2282
        %s2323 = sand.u32 %s90, 1
        %s2324 = sand.u32 %s90, 1
        %s2325 = smul.addr %s2324, 144
        %s2326 = scalar_lea.vmem [#allocation3], %s2325
        // Predicated region
        $region59: #{forward.6} parent=53 // pred_check
          %p2327 = pneg %p100
        $region60: #{forward.6} parent=53 // pred_check_branch
          %2329 = sbr.rel (%p2327) target = $region62
        $region61: #{forward.6} parent=53 // pred_region
          %s2330 = smul.u32 9, %s14
          %s2331 = smul.addr %s2330, 4
          %s2332 = scalar_lea.vmem %s3, %s2331
          // Predicated region
          $region63: #{forward.6} parent=61 // pred_check
            _
          $region64: #{forward.6} parent=61 // pred_check_branch
            %2334 = sbr.rel (0) target = $region66
          $region65: #{forward.6} parent=61 // pred_region
            // Predicated region
            $region67: #{forward.6} parent=65 // pred_check
              _
            $region68: #{forward.6} parent=65 // pred_check_branch
              %2336 = sbr.rel (0) target = $region70
            $region69: #{forward.6} parent=65 // pred_region
              %s2337 = scalar_lea.vmem %s2326, 32 [#allocation3]
              %s2338 = scalar_lea.vmem %s2332, 32
              loop: start=0, step=1, limit=1
              $region71: #{forward.6} parent=69 // loop_pre_header
                _
              $region72: #{forward.6} parent=69 // loop_header
                %s2340 = sphi 0, %s2344
                %p2341 = scmp.ge.s32.totalorder %s2340, 1
                %s2345 = sphi %s2326, %s2326
                %s2346 = sphi %s2332, %s2332
              $region73: #{forward.6} parent=69 // loop_header_branch
                %2343 = sbr.rel (%p2341) target = $region77
              $region74: #{forward.6} parent=69 // loop_body
                %v2347 = vld [vmem:[%s2345] sm:$0xff]
                %2348 = vst [vmem:[%s2346] sm:$0xff] %v2347
                %v2349 = vld [vmem:[%s2345 + $0x8] sm:$0xff]
                %2350 = vst [vmem:[%s2346 + $0x8] sm:$0xff] %v2349
                %v2351 = vld [vmem:[%s2345 + $0x10] sm:$0xff]
                %2352 = vst [vmem:[%s2346 + $0x10] sm:$0xff] %v2351
                %v2353 = vld [vmem:[%s2345 + $0x18] sm:$0xff]
                %2354 = vst [vmem:[%s2346 + $0x18] sm:$0xff] %v2353
                %v2355 = vld [vmem:[%s2345 + $0x24] sm:$0xff]
                %2356 = vst [vmem:[%s2346 + $0x48] sm:$0xff] %v2355
                %v2357 = vld [vmem:[%s2345 + $0x2c] sm:$0xff]
                %2358 = vst [vmem:[%s2346 + $0x50] sm:$0xff] %v2357
                %v2359 = vld [vmem:[%s2345 + $0x34] sm:$0xff]
                %2360 = vst [vmem:[%s2346 + $0x58] sm:$0xff] %v2359
                %v2361 = vld [vmem:[%s2345 + $0x3c] sm:$0xff]
                %2362 = vst [vmem:[%s2346 + $0x60] sm:$0xff] %v2361
                %v2363 = vld [vmem:[%s2345 + $0x48] sm:$0xff]
                %2364 = vst [vmem:[%s2346 + $0x90] sm:$0xff] %v2363
                %v2365 = vld [vmem:[%s2345 + $0x50] sm:$0xff]
                %2366 = vst [vmem:[%s2346 + $0x98] sm:$0xff] %v2365
                %v2367 = vld [vmem:[%s2345 + $0x58] sm:$0xff]
                %2368 = vst [vmem:[%s2346 + $0xa0] sm:$0xff] %v2367
                %v2369 = vld [vmem:[%s2345 + $0x60] sm:$0xff]
                %2370 = vst [vmem:[%s2346 + $0xa8] sm:$0xff] %v2369
                %v2371 = vld [vmem:[%s2345 + $0x6c] sm:$0xff]
                %2372 = vst [vmem:[%s2346 + $0xd8] sm:$0xff] %v2371
                %v2373 = vld [vmem:[%s2345 + $0x74] sm:$0xff]
                %2374 = vst [vmem:[%s2346 + $0xe0] sm:$0xff] %v2373
                %v2375 = vld [vmem:[%s2345 + $0x7c] sm:$0xff]
                %2376 = vst [vmem:[%s2346 + $0xe8] sm:$0xff] %v2375
                %v2377 = vld [vmem:[%s2345 + $0x84] sm:$0xff]
                %2378 = vst [vmem:[%s2346 + $0xf0] sm:$0xff] %v2377
              $region75: #{forward.6} parent=69 // loop_footer
                %s2344 = sadd.s32 1, %s2340
              $region76: #{forward.6} parent=69 // loop_footer_branch
                %2339 = sbr.rel target = $region72
              $region77: #{forward.6} parent=69 // loop_exit
                _
              %s2380 = ssub.s32 16, 1
              loop: start=0, step=1, limit=1
              $region78: #{forward.6} parent=69 // loop_pre_header
                _
              $region79: #{forward.6} parent=69 // loop_header
                %s2382 = sphi 0, %s2386
                %p2383 = scmp.ge.s32.totalorder %s2382, 1
                %s2387 = sphi %s2337, %s2337
                %s2388 = sphi %s2338, %s2338
              $region80: #{forward.6} parent=69 // loop_header_branch
                %2385 = sbr.rel (%p2383) target = $region84
              $region81: #{forward.6} parent=69 // loop_body
                %v2389 = vld [vmem:[%s2387] sm:%s2380]
                %2390 = vst [vmem:[%s2388] sm:%s2380] %v2389
                %v2391 = vld [vmem:[%s2387 + $0x24] sm:%s2380]
                %2392 = vst [vmem:[%s2388 + $0x48] sm:%s2380] %v2391
                %v2393 = vld [vmem:[%s2387 + $0x48] sm:%s2380]
                %2394 = vst [vmem:[%s2388 + $0x90] sm:%s2380] %v2393
                %v2395 = vld [vmem:[%s2387 + $0x6c] sm:%s2380]
                %2396 = vst [vmem:[%s2388 + $0xd8] sm:%s2380] %v2395
              $region82: #{forward.6} parent=69 // loop_footer
                %s2386 = sadd.s32 1, %s2382
              $region83: #{forward.6} parent=69 // loop_footer_branch
                %2381 = sbr.rel target = $region79
              $region84: #{forward.6} parent=69 // loop_exit
                _
            $region70: #{forward.6} parent=65 // pred_fallthru
              _
          $region66: #{forward.6} parent=61 // pred_fallthru
            _
          %2397 = vnop
        $region62: #{forward.6} parent=53 // pred_fallthru
          _
      $region54: #{forward.6} parent=5 // pred_fallthru
        _
      %p2398 = scmp.le.s32.totalorder 2, %s9
      // Predicated region
      $region85: #{forward.6} parent=5 // pred_check
        %p2399 = pneg %p2398
      $region86: #{forward.6} parent=5 // pred_check_branch
        %2401 = sbr.rel (%p2399) target = $region88
      $region87: #{forward.6} parent=5 // pred_region
        %s2402 = ssub.s32 %s9, 2
        // Predicated region
        $region89: #{forward.6} parent=87 // pred_check
          %p2403 = pneg %p106
        $region90: #{forward.6} parent=87 // pred_check_branch
          %2405 = sbr.rel (%p2403) target = $region92
        $region91: #{forward.6} parent=87 // pred_region
          %s2406 = sand.u32 %s91, 1
          %s2407 = sand.u32 %s91, 1
          %s2408 = smul.addr %s2407, 144
          %s2409 = scalar_lea.vmem [#allocation3], %s2408
        $region92: #{forward.6} parent=87 // pred_fallthru
          _
      $region88: #{forward.6} parent=5 // pred_fallthru
        _
    $region6: #{forward.6} parent=1 // loop_footer
      %s13 = sadd.s32 1, %s9
    $region7: #{forward.6} parent=1 // loop_footer_branch
      %8 = sbr.rel target = $region3
    $region8: #{forward.6} parent=1 // loop_exit
      _

// kernel: forward.7
$region0: #{forward.7}
  #allocation0 [shape = 'u32[]', space=smem, size = 0x4, offset = 0x4, fixed_abs, tag = 'smem constant byte address 0x4 - core index']
  #allocation1 [shape = 'u32[144,128]{1,0:T(1,128)}', space=vmem, size = 0x12000, scoped, tag = 'internal scratch']
  %s0 = inlined_call_operand.vmem [shape: bf16[288,576], index: 0, kind: input, shape index: {}]
  %s1 = inlined_call_operand.vmem [shape: bf16[32,288], index: 1, kind: input, shape index: {}]
  %s2 = inlined_call_operand.vmem [shape: f32[32,1], index: 2, kind: input, shape index: {}]
  %s3 = inlined_call_operand.vmem [shape: bf16[32,576], index: 3, kind: output, shape index: {}]
  %s4 = sld [smem:[#allocation0]]
  $region22: #{forward.7} parent=0
    _
  %s6 = ssub.s32 1, %s4
  %s7 = scalar_select 0, %s6, %s4
  // Predicated region
  $region2: #{forward.7} parent=0 // pred_check
    _
  $region3: #{forward.7} parent=0 // pred_check_branch
    %9 = sbr.rel (0) target = $region5
  $region4: #{forward.7} parent=0 // pred_region
    _
  $region5: #{forward.7} parent=0 // pred_fallthru
    _
  // Predicated region
  $region6: #{forward.7} parent=0 // pred_check
    _
  $region7: #{forward.7} parent=0 // pred_check_branch
    %11 = sbr.rel (0) target = $region9
  $region8: #{forward.7} parent=0 // pred_region
    _
  $region9: #{forward.7} parent=0 // pred_fallthru
    _
  // Predicated region
  $region10: #{forward.7} parent=0 // pred_check
    _
  $region11: #{forward.7} parent=0 // pred_check_branch
    %13 = sbr.rel (0) target = $region13
  $region12: #{forward.7} parent=0 // pred_region
    _
  $region13: #{forward.7} parent=0 // pred_fallthru
    _
  %v15 = vld [vmem:[%s1] sm:$0xff]
  %v16 = vld [vmem:[%s1 + $0x8] sm:$0xf]
  %v17 = vld [vmem:[%s1 + $0xc] sm:$0xff]
  %v18 = vld [vmem:[%s1 + $0x14] sm:$0xf]
  %v19 = vld [vmem:[%s1 + $0x18] sm:$0xff]
  %v20 = vld [vmem:[%s1 + $0x20] sm:$0xf]
  %v21 = vld [vmem:[%s1 + $0x24] sm:$0xff]
  %v22 = vld [vmem:[%s1 + $0x2c] sm:$0xf]
  %v23 = vld [vmem:[%s0] sm:$0xff]
  %v24 = vld [vmem:[%s0 + $0x8] sm:$0xff]
  %v25 = vld [vmem:[%s0 + $0x10] sm:$0xf]
  %v26 = vld [vmem:[%s0 + $0x14] sm:$0xff]
  %v27 = vld [vmem:[%s0 + $0x1c] sm:$0xff]
  %v28 = vld [vmem:[%s0 + $0x24] sm:$0xf]
  %v29 = vld [vmem:[%s0 + $0x28] sm:$0xff]
  %v30 = vld [vmem:[%s0 + $0x30] sm:$0xff]
  %v31 = vld [vmem:[%s0 + $0x38] sm:$0xf]
  %v32 = vld [vmem:[%s0 + $0x3c] sm:$0xff]
  %v33 = vld [vmem:[%s0 + $0x44] sm:$0xff]
  %v34 = vld [vmem:[%s0 + $0x4c] sm:$0xf]
  %v35 = vld [vmem:[%s0 + $0x50] sm:$0xff]
  %v36 = vld [vmem:[%s0 + $0x58] sm:$0xff]
  %v37 = vld [vmem:[%s0 + $0x60] sm:$0xf]
  %v38 = vld [vmem:[%s0 + $0x64] sm:$0xff]
  %v39 = vld [vmem:[%s0 + $0x6c] sm:$0xff]
  %v40 = vld [vmem:[%s0 + $0x74] sm:$0xf]
  %v41 = vld [vmem:[%s0 + $0x78] sm:$0xff]
  %v42 = vld [vmem:[%s0 + $0x80] sm:$0xff]
  %v43 = vld [vmem:[%s0 + $0x88] sm:$0xf]
  %v44 = vld [vmem:[%s0 + $0x8c] sm:$0xff]
  %v45 = vld [vmem:[%s0 + $0x94] sm:$0xff]
  %v46 = vld [vmem:[%s0 + $0x9c] sm:$0xf]
  %v47 = vld [vmem:[%s0 + $0xa0] sm:$0xff]
  %v48 = vld [vmem:[%s0 + $0xa8] sm:$0xff]
  %v49 = vld [vmem:[%s0 + $0xb0] sm:$0xf]
  %v50 = vld [vmem:[%s0 + $0xb4] sm:$0xff]
  %v51 = vld [vmem:[%s0 + $0xbc] sm:$0xff]
  %v52 = vld [vmem:[%s0 + $0xc4] sm:$0xf]
  %v53 = vld [vmem:[%s0 + $0xc8] sm:$0xff]
  %v54 = vld [vmem:[%s0 + $0xd0] sm:$0xff]
  %v55 = vld [vmem:[%s0 + $0xd8] sm:$0xf]
  %v56 = vld [vmem:[%s0 + $0xdc] sm:$0xff]
  %v57 = vld [vmem:[%s0 + $0xe4] sm:$0xff]
  %v58 = vld [vmem:[%s0 + $0xec] sm:$0xf]
  %v59 = vld [vmem:[%s0 + $0xf0] sm:$0xff]
  %v60 = vld [vmem:[%s0 + $0xf8] sm:$0xff]
  %v61 = vld [vmem:[%s0 + $0x100] sm:$0xf]
  %v62 = vld [vmem:[%s0 + $0x104] sm:$0xff]
  %v63 = vld [vmem:[%s0 + $0x10c] sm:$0xff]
  %v64 = vld [vmem:[%s0 + $0x114] sm:$0xf]
  %v65 = vld [vmem:[%s0 + $0x118] sm:$0xff]
  %v66 = vld [vmem:[%s0 + $0x120] sm:$0xff]
  %v67 = vld [vmem:[%s0 + $0x128] sm:$0xf]
  %v68 = vld [vmem:[%s0 + $0x12c] sm:$0xff]
  %v69 = vld [vmem:[%s0 + $0x134] sm:$0xff]
  %v70 = vld [vmem:[%s0 + $0x13c] sm:$0xf]
  %v71 = vld [vmem:[%s0 + $0x140] sm:$0xff]
  %v72 = vld [vmem:[%s0 + $0x148] sm:$0xff]
  %v73 = vld [vmem:[%s0 + $0x150] sm:$0xf]
  %v74 = vld [vmem:[%s0 + $0x154] sm:$0xff]
  %v75 = vld [vmem:[%s0 + $0x15c] sm:$0xff]
  %v76 = vld [vmem:[%s0 + $0x164] sm:$0xf]
  %v77 = vld [vmem:[%s0 + $0x168] sm:$0xff]
  %v78 = vld [vmem:[%s0 + $0x170] sm:$0xff]
  %v79 = vld [vmem:[%s0 + $0x178] sm:$0xf]
  %v80 = vld [vmem:[%s0 + $0x17c] sm:$0xff]
  %v81 = vld [vmem:[%s0 + $0x184] sm:$0xff]
  %v82 = vld [vmem:[%s0 + $0x18c] sm:$0xf]
  %v83 = vld [vmem:[%s0 + $0x190] sm:$0xff]
  %v84 = vld [vmem:[%s0 + $0x198] sm:$0xff]
  %v85 = vld [vmem:[%s0 + $0x1a0] sm:$0xf]
  %v86 = vld [vmem:[%s0 + $0x1a4] sm:$0xff]
  %v87 = vld [vmem:[%s0 + $0x1ac] sm:$0xff]
  %v88 = vld [vmem:[%s0 + $0x1b4] sm:$0xf]
  %v89 = vld [vmem:[%s0 + $0x1b8] sm:$0xff]
  %v90 = vld [vmem:[%s0 + $0x1c0] sm:$0xff]
  %v91 = vld [vmem:[%s0 + $0x1c8] sm:$0xf]
  %v92 = vld [vmem:[%s0 + $0x1cc] sm:$0xff]
  %v93 = vld [vmem:[%s0 + $0x1d4] sm:$0xff]
  %v94 = vld [vmem:[%s0 + $0x1dc] sm:$0xf]
  %v95 = vld [vmem:[%s0 + $0x1e0] sm:$0xff]
  %v96 = vld [vmem:[%s0 + $0x1e8] sm:$0xff]
  %v97 = vld [vmem:[%s0 + $0x1f0] sm:$0xf]
  %v98 = vld [vmem:[%s0 + $0x1f4] sm:$0xff]
  %v99 = vld [vmem:[%s0 + $0x1fc] sm:$0xff]
  %v100 = vld [vmem:[%s0 + $0x204] sm:$0xf]
  %v101 = vld [vmem:[%s0 + $0x208] sm:$0xff]
  %v102 = vld [vmem:[%s0 + $0x210] sm:$0xff]
  %v103 = vld [vmem:[%s0 + $0x218] sm:$0xf]
  %v104 = vld [vmem:[%s0 + $0x21c] sm:$0xff]
  %v105 = vld [vmem:[%s0 + $0x224] sm:$0xff]
  %v106 = vld [vmem:[%s0 + $0x22c] sm:$0xf]
  %v107 = vld [vmem:[%s0 + $0x230] sm:$0xff]
  %v108 = vld [vmem:[%s0 + $0x238] sm:$0xff]
  %v109 = vld [vmem:[%s0 + $0x240] sm:$0xf]
  %v110 = vld [vmem:[%s0 + $0x244] sm:$0xff]
  %v111 = vld [vmem:[%s0 + $0x24c] sm:$0xff]
  %v112 = vld [vmem:[%s0 + $0x254] sm:$0xf]
  %v113 = vld [vmem:[%s0 + $0x258] sm:$0xff]
  %v114 = vld [vmem:[%s0 + $0x260] sm:$0xff]
  %v115 = vld [vmem:[%s0 + $0x268] sm:$0xf]
  %v116 = vld [vmem:[%s0 + $0x26c] sm:$0xff]
  %v117 = vld [vmem:[%s0 + $0x274] sm:$0xff]
  %v118 = vld [vmem:[%s0 + $0x27c] sm:$0xf]
  %v119 = vld [vmem:[%s0 + $0x280] sm:$0xff]
  %v120 = vld [vmem:[%s0 + $0x288] sm:$0xff]
  %v121 = vld [vmem:[%s0 + $0x290] sm:$0xf]
  %v122 = vld [vmem:[%s0 + $0x294] sm:$0xff]
  %v123 = vld [vmem:[%s0 + $0x29c] sm:$0xff]
  %v124 = vld [vmem:[%s0 + $0x2a4] sm:$0xf]
  %v125 = vld [vmem:[%s0 + $0x2a8] sm:$0xff]
  %v126 = vld [vmem:[%s0 + $0x2b0] sm:$0xff]
  %v127 = vld [vmem:[%s0 + $0x2b8] sm:$0xf]
  %v128 = vld [vmem:[%s0 + $0x2bc] sm:$0xff]
  %v129 = vld [vmem:[%s0 + $0x2c4] sm:$0xff]
  %v130 = vld [vmem:[%s0 + $0x2cc] sm:$0xf]
  %v131 = vld [vmem:[%s2] sm:$0xff]
  %v132 = vld [vmem:[%s2 + $0x8] sm:$0xff]
  %v133 = vld [vmem:[%s2 + $0x10] sm:$0xff]
  %v134 = vld [vmem:[%s2 + $0x18] sm:$0xff]
  %136 = vset.pattern.permute.xlu0 0
  %137 = vperm.xlu0 %136, %v131
  %v138 = vpop.permute.xlu0 %137
  %141 = vset.pattern.permute.xlu0 0
  %142 = vperm.xlu0 %141, %v132
  %v143 = vpop.permute.xlu0 %142
  %146 = vset.pattern.permute.xlu0 0
  %147 = vperm.xlu0 %146, %v133
  %v148 = vpop.permute.xlu0 %147
  %151 = vset.pattern.permute.xlu0 0
  %152 = vperm.xlu0 %151, %v134
  %v153 = vpop.permute.xlu0 %152
  %v163 = vunpack.c.l.b16 %v15
  %v164 = vunpack.c.h.b16 %v15
  %v165 = vunpack.c.l.b16 %v16
  %v166 = vunpack.c.l.b16 %v17
  %v167 = vunpack.c.h.b16 %v17
  %v168 = vunpack.c.l.b16 %v18
  %v169 = vunpack.c.l.b16 %v19
  %v170 = vunpack.c.h.b16 %v19
  %v171 = vunpack.c.l.b16 %v20
  %v172 = vunpack.c.l.b16 %v21
  %v173 = vunpack.c.h.b16 %v21
  %v174 = vunpack.c.l.b16 %v22
  %v175 = vpack.c.b16 %v166, %v163
  %v176 = vpack.c.b16 %v167, %v164
  %v177 = vpack.c.b16 %v168, %v165
  %v178 = vpack.c.b16 %v172, %v169
  %v179 = vpack.c.b16 %v173, %v170
  %v180 = vpack.c.b16 %v174, %v171
  %v293 = vunpack.c.l.b16 %v23
  %v294 = vunpack.c.h.b16 %v23
  %v295 = vunpack.c.l.b16 %v24
  %v296 = vunpack.c.h.b16 %v24
  %v297 = vunpack.c.l.b16 %v25
  %v298 = vunpack.c.l.b16 %v26
  %v299 = vunpack.c.h.b16 %v26
  %v300 = vunpack.c.l.b16 %v27
  %v301 = vunpack.c.h.b16 %v27
  %v302 = vunpack.c.l.b16 %v28
  %v303 = vunpack.c.l.b16 %v29
  %v304 = vunpack.c.h.b16 %v29
  %v305 = vunpack.c.l.b16 %v30
  %v306 = vunpack.c.h.b16 %v30
  %v307 = vunpack.c.l.b16 %v31
  %v308 = vunpack.c.l.b16 %v32
  %v309 = vunpack.c.h.b16 %v32
  %v310 = vunpack.c.l.b16 %v33
  %v311 = vunpack.c.h.b16 %v33
  %v312 = vunpack.c.l.b16 %v34
  %v313 = vunpack.c.l.b16 %v35
  %v314 = vunpack.c.h.b16 %v35
  %v315 = vunpack.c.l.b16 %v36
  %v316 = vunpack.c.h.b16 %v36
  %v317 = vunpack.c.l.b16 %v37
  %v318 = vunpack.c.l.b16 %v38
  %v319 = vunpack.c.h.b16 %v38
  %v320 = vunpack.c.l.b16 %v39
  %v321 = vunpack.c.h.b16 %v39
  %v322 = vunpack.c.l.b16 %v40
  %v323 = vunpack.c.l.b16 %v41
  %v324 = vunpack.c.h.b16 %v41
  %v325 = vunpack.c.l.b16 %v42
  %v326 = vunpack.c.h.b16 %v42
  %v327 = vunpack.c.l.b16 %v43
  %v328 = vunpack.c.l.b16 %v44
  %v329 = vunpack.c.h.b16 %v44
  %v330 = vunpack.c.l.b16 %v45
  %v331 = vunpack.c.h.b16 %v45
  %v332 = vunpack.c.l.b16 %v46
  %v333 = vunpack.c.l.b16 %v47
  %v334 = vunpack.c.h.b16 %v47
  %v335 = vunpack.c.l.b16 %v48
  %v336 = vunpack.c.h.b16 %v48
  %v337 = vunpack.c.l.b16 %v49
  %v338 = vunpack.c.l.b16 %v50
  %v339 = vunpack.c.h.b16 %v50
  %v340 = vunpack.c.l.b16 %v51
  %v341 = vunpack.c.h.b16 %v51
  %v342 = vunpack.c.l.b16 %v52
  %v343 = vunpack.c.l.b16 %v53
  %v344 = vunpack.c.h.b16 %v53
  %v345 = vunpack.c.l.b16 %v54
  %v346 = vunpack.c.h.b16 %v54
  %v347 = vunpack.c.l.b16 %v55
  %v348 = vunpack.c.l.b16 %v56
  %v349 = vunpack.c.h.b16 %v56
  %v350 = vunpack.c.l.b16 %v57
  %v351 = vunpack.c.h.b16 %v57
  %v352 = vunpack.c.l.b16 %v58
  %v353 = vunpack.c.l.b16 %v59
  %v354 = vunpack.c.h.b16 %v59
  %v355 = vunpack.c.l.b16 %v60
  %v356 = vunpack.c.h.b16 %v60
  %v357 = vunpack.c.l.b16 %v61
  %v358 = vunpack.c.l.b16 %v62
  %v359 = vunpack.c.h.b16 %v62
  %v360 = vunpack.c.l.b16 %v63
  %v361 = vunpack.c.h.b16 %v63
  %v362 = vunpack.c.l.b16 %v64
  %v363 = vunpack.c.l.b16 %v65
  %v364 = vunpack.c.h.b16 %v65
  %v365 = vunpack.c.l.b16 %v66
  %v366 = vunpack.c.h.b16 %v66
  %v367 = vunpack.c.l.b16 %v67
  %v368 = vunpack.c.l.b16 %v68
  %v369 = vunpack.c.h.b16 %v68
  %v370 = vunpack.c.l.b16 %v69
  %v371 = vunpack.c.h.b16 %v69
  %v372 = vunpack.c.l.b16 %v70
  %v373 = vunpack.c.l.b16 %v71
  %v374 = vunpack.c.h.b16 %v71
  %v375 = vunpack.c.l.b16 %v72
  %v376 = vunpack.c.h.b16 %v72
  %v377 = vunpack.c.l.b16 %v73
  %v378 = vunpack.c.l.b16 %v74
  %v379 = vunpack.c.h.b16 %v74
  %v380 = vunpack.c.l.b16 %v75
  %v381 = vunpack.c.h.b16 %v75
  %v382 = vunpack.c.l.b16 %v76
  %v383 = vunpack.c.l.b16 %v77
  %v384 = vunpack.c.h.b16 %v77
  %v385 = vunpack.c.l.b16 %v78
  %v386 = vunpack.c.h.b16 %v78
  %v387 = vunpack.c.l.b16 %v79
  %v388 = vunpack.c.l.b16 %v80
  %v389 = vunpack.c.h.b16 %v80
  %v390 = vunpack.c.l.b16 %v81
  %v391 = vunpack.c.h.b16 %v81
  %v392 = vunpack.c.l.b16 %v82
  %v393 = vunpack.c.l.b16 %v83
  %v394 = vunpack.c.h.b16 %v83
  %v395 = vunpack.c.l.b16 %v84
  %v396 = vunpack.c.h.b16 %v84
  %v397 = vunpack.c.l.b16 %v85
  %v398 = vunpack.c.l.b16 %v86
  %v399 = vunpack.c.h.b16 %v86
  %v400 = vunpack.c.l.b16 %v87
  %v401 = vunpack.c.h.b16 %v87
  %v402 = vunpack.c.l.b16 %v88
  %v403 = vunpack.c.l.b16 %v89
  %v404 = vunpack.c.h.b16 %v89
  %v405 = vunpack.c.l.b16 %v90
  %v406 = vunpack.c.h.b16 %v90
  %v407 = vunpack.c.l.b16 %v91
  %v408 = vunpack.c.l.b16 %v92
  %v409 = vunpack.c.h.b16 %v92
  %v410 = vunpack.c.l.b16 %v93
  %v411 = vunpack.c.h.b16 %v93
  %v412 = vunpack.c.l.b16 %v94
  %v413 = vunpack.c.l.b16 %v95
  %v414 = vunpack.c.h.b16 %v95
  %v415 = vunpack.c.l.b16 %v96
  %v416 = vunpack.c.h.b16 %v96
  %v417 = vunpack.c.l.b16 %v97
  %v418 = vunpack.c.l.b16 %v98
  %v419 = vunpack.c.h.b16 %v98
  %v420 = vunpack.c.l.b16 %v99
  %v421 = vunpack.c.h.b16 %v99
  %v422 = vunpack.c.l.b16 %v100
  %v423 = vunpack.c.l.b16 %v101
  %v424 = vunpack.c.h.b16 %v101
  %v425 = vunpack.c.l.b16 %v102
  %v426 = vunpack.c.h.b16 %v102
  %v427 = vunpack.c.l.b16 %v103
  %v428 = vunpack.c.l.b16 %v104
  %v429 = vunpack.c.h.b16 %v104
  %v430 = vunpack.c.l.b16 %v105
  %v431 = vunpack.c.h.b16 %v105
  %v432 = vunpack.c.l.b16 %v106
  %v433 = vunpack.c.l.b16 %v107
  %v434 = vunpack.c.h.b16 %v107
  %v435 = vunpack.c.l.b16 %v108
  %v436 = vunpack.c.h.b16 %v108
  %v437 = vunpack.c.l.b16 %v109
  %v438 = vunpack.c.l.b16 %v110
  %v439 = vunpack.c.h.b16 %v110
  %v440 = vunpack.c.l.b16 %v111
  %v441 = vunpack.c.h.b16 %v111
  %v442 = vunpack.c.l.b16 %v112
  %v443 = vunpack.c.l.b16 %v113
  %v444 = vunpack.c.h.b16 %v113
  %v445 = vunpack.c.l.b16 %v114
  %v446 = vunpack.c.h.b16 %v114
  %v447 = vunpack.c.l.b16 %v115
  %v448 = vunpack.c.l.b16 %v116
  %v449 = vunpack.c.h.b16 %v116
  %v450 = vunpack.c.l.b16 %v117
  %v451 = vunpack.c.h.b16 %v117
  %v452 = vunpack.c.l.b16 %v118
  %v453 = vunpack.c.l.b16 %v119
  %v454 = vunpack.c.h.b16 %v119
  %v455 = vunpack.c.l.b16 %v120
  %v456 = vunpack.c.h.b16 %v120
  %v457 = vunpack.c.l.b16 %v121
  %v458 = vunpack.c.l.b16 %v122
  %v459 = vunpack.c.h.b16 %v122
  %v460 = vunpack.c.l.b16 %v123
  %v461 = vunpack.c.h.b16 %v123
  %v462 = vunpack.c.l.b16 %v124
  %v463 = vunpack.c.l.b16 %v125
  %v464 = vunpack.c.h.b16 %v125
  %v465 = vunpack.c.l.b16 %v126
  %v466 = vunpack.c.h.b16 %v126
  %v467 = vunpack.c.l.b16 %v127
  %v468 = vunpack.c.l.b16 %v128
  %v469 = vunpack.c.h.b16 %v128
  %v470 = vunpack.c.l.b16 %v129
  %v471 = vunpack.c.h.b16 %v129
  %v472 = vunpack.c.l.b16 %v130
  %v473 = vpack.c.b16 %v298, %v293
  %v474 = vpack.c.b16 %v299, %v294
  %v475 = vpack.c.b16 %v300, %v295
  %v476 = vpack.c.b16 %v301, %v296
  %v477 = vpack.c.b16 %v302, %v297
  %v478 = vpack.c.b16 %v308, %v303
  %v479 = vpack.c.b16 %v309, %v304
  %v480 = vpack.c.b16 %v310, %v305
  %v481 = vpack.c.b16 %v311, %v306
  %v482 = vpack.c.b16 %v312, %v307
  %v483 = vpack.c.b16 %v318, %v313
  %v484 = vpack.c.b16 %v319, %v314
  %v485 = vpack.c.b16 %v320, %v315
  %v486 = vpack.c.b16 %v321, %v316
  %v487 = vpack.c.b16 %v322, %v317
  %v488 = vpack.c.b16 %v328, %v323
  %v489 = vpack.c.b16 %v329, %v324
  %v490 = vpack.c.b16 %v330, %v325
  %v491 = vpack.c.b16 %v331, %v326
  %v492 = vpack.c.b16 %v332, %v327
  %v493 = vpack.c.b16 %v338, %v333
  %v494 = vpack.c.b16 %v339, %v334
  %v495 = vpack.c.b16 %v340, %v335
  %v496 = vpack.c.b16 %v341, %v336
  %v497 = vpack.c.b16 %v342, %v337
  %v498 = vpack.c.b16 %v348, %v343
  %v499 = vpack.c.b16 %v349, %v344
  %v500 = vpack.c.b16 %v350, %v345
  %v501 = vpack.c.b16 %v351, %v346
  %v502 = vpack.c.b16 %v352, %v347
  %v503 = vpack.c.b16 %v358, %v353
  %v504 = vpack.c.b16 %v359, %v354
  %v505 = vpack.c.b16 %v360, %v355
  %v506 = vpack.c.b16 %v361, %v356
  %v507 = vpack.c.b16 %v362, %v357
  %v508 = vpack.c.b16 %v368, %v363
  %v509 = vpack.c.b16 %v369, %v364
  %v510 = vpack.c.b16 %v370, %v365
  %v511 = vpack.c.b16 %v371, %v366
  %v512 = vpack.c.b16 %v372, %v367
  %v513 = vpack.c.b16 %v378, %v373
  %v514 = vpack.c.b16 %v379, %v374
  %v515 = vpack.c.b16 %v380, %v375
  %v516 = vpack.c.b16 %v381, %v376
  %v517 = vpack.c.b16 %v382, %v377
  %v518 = vpack.c.b16 %v388, %v383
  %v519 = vpack.c.b16 %v389, %v384
  %v520 = vpack.c.b16 %v390, %v385
  %v521 = vpack.c.b16 %v391, %v386
  %v522 = vpack.c.b16 %v392, %v387
  %v523 = vpack.c.b16 %v398, %v393
  %v524 = vpack.c.b16 %v399, %v394
  %v525 = vpack.c.b16 %v400, %v395
  %v526 = vpack.c.b16 %v401, %v396
  %v527 = vpack.c.b16 %v402, %v397
  %v528 = vpack.c.b16 %v408, %v403
  %v529 = vpack.c.b16 %v409, %v404
  %v530 = vpack.c.b16 %v410, %v405
  %v531 = vpack.c.b16 %v411, %v406
  %v532 = vpack.c.b16 %v412, %v407
  %v533 = vpack.c.b16 %v418, %v413
  %v534 = vpack.c.b16 %v419, %v414
  %v535 = vpack.c.b16 %v420, %v415
  %v536 = vpack.c.b16 %v421, %v416
  %v537 = vpack.c.b16 %v422, %v417
  %v538 = vpack.c.b16 %v428, %v423
  %v539 = vpack.c.b16 %v429, %v424
  %v540 = vpack.c.b16 %v430, %v425
  %v541 = vpack.c.b16 %v431, %v426
  %v542 = vpack.c.b16 %v432, %v427
  %v543 = vpack.c.b16 %v438, %v433
  %v544 = vpack.c.b16 %v439, %v434
  %v545 = vpack.c.b16 %v440, %v435
  %v546 = vpack.c.b16 %v441, %v436
  %v547 = vpack.c.b16 %v442, %v437
  %v548 = vpack.c.b16 %v448, %v443
  %v549 = vpack.c.b16 %v449, %v444
  %v550 = vpack.c.b16 %v450, %v445
  %v551 = vpack.c.b16 %v451, %v446
  %v552 = vpack.c.b16 %v452, %v447
  %v553 = vpack.c.b16 %v458, %v453
  %v554 = vpack.c.b16 %v459, %v454
  %v555 = vpack.c.b16 %v460, %v455
  %v556 = vpack.c.b16 %v461, %v456
  %v557 = vpack.c.b16 %v462, %v457
  %v558 = vpack.c.b16 %v468, %v463
  %v559 = vpack.c.b16 %v469, %v464
  %v560 = vpack.c.b16 %v470, %v465
  %v561 = vpack.c.b16 %v471, %v466
  %v562 = vpack.c.b16 %v472, %v467
  %vm653 = vcmask 261120
  %v655 = vsel %vm653, %v177, 0
  %v658 = vsel %vm653, %v180, 0
  %660 = vmatprep.subr.bf16.mxu0 %v509
  %661 = vmatpush1.bf16.msra.mxu0 %v508
  %662 = vmatprep.subr.bf16.mxu0 %v504
  %663 = vmatpush1.bf16.msra.mxu0 %v503
  %664 = vmatprep.subr.bf16.mxu0 %v499
  %665 = vmatpush1.bf16.msra.mxu0 %v498
  %666 = vmatprep.subr.bf16.mxu0 %v494
  %667 = vmatpush1.bf16.msra.mxu0 %v493
  %668 = vmatprep.subr.bf16.mxu0 %v489
  %669 = vmatpush1.bf16.msra.mxu0 %v488
  %670 = vmatprep.subr.bf16.mxu0 %v484
  %671 = vmatpush1.bf16.msra.mxu0 %v483
  %672 = vmatprep.subr.bf16.mxu0 %v479
  %673 = vmatpush1.bf16.msra.mxu0 %v478
  %674 = vmatprep.subr.bf16.mxu0 %v474
  %675 = vmatpush1.bf16.msra.mxu0 %v473
  %676 = vmatprep.subr.bf16.mxu0 %v549
  %677 = vmatpush2.bf16.msra.mxu0 %v548
  %678 = vmatprep.subr.bf16.mxu0 %v544
  %679 = vmatpush2.bf16.msra.mxu0 %v543
  %680 = vmatprep.subr.bf16.mxu0 %v539
  %681 = vmatpush2.bf16.msra.mxu0 %v538
  %682 = vmatprep.subr.bf16.mxu0 %v534
  %683 = vmatpush2.bf16.msra.mxu0 %v533
  %684 = vmatprep.subr.bf16.mxu0 %v529
  %685 = vmatpush2.bf16.msra.mxu0 %v528
  %686 = vmatprep.subr.bf16.mxu0 %v524
  %687 = vmatpush2.bf16.msra.mxu0 %v523
  %688 = vmatprep.subr.bf16.mxu0 %v519
  %689 = vmatpush2.bf16.msra.mxu0 %v518
  %690 = vmatprep.subr.bf16.mxu0 %v514
  %691 = vmatpush2.bf16.msra.mxu0 %v513
  %692 = vmatprep.mubr.bf16.mxu0 %v176
  %693 = vmatmul.mubr.bf16.gmra.mxu0 %v175
  %v694 = vpop.f32.mrf.mxu0
  %v695 = vadd.f32 %v138, %v694
  %v696 = vpop.f32.mrf.mxu0
  %v697 = vadd.f32 %v138, %v696
  %v698 = vpop.f32.mrf.mxu0
  %v699 = vadd.f32 %v143, %v698
  %v700 = vpop.f32.mrf.mxu0
  %v701 = vadd.f32 %v143, %v700
  %702 = vmatprep.mubr.bf16.mxu0 %v179
  %703 = vmatmul.mubr.bf16.gmra.mxu0 %v178
  %v704 = vpop.f32.mrf.mxu0
  %v705 = vadd.f32 %v148, %v704
  %v706 = vpop.f32.mrf.mxu0
  %v707 = vadd.f32 %v148, %v706
  %v708 = vpop.f32.mrf.mxu0
  %v709 = vadd.f32 %v153, %v708
  %v710 = vpop.f32.mrf.mxu0
  %v711 = vadd.f32 %v153, %v710
  %712 = vdwg.mxu0
  %713 = vmatprep.subr.bf16.mxu0 0
  %714 = vmatpush1.bf16.msra.mxu0 0
  %715 = vmatprep.subr.bf16.mxu0 0
  %716 = vmatpush1.bf16.msra.mxu0 0
  %717 = vmatprep.subr.bf16.mxu0 0
  %718 = vmatpush1.bf16.msra.mxu0 0
  %719 = vmatprep.subr.bf16.mxu0 0
  %720 = vmatpush1.bf16.msra.mxu0 0
  %721 = vmatprep.subr.bf16.mxu0 0
  %722 = vmatpush1.bf16.msra.mxu0 0
  %723 = vmatprep.subr.bf16.mxu0 0
  %724 = vmatpush1.bf16.msra.mxu0 0
  %725 = vmatprep.subr.bf16.mxu0 %v559
  %726 = vmatpush1.bf16.msra.mxu0 %v558
  %727 = vmatprep.subr.bf16.mxu0 %v554
  %728 = vmatpush1.bf16.msra.mxu0 %v553
  %729 = vmatprep.subr.bf16.mxu0 0
  %730 = vmatpush2.bf16.msra.mxu0 0
  %731 = vmatprep.subr.bf16.mxu0 0
  %732 = vmatpush2.bf16.msra.mxu0 0
  %733 = vmatprep.subr.bf16.mxu0 0
  %734 = vmatpush2.bf16.msra.mxu0 0
  %735 = vmatprep.subr.bf16.mxu0 0
  %736 = vmatpush2.bf16.msra.mxu0 0
  %737 = vmatprep.subr.bf16.mxu0 0
  %738 = vmatpush2.bf16.msra.mxu0 0
  %739 = vmatprep.subr.bf16.mxu0 0
  %740 = vmatpush2.bf16.msra.mxu0 0
  %741 = vmatprep.subr.bf16.mxu0 0
  %742 = vmatpush2.bf16.msra.mxu0 0
  %743 = vmatprep.subr.bf16.mxu0 0
  %744 = vmatpush2.bf16.msra.mxu0 0
  %745 = vmatprep.mubr.bf16.mxu0 0
  %746 = vmatmul.mubr.bf16.gmra.mxu0 %v655
  %v747 = vpop.f32.mrf.mxu0
  %v748 = vadd.f32 %v695, %v747
  %v749 = vpop.f32.mrf.mxu0
  %v750 = vadd.f32 %v697, %v749
  %v751 = vpop.f32.mrf.mxu0
  %v752 = vadd.f32 %v699, %v751
  %v753 = vpop.f32.mrf.mxu0
  %v754 = vadd.f32 %v701, %v753
  %755 = vmatprep.mubr.bf16.mxu0 0
  %756 = vmatmul.mubr.bf16.gmra.mxu0 %v658
  %v757 = vpop.f32.mrf.mxu0
  %v758 = vadd.f32 %v705, %v757
  %v759 = vpop.f32.mrf.mxu0
  %v760 = vadd.f32 %v707, %v759
  %v761 = vpop.f32.mrf.mxu0
  %v762 = vadd.f32 %v709, %v761
  %v763 = vpop.f32.mrf.mxu0
  %v764 = vadd.f32 %v711, %v763
  %765 = vdwg.mxu0
  %766 = vmatprep.subr.bf16.mxu0 %v511
  %767 = vmatpush1.bf16.msra.mxu0 %v510
  %768 = vmatprep.subr.bf16.mxu0 %v506
  %769 = vmatpush1.bf16.msra.mxu0 %v505
  %770 = vmatprep.subr.bf16.mxu0 %v501
  %771 = vmatpush1.bf16.msra.mxu0 %v500
  %772 = vmatprep.subr.bf16.mxu0 %v496
  %773 = vmatpush1.bf16.msra.mxu0 %v495
  %774 = vmatprep.subr.bf16.mxu0 %v491
  %775 = vmatpush1.bf16.msra.mxu0 %v490
  %776 = vmatprep.subr.bf16.mxu0 %v486
  %777 = vmatpush1.bf16.msra.mxu0 %v485
  %778 = vmatprep.subr.bf16.mxu0 %v481
  %779 = vmatpush1.bf16.msra.mxu0 %v480
  %780 = vmatprep.subr.bf16.mxu0 %v476
  %781 = vmatpush1.bf16.msra.mxu0 %v475
  %782 = vmatprep.subr.bf16.mxu0 %v551
  %783 = vmatpush2.bf16.msra.mxu0 %v550
  %784 = vmatprep.subr.bf16.mxu0 %v546
  %785 = vmatpush2.bf16.msra.mxu0 %v545
  %786 = vmatprep.subr.bf16.mxu0 %v541
  %787 = vmatpush2.bf16.msra.mxu0 %v540
  %788 = vmatprep.subr.bf16.mxu0 %v536
  %789 = vmatpush2.bf16.msra.mxu0 %v535
  %790 = vmatprep.subr.bf16.mxu0 %v531
  %791 = vmatpush2.bf16.msra.mxu0 %v530
  %792 = vmatprep.subr.bf16.mxu0 %v526
  %793 = vmatpush2.bf16.msra.mxu0 %v525
  %794 = vmatprep.subr.bf16.mxu0 %v521
  %795 = vmatpush2.bf16.msra.mxu0 %v520
  %796 = vmatprep.subr.bf16.mxu0 %v516
  %797 = vmatpush2.bf16.msra.mxu0 %v515
  %798 = vmatprep.mubr.bf16.mxu0 %v176
  %799 = vmatmul.mubr.bf16.gmra.mxu0 %v175
  %v800 = vpop.f32.mrf.mxu0
  %v801 = vadd.f32 %v138, %v800
  %v802 = vpop.f32.mrf.mxu0
  %v803 = vadd.f32 %v138, %v802
  %v804 = vpop.f32.mrf.mxu0
  %v805 = vadd.f32 %v143, %v804
  %v806 = vpop.f32.mrf.mxu0
  %v807 = vadd.f32 %v143, %v806
  %808 = vmatprep.mubr.bf16.mxu0 %v179
  %809 = vmatmul.mubr.bf16.gmra.mxu0 %v178
  %v810 = vpop.f32.mrf.mxu0
  %v811 = vadd.f32 %v148, %v810
  %v812 = vpop.f32.mrf.mxu0
  %v813 = vadd.f32 %v148, %v812
  %v814 = vpop.f32.mrf.mxu0
  %v815 = vadd.f32 %v153, %v814
  %v816 = vpop.f32.mrf.mxu0
  %v817 = vadd.f32 %v153, %v816
  %818 = vdwg.mxu0
  %819 = vmatprep.subr.bf16.mxu0 0
  %820 = vmatpush1.bf16.msra.mxu0 0
  %821 = vmatprep.subr.bf16.mxu0 0
  %822 = vmatpush1.bf16.msra.mxu0 0
  %823 = vmatprep.subr.bf16.mxu0 0
  %824 = vmatpush1.bf16.msra.mxu0 0
  %825 = vmatprep.subr.bf16.mxu0 0
  %826 = vmatpush1.bf16.msra.mxu0 0
  %827 = vmatprep.subr.bf16.mxu0 0
  %828 = vmatpush1.bf16.msra.mxu0 0
  %829 = vmatprep.subr.bf16.mxu0 0
  %830 = vmatpush1.bf16.msra.mxu0 0
  %831 = vmatprep.subr.bf16.mxu0 %v561
  %832 = vmatpush1.bf16.msra.mxu0 %v560
  %833 = vmatprep.subr.bf16.mxu0 %v556
  %834 = vmatpush1.bf16.msra.mxu0 %v555
  %835 = vmatprep.subr.bf16.mxu0 0
  %836 = vmatpush2.bf16.msra.mxu0 0
  %837 = vmatprep.subr.bf16.mxu0 0
  %838 = vmatpush2.bf16.msra.mxu0 0
  %839 = vmatprep.subr.bf16.mxu0 0
  %840 = vmatpush2.bf16.msra.mxu0 0
  %841 = vmatprep.subr.bf16.mxu0 0
  %842 = vmatpush2.bf16.msra.mxu0 0
  %843 = vmatprep.subr.bf16.mxu0 0
  %844 = vmatpush2.bf16.msra.mxu0 0
  %845 = vmatprep.subr.bf16.mxu0 0
  %846 = vmatpush2.bf16.msra.mxu0 0
  %847 = vmatprep.subr.bf16.mxu0 0
  %848 = vmatpush2.bf16.msra.mxu0 0
  %849 = vmatprep.subr.bf16.mxu0 0
  %850 = vmatpush2.bf16.msra.mxu0 0
  %851 = vmatprep.mubr.bf16.mxu0 0
  %852 = vmatmul.mubr.bf16.gmra.mxu0 %v655
  %v853 = vpop.f32.mrf.mxu0
  %v854 = vadd.f32 %v801, %v853
  %v855 = vpop.f32.mrf.mxu0
  %v856 = vadd.f32 %v803, %v855
  %v857 = vpop.f32.mrf.mxu0
  %v858 = vadd.f32 %v805, %v857
  %v859 = vpop.f32.mrf.mxu0
  %v860 = vadd.f32 %v807, %v859
  %861 = vmatprep.mubr.bf16.mxu0 0
  %862 = vmatmul.mubr.bf16.gmra.mxu0 %v658
  %v863 = vpop.f32.mrf.mxu0
  %v864 = vadd.f32 %v811, %v863
  %v865 = vpop.f32.mrf.mxu0
  %v866 = vadd.f32 %v813, %v865
  %v867 = vpop.f32.mrf.mxu0
  %v868 = vadd.f32 %v815, %v867
  %v869 = vpop.f32.mrf.mxu0
  %v870 = vadd.f32 %v817, %v869
  %871 = vdwg.mxu0
  %872 = vmatprep.subr.bf16.mxu0 0
  %873 = vmatpush1.bf16.msra.mxu0 %v512
  %874 = vmatprep.subr.bf16.mxu0 0
  %875 = vmatpush1.bf16.msra.mxu0 %v507
  %876 = vmatprep.subr.bf16.mxu0 0
  %877 = vmatpush1.bf16.msra.mxu0 %v502
  %878 = vmatprep.subr.bf16.mxu0 0
  %879 = vmatpush1.bf16.msra.mxu0 %v497
  %880 = vmatprep.subr.bf16.mxu0 0
  %881 = vmatpush1.bf16.msra.mxu0 %v492
  %882 = vmatprep.subr.bf16.mxu0 0
  %883 = vmatpush1.bf16.msra.mxu0 %v487
  %884 = vmatprep.subr.bf16.mxu0 0
  %885 = vmatpush1.bf16.msra.mxu0 %v482
  %886 = vmatprep.subr.bf16.mxu0 0
  %887 = vmatpush1.bf16.msra.mxu0 %v477
  %888 = vmatprep.subr.bf16.mxu0 0
  %889 = vmatpush2.bf16.msra.mxu0 %v552
  %890 = vmatprep.subr.bf16.mxu0 0
  %891 = vmatpush2.bf16.msra.mxu0 %v547
  %892 = vmatprep.subr.bf16.mxu0 0
  %893 = vmatpush2.bf16.msra.mxu0 %v542
  %894 = vmatprep.subr.bf16.mxu0 0
  %895 = vmatpush2.bf16.msra.mxu0 %v537
  %896 = vmatprep.subr.bf16.mxu0 0
  %897 = vmatpush2.bf16.msra.mxu0 %v532
  %898 = vmatprep.subr.bf16.mxu0 0
  %899 = vmatpush2.bf16.msra.mxu0 %v527
  %900 = vmatprep.subr.bf16.mxu0 0
  %901 = vmatpush2.bf16.msra.mxu0 %v522
  %902 = vmatprep.subr.bf16.mxu0 0
  %903 = vmatpush2.bf16.msra.mxu0 %v517
  %904 = vmatprep.mubr.bf16.mxu0 %v176
  %905 = vmatmul.mubr.bf16.gmra.mxu0 %v175
  %v906 = vpop.f32.mrf.mxu0
  %v907 = vadd.f32 %v138, %v906
  %v908 = vpop.f32.mrf.mxu0
  %v909 = vpop.f32.mrf.mxu0
  %v910 = vadd.f32 %v143, %v909
  %v911 = vpop.f32.mrf.mxu0
  %912 = vmatprep.mubr.bf16.mxu0 %v179
  %913 = vmatmul.mubr.bf16.gmra.mxu0 %v178
  %v914 = vpop.f32.mrf.mxu0
  %v915 = vadd.f32 %v148, %v914
  %v916 = vpop.f32.mrf.mxu0
  %v917 = vpop.f32.mrf.mxu0
  %v918 = vadd.f32 %v153, %v917
  %v919 = vpop.f32.mrf.mxu0
  %920 = vdwg.mxu0
  %921 = vmatprep.subr.bf16.mxu0 0
  %922 = vmatpush1.bf16.msra.mxu0 0
  %923 = vmatprep.subr.bf16.mxu0 0
  %924 = vmatpush1.bf16.msra.mxu0 0
  %925 = vmatprep.subr.bf16.mxu0 0
  %926 = vmatpush1.bf16.msra.mxu0 0
  %927 = vmatprep.subr.bf16.mxu0 0
  %928 = vmatpush1.bf16.msra.mxu0 0
  %929 = vmatprep.subr.bf16.mxu0 0
  %930 = vmatpush1.bf16.msra.mxu0 0
  %931 = vmatprep.subr.bf16.mxu0 0
  %932 = vmatpush1.bf16.msra.mxu0 0
  %933 = vmatprep.subr.bf16.mxu0 0
  %934 = vmatpush1.bf16.msra.mxu0 %v562
  %935 = vmatprep.subr.bf16.mxu0 0
  %936 = vmatpush1.bf16.msra.mxu0 %v557
  %937 = vmatprep.subr.bf16.mxu0 0
  %938 = vmatpush2.bf16.msra.mxu0 0
  %939 = vmatprep.subr.bf16.mxu0 0
  %940 = vmatpush2.bf16.msra.mxu0 0
  %941 = vmatprep.subr.bf16.mxu0 0
  %942 = vmatpush2.bf16.msra.mxu0 0
  %943 = vmatprep.subr.bf16.mxu0 0
  %944 = vmatpush2.bf16.msra.mxu0 0
  %945 = vmatprep.subr.bf16.mxu0 0
  %946 = vmatpush2.bf16.msra.mxu0 0
  %947 = vmatprep.subr.bf16.mxu0 0
  %948 = vmatpush2.bf16.msra.mxu0 0
  %949 = vmatprep.subr.bf16.mxu0 0
  %950 = vmatpush2.bf16.msra.mxu0 0
  %951 = vmatprep.subr.bf16.mxu0 0
  %952 = vmatpush2.bf16.msra.mxu0 0
  %953 = vmatprep.mubr.bf16.mxu0 0
  %954 = vmatmul.mubr.bf16.gmra.mxu0 %v655
  %v955 = vpop.f32.mrf.mxu0
  %v956 = vadd.f32 %v907, %v955
  %v957 = vpop.f32.mrf.mxu0
  %v958 = vpop.f32.mrf.mxu0
  %v959 = vadd.f32 %v910, %v958
  %v960 = vpop.f32.mrf.mxu0
  %961 = vmatprep.mubr.bf16.mxu0 0
  %962 = vmatmul.mubr.bf16.gmra.mxu0 %v658
  %v963 = vpop.f32.mrf.mxu0
  %v964 = vadd.f32 %v915, %v963
  %v965 = vpop.f32.mrf.mxu0
  %v966 = vpop.f32.mrf.mxu0
  %v967 = vadd.f32 %v918, %v966
  %v968 = vpop.f32.mrf.mxu0
  %969 = vdwg.mxu0
  %v970 = vmax.f32 %v748, 0.0
  %v971 = vmax.f32 %v750, 0.0
  %v972 = vmax.f32 %v854, 0.0
  %v973 = vmax.f32 %v856, 0.0
  %v974 = vmax.f32 %v956, 0.0
  %v975 = vmax.f32 %v752, 0.0
  %v976 = vmax.f32 %v754, 0.0
  %v977 = vmax.f32 %v858, 0.0
  %v978 = vmax.f32 %v860, 0.0
  %v979 = vmax.f32 %v959, 0.0
  %v980 = vmax.f32 %v758, 0.0
  %v981 = vmax.f32 %v760, 0.0
  %v982 = vmax.f32 %v864, 0.0
  %v983 = vmax.f32 %v866, 0.0
  %v984 = vmax.f32 %v964, 0.0
  %v985 = vmax.f32 %v762, 0.0
  %v986 = vmax.f32 %v764, 0.0
  %v987 = vmax.f32 %v868, 0.0
  %v988 = vmax.f32 %v870, 0.0
  %v989 = vmax.f32 %v967, 0.0
  %v990 = vpack.c.bf16 %v975, %v970
  %v991 = vpack.c.bf16 %v976, %v971
  %v992 = vpack.c.bf16 %v977, %v972
  %v993 = vpack.c.bf16 %v978, %v973
  %v994 = vpack.c.bf16 %v979, %v974
  %v995 = vpack.c.bf16 %v985, %v980
  %v996 = vpack.c.bf16 %v986, %v981
  %v997 = vpack.c.bf16 %v987, %v982
  %v998 = vpack.c.bf16 %v988, %v983
  %v999 = vpack.c.bf16 %v989, %v984
  %v1010 = vunpack.c.l.b16 %v990
  %v1011 = vunpack.c.l.b16 %v991
  %v1012 = vunpack.c.l.b16 %v992
  %v1013 = vunpack.c.l.b16 %v993
  %v1014 = vunpack.c.l.b16 %v994
  %v1015 = vunpack.c.h.b16 %v990
  %v1016 = vunpack.c.h.b16 %v991
  %v1017 = vunpack.c.h.b16 %v992
  %v1018 = vunpack.c.h.b16 %v993
  %v1019 = vunpack.c.h.b16 %v994
  %v1020 = vunpack.c.l.b16 %v995
  %v1021 = vunpack.c.l.b16 %v996
  %v1022 = vunpack.c.l.b16 %v997
  %v1023 = vunpack.c.l.b16 %v998
  %v1024 = vunpack.c.l.b16 %v999
  %v1025 = vunpack.c.h.b16 %v995
  %v1026 = vunpack.c.h.b16 %v996
  %v1027 = vunpack.c.h.b16 %v997
  %v1028 = vunpack.c.h.b16 %v998
  %v1029 = vunpack.c.h.b16 %v999
  %v1030 = vpack.c.b16 %v1011, %v1010
  %v1031 = vpack.c.b16 %v1013, %v1012
  %v1032 = vpack.c.b16 %v1014, %v1014
  %v1033 = vpack.c.b16 %v1016, %v1015
  %v1034 = vpack.c.b16 %v1018, %v1017
  %v1035 = vpack.c.b16 %v1019, %v1019
  %v1036 = vpack.c.b16 %v1021, %v1020
  %v1037 = vpack.c.b16 %v1023, %v1022
  %v1038 = vpack.c.b16 %v1024, %v1024
  %v1039 = vpack.c.b16 %v1026, %v1025
  %v1040 = vpack.c.b16 %v1028, %v1027
  %v1041 = vpack.c.b16 %v1029, %v1029
  %1054 = vst [vmem:[%s3] sm:$0xff] %v1030
  %1055 = vst [vmem:[%s3 + $0x8] sm:$0xff] %v1031
  %vm1056 = vcmask 519168
  %1057 = vst.msk [vmem:[%s3 + $0x10] sm:$0xf] %vm1056, %v1032
  %1058 = vst [vmem:[%s3 + $0x14] sm:$0xff] %v1033
  %1059 = vst [vmem:[%s3 + $0x1c] sm:$0xff] %v1034
  %1060 = vst.msk [vmem:[%s3 + $0x24] sm:$0xf] %vm1056, %v1035
  %1061 = vst [vmem:[%s3 + $0x28] sm:$0xff] %v1036
  %1062 = vst [vmem:[%s3 + $0x30] sm:$0xff] %v1037
  %1063 = vst.msk [vmem:[%s3 + $0x38] sm:$0xf] %vm1056, %v1038
  %1064 = vst [vmem:[%s3 + $0x3c] sm:$0xff] %v1039
  %1065 = vst [vmem:[%s3 + $0x44] sm:$0xff] %v1040
  %1066 = vst.msk [vmem:[%s3 + $0x4c] sm:$0xf] %vm1056, %v1041
  // Predicated region
  $region14: #{forward.7} parent=0 // pred_check
    _
  $region15: #{forward.7} parent=0 // pred_check_branch
    %1068 = sbr.rel (0) target = $region17
  $region16: #{forward.7} parent=0 // pred_region
    _
  $region17: #{forward.7} parent=0 // pred_fallthru
    _
  // Predicated region
  $region18: #{forward.7} parent=0 // pred_check
    _
  $region19: #{forward.7} parent=0 // pred_check_branch
    %1070 = sbr.rel (0) target = $region21
  $region20: #{forward.7} parent=0 // pred_region
    _
  $region21: #{forward.7} parent=0 // pred_fallthru
    _

// kernel: forward.8
$region0: #{forward.8}
  #allocation0 [shape = 'u32[]', space=smem, size = 0x4, offset = 0x4, fixed_abs, tag = 'smem constant byte address 0x4 - core index']
  #allocation1 [shape = 'u32[144,128]{1,0:T(1,128)}', space=vmem, size = 0x12000, scoped, tag = 'internal scratch']
  %s0 = inlined_call_operand.vmem [shape: bf16[288,144], index: 0, kind: input, shape index: {}]
  %s1 = inlined_call_operand.vmem [shape: bf16[32,288], index: 1, kind: input, shape index: {}]
  %s2 = inlined_call_operand.vmem [shape: f32[32,1], index: 2, kind: input, shape index: {}]
  %s3 = inlined_call_operand.vmem [shape: bf16[32,144], index: 3, kind: output, shape index: {}]
  %s4 = sld [smem:[#allocation0]]
  $region22: #{forward.8} parent=0
    _
  %s6 = ssub.s32 1, %s4
  %s7 = scalar_select 0, %s6, %s4
  // Predicated region
  $region2: #{forward.8} parent=0 // pred_check
    _
  $region3: #{forward.8} parent=0 // pred_check_branch
    %9 = sbr.rel (0) target = $region5
  $region4: #{forward.8} parent=0 // pred_region
    _
  $region5: #{forward.8} parent=0 // pred_fallthru
    _
  // Predicated region
  $region6: #{forward.8} parent=0 // pred_check
    _
  $region7: #{forward.8} parent=0 // pred_check_branch
    %11 = sbr.rel (0) target = $region9
  $region8: #{forward.8} parent=0 // pred_region
    _
  $region9: #{forward.8} parent=0 // pred_fallthru
    _
  // Predicated region
  $region10: #{forward.8} parent=0 // pred_check
    _
  $region11: #{forward.8} parent=0 // pred_check_branch
    %13 = sbr.rel (0) target = $region13
  $region12: #{forward.8} parent=0 // pred_region
    _
  $region13: #{forward.8} parent=0 // pred_fallthru
    _
  %v15 = vld [vmem:[%s1] sm:$0xff]
  %v16 = vld [vmem:[%s1 + $0x8] sm:$0xf]
  %v17 = vld [vmem:[%s1 + $0xc] sm:$0xff]
  %v18 = vld [vmem:[%s1 + $0x14] sm:$0xf]
  %v19 = vld [vmem:[%s1 + $0x18] sm:$0xff]
  %v20 = vld [vmem:[%s1 + $0x20] sm:$0xf]
  %v21 = vld [vmem:[%s1 + $0x24] sm:$0xff]
  %v22 = vld [vmem:[%s1 + $0x2c] sm:$0xf]
  %v23 = vld [vmem:[%s0] sm:$0xff]
  %v24 = vld [vmem:[%s0 + $0x8] sm:$0xff]
  %v25 = vld [vmem:[%s0 + $0x10] sm:$0xff]
  %v26 = vld [vmem:[%s0 + $0x18] sm:$0xff]
  %v27 = vld [vmem:[%s0 + $0x20] sm:$0xff]
  %v28 = vld [vmem:[%s0 + $0x28] sm:$0xff]
  %v29 = vld [vmem:[%s0 + $0x30] sm:$0xff]
  %v30 = vld [vmem:[%s0 + $0x38] sm:$0xff]
  %v31 = vld [vmem:[%s0 + $0x40] sm:$0xff]
  %v32 = vld [vmem:[%s0 + $0x48] sm:$0xff]
  %v33 = vld [vmem:[%s0 + $0x50] sm:$0xff]
  %v34 = vld [vmem:[%s0 + $0x58] sm:$0xff]
  %v35 = vld [vmem:[%s0 + $0x60] sm:$0xff]
  %v36 = vld [vmem:[%s0 + $0x68] sm:$0xff]
  %v37 = vld [vmem:[%s0 + $0x70] sm:$0xff]
  %v38 = vld [vmem:[%s0 + $0x78] sm:$0xff]
  %v39 = vld [vmem:[%s0 + $0x80] sm:$0xff]
  %v40 = vld [vmem:[%s0 + $0x88] sm:$0xff]
  %v41 = vld [vmem:[%s0 + $0x90] sm:$0xff]
  %v42 = vld [vmem:[%s0 + $0x98] sm:$0xff]
  %v43 = vld [vmem:[%s0 + $0xa0] sm:$0xff]
  %v44 = vld [vmem:[%s0 + $0xa8] sm:$0xff]
  %v45 = vld [vmem:[%s0 + $0xb0] sm:$0xff]
  %v46 = vld [vmem:[%s0 + $0xb8] sm:$0xff]
  %v47 = vld [vmem:[%s0 + $0xc0] sm:$0xff]
  %v48 = vld [vmem:[%s0 + $0xc8] sm:$0xff]
  %v49 = vld [vmem:[%s0 + $0xd0] sm:$0xff]
  %v50 = vld [vmem:[%s0 + $0xd8] sm:$0xff]
  %v51 = vld [vmem:[%s0 + $0xe0] sm:$0xff]
  %v52 = vld [vmem:[%s0 + $0xe8] sm:$0xff]
  %v53 = vld [vmem:[%s0 + $0xf0] sm:$0xff]
  %v54 = vld [vmem:[%s0 + $0xf8] sm:$0xff]
  %v55 = vld [vmem:[%s0 + $0x100] sm:$0xff]
  %v56 = vld [vmem:[%s0 + $0x108] sm:$0xff]
  %v57 = vld [vmem:[%s0 + $0x110] sm:$0xff]
  %v58 = vld [vmem:[%s0 + $0x118] sm:$0xff]
  %v59 = vld [vmem:[%s2] sm:$0xff]
  %v60 = vld [vmem:[%s2 + $0x8] sm:$0xff]
  %v61 = vld [vmem:[%s2 + $0x10] sm:$0xff]
  %v62 = vld [vmem:[%s2 + $0x18] sm:$0xff]
  %64 = vset.pattern.permute.xlu0 0
  %65 = vperm.xlu0 %64, %v59
  %v66 = vpop.permute.xlu0 %65
  %69 = vset.pattern.permute.xlu0 0
  %70 = vperm.xlu0 %69, %v60
  %v71 = vpop.permute.xlu0 %70
  %74 = vset.pattern.permute.xlu0 0
  %75 = vperm.xlu0 %74, %v61
  %v76 = vpop.permute.xlu0 %75
  %79 = vset.pattern.permute.xlu0 0
  %80 = vperm.xlu0 %79, %v62
  %v81 = vpop.permute.xlu0 %80
  %v91 = vunpack.c.l.b16 %v15
  %v92 = vunpack.c.h.b16 %v15
  %v93 = vunpack.c.l.b16 %v16
  %v94 = vunpack.c.l.b16 %v17
  %v95 = vunpack.c.h.b16 %v17
  %v96 = vunpack.c.l.b16 %v18
  %v97 = vunpack.c.l.b16 %v19
  %v98 = vunpack.c.h.b16 %v19
  %v99 = vunpack.c.l.b16 %v20
  %v100 = vunpack.c.l.b16 %v21
  %v101 = vunpack.c.h.b16 %v21
  %v102 = vunpack.c.l.b16 %v22
  %v103 = vpack.c.b16 %v94, %v91
  %v104 = vpack.c.b16 %v95, %v92
  %v105 = vpack.c.b16 %v96, %v93
  %v106 = vpack.c.b16 %v100, %v97
  %v107 = vpack.c.b16 %v101, %v98
  %v108 = vpack.c.b16 %v102, %v99
  %v149 = vunpack.c.l.b16 %v23
  %v150 = vunpack.c.h.b16 %v23
  %v151 = vunpack.c.l.b16 %v24
  %v152 = vunpack.c.h.b16 %v24
  %v153 = vunpack.c.l.b16 %v25
  %v154 = vunpack.c.h.b16 %v25
  %v155 = vunpack.c.l.b16 %v26
  %v156 = vunpack.c.h.b16 %v26
  %v157 = vunpack.c.l.b16 %v27
  %v158 = vunpack.c.h.b16 %v27
  %v159 = vunpack.c.l.b16 %v28
  %v160 = vunpack.c.h.b16 %v28
  %v161 = vunpack.c.l.b16 %v29
  %v162 = vunpack.c.h.b16 %v29
  %v163 = vunpack.c.l.b16 %v30
  %v164 = vunpack.c.h.b16 %v30
  %v165 = vunpack.c.l.b16 %v31
  %v166 = vunpack.c.h.b16 %v31
  %v167 = vunpack.c.l.b16 %v32
  %v168 = vunpack.c.h.b16 %v32
  %v169 = vunpack.c.l.b16 %v33
  %v170 = vunpack.c.h.b16 %v33
  %v171 = vunpack.c.l.b16 %v34
  %v172 = vunpack.c.h.b16 %v34
  %v173 = vunpack.c.l.b16 %v35
  %v174 = vunpack.c.h.b16 %v35
  %v175 = vunpack.c.l.b16 %v36
  %v176 = vunpack.c.h.b16 %v36
  %v177 = vunpack.c.l.b16 %v37
  %v178 = vunpack.c.h.b16 %v37
  %v179 = vunpack.c.l.b16 %v38
  %v180 = vunpack.c.h.b16 %v38
  %v181 = vunpack.c.l.b16 %v39
  %v182 = vunpack.c.h.b16 %v39
  %v183 = vunpack.c.l.b16 %v40
  %v184 = vunpack.c.h.b16 %v40
  %v185 = vunpack.c.l.b16 %v41
  %v186 = vunpack.c.h.b16 %v41
  %v187 = vunpack.c.l.b16 %v42
  %v188 = vunpack.c.h.b16 %v42
  %v189 = vunpack.c.l.b16 %v43
  %v190 = vunpack.c.h.b16 %v43
  %v191 = vunpack.c.l.b16 %v44
  %v192 = vunpack.c.h.b16 %v44
  %v193 = vunpack.c.l.b16 %v45
  %v194 = vunpack.c.h.b16 %v45
  %v195 = vunpack.c.l.b16 %v46
  %v196 = vunpack.c.h.b16 %v46
  %v197 = vunpack.c.l.b16 %v47
  %v198 = vunpack.c.h.b16 %v47
  %v199 = vunpack.c.l.b16 %v48
  %v200 = vunpack.c.h.b16 %v48
  %v201 = vunpack.c.l.b16 %v49
  %v202 = vunpack.c.h.b16 %v49
  %v203 = vunpack.c.l.b16 %v50
  %v204 = vunpack.c.h.b16 %v50
  %v205 = vunpack.c.l.b16 %v51
  %v206 = vunpack.c.h.b16 %v51
  %v207 = vunpack.c.l.b16 %v52
  %v208 = vunpack.c.h.b16 %v52
  %v209 = vunpack.c.l.b16 %v53
  %v210 = vunpack.c.h.b16 %v53
  %v211 = vunpack.c.l.b16 %v54
  %v212 = vunpack.c.h.b16 %v54
  %v213 = vunpack.c.l.b16 %v55
  %v214 = vunpack.c.h.b16 %v55
  %v215 = vunpack.c.l.b16 %v56
  %v216 = vunpack.c.h.b16 %v56
  %v217 = vunpack.c.l.b16 %v57
  %v218 = vunpack.c.h.b16 %v57
  %v219 = vunpack.c.l.b16 %v58
  %v220 = vunpack.c.h.b16 %v58
  %v221 = vpack.c.b16 %v151, %v149
  %v222 = vpack.c.b16 %v152, %v150
  %v223 = vpack.c.b16 %v155, %v153
  %v224 = vpack.c.b16 %v156, %v154
  %v225 = vpack.c.b16 %v159, %v157
  %v226 = vpack.c.b16 %v160, %v158
  %v227 = vpack.c.b16 %v163, %v161
  %v228 = vpack.c.b16 %v164, %v162
  %v229 = vpack.c.b16 %v167, %v165
  %v230 = vpack.c.b16 %v168, %v166
  %v231 = vpack.c.b16 %v171, %v169
  %v232 = vpack.c.b16 %v172, %v170
  %v233 = vpack.c.b16 %v175, %v173
  %v234 = vpack.c.b16 %v176, %v174
  %v235 = vpack.c.b16 %v179, %v177
  %v236 = vpack.c.b16 %v180, %v178
  %v237 = vpack.c.b16 %v183, %v181
  %v238 = vpack.c.b16 %v184, %v182
  %v239 = vpack.c.b16 %v187, %v185
  %v240 = vpack.c.b16 %v188, %v186
  %v241 = vpack.c.b16 %v191, %v189
  %v242 = vpack.c.b16 %v192, %v190
  %v243 = vpack.c.b16 %v195, %v193
  %v244 = vpack.c.b16 %v196, %v194
  %v245 = vpack.c.b16 %v199, %v197
  %v246 = vpack.c.b16 %v200, %v198
  %v247 = vpack.c.b16 %v203, %v201
  %v248 = vpack.c.b16 %v204, %v202
  %v249 = vpack.c.b16 %v207, %v205
  %v250 = vpack.c.b16 %v208, %v206
  %v251 = vpack.c.b16 %v211, %v209
  %v252 = vpack.c.b16 %v212, %v210
  %v253 = vpack.c.b16 %v215, %v213
  %v254 = vpack.c.b16 %v216, %v214
  %v255 = vpack.c.b16 %v219, %v217
  %v256 = vpack.c.b16 %v220, %v218
  %vm293 = vcmask 261120
  %v295 = vsel %vm293, %v105, 0
  %v298 = vsel %vm293, %v108, 0
  %300 = vmatprep.subr.bf16.mxu0 %v236
  %301 = vmatpush1.bf16.msra.mxu0 %v235
  %302 = vmatprep.subr.bf16.mxu0 %v234
  %303 = vmatpush1.bf16.msra.mxu0 %v233
  %304 = vmatprep.subr.bf16.mxu0 %v232
  %305 = vmatpush1.bf16.msra.mxu0 %v231
  %306 = vmatprep.subr.bf16.mxu0 %v230
  %307 = vmatpush1.bf16.msra.mxu0 %v229
  %308 = vmatprep.subr.bf16.mxu0 %v228
  %309 = vmatpush1.bf16.msra.mxu0 %v227
  %310 = vmatprep.subr.bf16.mxu0 %v226
  %311 = vmatpush1.bf16.msra.mxu0 %v225
  %312 = vmatprep.subr.bf16.mxu0 %v224
  %313 = vmatpush1.bf16.msra.mxu0 %v223
  %314 = vmatprep.subr.bf16.mxu0 %v222
  %315 = vmatpush1.bf16.msra.mxu0 %v221
  %316 = vmatprep.subr.bf16.mxu0 %v252
  %317 = vmatpush2.bf16.msra.mxu0 %v251
  %318 = vmatprep.subr.bf16.mxu0 %v250
  %319 = vmatpush2.bf16.msra.mxu0 %v249
  %320 = vmatprep.subr.bf16.mxu0 %v248
  %321 = vmatpush2.bf16.msra.mxu0 %v247
  %322 = vmatprep.subr.bf16.mxu0 %v246
  %323 = vmatpush2.bf16.msra.mxu0 %v245
  %324 = vmatprep.subr.bf16.mxu0 %v244
  %325 = vmatpush2.bf16.msra.mxu0 %v243
  %326 = vmatprep.subr.bf16.mxu0 %v242
  %327 = vmatpush2.bf16.msra.mxu0 %v241
  %328 = vmatprep.subr.bf16.mxu0 %v240
  %329 = vmatpush2.bf16.msra.mxu0 %v239
  %330 = vmatprep.subr.bf16.mxu0 %v238
  %331 = vmatpush2.bf16.msra.mxu0 %v237
  %332 = vmatprep.mubr.bf16.mxu0 %v104
  %333 = vmatmul.mubr.bf16.gmra.mxu0 %v103
  %v334 = vpop.f32.mrf.mxu0
  %v335 = vadd.f32 %v66, %v334
  %v336 = vpop.f32.mrf.mxu0
  %v337 = vadd.f32 %v66, %v336
  %v338 = vpop.f32.mrf.mxu0
  %v339 = vadd.f32 %v71, %v338
  %v340 = vpop.f32.mrf.mxu0
  %v341 = vadd.f32 %v71, %v340
  %342 = vmatprep.mubr.bf16.mxu0 %v107
  %343 = vmatmul.mubr.bf16.gmra.mxu0 %v106
  %v344 = vpop.f32.mrf.mxu0
  %v345 = vadd.f32 %v76, %v344
  %v346 = vpop.f32.mrf.mxu0
  %v347 = vadd.f32 %v76, %v346
  %v348 = vpop.f32.mrf.mxu0
  %v349 = vadd.f32 %v81, %v348
  %v350 = vpop.f32.mrf.mxu0
  %v351 = vadd.f32 %v81, %v350
  %352 = vdwg.mxu0
  %353 = vmatprep.subr.bf16.mxu0 0
  %354 = vmatpush1.bf16.msra.mxu0 0
  %355 = vmatprep.subr.bf16.mxu0 0
  %356 = vmatpush1.bf16.msra.mxu0 0
  %357 = vmatprep.subr.bf16.mxu0 0
  %358 = vmatpush1.bf16.msra.mxu0 0
  %359 = vmatprep.subr.bf16.mxu0 0
  %360 = vmatpush1.bf16.msra.mxu0 0
  %361 = vmatprep.subr.bf16.mxu0 0
  %362 = vmatpush1.bf16.msra.mxu0 0
  %363 = vmatprep.subr.bf16.mxu0 0
  %364 = vmatpush1.bf16.msra.mxu0 0
  %365 = vmatprep.subr.bf16.mxu0 %v256
  %366 = vmatpush1.bf16.msra.mxu0 %v255
  %367 = vmatprep.subr.bf16.mxu0 %v254
  %368 = vmatpush1.bf16.msra.mxu0 %v253
  %369 = vmatprep.subr.bf16.mxu0 0
  %370 = vmatpush2.bf16.msra.mxu0 0
  %371 = vmatprep.subr.bf16.mxu0 0
  %372 = vmatpush2.bf16.msra.mxu0 0
  %373 = vmatprep.subr.bf16.mxu0 0
  %374 = vmatpush2.bf16.msra.mxu0 0
  %375 = vmatprep.subr.bf16.mxu0 0
  %376 = vmatpush2.bf16.msra.mxu0 0
  %377 = vmatprep.subr.bf16.mxu0 0
  %378 = vmatpush2.bf16.msra.mxu0 0
  %379 = vmatprep.subr.bf16.mxu0 0
  %380 = vmatpush2.bf16.msra.mxu0 0
  %381 = vmatprep.subr.bf16.mxu0 0
  %382 = vmatpush2.bf16.msra.mxu0 0
  %383 = vmatprep.subr.bf16.mxu0 0
  %384 = vmatpush2.bf16.msra.mxu0 0
  %385 = vmatprep.mubr.bf16.mxu0 0
  %386 = vmatmul.mubr.bf16.gmra.mxu0 %v295
  %v387 = vpop.f32.mrf.mxu0
  %v388 = vadd.f32 %v335, %v387
  %v389 = vpop.f32.mrf.mxu0
  %v390 = vadd.f32 %v337, %v389
  %v391 = vpop.f32.mrf.mxu0
  %v392 = vadd.f32 %v339, %v391
  %v393 = vpop.f32.mrf.mxu0
  %v394 = vadd.f32 %v341, %v393
  %395 = vmatprep.mubr.bf16.mxu0 0
  %396 = vmatmul.mubr.bf16.gmra.mxu0 %v298
  %v397 = vpop.f32.mrf.mxu0
  %v398 = vadd.f32 %v345, %v397
  %v399 = vpop.f32.mrf.mxu0
  %v400 = vadd.f32 %v347, %v399
  %v401 = vpop.f32.mrf.mxu0
  %v402 = vadd.f32 %v349, %v401
  %v403 = vpop.f32.mrf.mxu0
  %v404 = vadd.f32 %v351, %v403
  %405 = vdwg.mxu0
  %v406 = vmax.f32 %v388, 0.0
  %v407 = vmax.f32 %v390, 0.0
  %v408 = vmax.f32 %v392, 0.0
  %v409 = vmax.f32 %v394, 0.0
  %v410 = vmax.f32 %v398, 0.0
  %v411 = vmax.f32 %v400, 0.0
  %v412 = vmax.f32 %v402, 0.0
  %v413 = vmax.f32 %v404, 0.0
  %v414 = vpack.c.bf16 %v408, %v406
  %v415 = vpack.c.bf16 %v409, %v407
  %v416 = vpack.c.bf16 %v412, %v410
  %v417 = vpack.c.bf16 %v413, %v411
  %v422 = vunpack.c.l.b16 %v414
  %v423 = vunpack.c.l.b16 %v415
  %v424 = vunpack.c.h.b16 %v414
  %v425 = vunpack.c.h.b16 %v415
  %v426 = vunpack.c.l.b16 %v416
  %v427 = vunpack.c.l.b16 %v417
  %v428 = vunpack.c.h.b16 %v416
  %v429 = vunpack.c.h.b16 %v417
  %v430 = vpack.c.b16 %v423, %v422
  %v431 = vpack.c.b16 %v425, %v424
  %v432 = vpack.c.b16 %v427, %v426
  %v433 = vpack.c.b16 %v429, %v428
  %vm438 = vcmask 1043456
  %vm439 = vcmask 130052
  %vm440 = vmor %vm439, %vm438
  %441 = vst.msk [vmem:[%s3] sm:$0xff] %vm440, %v430
  %442 = vst.msk [vmem:[%s3 + $0x8] sm:$0xff] %vm440, %v431
  %443 = vst.msk [vmem:[%s3 + $0x10] sm:$0xff] %vm440, %v432
  %444 = vst.msk [vmem:[%s3 + $0x18] sm:$0xff] %vm440, %v433
  // Predicated region
  $region14: #{forward.8} parent=0 // pred_check
    _
  $region15: #{forward.8} parent=0 // pred_check_branch
    %446 = sbr.rel (0) target = $region17
  $region16: #{forward.8} parent=0 // pred_region
    _
  $region17: #{forward.8} parent=0 // pred_fallthru
    _
  // Predicated region
  $region18: #{forward.8} parent=0 // pred_check
    _
  $region19: #{forward.8} parent=0 // pred_check_branch
    %448 = sbr.rel (0) target = $region21
  $region20: #{forward.8} parent=0 // pred_region
    _
  $region21: #{forward.8} parent=0 // pred_fallthru
    _

// kernel: forward.9
$region0: #{forward.9}
  #allocation0 [shape = 'u32[]', space=smem, size = 0x4, offset = 0x4, fixed_abs, tag = 'smem constant byte address 0x4 - core index']
  #allocation1 [shape = 'u32[144,128]{1,0:T(1,128)}', space=vmem, size = 0x12000, scoped, tag = 'internal scratch']
  %s0 = inlined_call_operand.vmem [shape: bf16[4,1152], index: 0, kind: input, shape index: {}]
  %s1 = inlined_call_operand.vmem [shape: bf16[1152,288], index: 1, kind: input, shape index: {}]
  %s2 = inlined_call_operand.vmem [shape: f32[1,288], index: 2, kind: input, shape index: {}]
  %s3 = inlined_call_operand.vmem [shape: bf16[576,256], index: 3, kind: input, shape index: {}]
  %s4 = inlined_call_operand.vmem [shape: f32[1,256], index: 4, kind: input, shape index: {}]
  %s5 = inlined_call_operand.vmem [shape: bf16[256,128], index: 5, kind: input, shape index: {}]
  %s6 = inlined_call_operand.vmem [shape: f32[1,128], index: 6, kind: input, shape index: {}]
  %s7 = inlined_call_operand.hbm [shape: f32[2,128], index: 7, kind: output, shape index: {}]
  %s8 = sld [smem:[#allocation0]]
  $region38: #{forward.9} parent=0
    _
  %s10 = ssub.s32 1, %s8
  %s11 = scalar_select 0, %s10, %s8
  $region1: #{forward.9} parent=0
    #allocation2 [shape = 'u8[1024]{0}', space=vmem, size = 0x400, scoped, tag = 'output window, operand 0, single buffered']
    #allocation3 [shape = 's32[1]{0}', space=sflag, size = 0x4, scoped, tag = 'scoped memory for forward.9']
    %12 = vsyncpa [#allocation3], 0
    // Predicated region
    $region2: #{forward.9} parent=1 // pred_check
      _
    $region3: #{forward.9} parent=1 // pred_check_branch
      %14 = sbr.rel (0) target = $region5
    $region4: #{forward.9} parent=1 // pred_region
      _
    $region5: #{forward.9} parent=1 // pred_fallthru
      _
    // Predicated region
    $region6: #{forward.9} parent=1 // pred_check
      _
    $region7: #{forward.9} parent=1 // pred_check_branch
      %16 = sbr.rel (0) target = $region9
    $region8: #{forward.9} parent=1 // pred_region
      _
    $region9: #{forward.9} parent=1 // pred_fallthru
      _
    // Predicated region
    $region10: #{forward.9} parent=1 // pred_check
      _
    $region11: #{forward.9} parent=1 // pred_check_branch
      %18 = sbr.rel (0) target = $region13
    $region12: #{forward.9} parent=1 // pred_region
      _
    $region13: #{forward.9} parent=1 // pred_fallthru
      _
    // Predicated region
    $region14: #{forward.9} parent=1 // pred_check
      _
    $region15: #{forward.9} parent=1 // pred_check_branch
      %20 = sbr.rel (0) target = $region17
    $region16: #{forward.9} parent=1 // pred_region
      _
    $region17: #{forward.9} parent=1 // pred_fallthru
      _
    // Predicated region
    $region18: #{forward.9} parent=1 // pred_check
      _
    $region19: #{forward.9} parent=1 // pred_check_branch
      %22 = sbr.rel (0) target = $region21
    $region20: #{forward.9} parent=1 // pred_region
      _
    $region21: #{forward.9} parent=1 // pred_fallthru
      _
    // Predicated region
    $region22: #{forward.9} parent=1 // pred_check
      _
    $region23: #{forward.9} parent=1 // pred_check_branch
      %24 = sbr.rel (0) target = $region25
    $region24: #{forward.9} parent=1 // pred_region
      _
    $region25: #{forward.9} parent=1 // pred_fallthru
      _
    // Predicated region
    $region26: #{forward.9} parent=1 // pred_check
      _
    $region27: #{forward.9} parent=1 // pred_check_branch
      %26 = sbr.rel (0) target = $region29
    $region28: #{forward.9} parent=1 // pred_region
      _
    $region29: #{forward.9} parent=1 // pred_fallthru
      _
    %v28 = vld [vmem:[%s0] sm:$0xff]
    %v29 = vld [vmem:[%s0 + $0x8] sm:$0xff]
    %v30 = vld [vmem:[%s0 + $0x10] sm:$0x3]
    %v31 = vld [vmem:[%s1] sm:$0xff]
    %v32 = vld [vmem:[%s1 + $0x8] sm:$0xf]
    %v33 = vld [vmem:[%s1 + $0xc] sm:$0xff]
    %v34 = vld [vmem:[%s1 + $0x14] sm:$0xf]
    %v35 = vld [vmem:[%s1 + $0x18] sm:$0xff]
    %v36 = vld [vmem:[%s1 + $0x20] sm:$0xf]
    %v37 = vld [vmem:[%s1 + $0x24] sm:$0xff]
    %v38 = vld [vmem:[%s1 + $0x2c] sm:$0xf]
    %v39 = vld [vmem:[%s1 + $0x30] sm:$0xff]
    %v40 = vld [vmem:[%s1 + $0x38] sm:$0xf]
    %v41 = vld [vmem:[%s1 + $0x3c] sm:$0xff]
    %v42 = vld [vmem:[%s1 + $0x44] sm:$0xf]
    %v43 = vld [vmem:[%s1 + $0x48] sm:$0xff]
    %v44 = vld [vmem:[%s1 + $0x50] sm:$0xf]
    %v45 = vld [vmem:[%s1 + $0x54] sm:$0xff]
    %v46 = vld [vmem:[%s1 + $0x5c] sm:$0xf]
    %v47 = vld [vmem:[%s1 + $0x60] sm:$0xff]
    %v48 = vld [vmem:[%s1 + $0x68] sm:$0xf]
    %v49 = vld [vmem:[%s1 + $0x6c] sm:$0xff]
    %v50 = vld [vmem:[%s1 + $0x74] sm:$0xf]
    %v51 = vld [vmem:[%s1 + $0x78] sm:$0xff]
    %v52 = vld [vmem:[%s1 + $0x80] sm:$0xf]
    %v53 = vld [vmem:[%s1 + $0x84] sm:$0xff]
    %v54 = vld [vmem:[%s1 + $0x8c] sm:$0xf]
    %v55 = vld [vmem:[%s1 + $0x90] sm:$0xff]
    %v56 = vld [vmem:[%s1 + $0x98] sm:$0xf]
    %v57 = vld [vmem:[%s1 + $0x9c] sm:$0xff]
    %v58 = vld [vmem:[%s1 + $0xa4] sm:$0xf]
    %v59 = vld [vmem:[%s1 + $0xa8] sm:$0xff]
    %v60 = vld [vmem:[%s1 + $0xb0] sm:$0xf]
    %v61 = vld [vmem:[%s1 + $0xb4] sm:$0xff]
    %v62 = vld [vmem:[%s1 + $0xbc] sm:$0xf]
    %v63 = vld [vmem:[%s1 + $0xc0] sm:$0xff]
    %v64 = vld [vmem:[%s1 + $0xc8] sm:$0xf]
    %v65 = vld [vmem:[%s1 + $0xcc] sm:$0xff]
    %v66 = vld [vmem:[%s1 + $0xd4] sm:$0xf]
    %v67 = vld [vmem:[%s1 + $0xd8] sm:$0xff]
    %v68 = vld [vmem:[%s1 + $0xe0] sm:$0xf]
    %v69 = vld [vmem:[%s1 + $0xe4] sm:$0xff]
    %v70 = vld [vmem:[%s1 + $0xec] sm:$0xf]
    %v71 = vld [vmem:[%s1 + $0xf0] sm:$0xff]
    %v72 = vld [vmem:[%s1 + $0xf8] sm:$0xf]
    %v73 = vld [vmem:[%s1 + $0xfc] sm:$0xff]
    %v74 = vld [vmem:[%s1 + $0x104] sm:$0xf]
    %v75 = vld [vmem:[%s1 + $0x108] sm:$0xff]
    %v76 = vld [vmem:[%s1 + $0x110] sm:$0xf]
    %v77 = vld [vmem:[%s1 + $0x114] sm:$0xff]
    %v78 = vld [vmem:[%s1 + $0x11c] sm:$0xf]
    %v79 = vld [vmem:[%s1 + $0x120] sm:$0xff]
    %v80 = vld [vmem:[%s1 + $0x128] sm:$0xf]
    %v81 = vld [vmem:[%s1 + $0x12c] sm:$0xff]
    %v82 = vld [vmem:[%s1 + $0x134] sm:$0xf]
    %v83 = vld [vmem:[%s1 + $0x138] sm:$0xff]
    %v84 = vld [vmem:[%s1 + $0x140] sm:$0xf]
    %v85 = vld [vmem:[%s1 + $0x144] sm:$0xff]
    %v86 = vld [vmem:[%s1 + $0x14c] sm:$0xf]
    %v87 = vld [vmem:[%s1 + $0x150] sm:$0xff]
    %v88 = vld [vmem:[%s1 + $0x158] sm:$0xf]
    %v89 = vld [vmem:[%s1 + $0x15c] sm:$0xff]
    %v90 = vld [vmem:[%s1 + $0x164] sm:$0xf]
    %v91 = vld [vmem:[%s1 + $0x168] sm:$0xff]
    %v92 = vld [vmem:[%s1 + $0x170] sm:$0xf]
    %v93 = vld [vmem:[%s1 + $0x174] sm:$0xff]
    %v94 = vld [vmem:[%s1 + $0x17c] sm:$0xf]
    %v95 = vld [vmem:[%s1 + $0x180] sm:$0xff]
    %v96 = vld [vmem:[%s1 + $0x188] sm:$0xf]
    %v97 = vld [vmem:[%s1 + $0x18c] sm:$0xff]
    %v98 = vld [vmem:[%s1 + $0x194] sm:$0xf]
    %v99 = vld [vmem:[%s1 + $0x198] sm:$0xff]
    %v100 = vld [vmem:[%s1 + $0x1a0] sm:$0xf]
    %v101 = vld [vmem:[%s1 + $0x1a4] sm:$0xff]
    %v102 = vld [vmem:[%s1 + $0x1ac] sm:$0xf]
    %v103 = vld [vmem:[%s1 + $0x1b0] sm:$0xff]
    %v104 = vld [vmem:[%s1 + $0x1b8] sm:$0xf]
    %v105 = vld [vmem:[%s1 + $0x1bc] sm:$0xff]
    %v106 = vld [vmem:[%s1 + $0x1c4] sm:$0xf]
    %v107 = vld [vmem:[%s1 + $0x1c8] sm:$0xff]
    %v108 = vld [vmem:[%s1 + $0x1d0] sm:$0xf]
    %v109 = vld [vmem:[%s1 + $0x1d4] sm:$0xff]
    %v110 = vld [vmem:[%s1 + $0x1dc] sm:$0xf]
    %v111 = vld [vmem:[%s1 + $0x1e0] sm:$0xff]
    %v112 = vld [vmem:[%s1 + $0x1e8] sm:$0xf]
    %v113 = vld [vmem:[%s1 + $0x1ec] sm:$0xff]
    %v114 = vld [vmem:[%s1 + $0x1f4] sm:$0xf]
    %v115 = vld [vmem:[%s1 + $0x1f8] sm:$0xff]
    %v116 = vld [vmem:[%s1 + $0x200] sm:$0xf]
    %v117 = vld [vmem:[%s1 + $0x204] sm:$0xff]
    %v118 = vld [vmem:[%s1 + $0x20c] sm:$0xf]
    %v119 = vld [vmem:[%s1 + $0x210] sm:$0xff]
    %v120 = vld [vmem:[%s1 + $0x218] sm:$0xf]
    %v121 = vld [vmem:[%s1 + $0x21c] sm:$0xff]
    %v122 = vld [vmem:[%s1 + $0x224] sm:$0xf]
    %v123 = vld [vmem:[%s1 + $0x228] sm:$0xff]
    %v124 = vld [vmem:[%s1 + $0x230] sm:$0xf]
    %v125 = vld [vmem:[%s1 + $0x234] sm:$0xff]
    %v126 = vld [vmem:[%s1 + $0x23c] sm:$0xf]
    %v127 = vld [vmem:[%s1 + $0x240] sm:$0xff]
    %v128 = vld [vmem:[%s1 + $0x248] sm:$0xf]
    %v129 = vld [vmem:[%s1 + $0x24c] sm:$0xff]
    %v130 = vld [vmem:[%s1 + $0x254] sm:$0xf]
    %v131 = vld [vmem:[%s1 + $0x258] sm:$0xff]
    %v132 = vld [vmem:[%s1 + $0x260] sm:$0xf]
    %v133 = vld [vmem:[%s1 + $0x264] sm:$0xff]
    %v134 = vld [vmem:[%s1 + $0x26c] sm:$0xf]
    %v135 = vld [vmem:[%s1 + $0x270] sm:$0xff]
    %v136 = vld [vmem:[%s1 + $0x278] sm:$0xf]
    %v137 = vld [vmem:[%s1 + $0x27c] sm:$0xff]
    %v138 = vld [vmem:[%s1 + $0x284] sm:$0xf]
    %v139 = vld [vmem:[%s1 + $0x288] sm:$0xff]
    %v140 = vld [vmem:[%s1 + $0x290] sm:$0xf]
    %v141 = vld [vmem:[%s1 + $0x294] sm:$0xff]
    %v142 = vld [vmem:[%s1 + $0x29c] sm:$0xf]
    %v143 = vld [vmem:[%s1 + $0x2a0] sm:$0xff]
    %v144 = vld [vmem:[%s1 + $0x2a8] sm:$0xf]
    %v145 = vld [vmem:[%s1 + $0x2ac] sm:$0xff]
    %v146 = vld [vmem:[%s1 + $0x2b4] sm:$0xf]
    %v147 = vld [vmem:[%s1 + $0x2b8] sm:$0xff]
    %v148 = vld [vmem:[%s1 + $0x2c0] sm:$0xf]
    %v149 = vld [vmem:[%s1 + $0x2c4] sm:$0xff]
    %v150 = vld [vmem:[%s1 + $0x2cc] sm:$0xf]
    %v151 = vld [vmem:[%s1 + $0x2d0] sm:$0xff]
    %v152 = vld [vmem:[%s1 + $0x2d8] sm:$0xf]
    %v153 = vld [vmem:[%s1 + $0x2dc] sm:$0xff]
    %v154 = vld [vmem:[%s1 + $0x2e4] sm:$0xf]
    %v155 = vld [vmem:[%s1 + $0x2e8] sm:$0xff]
    %v156 = vld [vmem:[%s1 + $0x2f0] sm:$0xf]
    %v157 = vld [vmem:[%s1 + $0x2f4] sm:$0xff]
    %v158 = vld [vmem:[%s1 + $0x2fc] sm:$0xf]
    %v159 = vld [vmem:[%s1 + $0x300] sm:$0xff]
    %v160 = vld [vmem:[%s1 + $0x308] sm:$0xf]
    %v161 = vld [vmem:[%s1 + $0x30c] sm:$0xff]
    %v162 = vld [vmem:[%s1 + $0x314] sm:$0xf]
    %v163 = vld [vmem:[%s1 + $0x318] sm:$0xff]
    %v164 = vld [vmem:[%s1 + $0x320] sm:$0xf]
    %v165 = vld [vmem:[%s1 + $0x324] sm:$0xff]
    %v166 = vld [vmem:[%s1 + $0x32c] sm:$0xf]
    %v167 = vld [vmem:[%s1 + $0x330] sm:$0xff]
    %v168 = vld [vmem:[%s1 + $0x338] sm:$0xf]
    %v169 = vld [vmem:[%s1 + $0x33c] sm:$0xff]
    %v170 = vld [vmem:[%s1 + $0x344] sm:$0xf]
    %v171 = vld [vmem:[%s1 + $0x348] sm:$0xff]
    %v172 = vld [vmem:[%s1 + $0x350] sm:$0xf]
    %v173 = vld [vmem:[%s1 + $0x354] sm:$0xff]
    %v174 = vld [vmem:[%s1 + $0x35c] sm:$0xf]
    %v175 = vld [vmem:[%s1 + $0x360] sm:$0xff]
    %v176 = vld [vmem:[%s1 + $0x368] sm:$0xf]
    %v177 = vld [vmem:[%s1 + $0x36c] sm:$0xff]
    %v178 = vld [vmem:[%s1 + $0x374] sm:$0xf]
    %v179 = vld [vmem:[%s1 + $0x378] sm:$0xff]
    %v180 = vld [vmem:[%s1 + $0x380] sm:$0xf]
    %v181 = vld [vmem:[%s1 + $0x384] sm:$0xff]
    %v182 = vld [vmem:[%s1 + $0x38c] sm:$0xf]
    %v183 = vld [vmem:[%s1 + $0x390] sm:$0xff]
    %v184 = vld [vmem:[%s1 + $0x398] sm:$0xf]
    %v185 = vld [vmem:[%s1 + $0x39c] sm:$0xff]
    %v186 = vld [vmem:[%s1 + $0x3a4] sm:$0xf]
    %v187 = vld [vmem:[%s1 + $0x3a8] sm:$0xff]
    %v188 = vld [vmem:[%s1 + $0x3b0] sm:$0xf]
    %v189 = vld [vmem:[%s1 + $0x3b4] sm:$0xff]
    %v190 = vld [vmem:[%s1 + $0x3bc] sm:$0xf]
    %v191 = vld [vmem:[%s1 + $0x3c0] sm:$0xff]
    %v192 = vld [vmem:[%s1 + $0x3c8] sm:$0xf]
    %v193 = vld [vmem:[%s1 + $0x3cc] sm:$0xff]
    %v194 = vld [vmem:[%s1 + $0x3d4] sm:$0xf]
    %v195 = vld [vmem:[%s1 + $0x3d8] sm:$0xff]
    %v196 = vld [vmem:[%s1 + $0x3e0] sm:$0xf]
    %v197 = vld [vmem:[%s1 + $0x3e4] sm:$0xff]
    %v198 = vld [vmem:[%s1 + $0x3ec] sm:$0xf]
    %v199 = vld [vmem:[%s1 + $0x3f0] sm:$0xff]
    %v200 = vld [vmem:[%s1 + $0x3f8] sm:$0xf]
    %v201 = vld [vmem:[%s1 + $0x3fc] sm:$0xff]
    %v202 = vld [vmem:[%s1 + $0x404] sm:$0xf]
    %v203 = vld [vmem:[%s1 + $0x408] sm:$0xff]
    %v204 = vld [vmem:[%s1 + $0x410] sm:$0xf]
    %v205 = vld [vmem:[%s1 + $0x414] sm:$0xff]
    %v206 = vld [vmem:[%s1 + $0x41c] sm:$0xf]
    %v207 = vld [vmem:[%s1 + $0x420] sm:$0xff]
    %v208 = vld [vmem:[%s1 + $0x428] sm:$0xf]
    %v209 = vld [vmem:[%s1 + $0x42c] sm:$0xff]
    %v210 = vld [vmem:[%s1 + $0x434] sm:$0xf]
    %v211 = vld [vmem:[%s1 + $0x438] sm:$0xff]
    %v212 = vld [vmem:[%s1 + $0x440] sm:$0xf]
    %v213 = vld [vmem:[%s1 + $0x444] sm:$0xff]
    %v214 = vld [vmem:[%s1 + $0x44c] sm:$0xf]
    %v215 = vld [vmem:[%s1 + $0x450] sm:$0xff]
    %v216 = vld [vmem:[%s1 + $0x458] sm:$0xf]
    %v217 = vld [vmem:[%s1 + $0x45c] sm:$0xff]
    %v218 = vld [vmem:[%s1 + $0x464] sm:$0xf]
    %v219 = vld [vmem:[%s1 + $0x468] sm:$0xff]
    %v220 = vld [vmem:[%s1 + $0x470] sm:$0xf]
    %v221 = vld [vmem:[%s1 + $0x474] sm:$0xff]
    %v222 = vld [vmem:[%s1 + $0x47c] sm:$0xf]
    %v223 = vld [vmem:[%s1 + $0x480] sm:$0xff]
    %v224 = vld [vmem:[%s1 + $0x488] sm:$0xf]
    %v225 = vld [vmem:[%s1 + $0x48c] sm:$0xff]
    %v226 = vld [vmem:[%s1 + $0x494] sm:$0xf]
    %v227 = vld [vmem:[%s1 + $0x498] sm:$0xff]
    %v228 = vld [vmem:[%s1 + $0x4a0] sm:$0xf]
    %v229 = vld [vmem:[%s1 + $0x4a4] sm:$0xff]
    %v230 = vld [vmem:[%s1 + $0x4ac] sm:$0xf]
    %v231 = vld [vmem:[%s1 + $0x4b0] sm:$0xff]
    %v232 = vld [vmem:[%s1 + $0x4b8] sm:$0xf]
    %v233 = vld [vmem:[%s1 + $0x4bc] sm:$0xff]
    %v234 = vld [vmem:[%s1 + $0x4c4] sm:$0xf]
    %v235 = vld [vmem:[%s1 + $0x4c8] sm:$0xff]
    %v236 = vld [vmem:[%s1 + $0x4d0] sm:$0xf]
    %v237 = vld [vmem:[%s1 + $0x4d4] sm:$0xff]
    %v238 = vld [vmem:[%s1 + $0x4dc] sm:$0xf]
    %v239 = vld [vmem:[%s1 + $0x4e0] sm:$0xff]
    %v240 = vld [vmem:[%s1 + $0x4e8] sm:$0xf]
    %v241 = vld [vmem:[%s1 + $0x4ec] sm:$0xff]
    %v242 = vld [vmem:[%s1 + $0x4f4] sm:$0xf]
    %v243 = vld [vmem:[%s1 + $0x4f8] sm:$0xff]
    %v244 = vld [vmem:[%s1 + $0x500] sm:$0xf]
    %v245 = vld [vmem:[%s1 + $0x504] sm:$0xff]
    %v246 = vld [vmem:[%s1 + $0x50c] sm:$0xf]
    %v247 = vld [vmem:[%s1 + $0x510] sm:$0xff]
    %v248 = vld [vmem:[%s1 + $0x518] sm:$0xf]
    %v249 = vld [vmem:[%s1 + $0x51c] sm:$0xff]
    %v250 = vld [vmem:[%s1 + $0x524] sm:$0xf]
    %v251 = vld [vmem:[%s1 + $0x528] sm:$0xff]
    %v252 = vld [vmem:[%s1 + $0x530] sm:$0xf]
    %v253 = vld [vmem:[%s1 + $0x534] sm:$0xff]
    %v254 = vld [vmem:[%s1 + $0x53c] sm:$0xf]
    %v255 = vld [vmem:[%s1 + $0x540] sm:$0xff]
    %v256 = vld [vmem:[%s1 + $0x548] sm:$0xf]
    %v257 = vld [vmem:[%s1 + $0x54c] sm:$0xff]
    %v258 = vld [vmem:[%s1 + $0x554] sm:$0xf]
    %v259 = vld [vmem:[%s1 + $0x558] sm:$0xff]
    %v260 = vld [vmem:[%s1 + $0x560] sm:$0xf]
    %v261 = vld [vmem:[%s1 + $0x564] sm:$0xff]
    %v262 = vld [vmem:[%s1 + $0x56c] sm:$0xf]
    %v263 = vld [vmem:[%s1 + $0x570] sm:$0xff]
    %v264 = vld [vmem:[%s1 + $0x578] sm:$0xf]
    %v265 = vld [vmem:[%s1 + $0x57c] sm:$0xff]
    %v266 = vld [vmem:[%s1 + $0x584] sm:$0xf]
    %v267 = vld [vmem:[%s1 + $0x588] sm:$0xff]
    %v268 = vld [vmem:[%s1 + $0x590] sm:$0xf]
    %v269 = vld [vmem:[%s1 + $0x594] sm:$0xff]
    %v270 = vld [vmem:[%s1 + $0x59c] sm:$0xf]
    %v271 = vld [vmem:[%s1 + $0x5a0] sm:$0xff]
    %v272 = vld [vmem:[%s1 + $0x5a8] sm:$0xf]
    %v273 = vld [vmem:[%s1 + $0x5ac] sm:$0xff]
    %v274 = vld [vmem:[%s1 + $0x5b4] sm:$0xf]
    %v275 = vld [vmem:[%s1 + $0x5b8] sm:$0xff]
    %v276 = vld [vmem:[%s1 + $0x5c0] sm:$0xf]
    %v277 = vld [vmem:[%s1 + $0x5c4] sm:$0xff]
    %v278 = vld [vmem:[%s1 + $0x5cc] sm:$0xf]
    %v279 = vld [vmem:[%s1 + $0x5d0] sm:$0xff]
    %v280 = vld [vmem:[%s1 + $0x5d8] sm:$0xf]
    %v281 = vld [vmem:[%s1 + $0x5dc] sm:$0xff]
    %v282 = vld [vmem:[%s1 + $0x5e4] sm:$0xf]
    %v283 = vld [vmem:[%s1 + $0x5e8] sm:$0xff]
    %v284 = vld [vmem:[%s1 + $0x5f0] sm:$0xf]
    %v285 = vld [vmem:[%s1 + $0x5f4] sm:$0xff]
    %v286 = vld [vmem:[%s1 + $0x5fc] sm:$0xf]
    %v287 = vld [vmem:[%s1 + $0x600] sm:$0xff]
    %v288 = vld [vmem:[%s1 + $0x608] sm:$0xf]
    %v289 = vld [vmem:[%s1 + $0x60c] sm:$0xff]
    %v290 = vld [vmem:[%s1 + $0x614] sm:$0xf]
    %v291 = vld [vmem:[%s1 + $0x618] sm:$0xff]
    %v292 = vld [vmem:[%s1 + $0x620] sm:$0xf]
    %v293 = vld [vmem:[%s1 + $0x624] sm:$0xff]
    %v294 = vld [vmem:[%s1 + $0x62c] sm:$0xf]
    %v295 = vld [vmem:[%s1 + $0x630] sm:$0xff]
    %v296 = vld [vmem:[%s1 + $0x638] sm:$0xf]
    %v297 = vld [vmem:[%s1 + $0x63c] sm:$0xff]
    %v298 = vld [vmem:[%s1 + $0x644] sm:$0xf]
    %v299 = vld [vmem:[%s1 + $0x648] sm:$0xff]
    %v300 = vld [vmem:[%s1 + $0x650] sm:$0xf]
    %v301 = vld [vmem:[%s1 + $0x654] sm:$0xff]
    %v302 = vld [vmem:[%s1 + $0x65c] sm:$0xf]
    %v303 = vld [vmem:[%s1 + $0x660] sm:$0xff]
    %v304 = vld [vmem:[%s1 + $0x668] sm:$0xf]
    %v305 = vld [vmem:[%s1 + $0x66c] sm:$0xff]
    %v306 = vld [vmem:[%s1 + $0x674] sm:$0xf]
    %v307 = vld [vmem:[%s1 + $0x678] sm:$0xff]
    %v308 = vld [vmem:[%s1 + $0x680] sm:$0xf]
    %v309 = vld [vmem:[%s1 + $0x684] sm:$0xff]
    %v310 = vld [vmem:[%s1 + $0x68c] sm:$0xf]
    %v311 = vld [vmem:[%s1 + $0x690] sm:$0xff]
    %v312 = vld [vmem:[%s1 + $0x698] sm:$0xf]
    %v313 = vld [vmem:[%s1 + $0x69c] sm:$0xff]
    %v314 = vld [vmem:[%s1 + $0x6a4] sm:$0xf]
    %v315 = vld [vmem:[%s1 + $0x6a8] sm:$0xff]
    %v316 = vld [vmem:[%s1 + $0x6b0] sm:$0xf]
    %v317 = vld [vmem:[%s1 + $0x6b4] sm:$0xff]
    %v318 = vld [vmem:[%s1 + $0x6bc] sm:$0xf]
    %v319 = vld [vmem:[%s2] sm:$0x7]
    %v321 = vlaneseq
    %v322 = vshrl.u32 %v321, 7
    %v323 = vsub.s32 0, %v322
    %v324 = vrot.slane %v319, %v323
    %v325 = vlaneseq
    %v326 = vshrl.u32 %v325, 7
    %v327 = vsub.s32 1, %v326
    %v328 = vrot.slane %v319, %v327
    %v329 = vlaneseq
    %v330 = vshrl.u32 %v329, 7
    %v331 = vsub.s32 2, %v330
    %v332 = vrot.slane %v319, %v331
    %v339 = vcombine.high %v28, %v28
    %v341 = vunpack.c.l.s4 1983009808
    %v342 = vunpack.c.0.s8 %v341
    %v343 = vlaneseq
    %v344 = vshrl.u32 %v343, 7
    %v345 = vsub.s32 %v342, %v344
    %v346 = vrot.slane %v28, %v345
    %v348 = vunpack.c.l.s4 1983009808
    %v349 = vunpack.c.0.s8 %v348
    %v350 = vlaneseq
    %v351 = vshrl.u32 %v350, 7
    %v352 = vsub.s32 %v349, %v351
    %v353 = vrot.slane %v339, %v352
    %v354 = vcombine.high %v346, %v346
    %v355 = vcombine.high %v353, %v353
    %v356 = vcombine.high %v29, %v29
    %v358 = vunpack.c.l.s4 1983009808
    %v359 = vunpack.c.0.s8 %v358
    %v360 = vlaneseq
    %v361 = vshrl.u32 %v360, 7
    %v362 = vsub.s32 %v359, %v361
    %v363 = vrot.slane %v29, %v362
    %v365 = vunpack.c.l.s4 1983009808
    %v366 = vunpack.c.0.s8 %v365
    %v367 = vlaneseq
    %v368 = vshrl.u32 %v367, 7
    %v369 = vsub.s32 %v366, %v368
    %v370 = vrot.slane %v356, %v369
    %v371 = vcombine.high %v363, %v363
    %v372 = vcombine.high %v370, %v370
    %v374 = vunpack.c.l.s4 1983009808
    %v375 = vunpack.c.0.s8 %v374
    %v376 = vlaneseq
    %v377 = vshrl.u32 %v376, 7
    %v378 = vsub.s32 %v375, %v377
    %v379 = vrot.slane %v30, %v378
    %v677 = vunpack.c.l.b16 %v31
    %v678 = vunpack.c.h.b16 %v31
    %v679 = vunpack.c.l.b16 %v32
    %v680 = vunpack.c.l.b16 %v33
    %v681 = vunpack.c.h.b16 %v33
    %v682 = vunpack.c.l.b16 %v34
    %v683 = vunpack.c.l.b16 %v35
    %v684 = vunpack.c.h.b16 %v35
    %v685 = vunpack.c.l.b16 %v36
    %v686 = vunpack.c.l.b16 %v37
    %v687 = vunpack.c.h.b16 %v37
    %v688 = vunpack.c.l.b16 %v38
    %v689 = vunpack.c.l.b16 %v39
    %v690 = vunpack.c.h.b16 %v39
    %v691 = vunpack.c.l.b16 %v40
    %v692 = vunpack.c.l.b16 %v41
    %v693 = vunpack.c.h.b16 %v41
    %v694 = vunpack.c.l.b16 %v42
    %v695 = vunpack.c.l.b16 %v43
    %v696 = vunpack.c.h.b16 %v43
    %v697 = vunpack.c.l.b16 %v44
    %v698 = vunpack.c.l.b16 %v45
    %v699 = vunpack.c.h.b16 %v45
    %v700 = vunpack.c.l.b16 %v46
    %v701 = vunpack.c.l.b16 %v47
    %v702 = vunpack.c.h.b16 %v47
    %v703 = vunpack.c.l.b16 %v48
    %v704 = vunpack.c.l.b16 %v49
    %v705 = vunpack.c.h.b16 %v49
    %v706 = vunpack.c.l.b16 %v50
    %v707 = vunpack.c.l.b16 %v51
    %v708 = vunpack.c.h.b16 %v51
    %v709 = vunpack.c.l.b16 %v52
    %v710 = vunpack.c.l.b16 %v53
    %v711 = vunpack.c.h.b16 %v53
    %v712 = vunpack.c.l.b16 %v54
    %v713 = vunpack.c.l.b16 %v55
    %v714 = vunpack.c.h.b16 %v55
    %v715 = vunpack.c.l.b16 %v56
    %v716 = vunpack.c.l.b16 %v57
    %v717 = vunpack.c.h.b16 %v57
    %v718 = vunpack.c.l.b16 %v58
    %v719 = vunpack.c.l.b16 %v59
    %v720 = vunpack.c.h.b16 %v59
    %v721 = vunpack.c.l.b16 %v60
    %v722 = vunpack.c.l.b16 %v61
    %v723 = vunpack.c.h.b16 %v61
    %v724 = vunpack.c.l.b16 %v62
    %v725 = vunpack.c.l.b16 %v63
    %v726 = vunpack.c.h.b16 %v63
    %v727 = vunpack.c.l.b16 %v64
    %v728 = vunpack.c.l.b16 %v65
    %v729 = vunpack.c.h.b16 %v65
    %v730 = vunpack.c.l.b16 %v66
    %v731 = vunpack.c.l.b16 %v67
    %v732 = vunpack.c.h.b16 %v67
    %v733 = vunpack.c.l.b16 %v68
    %v734 = vunpack.c.l.b16 %v69
    %v735 = vunpack.c.h.b16 %v69
    %v736 = vunpack.c.l.b16 %v70
    %v737 = vunpack.c.l.b16 %v71
    %v738 = vunpack.c.h.b16 %v71
    %v739 = vunpack.c.l.b16 %v72
    %v740 = vunpack.c.l.b16 %v73
    %v741 = vunpack.c.h.b16 %v73
    %v742 = vunpack.c.l.b16 %v74
    %v743 = vunpack.c.l.b16 %v75
    %v744 = vunpack.c.h.b16 %v75
    %v745 = vunpack.c.l.b16 %v76
    %v746 = vunpack.c.l.b16 %v77
    %v747 = vunpack.c.h.b16 %v77
    %v748 = vunpack.c.l.b16 %v78
    %v749 = vunpack.c.l.b16 %v79
    %v750 = vunpack.c.h.b16 %v79
    %v751 = vunpack.c.l.b16 %v80
    %v752 = vunpack.c.l.b16 %v81
    %v753 = vunpack.c.h.b16 %v81
    %v754 = vunpack.c.l.b16 %v82
    %v755 = vunpack.c.l.b16 %v83
    %v756 = vunpack.c.h.b16 %v83
    %v757 = vunpack.c.l.b16 %v84
    %v758 = vunpack.c.l.b16 %v85
    %v759 = vunpack.c.h.b16 %v85
    %v760 = vunpack.c.l.b16 %v86
    %v761 = vunpack.c.l.b16 %v87
    %v762 = vunpack.c.h.b16 %v87
    %v763 = vunpack.c.l.b16 %v88
    %v764 = vunpack.c.l.b16 %v89
    %v765 = vunpack.c.h.b16 %v89
    %v766 = vunpack.c.l.b16 %v90
    %v767 = vunpack.c.l.b16 %v91
    %v768 = vunpack.c.h.b16 %v91
    %v769 = vunpack.c.l.b16 %v92
    %v770 = vunpack.c.l.b16 %v93
    %v771 = vunpack.c.h.b16 %v93
    %v772 = vunpack.c.l.b16 %v94
    %v773 = vunpack.c.l.b16 %v95
    %v774 = vunpack.c.h.b16 %v95
    %v775 = vunpack.c.l.b16 %v96
    %v776 = vunpack.c.l.b16 %v97
    %v777 = vunpack.c.h.b16 %v97
    %v778 = vunpack.c.l.b16 %v98
    %v779 = vunpack.c.l.b16 %v99
    %v780 = vunpack.c.h.b16 %v99
    %v781 = vunpack.c.l.b16 %v100
    %v782 = vunpack.c.l.b16 %v101
    %v783 = vunpack.c.h.b16 %v101
    %v784 = vunpack.c.l.b16 %v102
    %v785 = vunpack.c.l.b16 %v103
    %v786 = vunpack.c.h.b16 %v103
    %v787 = vunpack.c.l.b16 %v104
    %v788 = vunpack.c.l.b16 %v105
    %v789 = vunpack.c.h.b16 %v105
    %v790 = vunpack.c.l.b16 %v106
    %v791 = vunpack.c.l.b16 %v107
    %v792 = vunpack.c.h.b16 %v107
    %v793 = vunpack.c.l.b16 %v108
    %v794 = vunpack.c.l.b16 %v109
    %v795 = vunpack.c.h.b16 %v109
    %v796 = vunpack.c.l.b16 %v110
    %v797 = vunpack.c.l.b16 %v111
    %v798 = vunpack.c.h.b16 %v111
    %v799 = vunpack.c.l.b16 %v112
    %v800 = vunpack.c.l.b16 %v113
    %v801 = vunpack.c.h.b16 %v113
    %v802 = vunpack.c.l.b16 %v114
    %v803 = vunpack.c.l.b16 %v115
    %v804 = vunpack.c.h.b16 %v115
    %v805 = vunpack.c.l.b16 %v116
    %v806 = vunpack.c.l.b16 %v117
    %v807 = vunpack.c.h.b16 %v117
    %v808 = vunpack.c.l.b16 %v118
    %v809 = vunpack.c.l.b16 %v119
    %v810 = vunpack.c.h.b16 %v119
    %v811 = vunpack.c.l.b16 %v120
    %v812 = vunpack.c.l.b16 %v121
    %v813 = vunpack.c.h.b16 %v121
    %v814 = vunpack.c.l.b16 %v122
    %v815 = vunpack.c.l.b16 %v123
    %v816 = vunpack.c.h.b16 %v123
    %v817 = vunpack.c.l.b16 %v124
    %v818 = vunpack.c.l.b16 %v125
    %v819 = vunpack.c.h.b16 %v125
    %v820 = vunpack.c.l.b16 %v126
    %v821 = vunpack.c.l.b16 %v127
    %v822 = vunpack.c.h.b16 %v127
    %v823 = vunpack.c.l.b16 %v128
    %v824 = vunpack.c.l.b16 %v129
    %v825 = vunpack.c.h.b16 %v129
    %v826 = vunpack.c.l.b16 %v130
    %v827 = vunpack.c.l.b16 %v131
    %v828 = vunpack.c.h.b16 %v131
    %v829 = vunpack.c.l.b16 %v132
    %v830 = vunpack.c.l.b16 %v133
    %v831 = vunpack.c.h.b16 %v133
    %v832 = vunpack.c.l.b16 %v134
    %v833 = vunpack.c.l.b16 %v135
    %v834 = vunpack.c.h.b16 %v135
    %v835 = vunpack.c.l.b16 %v136
    %v836 = vunpack.c.l.b16 %v137
    %v837 = vunpack.c.h.b16 %v137
    %v838 = vunpack.c.l.b16 %v138
    %v839 = vunpack.c.l.b16 %v139
    %v840 = vunpack.c.h.b16 %v139
    %v841 = vunpack.c.l.b16 %v140
    %v842 = vunpack.c.l.b16 %v141
    %v843 = vunpack.c.h.b16 %v141
    %v844 = vunpack.c.l.b16 %v142
    %v845 = vunpack.c.l.b16 %v143
    %v846 = vunpack.c.h.b16 %v143
    %v847 = vunpack.c.l.b16 %v144
    %v848 = vunpack.c.l.b16 %v145
    %v849 = vunpack.c.h.b16 %v145
    %v850 = vunpack.c.l.b16 %v146
    %v851 = vunpack.c.l.b16 %v147
    %v852 = vunpack.c.h.b16 %v147
    %v853 = vunpack.c.l.b16 %v148
    %v854 = vunpack.c.l.b16 %v149
    %v855 = vunpack.c.h.b16 %v149
    %v856 = vunpack.c.l.b16 %v150
    %v857 = vunpack.c.l.b16 %v151
    %v858 = vunpack.c.h.b16 %v151
    %v859 = vunpack.c.l.b16 %v152
    %v860 = vunpack.c.l.b16 %v153
    %v861 = vunpack.c.h.b16 %v153
    %v862 = vunpack.c.l.b16 %v154
    %v863 = vunpack.c.l.b16 %v155
    %v864 = vunpack.c.h.b16 %v155
    %v865 = vunpack.c.l.b16 %v156
    %v866 = vunpack.c.l.b16 %v157
    %v867 = vunpack.c.h.b16 %v157
    %v868 = vunpack.c.l.b16 %v158
    %v869 = vunpack.c.l.b16 %v159
    %v870 = vunpack.c.h.b16 %v159
    %v871 = vunpack.c.l.b16 %v160
    %v872 = vunpack.c.l.b16 %v161
    %v873 = vunpack.c.h.b16 %v161
    %v874 = vunpack.c.l.b16 %v162
    %v875 = vunpack.c.l.b16 %v163
    %v876 = vunpack.c.h.b16 %v163
    %v877 = vunpack.c.l.b16 %v164
    %v878 = vunpack.c.l.b16 %v165
    %v879 = vunpack.c.h.b16 %v165
    %v880 = vunpack.c.l.b16 %v166
    %v881 = vunpack.c.l.b16 %v167
    %v882 = vunpack.c.h.b16 %v167
    %v883 = vunpack.c.l.b16 %v168
    %v884 = vunpack.c.l.b16 %v169
    %v885 = vunpack.c.h.b16 %v169
    %v886 = vunpack.c.l.b16 %v170
    %v887 = vunpack.c.l.b16 %v171
    %v888 = vunpack.c.h.b16 %v171
    %v889 = vunpack.c.l.b16 %v172
    %v890 = vunpack.c.l.b16 %v173
    %v891 = vunpack.c.h.b16 %v173
    %v892 = vunpack.c.l.b16 %v174
    %v893 = vunpack.c.l.b16 %v175
    %v894 = vunpack.c.h.b16 %v175
    %v895 = vunpack.c.l.b16 %v176
    %v896 = vunpack.c.l.b16 %v177
    %v897 = vunpack.c.h.b16 %v177
    %v898 = vunpack.c.l.b16 %v178
    %v899 = vunpack.c.l.b16 %v179
    %v900 = vunpack.c.h.b16 %v179
    %v901 = vunpack.c.l.b16 %v180
    %v902 = vunpack.c.l.b16 %v181
    %v903 = vunpack.c.h.b16 %v181
    %v904 = vunpack.c.l.b16 %v182
    %v905 = vunpack.c.l.b16 %v183
    %v906 = vunpack.c.h.b16 %v183
    %v907 = vunpack.c.l.b16 %v184
    %v908 = vunpack.c.l.b16 %v185
    %v909 = vunpack.c.h.b16 %v185
    %v910 = vunpack.c.l.b16 %v186
    %v911 = vunpack.c.l.b16 %v187
    %v912 = vunpack.c.h.b16 %v187
    %v913 = vunpack.c.l.b16 %v188
    %v914 = vunpack.c.l.b16 %v189
    %v915 = vunpack.c.h.b16 %v189
    %v916 = vunpack.c.l.b16 %v190
    %v917 = vunpack.c.l.b16 %v191
    %v918 = vunpack.c.h.b16 %v191
    %v919 = vunpack.c.l.b16 %v192
    %v920 = vunpack.c.l.b16 %v193
    %v921 = vunpack.c.h.b16 %v193
    %v922 = vunpack.c.l.b16 %v194
    %v923 = vunpack.c.l.b16 %v195
    %v924 = vunpack.c.h.b16 %v195
    %v925 = vunpack.c.l.b16 %v196
    %v926 = vunpack.c.l.b16 %v197
    %v927 = vunpack.c.h.b16 %v197
    %v928 = vunpack.c.l.b16 %v198
    %v929 = vunpack.c.l.b16 %v199
    %v930 = vunpack.c.h.b16 %v199
    %v931 = vunpack.c.l.b16 %v200
    %v932 = vunpack.c.l.b16 %v201
    %v933 = vunpack.c.h.b16 %v201
    %v934 = vunpack.c.l.b16 %v202
    %v935 = vunpack.c.l.b16 %v203
    %v936 = vunpack.c.h.b16 %v203
    %v937 = vunpack.c.l.b16 %v204
    %v938 = vunpack.c.l.b16 %v205
    %v939 = vunpack.c.h.b16 %v205
    %v940 = vunpack.c.l.b16 %v206
    %v941 = vunpack.c.l.b16 %v207
    %v942 = vunpack.c.h.b16 %v207
    %v943 = vunpack.c.l.b16 %v208
    %v944 = vunpack.c.l.b16 %v209
    %v945 = vunpack.c.h.b16 %v209
    %v946 = vunpack.c.l.b16 %v210
    %v947 = vunpack.c.l.b16 %v211
    %v948 = vunpack.c.h.b16 %v211
    %v949 = vunpack.c.l.b16 %v212
    %v950 = vunpack.c.l.b16 %v213
    %v951 = vunpack.c.h.b16 %v213
    %v952 = vunpack.c.l.b16 %v214
    %v953 = vunpack.c.l.b16 %v215
    %v954 = vunpack.c.h.b16 %v215
    %v955 = vunpack.c.l.b16 %v216
    %v956 = vunpack.c.l.b16 %v217
    %v957 = vunpack.c.h.b16 %v217
    %v958 = vunpack.c.l.b16 %v218
    %v959 = vunpack.c.l.b16 %v219
    %v960 = vunpack.c.h.b16 %v219
    %v961 = vunpack.c.l.b16 %v220
    %v962 = vunpack.c.l.b16 %v221
    %v963 = vunpack.c.h.b16 %v221
    %v964 = vunpack.c.l.b16 %v222
    %v965 = vunpack.c.l.b16 %v223
    %v966 = vunpack.c.h.b16 %v223
    %v967 = vunpack.c.l.b16 %v224
    %v968 = vunpack.c.l.b16 %v225
    %v969 = vunpack.c.h.b16 %v225
    %v970 = vunpack.c.l.b16 %v226
    %v971 = vunpack.c.l.b16 %v227
    %v972 = vunpack.c.h.b16 %v227
    %v973 = vunpack.c.l.b16 %v228
    %v974 = vunpack.c.l.b16 %v229
    %v975 = vunpack.c.h.b16 %v229
    %v976 = vunpack.c.l.b16 %v230
    %v977 = vunpack.c.l.b16 %v231
    %v978 = vunpack.c.h.b16 %v231
    %v979 = vunpack.c.l.b16 %v232
    %v980 = vunpack.c.l.b16 %v233
    %v981 = vunpack.c.h.b16 %v233
    %v982 = vunpack.c.l.b16 %v234
    %v983 = vunpack.c.l.b16 %v235
    %v984 = vunpack.c.h.b16 %v235
    %v985 = vunpack.c.l.b16 %v236
    %v986 = vunpack.c.l.b16 %v237
    %v987 = vunpack.c.h.b16 %v237
    %v988 = vunpack.c.l.b16 %v238
    %v989 = vunpack.c.l.b16 %v239
    %v990 = vunpack.c.h.b16 %v239
    %v991 = vunpack.c.l.b16 %v240
    %v992 = vunpack.c.l.b16 %v241
    %v993 = vunpack.c.h.b16 %v241
    %v994 = vunpack.c.l.b16 %v242
    %v995 = vunpack.c.l.b16 %v243
    %v996 = vunpack.c.h.b16 %v243
    %v997 = vunpack.c.l.b16 %v244
    %v998 = vunpack.c.l.b16 %v245
    %v999 = vunpack.c.h.b16 %v245
    %v1000 = vunpack.c.l.b16 %v246
    %v1001 = vunpack.c.l.b16 %v247
    %v1002 = vunpack.c.h.b16 %v247
    %v1003 = vunpack.c.l.b16 %v248
    %v1004 = vunpack.c.l.b16 %v249
    %v1005 = vunpack.c.h.b16 %v249
    %v1006 = vunpack.c.l.b16 %v250
    %v1007 = vunpack.c.l.b16 %v251
    %v1008 = vunpack.c.h.b16 %v251
    %v1009 = vunpack.c.l.b16 %v252
    %v1010 = vunpack.c.l.b16 %v253
    %v1011 = vunpack.c.h.b16 %v253
    %v1012 = vunpack.c.l.b16 %v254
    %v1013 = vunpack.c.l.b16 %v255
    %v1014 = vunpack.c.h.b16 %v255
    %v1015 = vunpack.c.l.b16 %v256
    %v1016 = vunpack.c.l.b16 %v257
    %v1017 = vunpack.c.h.b16 %v257
    %v1018 = vunpack.c.l.b16 %v258
    %v1019 = vunpack.c.l.b16 %v259
    %v1020 = vunpack.c.h.b16 %v259
    %v1021 = vunpack.c.l.b16 %v260
    %v1022 = vunpack.c.l.b16 %v261
    %v1023 = vunpack.c.h.b16 %v261
    %v1024 = vunpack.c.l.b16 %v262
    %v1025 = vunpack.c.l.b16 %v263
    %v1026 = vunpack.c.h.b16 %v263
    %v1027 = vunpack.c.l.b16 %v264
    %v1028 = vunpack.c.l.b16 %v265
    %v1029 = vunpack.c.h.b16 %v265
    %v1030 = vunpack.c.l.b16 %v266
    %v1031 = vunpack.c.l.b16 %v267
    %v1032 = vunpack.c.h.b16 %v267
    %v1033 = vunpack.c.l.b16 %v268
    %v1034 = vunpack.c.l.b16 %v269
    %v1035 = vunpack.c.h.b16 %v269
    %v1036 = vunpack.c.l.b16 %v270
    %v1037 = vunpack.c.l.b16 %v271
    %v1038 = vunpack.c.h.b16 %v271
    %v1039 = vunpack.c.l.b16 %v272
    %v1040 = vunpack.c.l.b16 %v273
    %v1041 = vunpack.c.h.b16 %v273
    %v1042 = vunpack.c.l.b16 %v274
    %v1043 = vunpack.c.l.b16 %v275
    %v1044 = vunpack.c.h.b16 %v275
    %v1045 = vunpack.c.l.b16 %v276
    %v1046 = vunpack.c.l.b16 %v277
    %v1047 = vunpack.c.h.b16 %v277
    %v1048 = vunpack.c.l.b16 %v278
    %v1049 = vunpack.c.l.b16 %v279
    %v1050 = vunpack.c.h.b16 %v279
    %v1051 = vunpack.c.l.b16 %v280
    %v1052 = vunpack.c.l.b16 %v281
    %v1053 = vunpack.c.h.b16 %v281
    %v1054 = vunpack.c.l.b16 %v282
    %v1055 = vunpack.c.l.b16 %v283
    %v1056 = vunpack.c.h.b16 %v283
    %v1057 = vunpack.c.l.b16 %v284
    %v1058 = vunpack.c.l.b16 %v285
    %v1059 = vunpack.c.h.b16 %v285
    %v1060 = vunpack.c.l.b16 %v286
    %v1061 = vunpack.c.l.b16 %v287
    %v1062 = vunpack.c.h.b16 %v287
    %v1063 = vunpack.c.l.b16 %v288
    %v1064 = vunpack.c.l.b16 %v289
    %v1065 = vunpack.c.h.b16 %v289
    %v1066 = vunpack.c.l.b16 %v290
    %v1067 = vunpack.c.l.b16 %v291
    %v1068 = vunpack.c.h.b16 %v291
    %v1069 = vunpack.c.l.b16 %v292
    %v1070 = vunpack.c.l.b16 %v293
    %v1071 = vunpack.c.h.b16 %v293
    %v1072 = vunpack.c.l.b16 %v294
    %v1073 = vunpack.c.l.b16 %v295
    %v1074 = vunpack.c.h.b16 %v295
    %v1075 = vunpack.c.l.b16 %v296
    %v1076 = vunpack.c.l.b16 %v297
    %v1077 = vunpack.c.h.b16 %v297
    %v1078 = vunpack.c.l.b16 %v298
    %v1079 = vunpack.c.l.b16 %v299
    %v1080 = vunpack.c.h.b16 %v299
    %v1081 = vunpack.c.l.b16 %v300
    %v1082 = vunpack.c.l.b16 %v301
    %v1083 = vunpack.c.h.b16 %v301
    %v1084 = vunpack.c.l.b16 %v302
    %v1085 = vunpack.c.l.b16 %v303
    %v1086 = vunpack.c.h.b16 %v303
    %v1087 = vunpack.c.l.b16 %v304
    %v1088 = vunpack.c.l.b16 %v305
    %v1089 = vunpack.c.h.b16 %v305
    %v1090 = vunpack.c.l.b16 %v306
    %v1091 = vunpack.c.l.b16 %v307
    %v1092 = vunpack.c.h.b16 %v307
    %v1093 = vunpack.c.l.b16 %v308
    %v1094 = vunpack.c.l.b16 %v309
    %v1095 = vunpack.c.h.b16 %v309
    %v1096 = vunpack.c.l.b16 %v310
    %v1097 = vunpack.c.l.b16 %v311
    %v1098 = vunpack.c.h.b16 %v311
    %v1099 = vunpack.c.l.b16 %v312
    %v1100 = vunpack.c.l.b16 %v313
    %v1101 = vunpack.c.h.b16 %v313
    %v1102 = vunpack.c.l.b16 %v314
    %v1103 = vunpack.c.l.b16 %v315
    %v1104 = vunpack.c.h.b16 %v315
    %v1105 = vunpack.c.l.b16 %v316
    %v1106 = vunpack.c.l.b16 %v317
    %v1107 = vunpack.c.h.b16 %v317
    %v1108 = vunpack.c.l.b16 %v318
    %v1109 = vpack.c.b16 %v680, %v677
    %v1110 = vpack.c.b16 %v681, %v678
    %v1111 = vpack.c.b16 %v682, %v679
    %v1112 = vpack.c.b16 %v686, %v683
    %v1113 = vpack.c.b16 %v687, %v684
    %v1114 = vpack.c.b16 %v688, %v685
    %v1115 = vpack.c.b16 %v692, %v689
    %v1116 = vpack.c.b16 %v693, %v690
    %v1117 = vpack.c.b16 %v694, %v691
    %v1118 = vpack.c.b16 %v698, %v695
    %v1119 = vpack.c.b16 %v699, %v696
    %v1120 = vpack.c.b16 %v700, %v697
    %v1121 = vpack.c.b16 %v704, %v701
    %v1122 = vpack.c.b16 %v705, %v702
    %v1123 = vpack.c.b16 %v706, %v703
    %v1124 = vpack.c.b16 %v710, %v707
    %v1125 = vpack.c.b16 %v711, %v708
    %v1126 = vpack.c.b16 %v712, %v709
    %v1127 = vpack.c.b16 %v716, %v713
    %v1128 = vpack.c.b16 %v717, %v714
    %v1129 = vpack.c.b16 %v718, %v715
    %v1130 = vpack.c.b16 %v722, %v719
    %v1131 = vpack.c.b16 %v723, %v720
    %v1132 = vpack.c.b16 %v724, %v721
    %v1133 = vpack.c.b16 %v728, %v725
    %v1134 = vpack.c.b16 %v729, %v726
    %v1135 = vpack.c.b16 %v730, %v727
    %v1136 = vpack.c.b16 %v734, %v731
    %v1137 = vpack.c.b16 %v735, %v732
    %v1138 = vpack.c.b16 %v736, %v733
    %v1139 = vpack.c.b16 %v740, %v737
    %v1140 = vpack.c.b16 %v741, %v738
    %v1141 = vpack.c.b16 %v742, %v739
    %v1142 = vpack.c.b16 %v746, %v743
    %v1143 = vpack.c.b16 %v747, %v744
    %v1144 = vpack.c.b16 %v748, %v745
    %v1145 = vpack.c.b16 %v752, %v749
    %v1146 = vpack.c.b16 %v753, %v750
    %v1147 = vpack.c.b16 %v754, %v751
    %v1148 = vpack.c.b16 %v758, %v755
    %v1149 = vpack.c.b16 %v759, %v756
    %v1150 = vpack.c.b16 %v760, %v757
    %v1151 = vpack.c.b16 %v764, %v761
    %v1152 = vpack.c.b16 %v765, %v762
    %v1153 = vpack.c.b16 %v766, %v763
    %v1154 = vpack.c.b16 %v770, %v767
    %v1155 = vpack.c.b16 %v771, %v768
    %v1156 = vpack.c.b16 %v772, %v769
    %v1157 = vpack.c.b16 %v776, %v773
    %v1158 = vpack.c.b16 %v777, %v774
    %v1159 = vpack.c.b16 %v778, %v775
    %v1160 = vpack.c.b16 %v782, %v779
    %v1161 = vpack.c.b16 %v783, %v780
    %v1162 = vpack.c.b16 %v784, %v781
    %v1163 = vpack.c.b16 %v788, %v785
    %v1164 = vpack.c.b16 %v789, %v786
    %v1165 = vpack.c.b16 %v790, %v787
    %v1166 = vpack.c.b16 %v794, %v791
    %v1167 = vpack.c.b16 %v795, %v792
    %v1168 = vpack.c.b16 %v796, %v793
    %v1169 = vpack.c.b16 %v800, %v797
    %v1170 = vpack.c.b16 %v801, %v798
    %v1171 = vpack.c.b16 %v802, %v799
    %v1172 = vpack.c.b16 %v806, %v803
    %v1173 = vpack.c.b16 %v807, %v804
    %v1174 = vpack.c.b16 %v808, %v805
    %v1175 = vpack.c.b16 %v812, %v809
    %v1176 = vpack.c.b16 %v813, %v810
    %v1177 = vpack.c.b16 %v814, %v811
    %v1178 = vpack.c.b16 %v818, %v815
    %v1179 = vpack.c.b16 %v819, %v816
    %v1180 = vpack.c.b16 %v820, %v817
    %v1181 = vpack.c.b16 %v824, %v821
    %v1182 = vpack.c.b16 %v825, %v822
    %v1183 = vpack.c.b16 %v826, %v823
    %v1184 = vpack.c.b16 %v830, %v827
    %v1185 = vpack.c.b16 %v831, %v828
    %v1186 = vpack.c.b16 %v832, %v829
    %v1187 = vpack.c.b16 %v836, %v833
    %v1188 = vpack.c.b16 %v837, %v834
    %v1189 = vpack.c.b16 %v838, %v835
    %v1190 = vpack.c.b16 %v842, %v839
    %v1191 = vpack.c.b16 %v843, %v840
    %v1192 = vpack.c.b16 %v844, %v841
    %v1193 = vpack.c.b16 %v848, %v845
    %v1194 = vpack.c.b16 %v849, %v846
    %v1195 = vpack.c.b16 %v850, %v847
    %v1196 = vpack.c.b16 %v854, %v851
    %v1197 = vpack.c.b16 %v855, %v852
    %v1198 = vpack.c.b16 %v856, %v853
    %v1199 = vpack.c.b16 %v860, %v857
    %v1200 = vpack.c.b16 %v861, %v858
    %v1201 = vpack.c.b16 %v862, %v859
    %v1202 = vpack.c.b16 %v866, %v863
    %v1203 = vpack.c.b16 %v867, %v864
    %v1204 = vpack.c.b16 %v868, %v865
    %v1205 = vpack.c.b16 %v872, %v869
    %v1206 = vpack.c.b16 %v873, %v870
    %v1207 = vpack.c.b16 %v874, %v871
    %v1208 = vpack.c.b16 %v878, %v875
    %v1209 = vpack.c.b16 %v879, %v876
    %v1210 = vpack.c.b16 %v880, %v877
    %v1211 = vpack.c.b16 %v884, %v881
    %v1212 = vpack.c.b16 %v885, %v882
    %v1213 = vpack.c.b16 %v886, %v883
    %v1214 = vpack.c.b16 %v890, %v887
    %v1215 = vpack.c.b16 %v891, %v888
    %v1216 = vpack.c.b16 %v892, %v889
    %v1217 = vpack.c.b16 %v896, %v893
    %v1218 = vpack.c.b16 %v897, %v894
    %v1219 = vpack.c.b16 %v898, %v895
    %v1220 = vpack.c.b16 %v902, %v899
    %v1221 = vpack.c.b16 %v903, %v900
    %v1222 = vpack.c.b16 %v904, %v901
    %v1223 = vpack.c.b16 %v908, %v905
    %v1224 = vpack.c.b16 %v909, %v906
    %v1225 = vpack.c.b16 %v910, %v907
    %v1226 = vpack.c.b16 %v914, %v911
    %v1227 = vpack.c.b16 %v915, %v912
    %v1228 = vpack.c.b16 %v916, %v913
    %v1229 = vpack.c.b16 %v920, %v917
    %v1230 = vpack.c.b16 %v921, %v918
    %v1231 = vpack.c.b16 %v922, %v919
    %v1232 = vpack.c.b16 %v926, %v923
    %v1233 = vpack.c.b16 %v927, %v924
    %v1234 = vpack.c.b16 %v928, %v925
    %v1235 = vpack.c.b16 %v932, %v929
    %v1236 = vpack.c.b16 %v933, %v930
    %v1237 = vpack.c.b16 %v934, %v931
    %v1238 = vpack.c.b16 %v938, %v935
    %v1239 = vpack.c.b16 %v939, %v936
    %v1240 = vpack.c.b16 %v940, %v937
    %v1241 = vpack.c.b16 %v944, %v941
    %v1242 = vpack.c.b16 %v945, %v942
    %v1243 = vpack.c.b16 %v946, %v943
    %v1244 = vpack.c.b16 %v950, %v947
    %v1245 = vpack.c.b16 %v951, %v948
    %v1246 = vpack.c.b16 %v952, %v949
    %v1247 = vpack.c.b16 %v956, %v953
    %v1248 = vpack.c.b16 %v957, %v954
    %v1249 = vpack.c.b16 %v958, %v955
    %v1250 = vpack.c.b16 %v962, %v959
    %v1251 = vpack.c.b16 %v963, %v960
    %v1252 = vpack.c.b16 %v964, %v961
    %v1253 = vpack.c.b16 %v968, %v965
    %v1254 = vpack.c.b16 %v969, %v966
    %v1255 = vpack.c.b16 %v970, %v967
    %v1256 = vpack.c.b16 %v974, %v971
    %v1257 = vpack.c.b16 %v975, %v972
    %v1258 = vpack.c.b16 %v976, %v973
    %v1259 = vpack.c.b16 %v980, %v977
    %v1260 = vpack.c.b16 %v981, %v978
    %v1261 = vpack.c.b16 %v982, %v979
    %v1262 = vpack.c.b16 %v986, %v983
    %v1263 = vpack.c.b16 %v987, %v984
    %v1264 = vpack.c.b16 %v988, %v985
    %v1265 = vpack.c.b16 %v992, %v989
    %v1266 = vpack.c.b16 %v993, %v990
    %v1267 = vpack.c.b16 %v994, %v991
    %v1268 = vpack.c.b16 %v998, %v995
    %v1269 = vpack.c.b16 %v999, %v996
    %v1270 = vpack.c.b16 %v1000, %v997
    %v1271 = vpack.c.b16 %v1004, %v1001
    %v1272 = vpack.c.b16 %v1005, %v1002
    %v1273 = vpack.c.b16 %v1006, %v1003
    %v1274 = vpack.c.b16 %v1010, %v1007
    %v1275 = vpack.c.b16 %v1011, %v1008
    %v1276 = vpack.c.b16 %v1012, %v1009
    %v1277 = vpack.c.b16 %v1016, %v1013
    %v1278 = vpack.c.b16 %v1017, %v1014
    %v1279 = vpack.c.b16 %v1018, %v1015
    %v1280 = vpack.c.b16 %v1022, %v1019
    %v1281 = vpack.c.b16 %v1023, %v1020
    %v1282 = vpack.c.b16 %v1024, %v1021
    %v1283 = vpack.c.b16 %v1028, %v1025
    %v1284 = vpack.c.b16 %v1029, %v1026
    %v1285 = vpack.c.b16 %v1030, %v1027
    %v1286 = vpack.c.b16 %v1034, %v1031
    %v1287 = vpack.c.b16 %v1035, %v1032
    %v1288 = vpack.c.b16 %v1036, %v1033
    %v1289 = vpack.c.b16 %v1040, %v1037
    %v1290 = vpack.c.b16 %v1041, %v1038
    %v1291 = vpack.c.b16 %v1042, %v1039
    %v1292 = vpack.c.b16 %v1046, %v1043
    %v1293 = vpack.c.b16 %v1047, %v1044
    %v1294 = vpack.c.b16 %v1048, %v1045
    %v1295 = vpack.c.b16 %v1052, %v1049
    %v1296 = vpack.c.b16 %v1053, %v1050
    %v1297 = vpack.c.b16 %v1054, %v1051
    %v1298 = vpack.c.b16 %v1058, %v1055
    %v1299 = vpack.c.b16 %v1059, %v1056
    %v1300 = vpack.c.b16 %v1060, %v1057
    %v1301 = vpack.c.b16 %v1064, %v1061
    %v1302 = vpack.c.b16 %v1065, %v1062
    %v1303 = vpack.c.b16 %v1066, %v1063
    %v1304 = vpack.c.b16 %v1070, %v1067
    %v1305 = vpack.c.b16 %v1071, %v1068
    %v1306 = vpack.c.b16 %v1072, %v1069
    %v1307 = vpack.c.b16 %v1076, %v1073
    %v1308 = vpack.c.b16 %v1077, %v1074
    %v1309 = vpack.c.b16 %v1078, %v1075
    %v1310 = vpack.c.b16 %v1082, %v1079
    %v1311 = vpack.c.b16 %v1083, %v1080
    %v1312 = vpack.c.b16 %v1084, %v1081
    %v1313 = vpack.c.b16 %v1088, %v1085
    %v1314 = vpack.c.b16 %v1089, %v1086
    %v1315 = vpack.c.b16 %v1090, %v1087
    %v1316 = vpack.c.b16 %v1094, %v1091
    %v1317 = vpack.c.b16 %v1095, %v1092
    %v1318 = vpack.c.b16 %v1096, %v1093
    %v1319 = vpack.c.b16 %v1100, %v1097
    %v1320 = vpack.c.b16 %v1101, %v1098
    %v1321 = vpack.c.b16 %v1102, %v1099
    %v1322 = vpack.c.b16 %v1106, %v1103
    %v1323 = vpack.c.b16 %v1107, %v1104
    %v1324 = vpack.c.b16 %v1108, %v1105
    %1541 = vmatprep.subr.bf16.mxu0 %v1131
    %1542 = vmatpush1.bf16.msra.mxu0 %v1130
    %1543 = vmatprep.subr.bf16.mxu0 %v1128
    %1544 = vmatpush1.bf16.msra.mxu0 %v1127
    %1545 = vmatprep.subr.bf16.mxu0 %v1125
    %1546 = vmatpush1.bf16.msra.mxu0 %v1124
    %1547 = vmatprep.subr.bf16.mxu0 %v1122
    %1548 = vmatpush1.bf16.msra.mxu0 %v1121
    %1549 = vmatprep.subr.bf16.mxu0 %v1119
    %1550 = vmatpush1.bf16.msra.mxu0 %v1118
    %1551 = vmatprep.subr.bf16.mxu0 %v1116
    %1552 = vmatpush1.bf16.msra.mxu0 %v1115
    %1553 = vmatprep.subr.bf16.mxu0 %v1113
    %1554 = vmatpush1.bf16.msra.mxu0 %v1112
    %1555 = vmatprep.subr.bf16.mxu0 %v1110
    %1556 = vmatpush1.bf16.msra.mxu0 %v1109
    %1557 = vmatprep.subr.bf16.mxu0 %v1155
    %1558 = vmatpush2.bf16.msra.mxu0 %v1154
    %1559 = vmatprep.subr.bf16.mxu0 %v1152
    %1560 = vmatpush2.bf16.msra.mxu0 %v1151
    %1561 = vmatprep.subr.bf16.mxu0 %v1149
    %1562 = vmatpush2.bf16.msra.mxu0 %v1148
    %1563 = vmatprep.subr.bf16.mxu0 %v1146
    %1564 = vmatpush2.bf16.msra.mxu0 %v1145
    %1565 = vmatprep.subr.bf16.mxu0 %v1143
    %1566 = vmatpush2.bf16.msra.mxu0 %v1142
    %1567 = vmatprep.subr.bf16.mxu0 %v1140
    %1568 = vmatpush2.bf16.msra.mxu0 %v1139
    %1569 = vmatprep.subr.bf16.mxu0 %v1137
    %1570 = vmatpush2.bf16.msra.mxu0 %v1136
    %1571 = vmatprep.subr.bf16.mxu0 %v1134
    %1572 = vmatpush2.bf16.msra.mxu0 %v1133
    %1573 = vmatprep.mubr.bf16.mxu0 %v354
    %1574 = vmatmul.mubr.bf16.gmra.mxu0 %v346
    %v1575 = vpop.f32.mrf.mxu0
    %v1576 = vadd.f32 %v324, %v1575
    %v1577 = vpop.f32.mrf.mxu0
    %v1578 = vadd.f32 %v328, %v1577
    %v1579 = vpop.f32.mrf.mxu0
    %v1580 = vpop.f32.mrf.mxu0
    %1581 = vdwg.mxu0
    %1582 = vmatprep.subr.bf16.mxu0 %v1179
    %1583 = vmatpush1.bf16.msra.mxu0 %v1178
    %1584 = vmatprep.subr.bf16.mxu0 %v1176
    %1585 = vmatpush1.bf16.msra.mxu0 %v1175
    %1586 = vmatprep.subr.bf16.mxu0 %v1173
    %1587 = vmatpush1.bf16.msra.mxu0 %v1172
    %1588 = vmatprep.subr.bf16.mxu0 %v1170
    %1589 = vmatpush1.bf16.msra.mxu0 %v1169
    %1590 = vmatprep.subr.bf16.mxu0 %v1167
    %1591 = vmatpush1.bf16.msra.mxu0 %v1166
    %1592 = vmatprep.subr.bf16.mxu0 %v1164
    %1593 = vmatpush1.bf16.msra.mxu0 %v1163
    %1594 = vmatprep.subr.bf16.mxu0 %v1161
    %1595 = vmatpush1.bf16.msra.mxu0 %v1160
    %1596 = vmatprep.subr.bf16.mxu0 %v1158
    %1597 = vmatpush1.bf16.msra.mxu0 %v1157
    %1598 = vmatprep.subr.bf16.mxu0 %v1203
    %1599 = vmatpush2.bf16.msra.mxu0 %v1202
    %1600 = vmatprep.subr.bf16.mxu0 %v1200
    %1601 = vmatpush2.bf16.msra.mxu0 %v1199
    %1602 = vmatprep.subr.bf16.mxu0 %v1197
    %1603 = vmatpush2.bf16.msra.mxu0 %v1196
    %1604 = vmatprep.subr.bf16.mxu0 %v1194
    %1605 = vmatpush2.bf16.msra.mxu0 %v1193
    %1606 = vmatprep.subr.bf16.mxu0 %v1191
    %1607 = vmatpush2.bf16.msra.mxu0 %v1190
    %1608 = vmatprep.subr.bf16.mxu0 %v1188
    %1609 = vmatpush2.bf16.msra.mxu0 %v1187
    %1610 = vmatprep.subr.bf16.mxu0 %v1185
    %1611 = vmatpush2.bf16.msra.mxu0 %v1184
    %1612 = vmatprep.subr.bf16.mxu0 %v1182
    %1613 = vmatpush2.bf16.msra.mxu0 %v1181
    %1614 = vmatprep.mubr.bf16.mxu0 %v355
    %1615 = vmatmul.mubr.bf16.gmra.mxu0 %v353
    %v1616 = vpop.f32.mrf.mxu0
    %v1617 = vadd.f32 %v1576, %v1616
    %v1618 = vpop.f32.mrf.mxu0
    %v1619 = vadd.f32 %v1578, %v1618
    %v1620 = vpop.f32.mrf.mxu0
    %v1621 = vpop.f32.mrf.mxu0
    %1622 = vdwg.mxu0
    %1623 = vmatprep.subr.bf16.mxu0 %v1227
    %1624 = vmatpush1.bf16.msra.mxu0 %v1226
    %1625 = vmatprep.subr.bf16.mxu0 %v1224
    %1626 = vmatpush1.bf16.msra.mxu0 %v1223
    %1627 = vmatprep.subr.bf16.mxu0 %v1221
    %1628 = vmatpush1.bf16.msra.mxu0 %v1220
    %1629 = vmatprep.subr.bf16.mxu0 %v1218
    %1630 = vmatpush1.bf16.msra.mxu0 %v1217
    %1631 = vmatprep.subr.bf16.mxu0 %v1215
    %1632 = vmatpush1.bf16.msra.mxu0 %v1214
    %1633 = vmatprep.subr.bf16.mxu0 %v1212
    %1634 = vmatpush1.bf16.msra.mxu0 %v1211
    %1635 = vmatprep.subr.bf16.mxu0 %v1209
    %1636 = vmatpush1.bf16.msra.mxu0 %v1208
    %1637 = vmatprep.subr.bf16.mxu0 %v1206
    %1638 = vmatpush1.bf16.msra.mxu0 %v1205
    %1639 = vmatprep.subr.bf16.mxu0 %v1251
    %1640 = vmatpush2.bf16.msra.mxu0 %v1250
    %1641 = vmatprep.subr.bf16.mxu0 %v1248
    %1642 = vmatpush2.bf16.msra.mxu0 %v1247
    %1643 = vmatprep.subr.bf16.mxu0 %v1245
    %1644 = vmatpush2.bf16.msra.mxu0 %v1244
    %1645 = vmatprep.subr.bf16.mxu0 %v1242
    %1646 = vmatpush2.bf16.msra.mxu0 %v1241
    %1647 = vmatprep.subr.bf16.mxu0 %v1239
    %1648 = vmatpush2.bf16.msra.mxu0 %v1238
    %1649 = vmatprep.subr.bf16.mxu0 %v1236
    %1650 = vmatpush2.bf16.msra.mxu0 %v1235
    %1651 = vmatprep.subr.bf16.mxu0 %v1233
    %1652 = vmatpush2.bf16.msra.mxu0 %v1232
    %1653 = vmatprep.subr.bf16.mxu0 %v1230
    %1654 = vmatpush2.bf16.msra.mxu0 %v1229
    %1655 = vmatprep.mubr.bf16.mxu0 %v371
    %1656 = vmatmul.mubr.bf16.gmra.mxu0 %v363
    %v1657 = vpop.f32.mrf.mxu0
    %v1658 = vadd.f32 %v1617, %v1657
    %v1659 = vpop.f32.mrf.mxu0
    %v1660 = vadd.f32 %v1619, %v1659
    %v1661 = vpop.f32.mrf.mxu0
    %v1662 = vpop.f32.mrf.mxu0
    %1663 = vdwg.mxu0
    %1664 = vmatprep.subr.bf16.mxu0 %v1275
    %1665 = vmatpush1.bf16.msra.mxu0 %v1274
    %1666 = vmatprep.subr.bf16.mxu0 %v1272
    %1667 = vmatpush1.bf16.msra.mxu0 %v1271
    %1668 = vmatprep.subr.bf16.mxu0 %v1269
    %1669 = vmatpush1.bf16.msra.mxu0 %v1268
    %1670 = vmatprep.subr.bf16.mxu0 %v1266
    %1671 = vmatpush1.bf16.msra.mxu0 %v1265
    %1672 = vmatprep.subr.bf16.mxu0 %v1263
    %1673 = vmatpush1.bf16.msra.mxu0 %v1262
    %1674 = vmatprep.subr.bf16.mxu0 %v1260
    %1675 = vmatpush1.bf16.msra.mxu0 %v1259
    %1676 = vmatprep.subr.bf16.mxu0 %v1257
    %1677 = vmatpush1.bf16.msra.mxu0 %v1256
    %1678 = vmatprep.subr.bf16.mxu0 %v1254
    %1679 = vmatpush1.bf16.msra.mxu0 %v1253
    %1680 = vmatprep.subr.bf16.mxu0 %v1299
    %1681 = vmatpush2.bf16.msra.mxu0 %v1298
    %1682 = vmatprep.subr.bf16.mxu0 %v1296
    %1683 = vmatpush2.bf16.msra.mxu0 %v1295
    %1684 = vmatprep.subr.bf16.mxu0 %v1293
    %1685 = vmatpush2.bf16.msra.mxu0 %v1292
    %1686 = vmatprep.subr.bf16.mxu0 %v1290
    %1687 = vmatpush2.bf16.msra.mxu0 %v1289
    %1688 = vmatprep.subr.bf16.mxu0 %v1287
    %1689 = vmatpush2.bf16.msra.mxu0 %v1286
    %1690 = vmatprep.subr.bf16.mxu0 %v1284
    %1691 = vmatpush2.bf16.msra.mxu0 %v1283
    %1692 = vmatprep.subr.bf16.mxu0 %v1281
    %1693 = vmatpush2.bf16.msra.mxu0 %v1280
    %1694 = vmatprep.subr.bf16.mxu0 %v1278
    %1695 = vmatpush2.bf16.msra.mxu0 %v1277
    %1696 = vmatprep.mubr.bf16.mxu0 %v372
    %1697 = vmatmul.mubr.bf16.gmra.mxu0 %v370
    %v1698 = vpop.f32.mrf.mxu0
    %v1699 = vadd.f32 %v1658, %v1698
    %v1700 = vpop.f32.mrf.mxu0
    %v1701 = vadd.f32 %v1660, %v1700
    %v1702 = vpop.f32.mrf.mxu0
    %v1703 = vpop.f32.mrf.mxu0
    %1704 = vdwg.mxu0
    %1705 = vmatprep.subr.bf16.mxu0 %v1323
    %1706 = vmatpush1.bf16.msra.mxu0 %v1322
    %1707 = vmatprep.subr.bf16.mxu0 %v1320
    %1708 = vmatpush1.bf16.msra.mxu0 %v1319
    %1709 = vmatprep.subr.bf16.mxu0 %v1317
    %1710 = vmatpush1.bf16.msra.mxu0 %v1316
    %1711 = vmatprep.subr.bf16.mxu0 %v1314
    %1712 = vmatpush1.bf16.msra.mxu0 %v1313
    %1713 = vmatprep.subr.bf16.mxu0 %v1311
    %1714 = vmatpush1.bf16.msra.mxu0 %v1310
    %1715 = vmatprep.subr.bf16.mxu0 %v1308
    %1716 = vmatpush1.bf16.msra.mxu0 %v1307
    %1717 = vmatprep.subr.bf16.mxu0 %v1305
    %1718 = vmatpush1.bf16.msra.mxu0 %v1304
    %1719 = vmatprep.subr.bf16.mxu0 %v1302
    %1720 = vmatpush1.bf16.msra.mxu0 %v1301
    %1721 = vmatprep.subr.bf16.mxu0 0
    %1722 = vmatpush2.bf16.msra.mxu0 0
    %1723 = vmatprep.subr.bf16.mxu0 0
    %1724 = vmatpush2.bf16.msra.mxu0 0
    %1725 = vmatprep.subr.bf16.mxu0 0
    %1726 = vmatpush2.bf16.msra.mxu0 0
    %1727 = vmatprep.subr.bf16.mxu0 0
    %1728 = vmatpush2.bf16.msra.mxu0 0
    %1729 = vmatprep.subr.bf16.mxu0 0
    %1730 = vmatpush2.bf16.msra.mxu0 0
    %1731 = vmatprep.subr.bf16.mxu0 0
    %1732 = vmatpush2.bf16.msra.mxu0 0
    %1733 = vmatprep.subr.bf16.mxu0 0
    %1734 = vmatpush2.bf16.msra.mxu0 0
    %1735 = vmatprep.subr.bf16.mxu0 0
    %1736 = vmatpush2.bf16.msra.mxu0 0
    %1737 = vmatprep.mubr.bf16.mxu0 0
    %1738 = vmatmul.mubr.bf16.gmra.mxu0 %v379
    %v1739 = vpop.f32.mrf.mxu0
    %v1740 = vadd.f32 %v1699, %v1739
    %v1741 = vpop.f32.mrf.mxu0
    %v1742 = vadd.f32 %v1701, %v1741
    %v1743 = vpop.f32.mrf.mxu0
    %v1744 = vpop.f32.mrf.mxu0
    %1745 = vdwg.mxu0
    %1746 = vmatprep.subr.bf16.mxu0 0
    %1747 = vmatpush1.bf16.msra.mxu0 %v1132
    %1748 = vmatprep.subr.bf16.mxu0 0
    %1749 = vmatpush1.bf16.msra.mxu0 %v1129
    %1750 = vmatprep.subr.bf16.mxu0 0
    %1751 = vmatpush1.bf16.msra.mxu0 %v1126
    %1752 = vmatprep.subr.bf16.mxu0 0
    %1753 = vmatpush1.bf16.msra.mxu0 %v1123
    %1754 = vmatprep.subr.bf16.mxu0 0
    %1755 = vmatpush1.bf16.msra.mxu0 %v1120
    %1756 = vmatprep.subr.bf16.mxu0 0
    %1757 = vmatpush1.bf16.msra.mxu0 %v1117
    %1758 = vmatprep.subr.bf16.mxu0 0
    %1759 = vmatpush1.bf16.msra.mxu0 %v1114
    %1760 = vmatprep.subr.bf16.mxu0 0
    %1761 = vmatpush1.bf16.msra.mxu0 %v1111
    %1762 = vmatprep.subr.bf16.mxu0 0
    %1763 = vmatpush2.bf16.msra.mxu0 %v1156
    %1764 = vmatprep.subr.bf16.mxu0 0
    %1765 = vmatpush2.bf16.msra.mxu0 %v1153
    %1766 = vmatprep.subr.bf16.mxu0 0
    %1767 = vmatpush2.bf16.msra.mxu0 %v1150
    %1768 = vmatprep.subr.bf16.mxu0 0
    %1769 = vmatpush2.bf16.msra.mxu0 %v1147
    %1770 = vmatprep.subr.bf16.mxu0 0
    %1771 = vmatpush2.bf16.msra.mxu0 %v1144
    %1772 = vmatprep.subr.bf16.mxu0 0
    %1773 = vmatpush2.bf16.msra.mxu0 %v1141
    %1774 = vmatprep.subr.bf16.mxu0 0
    %1775 = vmatpush2.bf16.msra.mxu0 %v1138
    %1776 = vmatprep.subr.bf16.mxu0 0
    %1777 = vmatpush2.bf16.msra.mxu0 %v1135
    %1778 = vmatprep.mubr.bf16.mxu0 %v354
    %1779 = vmatmul.mubr.bf16.gmra.mxu0 %v346
    %v1780 = vpop.f32.mrf.mxu0
    %v1781 = vadd.f32 %v332, %v1780
    %v1782 = vpop.f32.mrf.mxu0
    %v1783 = vpop.f32.mrf.mxu0
    %v1784 = vpop.f32.mrf.mxu0
    %1785 = vdwg.mxu0
    %1786 = vmatprep.subr.bf16.mxu0 0
    %1787 = vmatpush1.bf16.msra.mxu0 %v1180
    %1788 = vmatprep.subr.bf16.mxu0 0
    %1789 = vmatpush1.bf16.msra.mxu0 %v1177
    %1790 = vmatprep.subr.bf16.mxu0 0
    %1791 = vmatpush1.bf16.msra.mxu0 %v1174
    %1792 = vmatprep.subr.bf16.mxu0 0
    %1793 = vmatpush1.bf16.msra.mxu0 %v1171
    %1794 = vmatprep.subr.bf16.mxu0 0
    %1795 = vmatpush1.bf16.msra.mxu0 %v1168
    %1796 = vmatprep.subr.bf16.mxu0 0
    %1797 = vmatpush1.bf16.msra.mxu0 %v1165
    %1798 = vmatprep.subr.bf16.mxu0 0
    %1799 = vmatpush1.bf16.msra.mxu0 %v1162
    %1800 = vmatprep.subr.bf16.mxu0 0
    %1801 = vmatpush1.bf16.msra.mxu0 %v1159
    %1802 = vmatprep.subr.bf16.mxu0 0
    %1803 = vmatpush2.bf16.msra.mxu0 %v1204
    %1804 = vmatprep.subr.bf16.mxu0 0
    %1805 = vmatpush2.bf16.msra.mxu0 %v1201
    %1806 = vmatprep.subr.bf16.mxu0 0
    %1807 = vmatpush2.bf16.msra.mxu0 %v1198
    %1808 = vmatprep.subr.bf16.mxu0 0
    %1809 = vmatpush2.bf16.msra.mxu0 %v1195
    %1810 = vmatprep.subr.bf16.mxu0 0
    %1811 = vmatpush2.bf16.msra.mxu0 %v1192
    %1812 = vmatprep.subr.bf16.mxu0 0
    %1813 = vmatpush2.bf16.msra.mxu0 %v1189
    %1814 = vmatprep.subr.bf16.mxu0 0
    %1815 = vmatpush2.bf16.msra.mxu0 %v1186
    %1816 = vmatprep.subr.bf16.mxu0 0
    %1817 = vmatpush2.bf16.msra.mxu0 %v1183
    %1818 = vmatprep.mubr.bf16.mxu0 %v355
    %1819 = vmatmul.mubr.bf16.gmra.mxu0 %v353
    %v1820 = vpop.f32.mrf.mxu0
    %v1821 = vadd.f32 %v1781, %v1820
    %v1822 = vpop.f32.mrf.mxu0
    %v1823 = vpop.f32.mrf.mxu0
    %v1824 = vpop.f32.mrf.mxu0
    %1825 = vdwg.mxu0
    %1826 = vmatprep.subr.bf16.mxu0 0
    %1827 = vmatpush1.bf16.msra.mxu0 %v1228
    %1828 = vmatprep.subr.bf16.mxu0 0
    %1829 = vmatpush1.bf16.msra.mxu0 %v1225
    %1830 = vmatprep.subr.bf16.mxu0 0
    %1831 = vmatpush1.bf16.msra.mxu0 %v1222
    %1832 = vmatprep.subr.bf16.mxu0 0
    %1833 = vmatpush1.bf16.msra.mxu0 %v1219
    %1834 = vmatprep.subr.bf16.mxu0 0
    %1835 = vmatpush1.bf16.msra.mxu0 %v1216
    %1836 = vmatprep.subr.bf16.mxu0 0
    %1837 = vmatpush1.bf16.msra.mxu0 %v1213
    %1838 = vmatprep.subr.bf16.mxu0 0
    %1839 = vmatpush1.bf16.msra.mxu0 %v1210
    %1840 = vmatprep.subr.bf16.mxu0 0
    %1841 = vmatpush1.bf16.msra.mxu0 %v1207
    %1842 = vmatprep.subr.bf16.mxu0 0
    %1843 = vmatpush2.bf16.msra.mxu0 %v1252
    %1844 = vmatprep.subr.bf16.mxu0 0
    %1845 = vmatpush2.bf16.msra.mxu0 %v1249
    %1846 = vmatprep.subr.bf16.mxu0 0
    %1847 = vmatpush2.bf16.msra.mxu0 %v1246
    %1848 = vmatprep.subr.bf16.mxu0 0
    %1849 = vmatpush2.bf16.msra.mxu0 %v1243
    %1850 = vmatprep.subr.bf16.mxu0 0
    %1851 = vmatpush2.bf16.msra.mxu0 %v1240
    %1852 = vmatprep.subr.bf16.mxu0 0
    %1853 = vmatpush2.bf16.msra.mxu0 %v1237
    %1854 = vmatprep.subr.bf16.mxu0 0
    %1855 = vmatpush2.bf16.msra.mxu0 %v1234
    %1856 = vmatprep.subr.bf16.mxu0 0
    %1857 = vmatpush2.bf16.msra.mxu0 %v1231
    %1858 = vmatprep.mubr.bf16.mxu0 %v371
    %1859 = vmatmul.mubr.bf16.gmra.mxu0 %v363
    %v1860 = vpop.f32.mrf.mxu0
    %v1861 = vadd.f32 %v1821, %v1860
    %v1862 = vpop.f32.mrf.mxu0
    %v1863 = vpop.f32.mrf.mxu0
    %v1864 = vpop.f32.mrf.mxu0
    %1865 = vdwg.mxu0
    %1866 = vmatprep.subr.bf16.mxu0 0
    %1867 = vmatpush1.bf16.msra.mxu0 %v1276
    %1868 = vmatprep.subr.bf16.mxu0 0
    %1869 = vmatpush1.bf16.msra.mxu0 %v1273
    %1870 = vmatprep.subr.bf16.mxu0 0
    %1871 = vmatpush1.bf16.msra.mxu0 %v1270
    %1872 = vmatprep.subr.bf16.mxu0 0
    %1873 = vmatpush1.bf16.msra.mxu0 %v1267
    %1874 = vmatprep.subr.bf16.mxu0 0
    %1875 = vmatpush1.bf16.msra.mxu0 %v1264
    %1876 = vmatprep.subr.bf16.mxu0 0
    %1877 = vmatpush1.bf16.msra.mxu0 %v1261
    %1878 = vmatprep.subr.bf16.mxu0 0
    %1879 = vmatpush1.bf16.msra.mxu0 %v1258
    %1880 = vmatprep.subr.bf16.mxu0 0
    %1881 = vmatpush1.bf16.msra.mxu0 %v1255
    %1882 = vmatprep.subr.bf16.mxu0 0
    %1883 = vmatpush2.bf16.msra.mxu0 %v1300
    %1884 = vmatprep.subr.bf16.mxu0 0
    %1885 = vmatpush2.bf16.msra.mxu0 %v1297
    %1886 = vmatprep.subr.bf16.mxu0 0
    %1887 = vmatpush2.bf16.msra.mxu0 %v1294
    %1888 = vmatprep.subr.bf16.mxu0 0
    %1889 = vmatpush2.bf16.msra.mxu0 %v1291
    %1890 = vmatprep.subr.bf16.mxu0 0
    %1891 = vmatpush2.bf16.msra.mxu0 %v1288
    %1892 = vmatprep.subr.bf16.mxu0 0
    %1893 = vmatpush2.bf16.msra.mxu0 %v1285
    %1894 = vmatprep.subr.bf16.mxu0 0
    %1895 = vmatpush2.bf16.msra.mxu0 %v1282
    %1896 = vmatprep.subr.bf16.mxu0 0
    %1897 = vmatpush2.bf16.msra.mxu0 %v1279
    %1898 = vmatprep.mubr.bf16.mxu0 %v372
    %1899 = vmatmul.mubr.bf16.gmra.mxu0 %v370
    %v1900 = vpop.f32.mrf.mxu0
    %v1901 = vadd.f32 %v1861, %v1900
    %v1902 = vpop.f32.mrf.mxu0
    %v1903 = vpop.f32.mrf.mxu0
    %v1904 = vpop.f32.mrf.mxu0
    %1905 = vdwg.mxu0
    %1906 = vmatprep.subr.bf16.mxu0 0
    %1907 = vmatpush1.bf16.msra.mxu0 %v1324
    %1908 = vmatprep.subr.bf16.mxu0 0
    %1909 = vmatpush1.bf16.msra.mxu0 %v1321
    %1910 = vmatprep.subr.bf16.mxu0 0
    %1911 = vmatpush1.bf16.msra.mxu0 %v1318
    %1912 = vmatprep.subr.bf16.mxu0 0
    %1913 = vmatpush1.bf16.msra.mxu0 %v1315
    %1914 = vmatprep.subr.bf16.mxu0 0
    %1915 = vmatpush1.bf16.msra.mxu0 %v1312
    %1916 = vmatprep.subr.bf16.mxu0 0
    %1917 = vmatpush1.bf16.msra.mxu0 %v1309
    %1918 = vmatprep.subr.bf16.mxu0 0
    %1919 = vmatpush1.bf16.msra.mxu0 %v1306
    %1920 = vmatprep.subr.bf16.mxu0 0
    %1921 = vmatpush1.bf16.msra.mxu0 %v1303
    %1922 = vmatprep.subr.bf16.mxu0 0
    %1923 = vmatpush2.bf16.msra.mxu0 0
    %1924 = vmatprep.subr.bf16.mxu0 0
    %1925 = vmatpush2.bf16.msra.mxu0 0
    %1926 = vmatprep.subr.bf16.mxu0 0
    %1927 = vmatpush2.bf16.msra.mxu0 0
    %1928 = vmatprep.subr.bf16.mxu0 0
    %1929 = vmatpush2.bf16.msra.mxu0 0
    %1930 = vmatprep.subr.bf16.mxu0 0
    %1931 = vmatpush2.bf16.msra.mxu0 0
    %1932 = vmatprep.subr.bf16.mxu0 0
    %1933 = vmatpush2.bf16.msra.mxu0 0
    %1934 = vmatprep.subr.bf16.mxu0 0
    %1935 = vmatpush2.bf16.msra.mxu0 0
    %1936 = vmatprep.subr.bf16.mxu0 0
    %1937 = vmatpush2.bf16.msra.mxu0 0
    %1938 = vmatprep.mubr.bf16.mxu0 0
    %1939 = vmatmul.mubr.bf16.gmra.mxu0 %v379
    %v1940 = vpop.f32.mrf.mxu0
    %v1941 = vadd.f32 %v1901, %v1940
    %v1942 = vpop.f32.mrf.mxu0
    %v1943 = vpop.f32.mrf.mxu0
    %v1944 = vpop.f32.mrf.mxu0
    %1945 = vdwg.mxu0
    %v1946 = vmax.f32 %v1740, 0.0
    %v1947 = vmax.f32 %v1742, 0.0
    %v1948 = vmax.f32 %v1941, 0.0
    %v1949 = vpack.c.bf16 %v1946, %v1946
    %v1950 = vpack.c.bf16 %v1947, %v1947
    %v1951 = vpack.c.bf16 %v1948, %v1948
    %v1952 = vld [vmem:[%s3] sm:$0xff]
    %v1953 = vld [vmem:[%s3 + $0x8] sm:$0xff]
    %v1954 = vld [vmem:[%s3 + $0x10] sm:$0xff]
    %v1955 = vld [vmem:[%s3 + $0x18] sm:$0xff]
    %v1956 = vld [vmem:[%s3 + $0x20] sm:$0xff]
    %v1957 = vld [vmem:[%s3 + $0x28] sm:$0xff]
    %v1958 = vld [vmem:[%s3 + $0x30] sm:$0xff]
    %v1959 = vld [vmem:[%s3 + $0x38] sm:$0xff]
    %v1960 = vld [vmem:[%s3 + $0x40] sm:$0xff]
    %v1961 = vld [vmem:[%s3 + $0x48] sm:$0xff]
    %v1962 = vld [vmem:[%s3 + $0x50] sm:$0xff]
    %v1963 = vld [vmem:[%s3 + $0x58] sm:$0xff]
    %v1964 = vld [vmem:[%s3 + $0x60] sm:$0xff]
    %v1965 = vld [vmem:[%s3 + $0x68] sm:$0xff]
    %v1966 = vld [vmem:[%s3 + $0x70] sm:$0xff]
    %v1967 = vld [vmem:[%s3 + $0x78] sm:$0xff]
    %v1968 = vld [vmem:[%s3 + $0x80] sm:$0xff]
    %v1969 = vld [vmem:[%s3 + $0x88] sm:$0xff]
    %v1970 = vld [vmem:[%s3 + $0x90] sm:$0xff]
    %v1971 = vld [vmem:[%s3 + $0x98] sm:$0xff]
    %v1972 = vld [vmem:[%s3 + $0xa0] sm:$0xff]
    %v1973 = vld [vmem:[%s3 + $0xa8] sm:$0xff]
    %v1974 = vld [vmem:[%s3 + $0xb0] sm:$0xff]
    %v1975 = vld [vmem:[%s3 + $0xb8] sm:$0xff]
    %v1976 = vld [vmem:[%s3 + $0xc0] sm:$0xff]
    %v1977 = vld [vmem:[%s3 + $0xc8] sm:$0xff]
    %v1978 = vld [vmem:[%s3 + $0xd0] sm:$0xff]
    %v1979 = vld [vmem:[%s3 + $0xd8] sm:$0xff]
    %v1980 = vld [vmem:[%s3 + $0xe0] sm:$0xff]
    %v1981 = vld [vmem:[%s3 + $0xe8] sm:$0xff]
    %v1982 = vld [vmem:[%s3 + $0xf0] sm:$0xff]
    %v1983 = vld [vmem:[%s3 + $0xf8] sm:$0xff]
    %v1984 = vld [vmem:[%s3 + $0x100] sm:$0xff]
    %v1985 = vld [vmem:[%s3 + $0x108] sm:$0xff]
    %v1986 = vld [vmem:[%s3 + $0x110] sm:$0xff]
    %v1987 = vld [vmem:[%s3 + $0x118] sm:$0xff]
    %v1988 = vld [vmem:[%s3 + $0x120] sm:$0xff]
    %v1989 = vld [vmem:[%s3 + $0x128] sm:$0xff]
    %v1990 = vld [vmem:[%s3 + $0x130] sm:$0xff]
    %v1991 = vld [vmem:[%s3 + $0x138] sm:$0xff]
    %v1992 = vld [vmem:[%s3 + $0x140] sm:$0xff]
    %v1993 = vld [vmem:[%s3 + $0x148] sm:$0xff]
    %v1994 = vld [vmem:[%s3 + $0x150] sm:$0xff]
    %v1995 = vld [vmem:[%s3 + $0x158] sm:$0xff]
    %v1996 = vld [vmem:[%s3 + $0x160] sm:$0xff]
    %v1997 = vld [vmem:[%s3 + $0x168] sm:$0xff]
    %v1998 = vld [vmem:[%s3 + $0x170] sm:$0xff]
    %v1999 = vld [vmem:[%s3 + $0x178] sm:$0xff]
    %v2000 = vld [vmem:[%s3 + $0x180] sm:$0xff]
    %v2001 = vld [vmem:[%s3 + $0x188] sm:$0xff]
    %v2002 = vld [vmem:[%s3 + $0x190] sm:$0xff]
    %v2003 = vld [vmem:[%s3 + $0x198] sm:$0xff]
    %v2004 = vld [vmem:[%s3 + $0x1a0] sm:$0xff]
    %v2005 = vld [vmem:[%s3 + $0x1a8] sm:$0xff]
    %v2006 = vld [vmem:[%s3 + $0x1b0] sm:$0xff]
    %v2007 = vld [vmem:[%s3 + $0x1b8] sm:$0xff]
    %v2008 = vld [vmem:[%s3 + $0x1c0] sm:$0xff]
    %v2009 = vld [vmem:[%s3 + $0x1c8] sm:$0xff]
    %v2010 = vld [vmem:[%s3 + $0x1d0] sm:$0xff]
    %v2011 = vld [vmem:[%s3 + $0x1d8] sm:$0xff]
    %v2012 = vld [vmem:[%s3 + $0x1e0] sm:$0xff]
    %v2013 = vld [vmem:[%s3 + $0x1e8] sm:$0xff]
    %v2014 = vld [vmem:[%s3 + $0x1f0] sm:$0xff]
    %v2015 = vld [vmem:[%s3 + $0x1f8] sm:$0xff]
    %v2016 = vld [vmem:[%s3 + $0x200] sm:$0xff]
    %v2017 = vld [vmem:[%s3 + $0x208] sm:$0xff]
    %v2018 = vld [vmem:[%s3 + $0x210] sm:$0xff]
    %v2019 = vld [vmem:[%s3 + $0x218] sm:$0xff]
    %v2020 = vld [vmem:[%s3 + $0x220] sm:$0xff]
    %v2021 = vld [vmem:[%s3 + $0x228] sm:$0xff]
    %v2022 = vld [vmem:[%s3 + $0x230] sm:$0xff]
    %v2023 = vld [vmem:[%s3 + $0x238] sm:$0xff]
    %v2027 = vrot.slane %v1949, 1
    %v2028 = vrot.slane %v1950, 1
    %v2029 = vrot.slane %v1951, 1
    %v2068 = vunpack.c.l.b16 %v1988
    %v2069 = vunpack.c.h.b16 %v1988
    %v2070 = vunpack.c.l.b16 %v1989
    %v2071 = vunpack.c.h.b16 %v1989
    %v2072 = vunpack.c.l.b16 %v1990
    %v2073 = vunpack.c.h.b16 %v1990
    %v2074 = vunpack.c.l.b16 %v1991
    %v2075 = vunpack.c.h.b16 %v1991
    %v2076 = vunpack.c.l.b16 %v1992
    %v2077 = vunpack.c.h.b16 %v1992
    %v2078 = vunpack.c.l.b16 %v1993
    %v2079 = vunpack.c.h.b16 %v1993
    %v2080 = vunpack.c.l.b16 %v1994
    %v2081 = vunpack.c.h.b16 %v1994
    %v2082 = vunpack.c.l.b16 %v1995
    %v2083 = vunpack.c.h.b16 %v1995
    %v2084 = vunpack.c.l.b16 %v1996
    %v2085 = vunpack.c.h.b16 %v1996
    %v2086 = vunpack.c.l.b16 %v1997
    %v2087 = vunpack.c.h.b16 %v1997
    %v2088 = vunpack.c.l.b16 %v1998
    %v2089 = vunpack.c.h.b16 %v1998
    %v2090 = vunpack.c.l.b16 %v1999
    %v2091 = vunpack.c.h.b16 %v1999
    %v2092 = vunpack.c.l.b16 %v2000
    %v2093 = vunpack.c.h.b16 %v2000
    %v2094 = vunpack.c.l.b16 %v2001
    %v2095 = vunpack.c.h.b16 %v2001
    %v2096 = vunpack.c.l.b16 %v2002
    %v2097 = vunpack.c.h.b16 %v2002
    %v2098 = vunpack.c.l.b16 %v2003
    %v2099 = vunpack.c.h.b16 %v2003
    %v2100 = vunpack.c.l.b16 %v2004
    %v2101 = vunpack.c.h.b16 %v2004
    %v2102 = vunpack.c.l.b16 %v2005
    %v2103 = vunpack.c.h.b16 %v2005
    %v2104 = vunpack.c.l.b16 %v2006
    %v2105 = vunpack.c.h.b16 %v2006
    %v2106 = vunpack.c.l.b16 %v2007
    %v2107 = vunpack.c.h.b16 %v2007
    %v2108 = vunpack.c.l.b16 %v2008
    %v2109 = vunpack.c.h.b16 %v2008
    %v2110 = vunpack.c.l.b16 %v2009
    %v2111 = vunpack.c.h.b16 %v2009
    %v2112 = vunpack.c.l.b16 %v2010
    %v2113 = vunpack.c.h.b16 %v2010
    %v2114 = vunpack.c.l.b16 %v2011
    %v2115 = vunpack.c.h.b16 %v2011
    %v2116 = vunpack.c.l.b16 %v2012
    %v2117 = vunpack.c.h.b16 %v2012
    %v2118 = vunpack.c.l.b16 %v2013
    %v2119 = vunpack.c.h.b16 %v2013
    %v2120 = vunpack.c.l.b16 %v2014
    %v2121 = vunpack.c.h.b16 %v2014
    %v2122 = vunpack.c.l.b16 %v2015
    %v2123 = vunpack.c.h.b16 %v2015
    %v2124 = vunpack.c.l.b16 %v2016
    %v2125 = vunpack.c.h.b16 %v2016
    %v2126 = vunpack.c.l.b16 %v2017
    %v2127 = vunpack.c.h.b16 %v2017
    %v2128 = vunpack.c.l.b16 %v2018
    %v2129 = vunpack.c.h.b16 %v2018
    %v2130 = vunpack.c.l.b16 %v2019
    %v2131 = vunpack.c.h.b16 %v2019
    %v2132 = vunpack.c.l.b16 %v2020
    %v2133 = vunpack.c.h.b16 %v2020
    %v2134 = vunpack.c.l.b16 %v2021
    %v2135 = vunpack.c.h.b16 %v2021
    %v2136 = vunpack.c.l.b16 %v2022
    %v2137 = vunpack.c.h.b16 %v2022
    %v2138 = vunpack.c.l.b16 %v2023
    %v2139 = vunpack.c.h.b16 %v2023
    %v2140 = vpack.c.b16 %v2070, %v2068
    %v2141 = vpack.c.b16 %v2071, %v2069
    %v2142 = vpack.c.b16 %v2074, %v2072
    %v2143 = vpack.c.b16 %v2075, %v2073
    %v2144 = vpack.c.b16 %v2078, %v2076
    %v2145 = vpack.c.b16 %v2079, %v2077
    %v2146 = vpack.c.b16 %v2082, %v2080
    %v2147 = vpack.c.b16 %v2083, %v2081
    %v2148 = vpack.c.b16 %v2086, %v2084
    %v2149 = vpack.c.b16 %v2087, %v2085
    %v2150 = vpack.c.b16 %v2090, %v2088
    %v2151 = vpack.c.b16 %v2091, %v2089
    %v2152 = vpack.c.b16 %v2094, %v2092
    %v2153 = vpack.c.b16 %v2095, %v2093
    %v2154 = vpack.c.b16 %v2098, %v2096
    %v2155 = vpack.c.b16 %v2099, %v2097
    %v2156 = vpack.c.b16 %v2102, %v2100
    %v2157 = vpack.c.b16 %v2103, %v2101
    %v2158 = vpack.c.b16 %v2106, %v2104
    %v2159 = vpack.c.b16 %v2107, %v2105
    %v2160 = vpack.c.b16 %v2110, %v2108
    %v2161 = vpack.c.b16 %v2111, %v2109
    %v2162 = vpack.c.b16 %v2114, %v2112
    %v2163 = vpack.c.b16 %v2115, %v2113
    %v2164 = vpack.c.b16 %v2118, %v2116
    %v2165 = vpack.c.b16 %v2119, %v2117
    %v2166 = vpack.c.b16 %v2122, %v2120
    %v2167 = vpack.c.b16 %v2123, %v2121
    %v2168 = vpack.c.b16 %v2126, %v2124
    %v2169 = vpack.c.b16 %v2127, %v2125
    %v2170 = vpack.c.b16 %v2130, %v2128
    %v2171 = vpack.c.b16 %v2131, %v2129
    %v2172 = vpack.c.b16 %v2134, %v2132
    %v2173 = vpack.c.b16 %v2135, %v2133
    %v2174 = vpack.c.b16 %v2138, %v2136
    %v2175 = vpack.c.b16 %v2139, %v2137
    %vm2212 = vcmask 261120
    %v2214 = vsel %vm2212, %v2029, 0
    %2216 = vmatprep.subr.bf16.mxu0 %v2155
    %2217 = vmatpush1.bf16.msra.mxu0 %v2154
    %2218 = vmatprep.subr.bf16.mxu0 %v2153
    %2219 = vmatpush1.bf16.msra.mxu0 %v2152
    %2220 = vmatprep.subr.bf16.mxu0 %v2151
    %2221 = vmatpush1.bf16.msra.mxu0 %v2150
    %2222 = vmatprep.subr.bf16.mxu0 %v2149
    %2223 = vmatpush1.bf16.msra.mxu0 %v2148
    %2224 = vmatprep.subr.bf16.mxu0 %v2147
    %2225 = vmatpush1.bf16.msra.mxu0 %v2146
    %2226 = vmatprep.subr.bf16.mxu0 %v2145
    %2227 = vmatpush1.bf16.msra.mxu0 %v2144
    %2228 = vmatprep.subr.bf16.mxu0 %v2143
    %2229 = vmatpush1.bf16.msra.mxu0 %v2142
    %2230 = vmatprep.subr.bf16.mxu0 %v2141
    %2231 = vmatpush1.bf16.msra.mxu0 %v2140
    %2232 = vmatprep.subr.bf16.mxu0 %v2171
    %2233 = vmatpush2.bf16.msra.mxu0 %v2170
    %2234 = vmatprep.subr.bf16.mxu0 %v2169
    %2235 = vmatpush2.bf16.msra.mxu0 %v2168
    %2236 = vmatprep.subr.bf16.mxu0 %v2167
    %2237 = vmatpush2.bf16.msra.mxu0 %v2166
    %2238 = vmatprep.subr.bf16.mxu0 %v2165
    %2239 = vmatpush2.bf16.msra.mxu0 %v2164
    %2240 = vmatprep.subr.bf16.mxu0 %v2163
    %2241 = vmatpush2.bf16.msra.mxu0 %v2162
    %2242 = vmatprep.subr.bf16.mxu0 %v2161
    %2243 = vmatpush2.bf16.msra.mxu0 %v2160
    %2244 = vmatprep.subr.bf16.mxu0 %v2159
    %2245 = vmatpush2.bf16.msra.mxu0 %v2158
    %2246 = vmatprep.subr.bf16.mxu0 %v2157
    %2247 = vmatpush2.bf16.msra.mxu0 %v2156
    %2248 = vmatprep.mubr.bf16.mxu0 %v2028
    %2249 = vmatmul.mubr.bf16.gmra.mxu0 %v2027
    %v2250 = vpop.f32.mrf.mxu0
    %v2251 = vadd.f32 0.0, %v2250
    %v2252 = vpop.f32.mrf.mxu0
    %v2253 = vadd.f32 0.0, %v2252
    %v2254 = vpop.f32.mrf.mxu0
    %v2255 = vpop.f32.mrf.mxu0
    %2256 = vdwg.mxu0
    %2257 = vmatprep.subr.bf16.mxu0 0
    %2258 = vmatpush1.bf16.msra.mxu0 0
    %2259 = vmatprep.subr.bf16.mxu0 0
    %2260 = vmatpush1.bf16.msra.mxu0 0
    %2261 = vmatprep.subr.bf16.mxu0 0
    %2262 = vmatpush1.bf16.msra.mxu0 0
    %2263 = vmatprep.subr.bf16.mxu0 0
    %2264 = vmatpush1.bf16.msra.mxu0 0
    %2265 = vmatprep.subr.bf16.mxu0 0
    %2266 = vmatpush1.bf16.msra.mxu0 0
    %2267 = vmatprep.subr.bf16.mxu0 0
    %2268 = vmatpush1.bf16.msra.mxu0 0
    %2269 = vmatprep.subr.bf16.mxu0 %v2175
    %2270 = vmatpush1.bf16.msra.mxu0 %v2174
    %2271 = vmatprep.subr.bf16.mxu0 %v2173
    %2272 = vmatpush1.bf16.msra.mxu0 %v2172
    %2273 = vmatprep.subr.bf16.mxu0 0
    %2274 = vmatpush2.bf16.msra.mxu0 0
    %2275 = vmatprep.subr.bf16.mxu0 0
    %2276 = vmatpush2.bf16.msra.mxu0 0
    %2277 = vmatprep.subr.bf16.mxu0 0
    %2278 = vmatpush2.bf16.msra.mxu0 0
    %2279 = vmatprep.subr.bf16.mxu0 0
    %2280 = vmatpush2.bf16.msra.mxu0 0
    %2281 = vmatprep.subr.bf16.mxu0 0
    %2282 = vmatpush2.bf16.msra.mxu0 0
    %2283 = vmatprep.subr.bf16.mxu0 0
    %2284 = vmatpush2.bf16.msra.mxu0 0
    %2285 = vmatprep.subr.bf16.mxu0 0
    %2286 = vmatpush2.bf16.msra.mxu0 0
    %2287 = vmatprep.subr.bf16.mxu0 0
    %2288 = vmatpush2.bf16.msra.mxu0 0
    %2289 = vmatprep.mubr.bf16.mxu0 0
    %2290 = vmatmul.mubr.bf16.gmra.mxu0 %v2214
    %v2291 = vpop.f32.mrf.mxu0
    %v2292 = vadd.f32 %v2251, %v2291
    %v2293 = vpop.f32.mrf.mxu0
    %v2294 = vadd.f32 %v2253, %v2293
    %v2295 = vpop.f32.mrf.mxu0
    %v2296 = vpop.f32.mrf.mxu0
    %2297 = vdwg.mxu0
    %v2334 = vunpack.c.l.b16 %v1952
    %v2335 = vunpack.c.h.b16 %v1952
    %v2336 = vunpack.c.l.b16 %v1953
    %v2337 = vunpack.c.h.b16 %v1953
    %v2338 = vunpack.c.l.b16 %v1954
    %v2339 = vunpack.c.h.b16 %v1954
    %v2340 = vunpack.c.l.b16 %v1955
    %v2341 = vunpack.c.h.b16 %v1955
    %v2342 = vunpack.c.l.b16 %v1956
    %v2343 = vunpack.c.h.b16 %v1956
    %v2344 = vunpack.c.l.b16 %v1957
    %v2345 = vunpack.c.h.b16 %v1957
    %v2346 = vunpack.c.l.b16 %v1958
    %v2347 = vunpack.c.h.b16 %v1958
    %v2348 = vunpack.c.l.b16 %v1959
    %v2349 = vunpack.c.h.b16 %v1959
    %v2350 = vunpack.c.l.b16 %v1960
    %v2351 = vunpack.c.h.b16 %v1960
    %v2352 = vunpack.c.l.b16 %v1961
    %v2353 = vunpack.c.h.b16 %v1961
    %v2354 = vunpack.c.l.b16 %v1962
    %v2355 = vunpack.c.h.b16 %v1962
    %v2356 = vunpack.c.l.b16 %v1963
    %v2357 = vunpack.c.h.b16 %v1963
    %v2358 = vunpack.c.l.b16 %v1964
    %v2359 = vunpack.c.h.b16 %v1964
    %v2360 = vunpack.c.l.b16 %v1965
    %v2361 = vunpack.c.h.b16 %v1965
    %v2362 = vunpack.c.l.b16 %v1966
    %v2363 = vunpack.c.h.b16 %v1966
    %v2364 = vunpack.c.l.b16 %v1967
    %v2365 = vunpack.c.h.b16 %v1967
    %v2366 = vunpack.c.l.b16 %v1968
    %v2367 = vunpack.c.h.b16 %v1968
    %v2368 = vunpack.c.l.b16 %v1969
    %v2369 = vunpack.c.h.b16 %v1969
    %v2370 = vunpack.c.l.b16 %v1970
    %v2371 = vunpack.c.h.b16 %v1970
    %v2372 = vunpack.c.l.b16 %v1971
    %v2373 = vunpack.c.h.b16 %v1971
    %v2374 = vunpack.c.l.b16 %v1972
    %v2375 = vunpack.c.h.b16 %v1972
    %v2376 = vunpack.c.l.b16 %v1973
    %v2377 = vunpack.c.h.b16 %v1973
    %v2378 = vunpack.c.l.b16 %v1974
    %v2379 = vunpack.c.h.b16 %v1974
    %v2380 = vunpack.c.l.b16 %v1975
    %v2381 = vunpack.c.h.b16 %v1975
    %v2382 = vunpack.c.l.b16 %v1976
    %v2383 = vunpack.c.h.b16 %v1976
    %v2384 = vunpack.c.l.b16 %v1977
    %v2385 = vunpack.c.h.b16 %v1977
    %v2386 = vunpack.c.l.b16 %v1978
    %v2387 = vunpack.c.h.b16 %v1978
    %v2388 = vunpack.c.l.b16 %v1979
    %v2389 = vunpack.c.h.b16 %v1979
    %v2390 = vunpack.c.l.b16 %v1980
    %v2391 = vunpack.c.h.b16 %v1980
    %v2392 = vunpack.c.l.b16 %v1981
    %v2393 = vunpack.c.h.b16 %v1981
    %v2394 = vunpack.c.l.b16 %v1982
    %v2395 = vunpack.c.h.b16 %v1982
    %v2396 = vunpack.c.l.b16 %v1983
    %v2397 = vunpack.c.h.b16 %v1983
    %v2398 = vunpack.c.l.b16 %v1984
    %v2399 = vunpack.c.h.b16 %v1984
    %v2400 = vunpack.c.l.b16 %v1985
    %v2401 = vunpack.c.h.b16 %v1985
    %v2402 = vunpack.c.l.b16 %v1986
    %v2403 = vunpack.c.h.b16 %v1986
    %v2404 = vunpack.c.l.b16 %v1987
    %v2405 = vunpack.c.h.b16 %v1987
    %v2406 = vpack.c.b16 %v2336, %v2334
    %v2407 = vpack.c.b16 %v2337, %v2335
    %v2408 = vpack.c.b16 %v2340, %v2338
    %v2409 = vpack.c.b16 %v2341, %v2339
    %v2410 = vpack.c.b16 %v2344, %v2342
    %v2411 = vpack.c.b16 %v2345, %v2343
    %v2412 = vpack.c.b16 %v2348, %v2346
    %v2413 = vpack.c.b16 %v2349, %v2347
    %v2414 = vpack.c.b16 %v2352, %v2350
    %v2415 = vpack.c.b16 %v2353, %v2351
    %v2416 = vpack.c.b16 %v2356, %v2354
    %v2417 = vpack.c.b16 %v2357, %v2355
    %v2418 = vpack.c.b16 %v2360, %v2358
    %v2419 = vpack.c.b16 %v2361, %v2359
    %v2420 = vpack.c.b16 %v2364, %v2362
    %v2421 = vpack.c.b16 %v2365, %v2363
    %v2422 = vpack.c.b16 %v2368, %v2366
    %v2423 = vpack.c.b16 %v2369, %v2367
    %v2424 = vpack.c.b16 %v2372, %v2370
    %v2425 = vpack.c.b16 %v2373, %v2371
    %v2426 = vpack.c.b16 %v2376, %v2374
    %v2427 = vpack.c.b16 %v2377, %v2375
    %v2428 = vpack.c.b16 %v2380, %v2378
    %v2429 = vpack.c.b16 %v2381, %v2379
    %v2430 = vpack.c.b16 %v2384, %v2382
    %v2431 = vpack.c.b16 %v2385, %v2383
    %v2432 = vpack.c.b16 %v2388, %v2386
    %v2433 = vpack.c.b16 %v2389, %v2387
    %v2434 = vpack.c.b16 %v2392, %v2390
    %v2435 = vpack.c.b16 %v2393, %v2391
    %v2436 = vpack.c.b16 %v2396, %v2394
    %v2437 = vpack.c.b16 %v2397, %v2395
    %v2438 = vpack.c.b16 %v2400, %v2398
    %v2439 = vpack.c.b16 %v2401, %v2399
    %v2440 = vpack.c.b16 %v2404, %v2402
    %v2441 = vpack.c.b16 %v2405, %v2403
    %v2479 = vsel %vm2212, %v1951, 0
    %2481 = vmatprep.subr.bf16.mxu0 %v2421
    %2482 = vmatpush1.bf16.msra.mxu0 %v2420
    %2483 = vmatprep.subr.bf16.mxu0 %v2419
    %2484 = vmatpush1.bf16.msra.mxu0 %v2418
    %2485 = vmatprep.subr.bf16.mxu0 %v2417
    %2486 = vmatpush1.bf16.msra.mxu0 %v2416
    %2487 = vmatprep.subr.bf16.mxu0 %v2415
    %2488 = vmatpush1.bf16.msra.mxu0 %v2414
    %2489 = vmatprep.subr.bf16.mxu0 %v2413
    %2490 = vmatpush1.bf16.msra.mxu0 %v2412
    %2491 = vmatprep.subr.bf16.mxu0 %v2411
    %2492 = vmatpush1.bf16.msra.mxu0 %v2410
    %2493 = vmatprep.subr.bf16.mxu0 %v2409
    %2494 = vmatpush1.bf16.msra.mxu0 %v2408
    %2495 = vmatprep.subr.bf16.mxu0 %v2407
    %2496 = vmatpush1.bf16.msra.mxu0 %v2406
    %2497 = vmatprep.subr.bf16.mxu0 %v2437
    %2498 = vmatpush2.bf16.msra.mxu0 %v2436
    %2499 = vmatprep.subr.bf16.mxu0 %v2435
    %2500 = vmatpush2.bf16.msra.mxu0 %v2434
    %2501 = vmatprep.subr.bf16.mxu0 %v2433
    %2502 = vmatpush2.bf16.msra.mxu0 %v2432
    %2503 = vmatprep.subr.bf16.mxu0 %v2431
    %2504 = vmatpush2.bf16.msra.mxu0 %v2430
    %2505 = vmatprep.subr.bf16.mxu0 %v2429
    %2506 = vmatpush2.bf16.msra.mxu0 %v2428
    %2507 = vmatprep.subr.bf16.mxu0 %v2427
    %2508 = vmatpush2.bf16.msra.mxu0 %v2426
    %2509 = vmatprep.subr.bf16.mxu0 %v2425
    %2510 = vmatpush2.bf16.msra.mxu0 %v2424
    %2511 = vmatprep.subr.bf16.mxu0 %v2423
    %2512 = vmatpush2.bf16.msra.mxu0 %v2422
    %2513 = vmatprep.mubr.bf16.mxu0 %v1950
    %2514 = vmatmul.mubr.bf16.gmra.mxu0 %v1949
    %v2515 = vpop.f32.mrf.mxu0
    %v2516 = vadd.f32 %v2292, %v2515
    %v2517 = vpop.f32.mrf.mxu0
    %v2518 = vadd.f32 %v2294, %v2517
    %v2519 = vpop.f32.mrf.mxu0
    %v2520 = vpop.f32.mrf.mxu0
    %2521 = vdwg.mxu0
    %2522 = vmatprep.subr.bf16.mxu0 0
    %2523 = vmatpush1.bf16.msra.mxu0 0
    %2524 = vmatprep.subr.bf16.mxu0 0
    %2525 = vmatpush1.bf16.msra.mxu0 0
    %2526 = vmatprep.subr.bf16.mxu0 0
    %2527 = vmatpush1.bf16.msra.mxu0 0
    %2528 = vmatprep.subr.bf16.mxu0 0
    %2529 = vmatpush1.bf16.msra.mxu0 0
    %2530 = vmatprep.subr.bf16.mxu0 0
    %2531 = vmatpush1.bf16.msra.mxu0 0
    %2532 = vmatprep.subr.bf16.mxu0 0
    %2533 = vmatpush1.bf16.msra.mxu0 0
    %2534 = vmatprep.subr.bf16.mxu0 %v2441
    %2535 = vmatpush1.bf16.msra.mxu0 %v2440
    %2536 = vmatprep.subr.bf16.mxu0 %v2439
    %2537 = vmatpush1.bf16.msra.mxu0 %v2438
    %2538 = vmatprep.subr.bf16.mxu0 0
    %2539 = vmatpush2.bf16.msra.mxu0 0
    %2540 = vmatprep.subr.bf16.mxu0 0
    %2541 = vmatpush2.bf16.msra.mxu0 0
    %2542 = vmatprep.subr.bf16.mxu0 0
    %2543 = vmatpush2.bf16.msra.mxu0 0
    %2544 = vmatprep.subr.bf16.mxu0 0
    %2545 = vmatpush2.bf16.msra.mxu0 0
    %2546 = vmatprep.subr.bf16.mxu0 0
    %2547 = vmatpush2.bf16.msra.mxu0 0
    %2548 = vmatprep.subr.bf16.mxu0 0
    %2549 = vmatpush2.bf16.msra.mxu0 0
    %2550 = vmatprep.subr.bf16.mxu0 0
    %2551 = vmatpush2.bf16.msra.mxu0 0
    %2552 = vmatprep.subr.bf16.mxu0 0
    %2553 = vmatpush2.bf16.msra.mxu0 0
    %2554 = vmatprep.mubr.bf16.mxu0 0
    %2555 = vmatmul.mubr.bf16.gmra.mxu0 %v2479
    %v2556 = vpop.f32.mrf.mxu0
    %v2557 = vadd.f32 %v2516, %v2556
    %v2558 = vpop.f32.mrf.mxu0
    %v2559 = vadd.f32 %v2518, %v2558
    %v2560 = vpop.f32.mrf.mxu0
    %v2561 = vpop.f32.mrf.mxu0
    %2562 = vdwg.mxu0
    %v2563 = vld [vmem:[%s4] sm:$0x3]
    %v2565 = vlaneseq
    %v2566 = vshrl.u32 %v2565, 7
    %v2567 = vsub.s32 0, %v2566
    %v2568 = vrot.slane %v2563, %v2567
    %v2569 = vlaneseq
    %v2570 = vshrl.u32 %v2569, 7
    %v2571 = vsub.s32 1, %v2570
    %v2572 = vrot.slane %v2563, %v2571
    %v2575 = vadd.f32 %v2557, %v2568
    %v2576 = vadd.f32 %v2559, %v2572
    %v2577 = vmax.f32 %v2575, 0.0
    %v2578 = vmax.f32 %v2576, 0.0
    %v2579 = vpack.c.bf16 %v2577, %v2577
    %v2580 = vpack.c.bf16 %v2578, %v2578
    %v2581 = vld [vmem:[%s5] sm:$0xf]
    %v2582 = vld [vmem:[%s5 + $0x4] sm:$0xf]
    %v2583 = vld [vmem:[%s5 + $0x8] sm:$0xf]
    %v2584 = vld [vmem:[%s5 + $0xc] sm:$0xf]
    %v2585 = vld [vmem:[%s5 + $0x10] sm:$0xf]
    %v2586 = vld [vmem:[%s5 + $0x14] sm:$0xf]
    %v2587 = vld [vmem:[%s5 + $0x18] sm:$0xf]
    %v2588 = vld [vmem:[%s5 + $0x1c] sm:$0xf]
    %v2589 = vld [vmem:[%s5 + $0x20] sm:$0xf]
    %v2590 = vld [vmem:[%s5 + $0x24] sm:$0xf]
    %v2591 = vld [vmem:[%s5 + $0x28] sm:$0xf]
    %v2592 = vld [vmem:[%s5 + $0x2c] sm:$0xf]
    %v2593 = vld [vmem:[%s5 + $0x30] sm:$0xf]
    %v2594 = vld [vmem:[%s5 + $0x34] sm:$0xf]
    %v2595 = vld [vmem:[%s5 + $0x38] sm:$0xf]
    %v2596 = vld [vmem:[%s5 + $0x3c] sm:$0xf]
    %v2597 = vld [vmem:[%s5 + $0x40] sm:$0xf]
    %v2598 = vld [vmem:[%s5 + $0x44] sm:$0xf]
    %v2599 = vld [vmem:[%s5 + $0x48] sm:$0xf]
    %v2600 = vld [vmem:[%s5 + $0x4c] sm:$0xf]
    %v2601 = vld [vmem:[%s5 + $0x50] sm:$0xf]
    %v2602 = vld [vmem:[%s5 + $0x54] sm:$0xf]
    %v2603 = vld [vmem:[%s5 + $0x58] sm:$0xf]
    %v2604 = vld [vmem:[%s5 + $0x5c] sm:$0xf]
    %v2605 = vld [vmem:[%s5 + $0x60] sm:$0xf]
    %v2606 = vld [vmem:[%s5 + $0x64] sm:$0xf]
    %v2607 = vld [vmem:[%s5 + $0x68] sm:$0xf]
    %v2608 = vld [vmem:[%s5 + $0x6c] sm:$0xf]
    %v2609 = vld [vmem:[%s5 + $0x70] sm:$0xf]
    %v2610 = vld [vmem:[%s5 + $0x74] sm:$0xf]
    %v2611 = vld [vmem:[%s5 + $0x78] sm:$0xf]
    %v2612 = vld [vmem:[%s5 + $0x7c] sm:$0xf]
    %v2613 = vld [vmem:[%s6] sm:$0x1]
    %v2615 = vlaneseq
    %v2616 = vshrl.u32 %v2615, 7
    %v2617 = vsub.s32 0, %v2616
    %v2618 = vrot.slane %v2613, %v2617
    %v2652 = vunpack.c.l.b16 %v2581
    %v2653 = vunpack.c.l.b16 %v2582
    %v2654 = vunpack.c.l.b16 %v2583
    %v2655 = vunpack.c.l.b16 %v2584
    %v2656 = vunpack.c.l.b16 %v2585
    %v2657 = vunpack.c.l.b16 %v2586
    %v2658 = vunpack.c.l.b16 %v2587
    %v2659 = vunpack.c.l.b16 %v2588
    %v2660 = vunpack.c.l.b16 %v2589
    %v2661 = vunpack.c.l.b16 %v2590
    %v2662 = vunpack.c.l.b16 %v2591
    %v2663 = vunpack.c.l.b16 %v2592
    %v2664 = vunpack.c.l.b16 %v2593
    %v2665 = vunpack.c.l.b16 %v2594
    %v2666 = vunpack.c.l.b16 %v2595
    %v2667 = vunpack.c.l.b16 %v2596
    %v2668 = vunpack.c.l.b16 %v2597
    %v2669 = vunpack.c.l.b16 %v2598
    %v2670 = vunpack.c.l.b16 %v2599
    %v2671 = vunpack.c.l.b16 %v2600
    %v2672 = vunpack.c.l.b16 %v2601
    %v2673 = vunpack.c.l.b16 %v2602
    %v2674 = vunpack.c.l.b16 %v2603
    %v2675 = vunpack.c.l.b16 %v2604
    %v2676 = vunpack.c.l.b16 %v2605
    %v2677 = vunpack.c.l.b16 %v2606
    %v2678 = vunpack.c.l.b16 %v2607
    %v2679 = vunpack.c.l.b16 %v2608
    %v2680 = vunpack.c.l.b16 %v2609
    %v2681 = vunpack.c.l.b16 %v2610
    %v2682 = vunpack.c.l.b16 %v2611
    %v2683 = vunpack.c.l.b16 %v2612
    %v2684 = vpack.c.b16 %v2653, %v2652
    %v2685 = vpack.c.b16 %v2655, %v2654
    %v2686 = vpack.c.b16 %v2657, %v2656
    %v2687 = vpack.c.b16 %v2659, %v2658
    %v2688 = vpack.c.b16 %v2661, %v2660
    %v2689 = vpack.c.b16 %v2663, %v2662
    %v2690 = vpack.c.b16 %v2665, %v2664
    %v2691 = vpack.c.b16 %v2667, %v2666
    %v2692 = vpack.c.b16 %v2669, %v2668
    %v2693 = vpack.c.b16 %v2671, %v2670
    %v2694 = vpack.c.b16 %v2673, %v2672
    %v2695 = vpack.c.b16 %v2675, %v2674
    %v2696 = vpack.c.b16 %v2677, %v2676
    %v2697 = vpack.c.b16 %v2679, %v2678
    %v2698 = vpack.c.b16 %v2681, %v2680
    %v2699 = vpack.c.b16 %v2683, %v2682
    %2716 = vmatprep.subr.bf16.mxu0 0
    %2717 = vmatpush1.bf16.msra.mxu0 %v2691
    %2718 = vmatprep.subr.bf16.mxu0 0
    %2719 = vmatpush1.bf16.msra.mxu0 %v2690
    %2720 = vmatprep.subr.bf16.mxu0 0
    %2721 = vmatpush1.bf16.msra.mxu0 %v2689
    %2722 = vmatprep.subr.bf16.mxu0 0
    %2723 = vmatpush1.bf16.msra.mxu0 %v2688
    %2724 = vmatprep.subr.bf16.mxu0 0
    %2725 = vmatpush1.bf16.msra.mxu0 %v2687
    %2726 = vmatprep.subr.bf16.mxu0 0
    %2727 = vmatpush1.bf16.msra.mxu0 %v2686
    %2728 = vmatprep.subr.bf16.mxu0 0
    %2729 = vmatpush1.bf16.msra.mxu0 %v2685
    %2730 = vmatprep.subr.bf16.mxu0 0
    %2731 = vmatpush1.bf16.msra.mxu0 %v2684
    %2732 = vmatprep.subr.bf16.mxu0 0
    %2733 = vmatpush2.bf16.msra.mxu0 %v2699
    %2734 = vmatprep.subr.bf16.mxu0 0
    %2735 = vmatpush2.bf16.msra.mxu0 %v2698
    %2736 = vmatprep.subr.bf16.mxu0 0
    %2737 = vmatpush2.bf16.msra.mxu0 %v2697
    %2738 = vmatprep.subr.bf16.mxu0 0
    %2739 = vmatpush2.bf16.msra.mxu0 %v2696
    %2740 = vmatprep.subr.bf16.mxu0 0
    %2741 = vmatpush2.bf16.msra.mxu0 %v2695
    %2742 = vmatprep.subr.bf16.mxu0 0
    %2743 = vmatpush2.bf16.msra.mxu0 %v2694
    %2744 = vmatprep.subr.bf16.mxu0 0
    %2745 = vmatpush2.bf16.msra.mxu0 %v2693
    %2746 = vmatprep.subr.bf16.mxu0 0
    %2747 = vmatpush2.bf16.msra.mxu0 %v2692
    %2748 = vmatprep.mubr.bf16.mxu0 %v2580
    %2749 = vmatmul.mubr.bf16.gmra.mxu0 %v2579
    %v2750 = vpop.f32.mrf.mxu0
    %v2751 = vadd.f32 %v2618, %v2750
    %v2752 = vpop.f32.mrf.mxu0
    %v2753 = vpop.f32.mrf.mxu0
    %v2754 = vpop.f32.mrf.mxu0
    %2755 = vdwg.mxu0
    %2756 = vst [vmem:[#allocation2] sm:$0x3] %v2751
    // Predicated region
    $region30: #{forward.9} parent=1 // pred_check
      _
    $region31: #{forward.9} parent=1 // pred_check_branch
      %2758 = sbr.rel (0) target = $region33
    $region32: #{forward.9} parent=1 // pred_region
      %s2760 = ssub.s32 32, 32
      %2761 = vsyncadd [#allocation3], %s2760
      %s2763 = sshll.u32 [#allocation2], 4
      %s2764 = int_to_ptr.vmem [resolvable:$true] %s2763
      %2766 = dma.vmem_to_hbm [thread:$0]  %s2764, 32, %s7, [#allocation3]
    $region33: #{forward.9} parent=1 // pred_fallthru
      _
    // Predicated region
    $region34: #{forward.9} parent=1 // pred_check
      _
    $region35: #{forward.9} parent=1 // pred_check_branch
      %2768 = sbr.rel (0) target = $region37
    $region36: #{forward.9} parent=1 // pred_region
      %2769 = dma.done [#allocation3], 32
    $region37: #{forward.9} parent=1 // pred_fallthru
      _
    %2770 = vsyncpa [#allocation3], 1

</llo_original>
